<compile_context>
chip_gen: v7x
topology: tpu7x:2x2x1
jax: 0.10.0
libtpu: 0.0.40
codegen_flags: <defaults>
</compile_context>

<pallas_src>
import functools
import math

import jax
import jax.numpy as jnp
from jax.experimental import pallas as pl
from jax.experimental.pallas import tpu as pltpu

P = 20
D_MODEL = P * 2          # 40
EPSILON = 1e-4


def _layernorm_kernel(x_ref, w_ref, b_ref, seg_ref, segt_ref, o_ref, *, eps, n):
    """One grid step over TM packed rows.

    x_ref : (TM, PACK*n)   lane-dense packed rows (PACK logical rows each)
    w_ref : (1,  PACK*n)   gamma, replicated PACK times (VMEM-resident)
    b_ref : (1,  PACK*n)   beta,  replicated PACK times (VMEM-resident)
    seg_ref : (PACK*n, PACK) 0/1 group-membership matrix (segment reduce)
    segt_ref: (PACK, PACK*n) its transpose (broadcast per-row stats back)
    """
    x = x_ref[...].astype(jnp.float32)
    seg = seg_ref[...]
    segt = segt_ref[...]
    hi = jax.lax.Precision.HIGHEST  # full-f32 MXU contraction; MXU is idle here

    # Per-logical-row sums -> means (MXU segment reduction over the n lanes of
    # each group), then broadcast the mean back across each group's lanes.
    sums = jnp.dot(x, seg, preferred_element_type=jnp.float32, precision=hi)
    mean = sums * (1.0 / n)                                           # (TM, PACK)
    xc = x - jnp.dot(mean, segt, preferred_element_type=jnp.float32, precision=hi)

    # Unbiased std of xc (torch .std(): divide by N-1); eps added to std.
    ssq = jnp.dot(xc * xc, seg, preferred_element_type=jnp.float32, precision=hi)
    std = jnp.sqrt(ssq * (1.0 / (n - 1)))                             # (TM, PACK)
    inv = pl.reciprocal(std + eps, approx=False)       # per-row, exact reciprocal
    scale = jnp.dot(inv, segt, preferred_element_type=jnp.float32, precision=hi)

    y = xc * scale * w_ref[...] + b_ref[...]
    o_ref[...] = y.astype(o_ref.dtype)


@functools.partial(jax.jit, static_argnames=("use_ln", "epsilon", "block_rows"))
def layernorm(x, w_ln, b_ln, *, use_ln=True, epsilon=EPSILON, block_rows=16384):
    """x: (..., d_model); w_ln, b_ln: (d_model,). Returns same shape/dtype as x."""
    if not use_ln:
        return x

    orig_shape = x.shape
    d_model = orig_shape[-1]
    m = math.prod(orig_shape[:-1])

    # ---- lane-dense packing: PACK logical rows -> one row of width PACK*d ----
    pack = 128 // math.gcd(d_model, 128)           # 16 for d_model = 40
    packed_w = pack * d_model                      # 640 = 5 * 128 lanes

    x2d = x.reshape(m, d_model)
    # Pad M so the packed-row count is a multiple of 8 (sublane-aligned tiles).
    m_pad = -(-m // (pack * 8)) * (pack * 8)
    if m_pad != m:
        x2d = jnp.pad(x2d, ((0, m_pad - m), (0, 0)))
    m_packed = m_pad // pack
    xp = x2d.reshape(m_packed, packed_w)           # free metadata reshape

    # gamma/beta replicated across the packed groups (stay VMEM-resident).
    wp = jnp.tile(w_ln.astype(jnp.float32), pack).reshape(1, packed_w)
    bp = jnp.tile(b_ln.astype(jnp.float32), pack).reshape(1, packed_w)

    # Constant 0/1 segment matrix: column g selects group g's d_model lanes.
    group = jnp.arange(packed_w, dtype=jnp.int32) // d_model
    seg = (group[:, None] == jnp.arange(pack, dtype=jnp.int32)[None, :]).astype(
        jnp.float32)                               # (packed_w, pack)
    segt = seg.T                                   # (pack, packed_w)

    # ---- row tile: big (amortize per-step overhead), but leave >=4 grid steps
    # for medium M so v7x's two TensorCores both get work.
    block_packed = max(8, (block_rows // pack) // 8 * 8)   # 1024 packed rows
    tm = min(block_packed, m_packed)
    if m_packed >= 32:
        tm = min(tm, ((-(-m_packed // 4) + 7) // 8) * 8)
    grid = (pl.cdiv(m_packed, tm),)

    itemsize = jnp.dtype(x.dtype).itemsize
    cost = pl.CostEstimate(
        flops=3 * 2 * m_packed * packed_w * pack + 8 * m_pad * d_model,
        transcendentals=2 * m_pad,                 # sqrt + reciprocal per row
        bytes_accessed=2 * m_pad * d_model * itemsize
        + (2 * packed_w + 2 * packed_w * pack) * 4,
    )

    kernel = functools.partial(_layernorm_kernel, eps=float(epsilon), n=d_model)

    out_p = pl.pallas_call(
        kernel,
        out_shape=jax.ShapeDtypeStruct((m_packed, packed_w), x.dtype),
        grid=grid,
        in_specs=[
            pl.BlockSpec((tm, packed_w), lambda i: (i, 0)),    # x (streamed)
            pl.BlockSpec((1, packed_w), lambda i: (0, 0)),     # gamma (resident)
            pl.BlockSpec((1, packed_w), lambda i: (0, 0)),     # beta  (resident)
            pl.BlockSpec((packed_w, pack), lambda i: (0, 0)),  # seg   (resident)
            pl.BlockSpec((pack, packed_w), lambda i: (0, 0)),  # segT  (resident)
        ],
        out_specs=pl.BlockSpec((tm, packed_w), lambda i: (i, 0)),
        compiler_params=pltpu.CompilerParams(
            dimension_semantics=("parallel",),     # megacore sharding on v7x
        ),
        cost_estimate=cost,
    )(xp, wp, bp, seg, segt)

    out = out_p.reshape(m_pad, d_model)
    if m_pad != m:
        out = out[:m]
    return out.reshape(orig_shape)


def layernorm_ref(x, w_ln, b_ln, epsilon=EPSILON):
    """Plain-JAX reference matching the PyTorch forward (unbiased std, eps on std)."""
    xc = x - jnp.mean(x, axis=-1, keepdims=True)
    std = jnp.std(xc, axis=-1, keepdims=True, ddof=1)
    return xc / (std + epsilon) * w_ln + b_ln


if __name__ == "__main__":
    key = jax.random.PRNGKey(0)
    k_x, k_w, k_b, k_x2 = jax.random.split(key, 4)

    # Module-consistent small shapes: (batch=2, seq=8, d_model=40).
    batch, seq = 2, 8
    x = jax.random.normal(k_x, (batch, seq, D_MODEL), dtype=jnp.float32)
    # Module init is ones/zeros; random gamma/beta exercise the full path.
    w_ln = 1.0 + 0.1 * jax.random.normal(k_w, (D_MODEL,), dtype=jnp.float32)
    b_ln = 0.1 * jax.random.normal(k_b, (D_MODEL,), dtype=jnp.float32)

    out = layernorm(x, w_ln, b_ln, use_ln=True)
    jax.block_until_ready(out)
    ref = layernorm_ref(x, w_ln, b_ln)
    assert out.shape == x.shape, out.shape
    assert jnp.allclose(out, ref, atol=2e-5, rtol=2e-5), float(
        jnp.max(jnp.abs(out - ref)))

    # Larger, non-divisible M: exercises padding, multi-step grid, ragged tile.
    x2 = jax.random.normal(k_x2, (5, 123, D_MODEL), dtype=jnp.float32)
    out2 = layernorm(x2, w_ln, b_ln, use_ln=True)
    jax.block_until_ready(out2)
    ref2 = layernorm_ref(x2, w_ln, b_ln)
    assert out2.shape == x2.shape, out2.shape
    assert jnp.allclose(out2, ref2, atol=2e-5, rtol=2e-5), float(
        jnp.max(jnp.abs(out2 - ref2)))

    # use_ln=False path: identity.
    out_id = layernorm(x, w_ln, b_ln, use_ln=False)
    assert jnp.array_equal(out_id, x)

    print("KERNEL_OK")
</pallas_src>

<mosaic_0001>
module attributes {stable_mosaic.version = 11 : i64} {
  func.func @_layernorm_kernel(%arg0: i32, %arg1: memref<8x640xf32, #tpu.memory_space<vmem>>, %arg2: memref<1x640xf32, #tpu.memory_space<vmem>>, %arg3: memref<1x640xf32, #tpu.memory_space<vmem>>, %arg4: memref<640x16xf32, #tpu.memory_space<vmem>>, %arg5: memref<16x640xf32, #tpu.memory_space<vmem>>, %arg6: memref<8x640xf32, #tpu.memory_space<vmem>>) attributes {dimension_semantics = [#tpu.dimension_semantics<parallel>], iteration_bounds = array<i64: 1>, scalar_prefetch = 0 : i64, scratch_operands = 0 : i64, tpu.core_type = #tpu.core_type<tc>, window_params = [{transform_indices = @transform_0, window_bounds = array<i64: 8, 640>}, {pipeline_mode = #tpu.pipeline_mode<synchronous>, transform_indices = @transform_1, window_bounds = array<i64: 1, 640>}, {pipeline_mode = #tpu.pipeline_mode<synchronous>, transform_indices = @transform_2, window_bounds = array<i64: 1, 640>}, {pipeline_mode = #tpu.pipeline_mode<synchronous>, transform_indices = @transform_3, window_bounds = array<i64: 640, 16>}, {pipeline_mode = #tpu.pipeline_mode<synchronous>, transform_indices = @transform_4, window_bounds = array<i64: 16, 640>}, {transform_indices = @transform_5, window_bounds = array<i64: 8, 640>}]} {
    %c0 = arith.constant 0 : index
    %c0_0 = arith.constant 0 : index
    %0 = vector.load %arg1[%c0, %c0_0] : memref<8x640xf32, #tpu.memory_space<vmem>>, vector<8x640xf32>
    %c0_1 = arith.constant 0 : index
    %c0_2 = arith.constant 0 : index
    %1 = vector.load %arg4[%c0_1, %c0_2] : memref<640x16xf32, #tpu.memory_space<vmem>>, vector<640x16xf32>
    %c0_3 = arith.constant 0 : index
    %c0_4 = arith.constant 0 : index
    %2 = vector.load %arg5[%c0_3, %c0_4] : memref<16x640xf32, #tpu.memory_space<vmem>>, vector<16x640xf32>
    %cst = arith.constant dense<0.000000e+00> : vector<8x16xf32>
    %3 = tpu.matmul %0, %1, %cst {dimension_numbers = #tpu.dot_dimension_numbers<[1], [0], [0], [1], [0, 0, 1, 1], [], []>, precision = #tpu.contract_precision<fp32>} : vector<8x640xf32>, vector<640x16xf32>, vector<8x16xf32> -> vector<8x16xf32>
    %cst_5 = arith.constant 2.500000e-02 : f32
    %4 = vector.broadcast %cst_5 : f32 to vector<8x16xf32>
    %5 = arith.mulf %3, %4 : vector<8x16xf32>
    %cst_6 = arith.constant dense<0.000000e+00> : vector<8x640xf32>
    %6 = tpu.matmul %5, %2, %cst_6 {dimension_numbers = #tpu.dot_dimension_numbers<[1], [0], [0], [1], [0, 0, 1, 1], [], []>, precision = #tpu.contract_precision<fp32>} : vector<8x16xf32>, vector<16x640xf32>, vector<8x640xf32> -> vector<8x640xf32>
    %7 = arith.subf %0, %6 : vector<8x640xf32>
    %8 = arith.mulf %7, %7 : vector<8x640xf32>
    %cst_7 = arith.constant dense<0.000000e+00> : vector<8x16xf32>
    %9 = tpu.matmul %8, %1, %cst_7 {dimension_numbers = #tpu.dot_dimension_numbers<[1], [0], [0], [1], [0, 0, 1, 1], [], []>, precision = #tpu.contract_precision<fp32>} : vector<8x640xf32>, vector<640x16xf32>, vector<8x16xf32> -> vector<8x16xf32>
    %cst_8 = arith.constant 0.025641026 : f32
    %10 = vector.broadcast %cst_8 : f32 to vector<8x16xf32>
    %11 = arith.mulf %9, %10 : vector<8x16xf32>
    %12 = math.sqrt %11 : vector<8x16xf32>
    %cst_9 = arith.constant 9.99999974E-5 : f32
    %13 = vector.broadcast %cst_9 : f32 to vector<8x16xf32>
    %14 = arith.addf %12, %13 : vector<8x16xf32>
    %15 = tpu.reciprocal %14 : vector<8x16xf32> -> vector<8x16xf32>
    %cst_10 = arith.constant dense<0.000000e+00> : vector<8x640xf32>
    %16 = tpu.matmul %15, %2, %cst_10 {dimension_numbers = #tpu.dot_dimension_numbers<[1], [0], [0], [1], [0, 0, 1, 1], [], []>, precision = #tpu.contract_precision<fp32>} : vector<8x16xf32>, vector<16x640xf32>, vector<8x640xf32> -> vector<8x640xf32>
    %17 = arith.mulf %7, %16 : vector<8x640xf32>
    %c0_11 = arith.constant 0 : index
    %c0_12 = arith.constant 0 : index
    %18 = vector.load %arg2[%c0_11, %c0_12] : memref<1x640xf32, #tpu.memory_space<vmem>>, vector<1x640xf32>
    %19 = vector.broadcast %18 : vector<1x640xf32> to vector<8x640xf32>
    %20 = arith.mulf %17, %19 : vector<8x640xf32>
    %c0_13 = arith.constant 0 : index
    %c0_14 = arith.constant 0 : index
    %21 = vector.load %arg3[%c0_13, %c0_14] : memref<1x640xf32, #tpu.memory_space<vmem>>, vector<1x640xf32>
    %22 = vector.broadcast %21 : vector<1x640xf32> to vector<8x640xf32>
    %23 = arith.addf %20, %22 : vector<8x640xf32>
    %c0_15 = arith.constant 0 : index
    %c0_16 = arith.constant 0 : index
    %24 = vector.load %arg6[%c0_15, %c0_16] : memref<8x640xf32, #tpu.memory_space<vmem>>, vector<8x640xf32>
    tpu.vector_store %arg6[%c0_15, %c0_16], %23 {strides = array<i32>} : memref<8x640xf32, #tpu.memory_space<vmem>>, vector<8x640xf32>,
    return
  }
  func.func @transform_0(%arg0: i32) -> (i32, i32) {
    %c0_i32 = arith.constant 0 : i32
    %c0_i32_0 = arith.constant 0 : i32
    return %arg0, %c0_i32 : i32, i32
  }
  func.func @transform_1(%arg0: i32) -> (i32, i32) {
    %c0_i32 = arith.constant 0 : i32
    %c0_i32_0 = arith.constant 0 : i32
    %c0_i32_1 = arith.constant 0 : i32
    return %c0_i32, %c0_i32_0 : i32, i32
  }
  func.func @transform_2(%arg0: i32) -> (i32, i32) {
    %c0_i32 = arith.constant 0 : i32
    %c0_i32_0 = arith.constant 0 : i32
    %c0_i32_1 = arith.constant 0 : i32
    return %c0_i32, %c0_i32_0 : i32, i32
  }
  func.func @transform_3(%arg0: i32) -> (i32, i32) {
    %c0_i32 = arith.constant 0 : i32
    %c0_i32_0 = arith.constant 0 : i32
    %c0_i32_1 = arith.constant 0 : i32
    return %c0_i32, %c0_i32_0 : i32, i32
  }
  func.func @transform_4(%arg0: i32) -> (i32, i32) {
    %c0_i32 = arith.constant 0 : i32
    %c0_i32_0 = arith.constant 0 : i32
    %c0_i32_1 = arith.constant 0 : i32
    return %c0_i32, %c0_i32_0 : i32, i32
  }
  func.func @transform_5(%arg0: i32) -> (i32, i32) {
    %c0_i32 = arith.constant 0 : i32
    %c0_i32_0 = arith.constant 0 : i32
    return %arg0, %c0_i32 : i32, i32
  }
}

</mosaic_0001>

<llo_original>
// kernel: tile.13
$region0: #{tile.13}
  #allocation0 [shape = 's32[1]{0}', space=sflag, size = 0x4, scoped, tag = 'scoped memory for tile.13']
  %s0 = inlined_call_operand.vmem [shape: f32[40], index: 0, kind: input, shape index: {}]
  %s1 = inlined_call_operand.vmem [shape: f32[16,40], index: 1, kind: output, shape index: {}]
  // Predicated region
  $region2: #{tile.13} parent=0 // pred_check
    _
  $region3: #{tile.13} parent=0 // pred_check_branch
    %3 = sbr.rel (0) target = $region5
  $region4: #{tile.13} parent=0 // pred_region
    _
  $region5: #{tile.13} parent=0 // pred_fallthru
    _
  %v4 = vld [vmem:[%s0] ss:$0 sm:$0xff]
  %5 = vst [vmem:[%s1] sm:$0xff] %v4
  %s6 = scalar_lea.vmem %s1, 8
  %7 = vst [vmem:[%s6] sm:$0xff] %v4

// kernel: tile.14
$region0: #{tile.14}
  %s0 = inlined_call_operand.vmem [shape: f32[16,40], index: 0, kind: input, shape index: {}]
  %s1 = inlined_call_operand.vmem [shape: f32[1,640], index: 1, kind: output, shape index: {}]
  $region1: #{tile.14} parent=0
    #allocation0 [shape = 'u8[20480]{0}', space=vmem, size = 0x5000, scoped, tag = 'scoped mem for output reshape']
    %v2 = vld [vmem:[%s0] sm:$0x1]
    %vm3 = vcmask 326656
    %4 = vst.msk [vmem:[#allocation0] sm:$0x1] %vm3, %v2
    %s5 = scalar_lea.vmem %s0, 3
    %v6 = vld [vmem:[%s5] sm:$0x1]
    %s7 = scalar_lea.vmem %s0, 3
    %v8 = vld [vmem:[%s7] sm:$0x1]
    %vm9 = vcmask 64512
    %v10 = vsel %vm9, %v8, %v6
    %11 = vrot.lane.b32.xlu0 %v10, 120
    %v12 = vpop.permute.xlu0 %11
    %vm13 = vcmask 261120
    %s14 = scalar_lea.vmem [#allocation0], 8
    %15 = vst.msk [vmem:[%s14] sm:$0x1] %vm13, %v12
    %vm16 = vcmask 1048512
    %17 = vst.msk [vmem:[#allocation0] sm:$0x1] %vm16, %v12
    %s18 = scalar_lea.vmem %s0, 6
    %v19 = vld [vmem:[%s18] sm:$0x1]
    %s20 = scalar_lea.vmem %s0, 6
    %v21 = vld [vmem:[%s20] sm:$0x1]
    %vm22 = vcmask 130048
    %v23 = vsel %vm22, %v21, %v19
    %24 = vrot.lane.b32.xlu0 %v23, 112
    %v25 = vpop.permute.xlu0 %24
    %vm26 = vcmask 195584
    %s27 = scalar_lea.vmem [#allocation0], 16
    %28 = vst.msk [vmem:[%s27] sm:$0x1] %vm26, %v25
    %vm29 = vcmask 1048448
    %s30 = scalar_lea.vmem [#allocation0], 8
    %31 = vst.msk [vmem:[%s30] sm:$0x1] %vm29, %v25
    %s32 = scalar_lea.vmem %s0, 9
    %v33 = vld [vmem:[%s32] sm:$0x1]
    %s34 = scalar_lea.vmem %s0, 9
    %v35 = vld [vmem:[%s34] sm:$0x1]
    %vm36 = vcmask 195584
    %v37 = vsel %vm36, %v35, %v33
    %38 = vrot.lane.b32.xlu0 %v37, 104
    %v39 = vpop.permute.xlu0 %38
    %vm40 = vcmask 130048
    %s41 = scalar_lea.vmem [#allocation0], 24
    %42 = vst.msk [vmem:[%s41] sm:$0x1] %vm40, %v39
    %vm43 = vcmask 1048384
    %s44 = scalar_lea.vmem [#allocation0], 16
    %45 = vst.msk [vmem:[%s44] sm:$0x1] %vm43, %v39
    %s46 = scalar_lea.vmem %s0, 12
    %v47 = vld [vmem:[%s46] sm:$0x1]
    %s48 = scalar_lea.vmem %s0, 12
    %v49 = vld [vmem:[%s48] sm:$0x1]
    %vm50 = vcmask 261120
    %v51 = vsel %vm50, %v49, %v47
    %52 = vrot.lane.b32.xlu0 %v51, 96
    %v53 = vpop.permute.xlu0 %52
    %vm54 = vcmask 64512
    %s55 = scalar_lea.vmem [#allocation0], 32
    %56 = vst.msk [vmem:[%s55] sm:$0x1] %vm54, %v53
    %vm57 = vcmask 1048320
    %s58 = scalar_lea.vmem [#allocation0], 24
    %59 = vst.msk [vmem:[%s58] sm:$0x1] %vm57, %v53
    %s60 = scalar_lea.vmem %s0, 15
    %v61 = vld [vmem:[%s60] sm:$0x1]
    %62 = vrot.lane.b32.xlu0 %v61, 88
    %v63 = vpop.permute.xlu0 %62
    %vm64 = vcmask 1048256
    %s65 = scalar_lea.vmem [#allocation0], 32
    %66 = vst.msk [vmem:[%s65] sm:$0x1] %vm64, %v63
    %s67 = scalar_lea.vmem %s0, 2
    %v68 = vld [vmem:[%s67] sm:$0x1]
    %69 = vrot.lane.b32.xlu0 %v68, 80
    %v70 = vpop.permute.xlu0 %69
    %vm71 = vcmask 982656
    %72 = vst.msk [vmem:[#allocation0] sm:$0x1] %vm71, %v70
    %s73 = scalar_lea.vmem %s0, 5
    %v74 = vld [vmem:[%s73] sm:$0x1]
    %75 = vrot.lane.b32.xlu0 %v74, 72
    %v76 = vpop.permute.xlu0 %75
    %vm77 = vcmask 917056
    %s78 = scalar_lea.vmem [#allocation0], 8
    %79 = vst.msk [vmem:[%s78] sm:$0x1] %vm77, %v76
    %s80 = scalar_lea.vmem %s0, 8
    %v81 = vld [vmem:[%s80] sm:$0x1]
    %82 = vrot.lane.b32.xlu0 %v81, 64
    %v83 = vpop.permute.xlu0 %82
    %vm84 = vcmask 851456
    %s85 = scalar_lea.vmem [#allocation0], 16
    %86 = vst.msk [vmem:[%s85] sm:$0x1] %vm84, %v83
    %s87 = scalar_lea.vmem %s0, 11
    %v88 = vld [vmem:[%s87] sm:$0x1]
    %89 = vrot.lane.b32.xlu0 %v88, 56
    %v90 = vpop.permute.xlu0 %89
    %vm91 = vcmask 785856
    %s92 = scalar_lea.vmem [#allocation0], 24
    %93 = vst.msk [vmem:[%s92] sm:$0x1] %vm91, %v90
    %s94 = scalar_lea.vmem %s0, 14
    %v95 = vld [vmem:[%s94] sm:$0x1]
    %96 = vrot.lane.b32.xlu0 %v95, 48
    %v97 = vpop.permute.xlu0 %96
    %vm98 = vcmask 720256
    %s99 = scalar_lea.vmem [#allocation0], 32
    %100 = vst.msk [vmem:[%s99] sm:$0x1] %vm98, %v97
    %s101 = scalar_lea.vmem %s0, 1
    %v102 = vld [vmem:[%s101] sm:$0x1]
    %103 = vrot.lane.b32.xlu0 %v102, 40
    %v104 = vpop.permute.xlu0 %103
    %vm105 = vcmask 654656
    %106 = vst.msk [vmem:[#allocation0] sm:$0x1] %vm105, %v104
    %s107 = scalar_lea.vmem %s0, 4
    %v108 = vld [vmem:[%s107] sm:$0x1]
    %109 = vrot.lane.b32.xlu0 %v108, 32
    %v110 = vpop.permute.xlu0 %109
    %vm111 = vcmask 589056
    %s112 = scalar_lea.vmem [#allocation0], 8
    %113 = vst.msk [vmem:[%s112] sm:$0x1] %vm111, %v110
    %s114 = scalar_lea.vmem %s0, 7
    %v115 = vld [vmem:[%s114] sm:$0x1]
    %116 = vrot.lane.b32.xlu0 %v115, 24
    %v117 = vpop.permute.xlu0 %116
    %vm118 = vcmask 523456
    %s119 = scalar_lea.vmem [#allocation0], 16
    %120 = vst.msk [vmem:[%s119] sm:$0x1] %vm118, %v117
    %s121 = scalar_lea.vmem %s0, 10
    %v122 = vld [vmem:[%s121] sm:$0x1]
    %123 = vrot.lane.b32.xlu0 %v122, 16
    %v124 = vpop.permute.xlu0 %123
    %vm125 = vcmask 457856
    %s126 = scalar_lea.vmem [#allocation0], 24
    %127 = vst.msk [vmem:[%s126] sm:$0x1] %vm125, %v124
    %s128 = scalar_lea.vmem %s0, 13
    %v129 = vld [vmem:[%s128] sm:$0x1]
    %130 = vrot.lane.b32.xlu0 %v129, 8
    %v131 = vpop.permute.xlu0 %130
    %vm132 = vcmask 392256
    %s133 = scalar_lea.vmem [#allocation0], 32
    %134 = vst.msk [vmem:[%s133] sm:$0x1] %vm132, %v131
    %s136 = sshllo.u32 0, 1
    %v138 = vld [vmem:[#allocation0] sm:%s136]
    %s139 = sshllo.u32 0, 1
    %140 = vst [vmem:[%s1] sm:%s139] %v138
    %s141 = scalar_lea.vmem [#allocation0], 8
    %v142 = vld [vmem:[%s141] sm:%s136]
    %s143 = sshllo.u32 0, 1
    %s144 = scalar_lea.vmem %s1, 1
    %145 = vst [vmem:[%s144] sm:%s143] %v142
    %s146 = scalar_lea.vmem [#allocation0], 16
    %v147 = vld [vmem:[%s146] sm:%s136]
    %s148 = sshllo.u32 0, 1
    %s149 = smul.addr 1, 2
    %s150 = scalar_lea.vmem %s1, %s149
    %151 = vst [vmem:[%s150] sm:%s148] %v147
    %s152 = scalar_lea.vmem [#allocation0], 24
    %v153 = vld [vmem:[%s152] sm:%s136]
    %s154 = sshllo.u32 0, 1
    %s155 = smul.addr 1, 3
    %s156 = scalar_lea.vmem %s1, %s155
    %157 = vst [vmem:[%s156] sm:%s154] %v153
    %s158 = scalar_lea.vmem [#allocation0], 32
    %v159 = vld [vmem:[%s158] sm:%s136]
    %s160 = sshllo.u32 0, 1
    %s161 = smul.addr 1, 4
    %s162 = scalar_lea.vmem %s1, %s161
    %163 = vst [vmem:[%s162] sm:%s160] %v159

// kernel: layernorm.1
$region0: #{layernorm.1}
  #allocation0 [shape = 'u32[]', space=smem, size = 0x4, offset = 0x4, fixed_abs, tag = 'smem constant byte address 0x4 - core index']
  #allocation1 [shape = 'u32[144,128]{1,0:T(1,128)}', space=vmem, size = 0x12000, scoped, tag = 'internal scratch']
  %s0 = inlined_call_operand.vmem [shape: f32[8,640], index: 0, kind: input, shape index: {}]
  %s1 = inlined_call_operand.vmem [shape: f32[1,640], index: 1, kind: input, shape index: {}]
  %s2 = inlined_call_operand.vmem [shape: f32[1,640], index: 2, kind: input, shape index: {}]
  %s3 = inlined_call_operand.vmem [shape: f32[640,16], index: 3, kind: input, shape index: {}]
  %s4 = inlined_call_operand.vmem [shape: f32[16,640], index: 4, kind: input, shape index: {}]
  %s5 = inlined_call_operand.vmem [shape: f32[8,640], index: 5, kind: output, shape index: {}]
  %s6 = sld [smem:[#allocation0]]
  $region30: #{layernorm.1} parent=0
    _
  %s8 = ssub.s32 1, %s6
  %s9 = scalar_select 0, %s8, %s6
  // Predicated region
  $region2: #{layernorm.1} parent=0 // pred_check
    _
  $region3: #{layernorm.1} parent=0 // pred_check_branch
    %11 = sbr.rel (0) target = $region5
  $region4: #{layernorm.1} parent=0 // pred_region
    _
  $region5: #{layernorm.1} parent=0 // pred_fallthru
    _
  // Predicated region
  $region6: #{layernorm.1} parent=0 // pred_check
    _
  $region7: #{layernorm.1} parent=0 // pred_check_branch
    %13 = sbr.rel (0) target = $region9
  $region8: #{layernorm.1} parent=0 // pred_region
    _
  $region9: #{layernorm.1} parent=0 // pred_fallthru
    _
  // Predicated region
  $region10: #{layernorm.1} parent=0 // pred_check
    _
  $region11: #{layernorm.1} parent=0 // pred_check_branch
    %15 = sbr.rel (0) target = $region13
  $region12: #{layernorm.1} parent=0 // pred_region
    _
  $region13: #{layernorm.1} parent=0 // pred_fallthru
    _
  // Predicated region
  $region14: #{layernorm.1} parent=0 // pred_check
    _
  $region15: #{layernorm.1} parent=0 // pred_check_branch
    %17 = sbr.rel (0) target = $region17
  $region16: #{layernorm.1} parent=0 // pred_region
    _
  $region17: #{layernorm.1} parent=0 // pred_fallthru
    _
  // Predicated region
  $region18: #{layernorm.1} parent=0 // pred_check
    _
  $region19: #{layernorm.1} parent=0 // pred_check_branch
    %19 = sbr.rel (0) target = $region21
  $region20: #{layernorm.1} parent=0 // pred_region
    _
  $region21: #{layernorm.1} parent=0 // pred_fallthru
    _
  %v20 = vld [vmem:[%s0] sm:$0xff]
  %v21 = vld [vmem:[%s0 + $0x8] sm:$0xff]
  %v22 = vld [vmem:[%s0 + $0x10] sm:$0xff]
  %v23 = vld [vmem:[%s0 + $0x18] sm:$0xff]
  %v24 = vld [vmem:[%s0 + $0x20] sm:$0xff]
  %v25 = vld [vmem:[%s3] sm:$0xff]
  %v26 = vld [vmem:[%s3 + $0x8] sm:$0xff]
  %v27 = vld [vmem:[%s3 + $0x10] sm:$0xff]
  %v28 = vld [vmem:[%s3 + $0x18] sm:$0xff]
  %v29 = vld [vmem:[%s3 + $0x20] sm:$0xff]
  %v30 = vld [vmem:[%s3 + $0x28] sm:$0xff]
  %v31 = vld [vmem:[%s3 + $0x30] sm:$0xff]
  %v32 = vld [vmem:[%s3 + $0x38] sm:$0xff]
  %v33 = vld [vmem:[%s3 + $0x40] sm:$0xff]
  %v34 = vld [vmem:[%s3 + $0x48] sm:$0xff]
  %v35 = vld [vmem:[%s3 + $0x50] sm:$0xff]
  %v36 = vld [vmem:[%s3 + $0x58] sm:$0xff]
  %v37 = vld [vmem:[%s3 + $0x60] sm:$0xff]
  %v38 = vld [vmem:[%s3 + $0x68] sm:$0xff]
  %v39 = vld [vmem:[%s3 + $0x70] sm:$0xff]
  %v40 = vld [vmem:[%s3 + $0x78] sm:$0xff]
  %v41 = vld [vmem:[%s3 + $0x80] sm:$0xff]
  %v42 = vld [vmem:[%s3 + $0x88] sm:$0xff]
  %v43 = vld [vmem:[%s3 + $0x90] sm:$0xff]
  %v44 = vld [vmem:[%s3 + $0x98] sm:$0xff]
  %v45 = vld [vmem:[%s3 + $0xa0] sm:$0xff]
  %v46 = vld [vmem:[%s3 + $0xa8] sm:$0xff]
  %v47 = vld [vmem:[%s3 + $0xb0] sm:$0xff]
  %v48 = vld [vmem:[%s3 + $0xb8] sm:$0xff]
  %v49 = vld [vmem:[%s3 + $0xc0] sm:$0xff]
  %v50 = vld [vmem:[%s3 + $0xc8] sm:$0xff]
  %v51 = vld [vmem:[%s3 + $0xd0] sm:$0xff]
  %v52 = vld [vmem:[%s3 + $0xd8] sm:$0xff]
  %v53 = vld [vmem:[%s3 + $0xe0] sm:$0xff]
  %v54 = vld [vmem:[%s3 + $0xe8] sm:$0xff]
  %v55 = vld [vmem:[%s3 + $0xf0] sm:$0xff]
  %v56 = vld [vmem:[%s3 + $0xf8] sm:$0xff]
  %v57 = vld [vmem:[%s3 + $0x100] sm:$0xff]
  %v58 = vld [vmem:[%s3 + $0x108] sm:$0xff]
  %v59 = vld [vmem:[%s3 + $0x110] sm:$0xff]
  %v60 = vld [vmem:[%s3 + $0x118] sm:$0xff]
  %v61 = vld [vmem:[%s3 + $0x120] sm:$0xff]
  %v62 = vld [vmem:[%s3 + $0x128] sm:$0xff]
  %v63 = vld [vmem:[%s3 + $0x130] sm:$0xff]
  %v64 = vld [vmem:[%s3 + $0x138] sm:$0xff]
  %v65 = vld [vmem:[%s3 + $0x140] sm:$0xff]
  %v66 = vld [vmem:[%s3 + $0x148] sm:$0xff]
  %v67 = vld [vmem:[%s3 + $0x150] sm:$0xff]
  %v68 = vld [vmem:[%s3 + $0x158] sm:$0xff]
  %v69 = vld [vmem:[%s3 + $0x160] sm:$0xff]
  %v70 = vld [vmem:[%s3 + $0x168] sm:$0xff]
  %v71 = vld [vmem:[%s3 + $0x170] sm:$0xff]
  %v72 = vld [vmem:[%s3 + $0x178] sm:$0xff]
  %v73 = vld [vmem:[%s3 + $0x180] sm:$0xff]
  %v74 = vld [vmem:[%s3 + $0x188] sm:$0xff]
  %v75 = vld [vmem:[%s3 + $0x190] sm:$0xff]
  %v76 = vld [vmem:[%s3 + $0x198] sm:$0xff]
  %v77 = vld [vmem:[%s3 + $0x1a0] sm:$0xff]
  %v78 = vld [vmem:[%s3 + $0x1a8] sm:$0xff]
  %v79 = vld [vmem:[%s3 + $0x1b0] sm:$0xff]
  %v80 = vld [vmem:[%s3 + $0x1b8] sm:$0xff]
  %v81 = vld [vmem:[%s3 + $0x1c0] sm:$0xff]
  %v82 = vld [vmem:[%s3 + $0x1c8] sm:$0xff]
  %v83 = vld [vmem:[%s3 + $0x1d0] sm:$0xff]
  %v84 = vld [vmem:[%s3 + $0x1d8] sm:$0xff]
  %v85 = vld [vmem:[%s3 + $0x1e0] sm:$0xff]
  %v86 = vld [vmem:[%s3 + $0x1e8] sm:$0xff]
  %v87 = vld [vmem:[%s3 + $0x1f0] sm:$0xff]
  %v88 = vld [vmem:[%s3 + $0x1f8] sm:$0xff]
  %v89 = vld [vmem:[%s3 + $0x200] sm:$0xff]
  %v90 = vld [vmem:[%s3 + $0x208] sm:$0xff]
  %v91 = vld [vmem:[%s3 + $0x210] sm:$0xff]
  %v92 = vld [vmem:[%s3 + $0x218] sm:$0xff]
  %v93 = vld [vmem:[%s3 + $0x220] sm:$0xff]
  %v94 = vld [vmem:[%s3 + $0x228] sm:$0xff]
  %v95 = vld [vmem:[%s3 + $0x230] sm:$0xff]
  %v96 = vld [vmem:[%s3 + $0x238] sm:$0xff]
  %v97 = vld [vmem:[%s3 + $0x240] sm:$0xff]
  %v98 = vld [vmem:[%s3 + $0x248] sm:$0xff]
  %v99 = vld [vmem:[%s3 + $0x250] sm:$0xff]
  %v100 = vld [vmem:[%s3 + $0x258] sm:$0xff]
  %v101 = vld [vmem:[%s3 + $0x260] sm:$0xff]
  %v102 = vld [vmem:[%s3 + $0x268] sm:$0xff]
  %v103 = vld [vmem:[%s3 + $0x270] sm:$0xff]
  %v104 = vld [vmem:[%s3 + $0x278] sm:$0xff]
  %v105 = vld [vmem:[%s4] sm:$0xff]
  %v106 = vld [vmem:[%s4 + $0x8] sm:$0xff]
  %v107 = vld [vmem:[%s4 + $0x10] sm:$0xff]
  %v108 = vld [vmem:[%s4 + $0x18] sm:$0xff]
  %v109 = vld [vmem:[%s4 + $0x20] sm:$0xff]
  %v110 = vld [vmem:[%s4 + $0x28] sm:$0xff]
  %v111 = vld [vmem:[%s4 + $0x30] sm:$0xff]
  %v112 = vld [vmem:[%s4 + $0x38] sm:$0xff]
  %v113 = vld [vmem:[%s4 + $0x40] sm:$0xff]
  %v114 = vld [vmem:[%s4 + $0x48] sm:$0xff]
  %115 = vmatprep.subr.mxu0 0.0
  %v116 = vand.u32 %v25, 4294901760
  %117 = vmatpush1.msra.mxu0 %v116
  %118 = vmatprep.subr.mxu0 0.0
  %v119 = vand.u32 %v26, 4294901760
  %120 = vmatpush1.msra.mxu0 %v119
  %121 = vmatprep.subr.mxu0 0.0
  %v122 = vand.u32 %v27, 4294901760
  %123 = vmatpush1.msra.mxu0 %v122
  %124 = vmatprep.subr.mxu0 0.0
  %v125 = vand.u32 %v28, 4294901760
  %126 = vmatpush1.msra.mxu0 %v125
  %127 = vmatprep.subr.mxu0 0.0
  %v128 = vand.u32 %v29, 4294901760
  %129 = vmatpush1.msra.mxu0 %v128
  %130 = vmatprep.subr.mxu0 0.0
  %v131 = vand.u32 %v30, 4294901760
  %132 = vmatpush1.msra.mxu0 %v131
  %133 = vmatprep.subr.mxu0 0.0
  %v134 = vand.u32 %v31, 4294901760
  %135 = vmatpush1.msra.mxu0 %v134
  %136 = vmatprep.subr.mxu0 0.0
  %v137 = vand.u32 %v32, 4294901760
  %138 = vmatpush1.msra.mxu0 %v137
  %139 = vmatprep.subr.mxu0 0.0
  %v140 = vand.u32 %v33, 4294901760
  %141 = vmatpush1.msra.mxu0 %v140
  %142 = vmatprep.subr.mxu0 0.0
  %v143 = vand.u32 %v34, 4294901760
  %144 = vmatpush1.msra.mxu0 %v143
  %145 = vmatprep.subr.mxu0 0.0
  %v146 = vand.u32 %v35, 4294901760
  %147 = vmatpush1.msra.mxu0 %v146
  %148 = vmatprep.subr.mxu0 0.0
  %v149 = vand.u32 %v36, 4294901760
  %150 = vmatpush1.msra.mxu0 %v149
  %151 = vmatprep.subr.mxu0 0.0
  %v152 = vand.u32 %v37, 4294901760
  %153 = vmatpush1.msra.mxu0 %v152
  %154 = vmatprep.subr.mxu0 0.0
  %v155 = vand.u32 %v38, 4294901760
  %156 = vmatpush1.msra.mxu0 %v155
  %157 = vmatprep.subr.mxu0 0.0
  %v158 = vand.u32 %v39, 4294901760
  %159 = vmatpush1.msra.mxu0 %v158
  %160 = vmatprep.subr.mxu0 0.0
  %v161 = vand.u32 %v40, 4294901760
  %162 = vmatpush1.msra.mxu0 %v161
  %163 = vmatprep.subr.mxu0 0.0
  %v164 = vand.u32 %v41, 4294901760
  %165 = vmatpush1.msra.mxu0 %v164
  %166 = vmatprep.subr.mxu0 0.0
  %v167 = vand.u32 %v42, 4294901760
  %168 = vmatpush1.msra.mxu0 %v167
  %169 = vmatprep.subr.mxu0 0.0
  %v170 = vand.u32 %v43, 4294901760
  %171 = vmatpush1.msra.mxu0 %v170
  %172 = vmatprep.subr.mxu0 0.0
  %v173 = vand.u32 %v44, 4294901760
  %174 = vmatpush1.msra.mxu0 %v173
  %175 = vmatprep.subr.mxu0 0.0
  %v176 = vand.u32 %v45, 4294901760
  %177 = vmatpush1.msra.mxu0 %v176
  %178 = vmatprep.subr.mxu0 0.0
  %v179 = vand.u32 %v46, 4294901760
  %180 = vmatpush1.msra.mxu0 %v179
  %181 = vmatprep.subr.mxu0 0.0
  %v182 = vand.u32 %v47, 4294901760
  %183 = vmatpush1.msra.mxu0 %v182
  %184 = vmatprep.subr.mxu0 0.0
  %v185 = vand.u32 %v48, 4294901760
  %186 = vmatpush1.msra.mxu0 %v185
  %187 = vmatprep.subr.mxu0 0.0
  %v188 = vand.u32 %v49, 4294901760
  %189 = vmatpush1.msra.mxu0 %v188
  %190 = vmatprep.subr.mxu0 0.0
  %v191 = vand.u32 %v50, 4294901760
  %192 = vmatpush1.msra.mxu0 %v191
  %193 = vmatprep.subr.mxu0 0.0
  %v194 = vand.u32 %v51, 4294901760
  %195 = vmatpush1.msra.mxu0 %v194
  %196 = vmatprep.subr.mxu0 0.0
  %v197 = vand.u32 %v52, 4294901760
  %198 = vmatpush1.msra.mxu0 %v197
  %199 = vmatprep.subr.mxu0 0.0
  %v200 = vand.u32 %v53, 4294901760
  %201 = vmatpush1.msra.mxu0 %v200
  %202 = vmatprep.subr.mxu0 0.0
  %v203 = vand.u32 %v54, 4294901760
  %204 = vmatpush1.msra.mxu0 %v203
  %205 = vmatprep.subr.mxu0 0.0
  %v206 = vand.u32 %v55, 4294901760
  %207 = vmatpush1.msra.mxu0 %v206
  %208 = vmatprep.subr.mxu0 0.0
  %v209 = vand.u32 %v56, 4294901760
  %210 = vmatpush1.msra.mxu0 %v209
  %v211 = vand.u32 %v21, 4294901760
  %v212 = vsub.f32 %v21, %v211
  %v213 = vand.u32 %v212, 4294901760
  %v214 = vsub.f32 %v212, %v213
  %v215 = vand.u32 %v214, 4294901760
  %216 = vmatprep.mubr.f32.mxu0 %v215
  %v217 = vand.u32 %v20, 4294901760
  %v218 = vsub.f32 %v20, %v217
  %v219 = vand.u32 %v218, 4294901760
  %v220 = vsub.f32 %v218, %v219
  %v221 = vand.u32 %v220, 4294901760
  %222 = vmatmul.mubr.f32.gmra.mrb[0].mxu0 %v221
  %v223 = vpop.f32.mrb[0].mxu0
  %v224 = vadd.f32 0.0, %v223
  %v225 = vpop.f32.mrb[0].mxu0
  %226 = vdwg.mxu0
  %227 = vmatprep.subr.mxu0 0.0
  %v228 = vand.u32 %v25, 4294901760
  %v229 = vsub.f32 %v25, %v228
  %v230 = vand.u32 %v229, 4294901760
  %v231 = vsub.f32 %v229, %v230
  %v232 = vand.u32 %v231, 4294901760
  %233 = vmatpush1.msra.mxu0 %v232
  %234 = vmatprep.subr.mxu0 0.0
  %v235 = vand.u32 %v26, 4294901760
  %v236 = vsub.f32 %v26, %v235
  %v237 = vand.u32 %v236, 4294901760
  %v238 = vsub.f32 %v236, %v237
  %v239 = vand.u32 %v238, 4294901760
  %240 = vmatpush1.msra.mxu0 %v239
  %241 = vmatprep.subr.mxu0 0.0
  %v242 = vand.u32 %v27, 4294901760
  %v243 = vsub.f32 %v27, %v242
  %v244 = vand.u32 %v243, 4294901760
  %v245 = vsub.f32 %v243, %v244
  %v246 = vand.u32 %v245, 4294901760
  %247 = vmatpush1.msra.mxu0 %v246
  %248 = vmatprep.subr.mxu0 0.0
  %v249 = vand.u32 %v28, 4294901760
  %v250 = vsub.f32 %v28, %v249
  %v251 = vand.u32 %v250, 4294901760
  %v252 = vsub.f32 %v250, %v251
  %v253 = vand.u32 %v252, 4294901760
  %254 = vmatpush1.msra.mxu0 %v253
  %255 = vmatprep.subr.mxu0 0.0
  %v256 = vand.u32 %v29, 4294901760
  %v257 = vsub.f32 %v29, %v256
  %v258 = vand.u32 %v257, 4294901760
  %v259 = vsub.f32 %v257, %v258
  %v260 = vand.u32 %v259, 4294901760
  %261 = vmatpush1.msra.mxu0 %v260
  %262 = vmatprep.subr.mxu0 0.0
  %v263 = vand.u32 %v30, 4294901760
  %v264 = vsub.f32 %v30, %v263
  %v265 = vand.u32 %v264, 4294901760
  %v266 = vsub.f32 %v264, %v265
  %v267 = vand.u32 %v266, 4294901760
  %268 = vmatpush1.msra.mxu0 %v267
  %269 = vmatprep.subr.mxu0 0.0
  %v270 = vand.u32 %v31, 4294901760
  %v271 = vsub.f32 %v31, %v270
  %v272 = vand.u32 %v271, 4294901760
  %v273 = vsub.f32 %v271, %v272
  %v274 = vand.u32 %v273, 4294901760
  %275 = vmatpush1.msra.mxu0 %v274
  %276 = vmatprep.subr.mxu0 0.0
  %v277 = vand.u32 %v32, 4294901760
  %v278 = vsub.f32 %v32, %v277
  %v279 = vand.u32 %v278, 4294901760
  %v280 = vsub.f32 %v278, %v279
  %v281 = vand.u32 %v280, 4294901760
  %282 = vmatpush1.msra.mxu0 %v281
  %283 = vmatprep.subr.mxu0 0.0
  %v284 = vand.u32 %v33, 4294901760
  %v285 = vsub.f32 %v33, %v284
  %v286 = vand.u32 %v285, 4294901760
  %v287 = vsub.f32 %v285, %v286
  %v288 = vand.u32 %v287, 4294901760
  %289 = vmatpush1.msra.mxu0 %v288
  %290 = vmatprep.subr.mxu0 0.0
  %v291 = vand.u32 %v34, 4294901760
  %v292 = vsub.f32 %v34, %v291
  %v293 = vand.u32 %v292, 4294901760
  %v294 = vsub.f32 %v292, %v293
  %v295 = vand.u32 %v294, 4294901760
  %296 = vmatpush1.msra.mxu0 %v295
  %297 = vmatprep.subr.mxu0 0.0
  %v298 = vand.u32 %v35, 4294901760
  %v299 = vsub.f32 %v35, %v298
  %v300 = vand.u32 %v299, 4294901760
  %v301 = vsub.f32 %v299, %v300
  %v302 = vand.u32 %v301, 4294901760
  %303 = vmatpush1.msra.mxu0 %v302
  %304 = vmatprep.subr.mxu0 0.0
  %v305 = vand.u32 %v36, 4294901760
  %v306 = vsub.f32 %v36, %v305
  %v307 = vand.u32 %v306, 4294901760
  %v308 = vsub.f32 %v306, %v307
  %v309 = vand.u32 %v308, 4294901760
  %310 = vmatpush1.msra.mxu0 %v309
  %311 = vmatprep.subr.mxu0 0.0
  %v312 = vand.u32 %v37, 4294901760
  %v313 = vsub.f32 %v37, %v312
  %v314 = vand.u32 %v313, 4294901760
  %v315 = vsub.f32 %v313, %v314
  %v316 = vand.u32 %v315, 4294901760
  %317 = vmatpush1.msra.mxu0 %v316
  %318 = vmatprep.subr.mxu0 0.0
  %v319 = vand.u32 %v38, 4294901760
  %v320 = vsub.f32 %v38, %v319
  %v321 = vand.u32 %v320, 4294901760
  %v322 = vsub.f32 %v320, %v321
  %v323 = vand.u32 %v322, 4294901760
  %324 = vmatpush1.msra.mxu0 %v323
  %325 = vmatprep.subr.mxu0 0.0
  %v326 = vand.u32 %v39, 4294901760
  %v327 = vsub.f32 %v39, %v326
  %v328 = vand.u32 %v327, 4294901760
  %v329 = vsub.f32 %v327, %v328
  %v330 = vand.u32 %v329, 4294901760
  %331 = vmatpush1.msra.mxu0 %v330
  %332 = vmatprep.subr.mxu0 0.0
  %v333 = vand.u32 %v40, 4294901760
  %v334 = vsub.f32 %v40, %v333
  %v335 = vand.u32 %v334, 4294901760
  %v336 = vsub.f32 %v334, %v335
  %v337 = vand.u32 %v336, 4294901760
  %338 = vmatpush1.msra.mxu0 %v337
  %339 = vmatprep.subr.mxu0 0.0
  %v340 = vand.u32 %v41, 4294901760
  %v341 = vsub.f32 %v41, %v340
  %v342 = vand.u32 %v341, 4294901760
  %v343 = vsub.f32 %v341, %v342
  %v344 = vand.u32 %v343, 4294901760
  %345 = vmatpush1.msra.mxu0 %v344
  %346 = vmatprep.subr.mxu0 0.0
  %v347 = vand.u32 %v42, 4294901760
  %v348 = vsub.f32 %v42, %v347
  %v349 = vand.u32 %v348, 4294901760
  %v350 = vsub.f32 %v348, %v349
  %v351 = vand.u32 %v350, 4294901760
  %352 = vmatpush1.msra.mxu0 %v351
  %353 = vmatprep.subr.mxu0 0.0
  %v354 = vand.u32 %v43, 4294901760
  %v355 = vsub.f32 %v43, %v354
  %v356 = vand.u32 %v355, 4294901760
  %v357 = vsub.f32 %v355, %v356
  %v358 = vand.u32 %v357, 4294901760
  %359 = vmatpush1.msra.mxu0 %v358
  %360 = vmatprep.subr.mxu0 0.0
  %v361 = vand.u32 %v44, 4294901760
  %v362 = vsub.f32 %v44, %v361
  %v363 = vand.u32 %v362, 4294901760
  %v364 = vsub.f32 %v362, %v363
  %v365 = vand.u32 %v364, 4294901760
  %366 = vmatpush1.msra.mxu0 %v365
  %367 = vmatprep.subr.mxu0 0.0
  %v368 = vand.u32 %v45, 4294901760
  %v369 = vsub.f32 %v45, %v368
  %v370 = vand.u32 %v369, 4294901760
  %v371 = vsub.f32 %v369, %v370
  %v372 = vand.u32 %v371, 4294901760
  %373 = vmatpush1.msra.mxu0 %v372
  %374 = vmatprep.subr.mxu0 0.0
  %v375 = vand.u32 %v46, 4294901760
  %v376 = vsub.f32 %v46, %v375
  %v377 = vand.u32 %v376, 4294901760
  %v378 = vsub.f32 %v376, %v377
  %v379 = vand.u32 %v378, 4294901760
  %380 = vmatpush1.msra.mxu0 %v379
  %381 = vmatprep.subr.mxu0 0.0
  %v382 = vand.u32 %v47, 4294901760
  %v383 = vsub.f32 %v47, %v382
  %v384 = vand.u32 %v383, 4294901760
  %v385 = vsub.f32 %v383, %v384
  %v386 = vand.u32 %v385, 4294901760
  %387 = vmatpush1.msra.mxu0 %v386
  %388 = vmatprep.subr.mxu0 0.0
  %v389 = vand.u32 %v48, 4294901760
  %v390 = vsub.f32 %v48, %v389
  %v391 = vand.u32 %v390, 4294901760
  %v392 = vsub.f32 %v390, %v391
  %v393 = vand.u32 %v392, 4294901760
  %394 = vmatpush1.msra.mxu0 %v393
  %395 = vmatprep.subr.mxu0 0.0
  %v396 = vand.u32 %v49, 4294901760
  %v397 = vsub.f32 %v49, %v396
  %v398 = vand.u32 %v397, 4294901760
  %v399 = vsub.f32 %v397, %v398
  %v400 = vand.u32 %v399, 4294901760
  %401 = vmatpush1.msra.mxu0 %v400
  %402 = vmatprep.subr.mxu0 0.0
  %v403 = vand.u32 %v50, 4294901760
  %v404 = vsub.f32 %v50, %v403
  %v405 = vand.u32 %v404, 4294901760
  %v406 = vsub.f32 %v404, %v405
  %v407 = vand.u32 %v406, 4294901760
  %408 = vmatpush1.msra.mxu0 %v407
  %409 = vmatprep.subr.mxu0 0.0
  %v410 = vand.u32 %v51, 4294901760
  %v411 = vsub.f32 %v51, %v410
  %v412 = vand.u32 %v411, 4294901760
  %v413 = vsub.f32 %v411, %v412
  %v414 = vand.u32 %v413, 4294901760
  %415 = vmatpush1.msra.mxu0 %v414
  %416 = vmatprep.subr.mxu0 0.0
  %v417 = vand.u32 %v52, 4294901760
  %v418 = vsub.f32 %v52, %v417
  %v419 = vand.u32 %v418, 4294901760
  %v420 = vsub.f32 %v418, %v419
  %v421 = vand.u32 %v420, 4294901760
  %422 = vmatpush1.msra.mxu0 %v421
  %423 = vmatprep.subr.mxu0 0.0
  %v424 = vand.u32 %v53, 4294901760
  %v425 = vsub.f32 %v53, %v424
  %v426 = vand.u32 %v425, 4294901760
  %v427 = vsub.f32 %v425, %v426
  %v428 = vand.u32 %v427, 4294901760
  %429 = vmatpush1.msra.mxu0 %v428
  %430 = vmatprep.subr.mxu0 0.0
  %v431 = vand.u32 %v54, 4294901760
  %v432 = vsub.f32 %v54, %v431
  %v433 = vand.u32 %v432, 4294901760
  %v434 = vsub.f32 %v432, %v433
  %v435 = vand.u32 %v434, 4294901760
  %436 = vmatpush1.msra.mxu0 %v435
  %437 = vmatprep.subr.mxu0 0.0
  %v438 = vand.u32 %v55, 4294901760
  %v439 = vsub.f32 %v55, %v438
  %v440 = vand.u32 %v439, 4294901760
  %v441 = vsub.f32 %v439, %v440
  %v442 = vand.u32 %v441, 4294901760
  %443 = vmatpush1.msra.mxu0 %v442
  %444 = vmatprep.subr.mxu0 0.0
  %v445 = vand.u32 %v56, 4294901760
  %v446 = vsub.f32 %v56, %v445
  %v447 = vand.u32 %v446, 4294901760
  %v448 = vsub.f32 %v446, %v447
  %v449 = vand.u32 %v448, 4294901760
  %450 = vmatpush1.msra.mxu0 %v449
  %v451 = vand.u32 %v21, 4294901760
  %452 = vmatprep.mubr.f32.mxu0 %v451
  %v453 = vand.u32 %v20, 4294901760
  %454 = vmatmul.mubr.f32.gmra.mrb[0].mxu0 %v453
  %v455 = vpop.f32.mrb[0].mxu0
  %v456 = vadd.f32 %v224, %v455
  %v457 = vpop.f32.mrb[0].mxu0
  %458 = vdwg.mxu0
  %459 = vmatprep.subr.mxu0 0.0
  %v460 = vand.u32 %v25, 4294901760
  %v461 = vsub.f32 %v25, %v460
  %462 = vmatpush1.msra.mxu0 %v461
  %463 = vmatprep.subr.mxu0 0.0
  %v464 = vand.u32 %v26, 4294901760
  %v465 = vsub.f32 %v26, %v464
  %466 = vmatpush1.msra.mxu0 %v465
  %467 = vmatprep.subr.mxu0 0.0
  %v468 = vand.u32 %v27, 4294901760
  %v469 = vsub.f32 %v27, %v468
  %470 = vmatpush1.msra.mxu0 %v469
  %471 = vmatprep.subr.mxu0 0.0
  %v472 = vand.u32 %v28, 4294901760
  %v473 = vsub.f32 %v28, %v472
  %474 = vmatpush1.msra.mxu0 %v473
  %475 = vmatprep.subr.mxu0 0.0
  %v476 = vand.u32 %v29, 4294901760
  %v477 = vsub.f32 %v29, %v476
  %478 = vmatpush1.msra.mxu0 %v477
  %479 = vmatprep.subr.mxu0 0.0
  %v480 = vand.u32 %v30, 4294901760
  %v481 = vsub.f32 %v30, %v480
  %482 = vmatpush1.msra.mxu0 %v481
  %483 = vmatprep.subr.mxu0 0.0
  %v484 = vand.u32 %v31, 4294901760
  %v485 = vsub.f32 %v31, %v484
  %486 = vmatpush1.msra.mxu0 %v485
  %487 = vmatprep.subr.mxu0 0.0
  %v488 = vand.u32 %v32, 4294901760
  %v489 = vsub.f32 %v32, %v488
  %490 = vmatpush1.msra.mxu0 %v489
  %491 = vmatprep.subr.mxu0 0.0
  %v492 = vand.u32 %v33, 4294901760
  %v493 = vsub.f32 %v33, %v492
  %494 = vmatpush1.msra.mxu0 %v493
  %495 = vmatprep.subr.mxu0 0.0
  %v496 = vand.u32 %v34, 4294901760
  %v497 = vsub.f32 %v34, %v496
  %498 = vmatpush1.msra.mxu0 %v497
  %499 = vmatprep.subr.mxu0 0.0
  %v500 = vand.u32 %v35, 4294901760
  %v501 = vsub.f32 %v35, %v500
  %502 = vmatpush1.msra.mxu0 %v501
  %503 = vmatprep.subr.mxu0 0.0
  %v504 = vand.u32 %v36, 4294901760
  %v505 = vsub.f32 %v36, %v504
  %506 = vmatpush1.msra.mxu0 %v505
  %507 = vmatprep.subr.mxu0 0.0
  %v508 = vand.u32 %v37, 4294901760
  %v509 = vsub.f32 %v37, %v508
  %510 = vmatpush1.msra.mxu0 %v509
  %511 = vmatprep.subr.mxu0 0.0
  %v512 = vand.u32 %v38, 4294901760
  %v513 = vsub.f32 %v38, %v512
  %514 = vmatpush1.msra.mxu0 %v513
  %515 = vmatprep.subr.mxu0 0.0
  %v516 = vand.u32 %v39, 4294901760
  %v517 = vsub.f32 %v39, %v516
  %518 = vmatpush1.msra.mxu0 %v517
  %519 = vmatprep.subr.mxu0 0.0
  %v520 = vand.u32 %v40, 4294901760
  %v521 = vsub.f32 %v40, %v520
  %522 = vmatpush1.msra.mxu0 %v521
  %523 = vmatprep.subr.mxu0 0.0
  %v524 = vand.u32 %v41, 4294901760
  %v525 = vsub.f32 %v41, %v524
  %526 = vmatpush1.msra.mxu0 %v525
  %527 = vmatprep.subr.mxu0 0.0
  %v528 = vand.u32 %v42, 4294901760
  %v529 = vsub.f32 %v42, %v528
  %530 = vmatpush1.msra.mxu0 %v529
  %531 = vmatprep.subr.mxu0 0.0
  %v532 = vand.u32 %v43, 4294901760
  %v533 = vsub.f32 %v43, %v532
  %534 = vmatpush1.msra.mxu0 %v533
  %535 = vmatprep.subr.mxu0 0.0
  %v536 = vand.u32 %v44, 4294901760
  %v537 = vsub.f32 %v44, %v536
  %538 = vmatpush1.msra.mxu0 %v537
  %539 = vmatprep.subr.mxu0 0.0
  %v540 = vand.u32 %v45, 4294901760
  %v541 = vsub.f32 %v45, %v540
  %542 = vmatpush1.msra.mxu0 %v541
  %543 = vmatprep.subr.mxu0 0.0
  %v544 = vand.u32 %v46, 4294901760
  %v545 = vsub.f32 %v46, %v544
  %546 = vmatpush1.msra.mxu0 %v545
  %547 = vmatprep.subr.mxu0 0.0
  %v548 = vand.u32 %v47, 4294901760
  %v549 = vsub.f32 %v47, %v548
  %550 = vmatpush1.msra.mxu0 %v549
  %551 = vmatprep.subr.mxu0 0.0
  %v552 = vand.u32 %v48, 4294901760
  %v553 = vsub.f32 %v48, %v552
  %554 = vmatpush1.msra.mxu0 %v553
  %555 = vmatprep.subr.mxu0 0.0
  %v556 = vand.u32 %v49, 4294901760
  %v557 = vsub.f32 %v49, %v556
  %558 = vmatpush1.msra.mxu0 %v557
  %559 = vmatprep.subr.mxu0 0.0
  %v560 = vand.u32 %v50, 4294901760
  %v561 = vsub.f32 %v50, %v560
  %562 = vmatpush1.msra.mxu0 %v561
  %563 = vmatprep.subr.mxu0 0.0
  %v564 = vand.u32 %v51, 4294901760
  %v565 = vsub.f32 %v51, %v564
  %566 = vmatpush1.msra.mxu0 %v565
  %567 = vmatprep.subr.mxu0 0.0
  %v568 = vand.u32 %v52, 4294901760
  %v569 = vsub.f32 %v52, %v568
  %570 = vmatpush1.msra.mxu0 %v569
  %571 = vmatprep.subr.mxu0 0.0
  %v572 = vand.u32 %v53, 4294901760
  %v573 = vsub.f32 %v53, %v572
  %574 = vmatpush1.msra.mxu0 %v573
  %575 = vmatprep.subr.mxu0 0.0
  %v576 = vand.u32 %v54, 4294901760
  %v577 = vsub.f32 %v54, %v576
  %578 = vmatpush1.msra.mxu0 %v577
  %579 = vmatprep.subr.mxu0 0.0
  %v580 = vand.u32 %v55, 4294901760
  %v581 = vsub.f32 %v55, %v580
  %582 = vmatpush1.msra.mxu0 %v581
  %583 = vmatprep.subr.mxu0 0.0
  %v584 = vand.u32 %v56, 4294901760
  %v585 = vsub.f32 %v56, %v584
  %586 = vmatpush1.msra.mxu0 %v585
  %v587 = vand.u32 %v21, 4294901760
  %v588 = vsub.f32 %v21, %v587
  %589 = vmatprep.mubr.f32.mxu0 %v588
  %v590 = vand.u32 %v20, 4294901760
  %v591 = vsub.f32 %v20, %v590
  %592 = vmatmul.mubr.f32.gmra.mrb[0].mxu0 %v591
  %v593 = vpop.f32.mrb[0].mxu0
  %v594 = vadd.f32 %v456, %v593
  %v595 = vpop.f32.mrb[0].mxu0
  %596 = vdwg.mxu0
  %597 = vmatprep.subr.mxu0 0.0
  %v598 = vand.u32 %v25, 4294901760
  %599 = vmatpush1.msra.mxu0 %v598
  %600 = vmatprep.subr.mxu0 0.0
  %v601 = vand.u32 %v26, 4294901760
  %602 = vmatpush1.msra.mxu0 %v601
  %603 = vmatprep.subr.mxu0 0.0
  %v604 = vand.u32 %v27, 4294901760
  %605 = vmatpush1.msra.mxu0 %v604
  %606 = vmatprep.subr.mxu0 0.0
  %v607 = vand.u32 %v28, 4294901760
  %608 = vmatpush1.msra.mxu0 %v607
  %609 = vmatprep.subr.mxu0 0.0
  %v610 = vand.u32 %v29, 4294901760
  %611 = vmatpush1.msra.mxu0 %v610
  %612 = vmatprep.subr.mxu0 0.0
  %v613 = vand.u32 %v30, 4294901760
  %614 = vmatpush1.msra.mxu0 %v613
  %615 = vmatprep.subr.mxu0 0.0
  %v616 = vand.u32 %v31, 4294901760
  %617 = vmatpush1.msra.mxu0 %v616
  %618 = vmatprep.subr.mxu0 0.0
  %v619 = vand.u32 %v32, 4294901760
  %620 = vmatpush1.msra.mxu0 %v619
  %621 = vmatprep.subr.mxu0 0.0
  %v622 = vand.u32 %v33, 4294901760
  %623 = vmatpush1.msra.mxu0 %v622
  %624 = vmatprep.subr.mxu0 0.0
  %v625 = vand.u32 %v34, 4294901760
  %626 = vmatpush1.msra.mxu0 %v625
  %627 = vmatprep.subr.mxu0 0.0
  %v628 = vand.u32 %v35, 4294901760
  %629 = vmatpush1.msra.mxu0 %v628
  %630 = vmatprep.subr.mxu0 0.0
  %v631 = vand.u32 %v36, 4294901760
  %632 = vmatpush1.msra.mxu0 %v631
  %633 = vmatprep.subr.mxu0 0.0
  %v634 = vand.u32 %v37, 4294901760
  %635 = vmatpush1.msra.mxu0 %v634
  %636 = vmatprep.subr.mxu0 0.0
  %v637 = vand.u32 %v38, 4294901760
  %638 = vmatpush1.msra.mxu0 %v637
  %639 = vmatprep.subr.mxu0 0.0
  %v640 = vand.u32 %v39, 4294901760
  %641 = vmatpush1.msra.mxu0 %v640
  %642 = vmatprep.subr.mxu0 0.0
  %v643 = vand.u32 %v40, 4294901760
  %644 = vmatpush1.msra.mxu0 %v643
  %645 = vmatprep.subr.mxu0 0.0
  %v646 = vand.u32 %v41, 4294901760
  %647 = vmatpush1.msra.mxu0 %v646
  %648 = vmatprep.subr.mxu0 0.0
  %v649 = vand.u32 %v42, 4294901760
  %650 = vmatpush1.msra.mxu0 %v649
  %651 = vmatprep.subr.mxu0 0.0
  %v652 = vand.u32 %v43, 4294901760
  %653 = vmatpush1.msra.mxu0 %v652
  %654 = vmatprep.subr.mxu0 0.0
  %v655 = vand.u32 %v44, 4294901760
  %656 = vmatpush1.msra.mxu0 %v655
  %657 = vmatprep.subr.mxu0 0.0
  %v658 = vand.u32 %v45, 4294901760
  %659 = vmatpush1.msra.mxu0 %v658
  %660 = vmatprep.subr.mxu0 0.0
  %v661 = vand.u32 %v46, 4294901760
  %662 = vmatpush1.msra.mxu0 %v661
  %663 = vmatprep.subr.mxu0 0.0
  %v664 = vand.u32 %v47, 4294901760
  %665 = vmatpush1.msra.mxu0 %v664
  %666 = vmatprep.subr.mxu0 0.0
  %v667 = vand.u32 %v48, 4294901760
  %668 = vmatpush1.msra.mxu0 %v667
  %669 = vmatprep.subr.mxu0 0.0
  %v670 = vand.u32 %v49, 4294901760
  %671 = vmatpush1.msra.mxu0 %v670
  %672 = vmatprep.subr.mxu0 0.0
  %v673 = vand.u32 %v50, 4294901760
  %674 = vmatpush1.msra.mxu0 %v673
  %675 = vmatprep.subr.mxu0 0.0
  %v676 = vand.u32 %v51, 4294901760
  %677 = vmatpush1.msra.mxu0 %v676
  %678 = vmatprep.subr.mxu0 0.0
  %v679 = vand.u32 %v52, 4294901760
  %680 = vmatpush1.msra.mxu0 %v679
  %681 = vmatprep.subr.mxu0 0.0
  %v682 = vand.u32 %v53, 4294901760
  %683 = vmatpush1.msra.mxu0 %v682
  %684 = vmatprep.subr.mxu0 0.0
  %v685 = vand.u32 %v54, 4294901760
  %686 = vmatpush1.msra.mxu0 %v685
  %687 = vmatprep.subr.mxu0 0.0
  %v688 = vand.u32 %v55, 4294901760
  %689 = vmatpush1.msra.mxu0 %v688
  %690 = vmatprep.subr.mxu0 0.0
  %v691 = vand.u32 %v56, 4294901760
  %692 = vmatpush1.msra.mxu0 %v691
  %v693 = vand.u32 %v21, 4294901760
  %v694 = vsub.f32 %v21, %v693
  %v695 = vand.u32 %v694, 4294901760
  %696 = vmatprep.mubr.f32.mxu0 %v695
  %v697 = vand.u32 %v20, 4294901760
  %v698 = vsub.f32 %v20, %v697
  %v699 = vand.u32 %v698, 4294901760
  %700 = vmatmul.mubr.f32.gmra.mrb[0].mxu0 %v699
  %v701 = vpop.f32.mrb[0].mxu0
  %v702 = vadd.f32 %v594, %v701
  %v703 = vpop.f32.mrb[0].mxu0
  %704 = vdwg.mxu0
  %705 = vmatprep.subr.mxu0 0.0
  %v706 = vand.u32 %v25, 4294901760
  %v707 = vsub.f32 %v25, %v706
  %v708 = vand.u32 %v707, 4294901760
  %709 = vmatpush1.msra.mxu0 %v708
  %710 = vmatprep.subr.mxu0 0.0
  %v711 = vand.u32 %v26, 4294901760
  %v712 = vsub.f32 %v26, %v711
  %v713 = vand.u32 %v712, 4294901760
  %714 = vmatpush1.msra.mxu0 %v713
  %715 = vmatprep.subr.mxu0 0.0
  %v716 = vand.u32 %v27, 4294901760
  %v717 = vsub.f32 %v27, %v716
  %v718 = vand.u32 %v717, 4294901760
  %719 = vmatpush1.msra.mxu0 %v718
  %720 = vmatprep.subr.mxu0 0.0
  %v721 = vand.u32 %v28, 4294901760
  %v722 = vsub.f32 %v28, %v721
  %v723 = vand.u32 %v722, 4294901760
  %724 = vmatpush1.msra.mxu0 %v723
  %725 = vmatprep.subr.mxu0 0.0
  %v726 = vand.u32 %v29, 4294901760
  %v727 = vsub.f32 %v29, %v726
  %v728 = vand.u32 %v727, 4294901760
  %729 = vmatpush1.msra.mxu0 %v728
  %730 = vmatprep.subr.mxu0 0.0
  %v731 = vand.u32 %v30, 4294901760
  %v732 = vsub.f32 %v30, %v731
  %v733 = vand.u32 %v732, 4294901760
  %734 = vmatpush1.msra.mxu0 %v733
  %735 = vmatprep.subr.mxu0 0.0
  %v736 = vand.u32 %v31, 4294901760
  %v737 = vsub.f32 %v31, %v736
  %v738 = vand.u32 %v737, 4294901760
  %739 = vmatpush1.msra.mxu0 %v738
  %740 = vmatprep.subr.mxu0 0.0
  %v741 = vand.u32 %v32, 4294901760
  %v742 = vsub.f32 %v32, %v741
  %v743 = vand.u32 %v742, 4294901760
  %744 = vmatpush1.msra.mxu0 %v743
  %745 = vmatprep.subr.mxu0 0.0
  %v746 = vand.u32 %v33, 4294901760
  %v747 = vsub.f32 %v33, %v746
  %v748 = vand.u32 %v747, 4294901760
  %749 = vmatpush1.msra.mxu0 %v748
  %750 = vmatprep.subr.mxu0 0.0
  %v751 = vand.u32 %v34, 4294901760
  %v752 = vsub.f32 %v34, %v751
  %v753 = vand.u32 %v752, 4294901760
  %754 = vmatpush1.msra.mxu0 %v753
  %755 = vmatprep.subr.mxu0 0.0
  %v756 = vand.u32 %v35, 4294901760
  %v757 = vsub.f32 %v35, %v756
  %v758 = vand.u32 %v757, 4294901760
  %759 = vmatpush1.msra.mxu0 %v758
  %760 = vmatprep.subr.mxu0 0.0
  %v761 = vand.u32 %v36, 4294901760
  %v762 = vsub.f32 %v36, %v761
  %v763 = vand.u32 %v762, 4294901760
  %764 = vmatpush1.msra.mxu0 %v763
  %765 = vmatprep.subr.mxu0 0.0
  %v766 = vand.u32 %v37, 4294901760
  %v767 = vsub.f32 %v37, %v766
  %v768 = vand.u32 %v767, 4294901760
  %769 = vmatpush1.msra.mxu0 %v768
  %770 = vmatprep.subr.mxu0 0.0
  %v771 = vand.u32 %v38, 4294901760
  %v772 = vsub.f32 %v38, %v771
  %v773 = vand.u32 %v772, 4294901760
  %774 = vmatpush1.msra.mxu0 %v773
  %775 = vmatprep.subr.mxu0 0.0
  %v776 = vand.u32 %v39, 4294901760
  %v777 = vsub.f32 %v39, %v776
  %v778 = vand.u32 %v777, 4294901760
  %779 = vmatpush1.msra.mxu0 %v778
  %780 = vmatprep.subr.mxu0 0.0
  %v781 = vand.u32 %v40, 4294901760
  %v782 = vsub.f32 %v40, %v781
  %v783 = vand.u32 %v782, 4294901760
  %784 = vmatpush1.msra.mxu0 %v783
  %785 = vmatprep.subr.mxu0 0.0
  %v786 = vand.u32 %v41, 4294901760
  %v787 = vsub.f32 %v41, %v786
  %v788 = vand.u32 %v787, 4294901760
  %789 = vmatpush1.msra.mxu0 %v788
  %790 = vmatprep.subr.mxu0 0.0
  %v791 = vand.u32 %v42, 4294901760
  %v792 = vsub.f32 %v42, %v791
  %v793 = vand.u32 %v792, 4294901760
  %794 = vmatpush1.msra.mxu0 %v793
  %795 = vmatprep.subr.mxu0 0.0
  %v796 = vand.u32 %v43, 4294901760
  %v797 = vsub.f32 %v43, %v796
  %v798 = vand.u32 %v797, 4294901760
  %799 = vmatpush1.msra.mxu0 %v798
  %800 = vmatprep.subr.mxu0 0.0
  %v801 = vand.u32 %v44, 4294901760
  %v802 = vsub.f32 %v44, %v801
  %v803 = vand.u32 %v802, 4294901760
  %804 = vmatpush1.msra.mxu0 %v803
  %805 = vmatprep.subr.mxu0 0.0
  %v806 = vand.u32 %v45, 4294901760
  %v807 = vsub.f32 %v45, %v806
  %v808 = vand.u32 %v807, 4294901760
  %809 = vmatpush1.msra.mxu0 %v808
  %810 = vmatprep.subr.mxu0 0.0
  %v811 = vand.u32 %v46, 4294901760
  %v812 = vsub.f32 %v46, %v811
  %v813 = vand.u32 %v812, 4294901760
  %814 = vmatpush1.msra.mxu0 %v813
  %815 = vmatprep.subr.mxu0 0.0
  %v816 = vand.u32 %v47, 4294901760
  %v817 = vsub.f32 %v47, %v816
  %v818 = vand.u32 %v817, 4294901760
  %819 = vmatpush1.msra.mxu0 %v818
  %820 = vmatprep.subr.mxu0 0.0
  %v821 = vand.u32 %v48, 4294901760
  %v822 = vsub.f32 %v48, %v821
  %v823 = vand.u32 %v822, 4294901760
  %824 = vmatpush1.msra.mxu0 %v823
  %825 = vmatprep.subr.mxu0 0.0
  %v826 = vand.u32 %v49, 4294901760
  %v827 = vsub.f32 %v49, %v826
  %v828 = vand.u32 %v827, 4294901760
  %829 = vmatpush1.msra.mxu0 %v828
  %830 = vmatprep.subr.mxu0 0.0
  %v831 = vand.u32 %v50, 4294901760
  %v832 = vsub.f32 %v50, %v831
  %v833 = vand.u32 %v832, 4294901760
  %834 = vmatpush1.msra.mxu0 %v833
  %835 = vmatprep.subr.mxu0 0.0
  %v836 = vand.u32 %v51, 4294901760
  %v837 = vsub.f32 %v51, %v836
  %v838 = vand.u32 %v837, 4294901760
  %839 = vmatpush1.msra.mxu0 %v838
  %840 = vmatprep.subr.mxu0 0.0
  %v841 = vand.u32 %v52, 4294901760
  %v842 = vsub.f32 %v52, %v841
  %v843 = vand.u32 %v842, 4294901760
  %844 = vmatpush1.msra.mxu0 %v843
  %845 = vmatprep.subr.mxu0 0.0
  %v846 = vand.u32 %v53, 4294901760
  %v847 = vsub.f32 %v53, %v846
  %v848 = vand.u32 %v847, 4294901760
  %849 = vmatpush1.msra.mxu0 %v848
  %850 = vmatprep.subr.mxu0 0.0
  %v851 = vand.u32 %v54, 4294901760
  %v852 = vsub.f32 %v54, %v851
  %v853 = vand.u32 %v852, 4294901760
  %854 = vmatpush1.msra.mxu0 %v853
  %855 = vmatprep.subr.mxu0 0.0
  %v856 = vand.u32 %v55, 4294901760
  %v857 = vsub.f32 %v55, %v856
  %v858 = vand.u32 %v857, 4294901760
  %859 = vmatpush1.msra.mxu0 %v858
  %860 = vmatprep.subr.mxu0 0.0
  %v861 = vand.u32 %v56, 4294901760
  %v862 = vsub.f32 %v56, %v861
  %v863 = vand.u32 %v862, 4294901760
  %864 = vmatpush1.msra.mxu0 %v863
  %v865 = vand.u32 %v21, 4294901760
  %866 = vmatprep.mubr.f32.mxu0 %v865
  %v867 = vand.u32 %v20, 4294901760
  %868 = vmatmul.mubr.f32.gmra.mrb[0].mxu0 %v867
  %v869 = vpop.f32.mrb[0].mxu0
  %v870 = vadd.f32 %v702, %v869
  %v871 = vpop.f32.mrb[0].mxu0
  %872 = vdwg.mxu0
  %873 = vmatprep.subr.mxu0 0.0
  %v874 = vand.u32 %v25, 4294901760
  %875 = vmatpush1.msra.mxu0 %v874
  %876 = vmatprep.subr.mxu0 0.0
  %v877 = vand.u32 %v26, 4294901760
  %878 = vmatpush1.msra.mxu0 %v877
  %879 = vmatprep.subr.mxu0 0.0
  %v880 = vand.u32 %v27, 4294901760
  %881 = vmatpush1.msra.mxu0 %v880
  %882 = vmatprep.subr.mxu0 0.0
  %v883 = vand.u32 %v28, 4294901760
  %884 = vmatpush1.msra.mxu0 %v883
  %885 = vmatprep.subr.mxu0 0.0
  %v886 = vand.u32 %v29, 4294901760
  %887 = vmatpush1.msra.mxu0 %v886
  %888 = vmatprep.subr.mxu0 0.0
  %v889 = vand.u32 %v30, 4294901760
  %890 = vmatpush1.msra.mxu0 %v889
  %891 = vmatprep.subr.mxu0 0.0
  %v892 = vand.u32 %v31, 4294901760
  %893 = vmatpush1.msra.mxu0 %v892
  %894 = vmatprep.subr.mxu0 0.0
  %v895 = vand.u32 %v32, 4294901760
  %896 = vmatpush1.msra.mxu0 %v895
  %897 = vmatprep.subr.mxu0 0.0
  %v898 = vand.u32 %v33, 4294901760
  %899 = vmatpush1.msra.mxu0 %v898
  %900 = vmatprep.subr.mxu0 0.0
  %v901 = vand.u32 %v34, 4294901760
  %902 = vmatpush1.msra.mxu0 %v901
  %903 = vmatprep.subr.mxu0 0.0
  %v904 = vand.u32 %v35, 4294901760
  %905 = vmatpush1.msra.mxu0 %v904
  %906 = vmatprep.subr.mxu0 0.0
  %v907 = vand.u32 %v36, 4294901760
  %908 = vmatpush1.msra.mxu0 %v907
  %909 = vmatprep.subr.mxu0 0.0
  %v910 = vand.u32 %v37, 4294901760
  %911 = vmatpush1.msra.mxu0 %v910
  %912 = vmatprep.subr.mxu0 0.0
  %v913 = vand.u32 %v38, 4294901760
  %914 = vmatpush1.msra.mxu0 %v913
  %915 = vmatprep.subr.mxu0 0.0
  %v916 = vand.u32 %v39, 4294901760
  %917 = vmatpush1.msra.mxu0 %v916
  %918 = vmatprep.subr.mxu0 0.0
  %v919 = vand.u32 %v40, 4294901760
  %920 = vmatpush1.msra.mxu0 %v919
  %921 = vmatprep.subr.mxu0 0.0
  %v922 = vand.u32 %v41, 4294901760
  %923 = vmatpush1.msra.mxu0 %v922
  %924 = vmatprep.subr.mxu0 0.0
  %v925 = vand.u32 %v42, 4294901760
  %926 = vmatpush1.msra.mxu0 %v925
  %927 = vmatprep.subr.mxu0 0.0
  %v928 = vand.u32 %v43, 4294901760
  %929 = vmatpush1.msra.mxu0 %v928
  %930 = vmatprep.subr.mxu0 0.0
  %v931 = vand.u32 %v44, 4294901760
  %932 = vmatpush1.msra.mxu0 %v931
  %933 = vmatprep.subr.mxu0 0.0
  %v934 = vand.u32 %v45, 4294901760
  %935 = vmatpush1.msra.mxu0 %v934
  %936 = vmatprep.subr.mxu0 0.0
  %v937 = vand.u32 %v46, 4294901760
  %938 = vmatpush1.msra.mxu0 %v937
  %939 = vmatprep.subr.mxu0 0.0
  %v940 = vand.u32 %v47, 4294901760
  %941 = vmatpush1.msra.mxu0 %v940
  %942 = vmatprep.subr.mxu0 0.0
  %v943 = vand.u32 %v48, 4294901760
  %944 = vmatpush1.msra.mxu0 %v943
  %945 = vmatprep.subr.mxu0 0.0
  %v946 = vand.u32 %v49, 4294901760
  %947 = vmatpush1.msra.mxu0 %v946
  %948 = vmatprep.subr.mxu0 0.0
  %v949 = vand.u32 %v50, 4294901760
  %950 = vmatpush1.msra.mxu0 %v949
  %951 = vmatprep.subr.mxu0 0.0
  %v952 = vand.u32 %v51, 4294901760
  %953 = vmatpush1.msra.mxu0 %v952
  %954 = vmatprep.subr.mxu0 0.0
  %v955 = vand.u32 %v52, 4294901760
  %956 = vmatpush1.msra.mxu0 %v955
  %957 = vmatprep.subr.mxu0 0.0
  %v958 = vand.u32 %v53, 4294901760
  %959 = vmatpush1.msra.mxu0 %v958
  %960 = vmatprep.subr.mxu0 0.0
  %v961 = vand.u32 %v54, 4294901760
  %962 = vmatpush1.msra.mxu0 %v961
  %963 = vmatprep.subr.mxu0 0.0
  %v964 = vand.u32 %v55, 4294901760
  %965 = vmatpush1.msra.mxu0 %v964
  %966 = vmatprep.subr.mxu0 0.0
  %v967 = vand.u32 %v56, 4294901760
  %968 = vmatpush1.msra.mxu0 %v967
  %v969 = vand.u32 %v21, 4294901760
  %970 = vmatprep.mubr.f32.mxu0 %v969
  %v971 = vand.u32 %v20, 4294901760
  %972 = vmatmul.mubr.f32.gmra.mrb[0].mxu0 %v971
  %v973 = vpop.f32.mrb[0].mxu0
  %v974 = vadd.f32 %v870, %v973
  %v975 = vpop.f32.mrb[0].mxu0
  %976 = vdwg.mxu0
  %977 = vmatprep.subr.mxu0 0.0
  %v978 = vand.u32 %v57, 4294901760
  %979 = vmatpush1.msra.mxu0 %v978
  %980 = vmatprep.subr.mxu0 0.0
  %v981 = vand.u32 %v58, 4294901760
  %982 = vmatpush1.msra.mxu0 %v981
  %983 = vmatprep.subr.mxu0 0.0
  %v984 = vand.u32 %v59, 4294901760
  %985 = vmatpush1.msra.mxu0 %v984
  %986 = vmatprep.subr.mxu0 0.0
  %v987 = vand.u32 %v60, 4294901760
  %988 = vmatpush1.msra.mxu0 %v987
  %989 = vmatprep.subr.mxu0 0.0
  %v990 = vand.u32 %v61, 4294901760
  %991 = vmatpush1.msra.mxu0 %v990
  %992 = vmatprep.subr.mxu0 0.0
  %v993 = vand.u32 %v62, 4294901760
  %994 = vmatpush1.msra.mxu0 %v993
  %995 = vmatprep.subr.mxu0 0.0
  %v996 = vand.u32 %v63, 4294901760
  %997 = vmatpush1.msra.mxu0 %v996
  %998 = vmatprep.subr.mxu0 0.0
  %v999 = vand.u32 %v64, 4294901760
  %1000 = vmatpush1.msra.mxu0 %v999
  %1001 = vmatprep.subr.mxu0 0.0
  %v1002 = vand.u32 %v65, 4294901760
  %1003 = vmatpush1.msra.mxu0 %v1002
  %1004 = vmatprep.subr.mxu0 0.0
  %v1005 = vand.u32 %v66, 4294901760
  %1006 = vmatpush1.msra.mxu0 %v1005
  %1007 = vmatprep.subr.mxu0 0.0
  %v1008 = vand.u32 %v67, 4294901760
  %1009 = vmatpush1.msra.mxu0 %v1008
  %1010 = vmatprep.subr.mxu0 0.0
  %v1011 = vand.u32 %v68, 4294901760
  %1012 = vmatpush1.msra.mxu0 %v1011
  %1013 = vmatprep.subr.mxu0 0.0
  %v1014 = vand.u32 %v69, 4294901760
  %1015 = vmatpush1.msra.mxu0 %v1014
  %1016 = vmatprep.subr.mxu0 0.0
  %v1017 = vand.u32 %v70, 4294901760
  %1018 = vmatpush1.msra.mxu0 %v1017
  %1019 = vmatprep.subr.mxu0 0.0
  %v1020 = vand.u32 %v71, 4294901760
  %1021 = vmatpush1.msra.mxu0 %v1020
  %1022 = vmatprep.subr.mxu0 0.0
  %v1023 = vand.u32 %v72, 4294901760
  %1024 = vmatpush1.msra.mxu0 %v1023
  %1025 = vmatprep.subr.mxu0 0.0
  %v1026 = vand.u32 %v73, 4294901760
  %1027 = vmatpush1.msra.mxu0 %v1026
  %1028 = vmatprep.subr.mxu0 0.0
  %v1029 = vand.u32 %v74, 4294901760
  %1030 = vmatpush1.msra.mxu0 %v1029
  %1031 = vmatprep.subr.mxu0 0.0
  %v1032 = vand.u32 %v75, 4294901760
  %1033 = vmatpush1.msra.mxu0 %v1032
  %1034 = vmatprep.subr.mxu0 0.0
  %v1035 = vand.u32 %v76, 4294901760
  %1036 = vmatpush1.msra.mxu0 %v1035
  %1037 = vmatprep.subr.mxu0 0.0
  %v1038 = vand.u32 %v77, 4294901760
  %1039 = vmatpush1.msra.mxu0 %v1038
  %1040 = vmatprep.subr.mxu0 0.0
  %v1041 = vand.u32 %v78, 4294901760
  %1042 = vmatpush1.msra.mxu0 %v1041
  %1043 = vmatprep.subr.mxu0 0.0
  %v1044 = vand.u32 %v79, 4294901760
  %1045 = vmatpush1.msra.mxu0 %v1044
  %1046 = vmatprep.subr.mxu0 0.0
  %v1047 = vand.u32 %v80, 4294901760
  %1048 = vmatpush1.msra.mxu0 %v1047
  %1049 = vmatprep.subr.mxu0 0.0
  %v1050 = vand.u32 %v81, 4294901760
  %1051 = vmatpush1.msra.mxu0 %v1050
  %1052 = vmatprep.subr.mxu0 0.0
  %v1053 = vand.u32 %v82, 4294901760
  %1054 = vmatpush1.msra.mxu0 %v1053
  %1055 = vmatprep.subr.mxu0 0.0
  %v1056 = vand.u32 %v83, 4294901760
  %1057 = vmatpush1.msra.mxu0 %v1056
  %1058 = vmatprep.subr.mxu0 0.0
  %v1059 = vand.u32 %v84, 4294901760
  %1060 = vmatpush1.msra.mxu0 %v1059
  %1061 = vmatprep.subr.mxu0 0.0
  %v1062 = vand.u32 %v85, 4294901760
  %1063 = vmatpush1.msra.mxu0 %v1062
  %1064 = vmatprep.subr.mxu0 0.0
  %v1065 = vand.u32 %v86, 4294901760
  %1066 = vmatpush1.msra.mxu0 %v1065
  %1067 = vmatprep.subr.mxu0 0.0
  %v1068 = vand.u32 %v87, 4294901760
  %1069 = vmatpush1.msra.mxu0 %v1068
  %1070 = vmatprep.subr.mxu0 0.0
  %v1071 = vand.u32 %v88, 4294901760
  %1072 = vmatpush1.msra.mxu0 %v1071
  %v1073 = vand.u32 %v23, 4294901760
  %v1074 = vsub.f32 %v23, %v1073
  %v1075 = vand.u32 %v1074, 4294901760
  %v1076 = vsub.f32 %v1074, %v1075
  %v1077 = vand.u32 %v1076, 4294901760
  %1078 = vmatprep.mubr.f32.mxu0 %v1077
  %v1079 = vand.u32 %v22, 4294901760
  %v1080 = vsub.f32 %v22, %v1079
  %v1081 = vand.u32 %v1080, 4294901760
  %v1082 = vsub.f32 %v1080, %v1081
  %v1083 = vand.u32 %v1082, 4294901760
  %1084 = vmatmul.mubr.f32.gmra.mrb[0].mxu0 %v1083
  %v1085 = vpop.f32.mrb[0].mxu0
  %v1086 = vadd.f32 %v974, %v1085
  %v1087 = vpop.f32.mrb[0].mxu0
  %1088 = vdwg.mxu0
  %1089 = vmatprep.subr.mxu0 0.0
  %v1090 = vand.u32 %v57, 4294901760
  %v1091 = vsub.f32 %v57, %v1090
  %v1092 = vand.u32 %v1091, 4294901760
  %v1093 = vsub.f32 %v1091, %v1092
  %v1094 = vand.u32 %v1093, 4294901760
  %1095 = vmatpush1.msra.mxu0 %v1094
  %1096 = vmatprep.subr.mxu0 0.0
  %v1097 = vand.u32 %v58, 4294901760
  %v1098 = vsub.f32 %v58, %v1097
  %v1099 = vand.u32 %v1098, 4294901760
  %v1100 = vsub.f32 %v1098, %v1099
  %v1101 = vand.u32 %v1100, 4294901760
  %1102 = vmatpush1.msra.mxu0 %v1101
  %1103 = vmatprep.subr.mxu0 0.0
  %v1104 = vand.u32 %v59, 4294901760
  %v1105 = vsub.f32 %v59, %v1104
  %v1106 = vand.u32 %v1105, 4294901760
  %v1107 = vsub.f32 %v1105, %v1106
  %v1108 = vand.u32 %v1107, 4294901760
  %1109 = vmatpush1.msra.mxu0 %v1108
  %1110 = vmatprep.subr.mxu0 0.0
  %v1111 = vand.u32 %v60, 4294901760
  %v1112 = vsub.f32 %v60, %v1111
  %v1113 = vand.u32 %v1112, 4294901760
  %v1114 = vsub.f32 %v1112, %v1113
  %v1115 = vand.u32 %v1114, 4294901760
  %1116 = vmatpush1.msra.mxu0 %v1115
  %1117 = vmatprep.subr.mxu0 0.0
  %v1118 = vand.u32 %v61, 4294901760
  %v1119 = vsub.f32 %v61, %v1118
  %v1120 = vand.u32 %v1119, 4294901760
  %v1121 = vsub.f32 %v1119, %v1120
  %v1122 = vand.u32 %v1121, 4294901760
  %1123 = vmatpush1.msra.mxu0 %v1122
  %1124 = vmatprep.subr.mxu0 0.0
  %v1125 = vand.u32 %v62, 4294901760
  %v1126 = vsub.f32 %v62, %v1125
  %v1127 = vand.u32 %v1126, 4294901760
  %v1128 = vsub.f32 %v1126, %v1127
  %v1129 = vand.u32 %v1128, 4294901760
  %1130 = vmatpush1.msra.mxu0 %v1129
  %1131 = vmatprep.subr.mxu0 0.0
  %v1132 = vand.u32 %v63, 4294901760
  %v1133 = vsub.f32 %v63, %v1132
  %v1134 = vand.u32 %v1133, 4294901760
  %v1135 = vsub.f32 %v1133, %v1134
  %v1136 = vand.u32 %v1135, 4294901760
  %1137 = vmatpush1.msra.mxu0 %v1136
  %1138 = vmatprep.subr.mxu0 0.0
  %v1139 = vand.u32 %v64, 4294901760
  %v1140 = vsub.f32 %v64, %v1139
  %v1141 = vand.u32 %v1140, 4294901760
  %v1142 = vsub.f32 %v1140, %v1141
  %v1143 = vand.u32 %v1142, 4294901760
  %1144 = vmatpush1.msra.mxu0 %v1143
  %1145 = vmatprep.subr.mxu0 0.0
  %v1146 = vand.u32 %v65, 4294901760
  %v1147 = vsub.f32 %v65, %v1146
  %v1148 = vand.u32 %v1147, 4294901760
  %v1149 = vsub.f32 %v1147, %v1148
  %v1150 = vand.u32 %v1149, 4294901760
  %1151 = vmatpush1.msra.mxu0 %v1150
  %1152 = vmatprep.subr.mxu0 0.0
  %v1153 = vand.u32 %v66, 4294901760
  %v1154 = vsub.f32 %v66, %v1153
  %v1155 = vand.u32 %v1154, 4294901760
  %v1156 = vsub.f32 %v1154, %v1155
  %v1157 = vand.u32 %v1156, 4294901760
  %1158 = vmatpush1.msra.mxu0 %v1157
  %1159 = vmatprep.subr.mxu0 0.0
  %v1160 = vand.u32 %v67, 4294901760
  %v1161 = vsub.f32 %v67, %v1160
  %v1162 = vand.u32 %v1161, 4294901760
  %v1163 = vsub.f32 %v1161, %v1162
  %v1164 = vand.u32 %v1163, 4294901760
  %1165 = vmatpush1.msra.mxu0 %v1164
  %1166 = vmatprep.subr.mxu0 0.0
  %v1167 = vand.u32 %v68, 4294901760
  %v1168 = vsub.f32 %v68, %v1167
  %v1169 = vand.u32 %v1168, 4294901760
  %v1170 = vsub.f32 %v1168, %v1169
  %v1171 = vand.u32 %v1170, 4294901760
  %1172 = vmatpush1.msra.mxu0 %v1171
  %1173 = vmatprep.subr.mxu0 0.0
  %v1174 = vand.u32 %v69, 4294901760
  %v1175 = vsub.f32 %v69, %v1174
  %v1176 = vand.u32 %v1175, 4294901760
  %v1177 = vsub.f32 %v1175, %v1176
  %v1178 = vand.u32 %v1177, 4294901760
  %1179 = vmatpush1.msra.mxu0 %v1178
  %1180 = vmatprep.subr.mxu0 0.0
  %v1181 = vand.u32 %v70, 4294901760
  %v1182 = vsub.f32 %v70, %v1181
  %v1183 = vand.u32 %v1182, 4294901760
  %v1184 = vsub.f32 %v1182, %v1183
  %v1185 = vand.u32 %v1184, 4294901760
  %1186 = vmatpush1.msra.mxu0 %v1185
  %1187 = vmatprep.subr.mxu0 0.0
  %v1188 = vand.u32 %v71, 4294901760
  %v1189 = vsub.f32 %v71, %v1188
  %v1190 = vand.u32 %v1189, 4294901760
  %v1191 = vsub.f32 %v1189, %v1190
  %v1192 = vand.u32 %v1191, 4294901760
  %1193 = vmatpush1.msra.mxu0 %v1192
  %1194 = vmatprep.subr.mxu0 0.0
  %v1195 = vand.u32 %v72, 4294901760
  %v1196 = vsub.f32 %v72, %v1195
  %v1197 = vand.u32 %v1196, 4294901760
  %v1198 = vsub.f32 %v1196, %v1197
  %v1199 = vand.u32 %v1198, 4294901760
  %1200 = vmatpush1.msra.mxu0 %v1199
  %1201 = vmatprep.subr.mxu0 0.0
  %v1202 = vand.u32 %v73, 4294901760
  %v1203 = vsub.f32 %v73, %v1202
  %v1204 = vand.u32 %v1203, 4294901760
  %v1205 = vsub.f32 %v1203, %v1204
  %v1206 = vand.u32 %v1205, 4294901760
  %1207 = vmatpush1.msra.mxu0 %v1206
  %1208 = vmatprep.subr.mxu0 0.0
  %v1209 = vand.u32 %v74, 4294901760
  %v1210 = vsub.f32 %v74, %v1209
  %v1211 = vand.u32 %v1210, 4294901760
  %v1212 = vsub.f32 %v1210, %v1211
  %v1213 = vand.u32 %v1212, 4294901760
  %1214 = vmatpush1.msra.mxu0 %v1213
  %1215 = vmatprep.subr.mxu0 0.0
  %v1216 = vand.u32 %v75, 4294901760
  %v1217 = vsub.f32 %v75, %v1216
  %v1218 = vand.u32 %v1217, 4294901760
  %v1219 = vsub.f32 %v1217, %v1218
  %v1220 = vand.u32 %v1219, 4294901760
  %1221 = vmatpush1.msra.mxu0 %v1220
  %1222 = vmatprep.subr.mxu0 0.0
  %v1223 = vand.u32 %v76, 4294901760
  %v1224 = vsub.f32 %v76, %v1223
  %v1225 = vand.u32 %v1224, 4294901760
  %v1226 = vsub.f32 %v1224, %v1225
  %v1227 = vand.u32 %v1226, 4294901760
  %1228 = vmatpush1.msra.mxu0 %v1227
  %1229 = vmatprep.subr.mxu0 0.0
  %v1230 = vand.u32 %v77, 4294901760
  %v1231 = vsub.f32 %v77, %v1230
  %v1232 = vand.u32 %v1231, 4294901760
  %v1233 = vsub.f32 %v1231, %v1232
  %v1234 = vand.u32 %v1233, 4294901760
  %1235 = vmatpush1.msra.mxu0 %v1234
  %1236 = vmatprep.subr.mxu0 0.0
  %v1237 = vand.u32 %v78, 4294901760
  %v1238 = vsub.f32 %v78, %v1237
  %v1239 = vand.u32 %v1238, 4294901760
  %v1240 = vsub.f32 %v1238, %v1239
  %v1241 = vand.u32 %v1240, 4294901760
  %1242 = vmatpush1.msra.mxu0 %v1241
  %1243 = vmatprep.subr.mxu0 0.0
  %v1244 = vand.u32 %v79, 4294901760
  %v1245 = vsub.f32 %v79, %v1244
  %v1246 = vand.u32 %v1245, 4294901760
  %v1247 = vsub.f32 %v1245, %v1246
  %v1248 = vand.u32 %v1247, 4294901760
  %1249 = vmatpush1.msra.mxu0 %v1248
  %1250 = vmatprep.subr.mxu0 0.0
  %v1251 = vand.u32 %v80, 4294901760
  %v1252 = vsub.f32 %v80, %v1251
  %v1253 = vand.u32 %v1252, 4294901760
  %v1254 = vsub.f32 %v1252, %v1253
  %v1255 = vand.u32 %v1254, 4294901760
  %1256 = vmatpush1.msra.mxu0 %v1255
  %1257 = vmatprep.subr.mxu0 0.0
  %v1258 = vand.u32 %v81, 4294901760
  %v1259 = vsub.f32 %v81, %v1258
  %v1260 = vand.u32 %v1259, 4294901760
  %v1261 = vsub.f32 %v1259, %v1260
  %v1262 = vand.u32 %v1261, 4294901760
  %1263 = vmatpush1.msra.mxu0 %v1262
  %1264 = vmatprep.subr.mxu0 0.0
  %v1265 = vand.u32 %v82, 4294901760
  %v1266 = vsub.f32 %v82, %v1265
  %v1267 = vand.u32 %v1266, 4294901760
  %v1268 = vsub.f32 %v1266, %v1267
  %v1269 = vand.u32 %v1268, 4294901760
  %1270 = vmatpush1.msra.mxu0 %v1269
  %1271 = vmatprep.subr.mxu0 0.0
  %v1272 = vand.u32 %v83, 4294901760
  %v1273 = vsub.f32 %v83, %v1272
  %v1274 = vand.u32 %v1273, 4294901760
  %v1275 = vsub.f32 %v1273, %v1274
  %v1276 = vand.u32 %v1275, 4294901760
  %1277 = vmatpush1.msra.mxu0 %v1276
  %1278 = vmatprep.subr.mxu0 0.0
  %v1279 = vand.u32 %v84, 4294901760
  %v1280 = vsub.f32 %v84, %v1279
  %v1281 = vand.u32 %v1280, 4294901760
  %v1282 = vsub.f32 %v1280, %v1281
  %v1283 = vand.u32 %v1282, 4294901760
  %1284 = vmatpush1.msra.mxu0 %v1283
  %1285 = vmatprep.subr.mxu0 0.0
  %v1286 = vand.u32 %v85, 4294901760
  %v1287 = vsub.f32 %v85, %v1286
  %v1288 = vand.u32 %v1287, 4294901760
  %v1289 = vsub.f32 %v1287, %v1288
  %v1290 = vand.u32 %v1289, 4294901760
  %1291 = vmatpush1.msra.mxu0 %v1290
  %1292 = vmatprep.subr.mxu0 0.0
  %v1293 = vand.u32 %v86, 4294901760
  %v1294 = vsub.f32 %v86, %v1293
  %v1295 = vand.u32 %v1294, 4294901760
  %v1296 = vsub.f32 %v1294, %v1295
  %v1297 = vand.u32 %v1296, 4294901760
  %1298 = vmatpush1.msra.mxu0 %v1297
  %1299 = vmatprep.subr.mxu0 0.0
  %v1300 = vand.u32 %v87, 4294901760
  %v1301 = vsub.f32 %v87, %v1300
  %v1302 = vand.u32 %v1301, 4294901760
  %v1303 = vsub.f32 %v1301, %v1302
  %v1304 = vand.u32 %v1303, 4294901760
  %1305 = vmatpush1.msra.mxu0 %v1304
  %1306 = vmatprep.subr.mxu0 0.0
  %v1307 = vand.u32 %v88, 4294901760
  %v1308 = vsub.f32 %v88, %v1307
  %v1309 = vand.u32 %v1308, 4294901760
  %v1310 = vsub.f32 %v1308, %v1309
  %v1311 = vand.u32 %v1310, 4294901760
  %1312 = vmatpush1.msra.mxu0 %v1311
  %v1313 = vand.u32 %v23, 4294901760
  %1314 = vmatprep.mubr.f32.mxu0 %v1313
  %v1315 = vand.u32 %v22, 4294901760
  %1316 = vmatmul.mubr.f32.gmra.mrb[0].mxu0 %v1315
  %v1317 = vpop.f32.mrb[0].mxu0
  %v1318 = vadd.f32 %v1086, %v1317
  %v1319 = vpop.f32.mrb[0].mxu0
  %1320 = vdwg.mxu0
  %1321 = vmatprep.subr.mxu0 0.0
  %v1322 = vand.u32 %v57, 4294901760
  %v1323 = vsub.f32 %v57, %v1322
  %1324 = vmatpush1.msra.mxu0 %v1323
  %1325 = vmatprep.subr.mxu0 0.0
  %v1326 = vand.u32 %v58, 4294901760
  %v1327 = vsub.f32 %v58, %v1326
  %1328 = vmatpush1.msra.mxu0 %v1327
  %1329 = vmatprep.subr.mxu0 0.0
  %v1330 = vand.u32 %v59, 4294901760
  %v1331 = vsub.f32 %v59, %v1330
  %1332 = vmatpush1.msra.mxu0 %v1331
  %1333 = vmatprep.subr.mxu0 0.0
  %v1334 = vand.u32 %v60, 4294901760
  %v1335 = vsub.f32 %v60, %v1334
  %1336 = vmatpush1.msra.mxu0 %v1335
  %1337 = vmatprep.subr.mxu0 0.0
  %v1338 = vand.u32 %v61, 4294901760
  %v1339 = vsub.f32 %v61, %v1338
  %1340 = vmatpush1.msra.mxu0 %v1339
  %1341 = vmatprep.subr.mxu0 0.0
  %v1342 = vand.u32 %v62, 4294901760
  %v1343 = vsub.f32 %v62, %v1342
  %1344 = vmatpush1.msra.mxu0 %v1343
  %1345 = vmatprep.subr.mxu0 0.0
  %v1346 = vand.u32 %v63, 4294901760
  %v1347 = vsub.f32 %v63, %v1346
  %1348 = vmatpush1.msra.mxu0 %v1347
  %1349 = vmatprep.subr.mxu0 0.0
  %v1350 = vand.u32 %v64, 4294901760
  %v1351 = vsub.f32 %v64, %v1350
  %1352 = vmatpush1.msra.mxu0 %v1351
  %1353 = vmatprep.subr.mxu0 0.0
  %v1354 = vand.u32 %v65, 4294901760
  %v1355 = vsub.f32 %v65, %v1354
  %1356 = vmatpush1.msra.mxu0 %v1355
  %1357 = vmatprep.subr.mxu0 0.0
  %v1358 = vand.u32 %v66, 4294901760
  %v1359 = vsub.f32 %v66, %v1358
  %1360 = vmatpush1.msra.mxu0 %v1359
  %1361 = vmatprep.subr.mxu0 0.0
  %v1362 = vand.u32 %v67, 4294901760
  %v1363 = vsub.f32 %v67, %v1362
  %1364 = vmatpush1.msra.mxu0 %v1363
  %1365 = vmatprep.subr.mxu0 0.0
  %v1366 = vand.u32 %v68, 4294901760
  %v1367 = vsub.f32 %v68, %v1366
  %1368 = vmatpush1.msra.mxu0 %v1367
  %1369 = vmatprep.subr.mxu0 0.0
  %v1370 = vand.u32 %v69, 4294901760
  %v1371 = vsub.f32 %v69, %v1370
  %1372 = vmatpush1.msra.mxu0 %v1371
  %1373 = vmatprep.subr.mxu0 0.0
  %v1374 = vand.u32 %v70, 4294901760
  %v1375 = vsub.f32 %v70, %v1374
  %1376 = vmatpush1.msra.mxu0 %v1375
  %1377 = vmatprep.subr.mxu0 0.0
  %v1378 = vand.u32 %v71, 4294901760
  %v1379 = vsub.f32 %v71, %v1378
  %1380 = vmatpush1.msra.mxu0 %v1379
  %1381 = vmatprep.subr.mxu0 0.0
  %v1382 = vand.u32 %v72, 4294901760
  %v1383 = vsub.f32 %v72, %v1382
  %1384 = vmatpush1.msra.mxu0 %v1383
  %1385 = vmatprep.subr.mxu0 0.0
  %v1386 = vand.u32 %v73, 4294901760
  %v1387 = vsub.f32 %v73, %v1386
  %1388 = vmatpush1.msra.mxu0 %v1387
  %1389 = vmatprep.subr.mxu0 0.0
  %v1390 = vand.u32 %v74, 4294901760
  %v1391 = vsub.f32 %v74, %v1390
  %1392 = vmatpush1.msra.mxu0 %v1391
  %1393 = vmatprep.subr.mxu0 0.0
  %v1394 = vand.u32 %v75, 4294901760
  %v1395 = vsub.f32 %v75, %v1394
  %1396 = vmatpush1.msra.mxu0 %v1395
  %1397 = vmatprep.subr.mxu0 0.0
  %v1398 = vand.u32 %v76, 4294901760
  %v1399 = vsub.f32 %v76, %v1398
  %1400 = vmatpush1.msra.mxu0 %v1399
  %1401 = vmatprep.subr.mxu0 0.0
  %v1402 = vand.u32 %v77, 4294901760
  %v1403 = vsub.f32 %v77, %v1402
  %1404 = vmatpush1.msra.mxu0 %v1403
  %1405 = vmatprep.subr.mxu0 0.0
  %v1406 = vand.u32 %v78, 4294901760
  %v1407 = vsub.f32 %v78, %v1406
  %1408 = vmatpush1.msra.mxu0 %v1407
  %1409 = vmatprep.subr.mxu0 0.0
  %v1410 = vand.u32 %v79, 4294901760
  %v1411 = vsub.f32 %v79, %v1410
  %1412 = vmatpush1.msra.mxu0 %v1411
  %1413 = vmatprep.subr.mxu0 0.0
  %v1414 = vand.u32 %v80, 4294901760
  %v1415 = vsub.f32 %v80, %v1414
  %1416 = vmatpush1.msra.mxu0 %v1415
  %1417 = vmatprep.subr.mxu0 0.0
  %v1418 = vand.u32 %v81, 4294901760
  %v1419 = vsub.f32 %v81, %v1418
  %1420 = vmatpush1.msra.mxu0 %v1419
  %1421 = vmatprep.subr.mxu0 0.0
  %v1422 = vand.u32 %v82, 4294901760
  %v1423 = vsub.f32 %v82, %v1422
  %1424 = vmatpush1.msra.mxu0 %v1423
  %1425 = vmatprep.subr.mxu0 0.0
  %v1426 = vand.u32 %v83, 4294901760
  %v1427 = vsub.f32 %v83, %v1426
  %1428 = vmatpush1.msra.mxu0 %v1427
  %1429 = vmatprep.subr.mxu0 0.0
  %v1430 = vand.u32 %v84, 4294901760
  %v1431 = vsub.f32 %v84, %v1430
  %1432 = vmatpush1.msra.mxu0 %v1431
  %1433 = vmatprep.subr.mxu0 0.0
  %v1434 = vand.u32 %v85, 4294901760
  %v1435 = vsub.f32 %v85, %v1434
  %1436 = vmatpush1.msra.mxu0 %v1435
  %1437 = vmatprep.subr.mxu0 0.0
  %v1438 = vand.u32 %v86, 4294901760
  %v1439 = vsub.f32 %v86, %v1438
  %1440 = vmatpush1.msra.mxu0 %v1439
  %1441 = vmatprep.subr.mxu0 0.0
  %v1442 = vand.u32 %v87, 4294901760
  %v1443 = vsub.f32 %v87, %v1442
  %1444 = vmatpush1.msra.mxu0 %v1443
  %1445 = vmatprep.subr.mxu0 0.0
  %v1446 = vand.u32 %v88, 4294901760
  %v1447 = vsub.f32 %v88, %v1446
  %1448 = vmatpush1.msra.mxu0 %v1447
  %v1449 = vand.u32 %v23, 4294901760
  %v1450 = vsub.f32 %v23, %v1449
  %1451 = vmatprep.mubr.f32.mxu0 %v1450
  %v1452 = vand.u32 %v22, 4294901760
  %v1453 = vsub.f32 %v22, %v1452
  %1454 = vmatmul.mubr.f32.gmra.mrb[0].mxu0 %v1453
  %v1455 = vpop.f32.mrb[0].mxu0
  %v1456 = vadd.f32 %v1318, %v1455
  %v1457 = vpop.f32.mrb[0].mxu0
  %1458 = vdwg.mxu0
  %1459 = vmatprep.subr.mxu0 0.0
  %v1460 = vand.u32 %v57, 4294901760
  %1461 = vmatpush1.msra.mxu0 %v1460
  %1462 = vmatprep.subr.mxu0 0.0
  %v1463 = vand.u32 %v58, 4294901760
  %1464 = vmatpush1.msra.mxu0 %v1463
  %1465 = vmatprep.subr.mxu0 0.0
  %v1466 = vand.u32 %v59, 4294901760
  %1467 = vmatpush1.msra.mxu0 %v1466
  %1468 = vmatprep.subr.mxu0 0.0
  %v1469 = vand.u32 %v60, 4294901760
  %1470 = vmatpush1.msra.mxu0 %v1469
  %1471 = vmatprep.subr.mxu0 0.0
  %v1472 = vand.u32 %v61, 4294901760
  %1473 = vmatpush1.msra.mxu0 %v1472
  %1474 = vmatprep.subr.mxu0 0.0
  %v1475 = vand.u32 %v62, 4294901760
  %1476 = vmatpush1.msra.mxu0 %v1475
  %1477 = vmatprep.subr.mxu0 0.0
  %v1478 = vand.u32 %v63, 4294901760
  %1479 = vmatpush1.msra.mxu0 %v1478
  %1480 = vmatprep.subr.mxu0 0.0
  %v1481 = vand.u32 %v64, 4294901760
  %1482 = vmatpush1.msra.mxu0 %v1481
  %1483 = vmatprep.subr.mxu0 0.0
  %v1484 = vand.u32 %v65, 4294901760
  %1485 = vmatpush1.msra.mxu0 %v1484
  %1486 = vmatprep.subr.mxu0 0.0
  %v1487 = vand.u32 %v66, 4294901760
  %1488 = vmatpush1.msra.mxu0 %v1487
  %1489 = vmatprep.subr.mxu0 0.0
  %v1490 = vand.u32 %v67, 4294901760
  %1491 = vmatpush1.msra.mxu0 %v1490
  %1492 = vmatprep.subr.mxu0 0.0
  %v1493 = vand.u32 %v68, 4294901760
  %1494 = vmatpush1.msra.mxu0 %v1493
  %1495 = vmatprep.subr.mxu0 0.0
  %v1496 = vand.u32 %v69, 4294901760
  %1497 = vmatpush1.msra.mxu0 %v1496
  %1498 = vmatprep.subr.mxu0 0.0
  %v1499 = vand.u32 %v70, 4294901760
  %1500 = vmatpush1.msra.mxu0 %v1499
  %1501 = vmatprep.subr.mxu0 0.0
  %v1502 = vand.u32 %v71, 4294901760
  %1503 = vmatpush1.msra.mxu0 %v1502
  %1504 = vmatprep.subr.mxu0 0.0
  %v1505 = vand.u32 %v72, 4294901760
  %1506 = vmatpush1.msra.mxu0 %v1505
  %1507 = vmatprep.subr.mxu0 0.0
  %v1508 = vand.u32 %v73, 4294901760
  %1509 = vmatpush1.msra.mxu0 %v1508
  %1510 = vmatprep.subr.mxu0 0.0
  %v1511 = vand.u32 %v74, 4294901760
  %1512 = vmatpush1.msra.mxu0 %v1511
  %1513 = vmatprep.subr.mxu0 0.0
  %v1514 = vand.u32 %v75, 4294901760
  %1515 = vmatpush1.msra.mxu0 %v1514
  %1516 = vmatprep.subr.mxu0 0.0
  %v1517 = vand.u32 %v76, 4294901760
  %1518 = vmatpush1.msra.mxu0 %v1517
  %1519 = vmatprep.subr.mxu0 0.0
  %v1520 = vand.u32 %v77, 4294901760
  %1521 = vmatpush1.msra.mxu0 %v1520
  %1522 = vmatprep.subr.mxu0 0.0
  %v1523 = vand.u32 %v78, 4294901760
  %1524 = vmatpush1.msra.mxu0 %v1523
  %1525 = vmatprep.subr.mxu0 0.0
  %v1526 = vand.u32 %v79, 4294901760
  %1527 = vmatpush1.msra.mxu0 %v1526
  %1528 = vmatprep.subr.mxu0 0.0
  %v1529 = vand.u32 %v80, 4294901760
  %1530 = vmatpush1.msra.mxu0 %v1529
  %1531 = vmatprep.subr.mxu0 0.0
  %v1532 = vand.u32 %v81, 4294901760
  %1533 = vmatpush1.msra.mxu0 %v1532
  %1534 = vmatprep.subr.mxu0 0.0
  %v1535 = vand.u32 %v82, 4294901760
  %1536 = vmatpush1.msra.mxu0 %v1535
  %1537 = vmatprep.subr.mxu0 0.0
  %v1538 = vand.u32 %v83, 4294901760
  %1539 = vmatpush1.msra.mxu0 %v1538
  %1540 = vmatprep.subr.mxu0 0.0
  %v1541 = vand.u32 %v84, 4294901760
  %1542 = vmatpush1.msra.mxu0 %v1541
  %1543 = vmatprep.subr.mxu0 0.0
  %v1544 = vand.u32 %v85, 4294901760
  %1545 = vmatpush1.msra.mxu0 %v1544
  %1546 = vmatprep.subr.mxu0 0.0
  %v1547 = vand.u32 %v86, 4294901760
  %1548 = vmatpush1.msra.mxu0 %v1547
  %1549 = vmatprep.subr.mxu0 0.0
  %v1550 = vand.u32 %v87, 4294901760
  %1551 = vmatpush1.msra.mxu0 %v1550
  %1552 = vmatprep.subr.mxu0 0.0
  %v1553 = vand.u32 %v88, 4294901760
  %1554 = vmatpush1.msra.mxu0 %v1553
  %v1555 = vand.u32 %v23, 4294901760
  %v1556 = vsub.f32 %v23, %v1555
  %v1557 = vand.u32 %v1556, 4294901760
  %1558 = vmatprep.mubr.f32.mxu0 %v1557
  %v1559 = vand.u32 %v22, 4294901760
  %v1560 = vsub.f32 %v22, %v1559
  %v1561 = vand.u32 %v1560, 4294901760
  %1562 = vmatmul.mubr.f32.gmra.mrb[0].mxu0 %v1561
  %v1563 = vpop.f32.mrb[0].mxu0
  %v1564 = vadd.f32 %v1456, %v1563
  %v1565 = vpop.f32.mrb[0].mxu0
  %1566 = vdwg.mxu0
  %1567 = vmatprep.subr.mxu0 0.0
  %v1568 = vand.u32 %v57, 4294901760
  %v1569 = vsub.f32 %v57, %v1568
  %v1570 = vand.u32 %v1569, 4294901760
  %1571 = vmatpush1.msra.mxu0 %v1570
  %1572 = vmatprep.subr.mxu0 0.0
  %v1573 = vand.u32 %v58, 4294901760
  %v1574 = vsub.f32 %v58, %v1573
  %v1575 = vand.u32 %v1574, 4294901760
  %1576 = vmatpush1.msra.mxu0 %v1575
  %1577 = vmatprep.subr.mxu0 0.0
  %v1578 = vand.u32 %v59, 4294901760
  %v1579 = vsub.f32 %v59, %v1578
  %v1580 = vand.u32 %v1579, 4294901760
  %1581 = vmatpush1.msra.mxu0 %v1580
  %1582 = vmatprep.subr.mxu0 0.0
  %v1583 = vand.u32 %v60, 4294901760
  %v1584 = vsub.f32 %v60, %v1583
  %v1585 = vand.u32 %v1584, 4294901760
  %1586 = vmatpush1.msra.mxu0 %v1585
  %1587 = vmatprep.subr.mxu0 0.0
  %v1588 = vand.u32 %v61, 4294901760
  %v1589 = vsub.f32 %v61, %v1588
  %v1590 = vand.u32 %v1589, 4294901760
  %1591 = vmatpush1.msra.mxu0 %v1590
  %1592 = vmatprep.subr.mxu0 0.0
  %v1593 = vand.u32 %v62, 4294901760
  %v1594 = vsub.f32 %v62, %v1593
  %v1595 = vand.u32 %v1594, 4294901760
  %1596 = vmatpush1.msra.mxu0 %v1595
  %1597 = vmatprep.subr.mxu0 0.0
  %v1598 = vand.u32 %v63, 4294901760
  %v1599 = vsub.f32 %v63, %v1598
  %v1600 = vand.u32 %v1599, 4294901760
  %1601 = vmatpush1.msra.mxu0 %v1600
  %1602 = vmatprep.subr.mxu0 0.0
  %v1603 = vand.u32 %v64, 4294901760
  %v1604 = vsub.f32 %v64, %v1603
  %v1605 = vand.u32 %v1604, 4294901760
  %1606 = vmatpush1.msra.mxu0 %v1605
  %1607 = vmatprep.subr.mxu0 0.0
  %v1608 = vand.u32 %v65, 4294901760
  %v1609 = vsub.f32 %v65, %v1608
  %v1610 = vand.u32 %v1609, 4294901760
  %1611 = vmatpush1.msra.mxu0 %v1610
  %1612 = vmatprep.subr.mxu0 0.0
  %v1613 = vand.u32 %v66, 4294901760
  %v1614 = vsub.f32 %v66, %v1613
  %v1615 = vand.u32 %v1614, 4294901760
  %1616 = vmatpush1.msra.mxu0 %v1615
  %1617 = vmatprep.subr.mxu0 0.0
  %v1618 = vand.u32 %v67, 4294901760
  %v1619 = vsub.f32 %v67, %v1618
  %v1620 = vand.u32 %v1619, 4294901760
  %1621 = vmatpush1.msra.mxu0 %v1620
  %1622 = vmatprep.subr.mxu0 0.0
  %v1623 = vand.u32 %v68, 4294901760
  %v1624 = vsub.f32 %v68, %v1623
  %v1625 = vand.u32 %v1624, 4294901760
  %1626 = vmatpush1.msra.mxu0 %v1625
  %1627 = vmatprep.subr.mxu0 0.0
  %v1628 = vand.u32 %v69, 4294901760
  %v1629 = vsub.f32 %v69, %v1628
  %v1630 = vand.u32 %v1629, 4294901760
  %1631 = vmatpush1.msra.mxu0 %v1630
  %1632 = vmatprep.subr.mxu0 0.0
  %v1633 = vand.u32 %v70, 4294901760
  %v1634 = vsub.f32 %v70, %v1633
  %v1635 = vand.u32 %v1634, 4294901760
  %1636 = vmatpush1.msra.mxu0 %v1635
  %1637 = vmatprep.subr.mxu0 0.0
  %v1638 = vand.u32 %v71, 4294901760
  %v1639 = vsub.f32 %v71, %v1638
  %v1640 = vand.u32 %v1639, 4294901760
  %1641 = vmatpush1.msra.mxu0 %v1640
  %1642 = vmatprep.subr.mxu0 0.0
  %v1643 = vand.u32 %v72, 4294901760
  %v1644 = vsub.f32 %v72, %v1643
  %v1645 = vand.u32 %v1644, 4294901760
  %1646 = vmatpush1.msra.mxu0 %v1645
  %1647 = vmatprep.subr.mxu0 0.0
  %v1648 = vand.u32 %v73, 4294901760
  %v1649 = vsub.f32 %v73, %v1648
  %v1650 = vand.u32 %v1649, 4294901760
  %1651 = vmatpush1.msra.mxu0 %v1650
  %1652 = vmatprep.subr.mxu0 0.0
  %v1653 = vand.u32 %v74, 4294901760
  %v1654 = vsub.f32 %v74, %v1653
  %v1655 = vand.u32 %v1654, 4294901760
  %1656 = vmatpush1.msra.mxu0 %v1655
  %1657 = vmatprep.subr.mxu0 0.0
  %v1658 = vand.u32 %v75, 4294901760
  %v1659 = vsub.f32 %v75, %v1658
  %v1660 = vand.u32 %v1659, 4294901760
  %1661 = vmatpush1.msra.mxu0 %v1660
  %1662 = vmatprep.subr.mxu0 0.0
  %v1663 = vand.u32 %v76, 4294901760
  %v1664 = vsub.f32 %v76, %v1663
  %v1665 = vand.u32 %v1664, 4294901760
  %1666 = vmatpush1.msra.mxu0 %v1665
  %1667 = vmatprep.subr.mxu0 0.0
  %v1668 = vand.u32 %v77, 4294901760
  %v1669 = vsub.f32 %v77, %v1668
  %v1670 = vand.u32 %v1669, 4294901760
  %1671 = vmatpush1.msra.mxu0 %v1670
  %1672 = vmatprep.subr.mxu0 0.0
  %v1673 = vand.u32 %v78, 4294901760
  %v1674 = vsub.f32 %v78, %v1673
  %v1675 = vand.u32 %v1674, 4294901760
  %1676 = vmatpush1.msra.mxu0 %v1675
  %1677 = vmatprep.subr.mxu0 0.0
  %v1678 = vand.u32 %v79, 4294901760
  %v1679 = vsub.f32 %v79, %v1678
  %v1680 = vand.u32 %v1679, 4294901760
  %1681 = vmatpush1.msra.mxu0 %v1680
  %1682 = vmatprep.subr.mxu0 0.0
  %v1683 = vand.u32 %v80, 4294901760
  %v1684 = vsub.f32 %v80, %v1683
  %v1685 = vand.u32 %v1684, 4294901760
  %1686 = vmatpush1.msra.mxu0 %v1685
  %1687 = vmatprep.subr.mxu0 0.0
  %v1688 = vand.u32 %v81, 4294901760
  %v1689 = vsub.f32 %v81, %v1688
  %v1690 = vand.u32 %v1689, 4294901760
  %1691 = vmatpush1.msra.mxu0 %v1690
  %1692 = vmatprep.subr.mxu0 0.0
  %v1693 = vand.u32 %v82, 4294901760
  %v1694 = vsub.f32 %v82, %v1693
  %v1695 = vand.u32 %v1694, 4294901760
  %1696 = vmatpush1.msra.mxu0 %v1695
  %1697 = vmatprep.subr.mxu0 0.0
  %v1698 = vand.u32 %v83, 4294901760
  %v1699 = vsub.f32 %v83, %v1698
  %v1700 = vand.u32 %v1699, 4294901760
  %1701 = vmatpush1.msra.mxu0 %v1700
  %1702 = vmatprep.subr.mxu0 0.0
  %v1703 = vand.u32 %v84, 4294901760
  %v1704 = vsub.f32 %v84, %v1703
  %v1705 = vand.u32 %v1704, 4294901760
  %1706 = vmatpush1.msra.mxu0 %v1705
  %1707 = vmatprep.subr.mxu0 0.0
  %v1708 = vand.u32 %v85, 4294901760
  %v1709 = vsub.f32 %v85, %v1708
  %v1710 = vand.u32 %v1709, 4294901760
  %1711 = vmatpush1.msra.mxu0 %v1710
  %1712 = vmatprep.subr.mxu0 0.0
  %v1713 = vand.u32 %v86, 4294901760
  %v1714 = vsub.f32 %v86, %v1713
  %v1715 = vand.u32 %v1714, 4294901760
  %1716 = vmatpush1.msra.mxu0 %v1715
  %1717 = vmatprep.subr.mxu0 0.0
  %v1718 = vand.u32 %v87, 4294901760
  %v1719 = vsub.f32 %v87, %v1718
  %v1720 = vand.u32 %v1719, 4294901760
  %1721 = vmatpush1.msra.mxu0 %v1720
  %1722 = vmatprep.subr.mxu0 0.0
  %v1723 = vand.u32 %v88, 4294901760
  %v1724 = vsub.f32 %v88, %v1723
  %v1725 = vand.u32 %v1724, 4294901760
  %1726 = vmatpush1.msra.mxu0 %v1725
  %v1727 = vand.u32 %v23, 4294901760
  %1728 = vmatprep.mubr.f32.mxu0 %v1727
  %v1729 = vand.u32 %v22, 4294901760
  %1730 = vmatmul.mubr.f32.gmra.mrb[0].mxu0 %v1729
  %v1731 = vpop.f32.mrb[0].mxu0
  %v1732 = vadd.f32 %v1564, %v1731
  %v1733 = vpop.f32.mrb[0].mxu0
  %1734 = vdwg.mxu0
  %1735 = vmatprep.subr.mxu0 0.0
  %v1736 = vand.u32 %v57, 4294901760
  %1737 = vmatpush1.msra.mxu0 %v1736
  %1738 = vmatprep.subr.mxu0 0.0
  %v1739 = vand.u32 %v58, 4294901760
  %1740 = vmatpush1.msra.mxu0 %v1739
  %1741 = vmatprep.subr.mxu0 0.0
  %v1742 = vand.u32 %v59, 4294901760
  %1743 = vmatpush1.msra.mxu0 %v1742
  %1744 = vmatprep.subr.mxu0 0.0
  %v1745 = vand.u32 %v60, 4294901760
  %1746 = vmatpush1.msra.mxu0 %v1745
  %1747 = vmatprep.subr.mxu0 0.0
  %v1748 = vand.u32 %v61, 4294901760
  %1749 = vmatpush1.msra.mxu0 %v1748
  %1750 = vmatprep.subr.mxu0 0.0
  %v1751 = vand.u32 %v62, 4294901760
  %1752 = vmatpush1.msra.mxu0 %v1751
  %1753 = vmatprep.subr.mxu0 0.0
  %v1754 = vand.u32 %v63, 4294901760
  %1755 = vmatpush1.msra.mxu0 %v1754
  %1756 = vmatprep.subr.mxu0 0.0
  %v1757 = vand.u32 %v64, 4294901760
  %1758 = vmatpush1.msra.mxu0 %v1757
  %1759 = vmatprep.subr.mxu0 0.0
  %v1760 = vand.u32 %v65, 4294901760
  %1761 = vmatpush1.msra.mxu0 %v1760
  %1762 = vmatprep.subr.mxu0 0.0
  %v1763 = vand.u32 %v66, 4294901760
  %1764 = vmatpush1.msra.mxu0 %v1763
  %1765 = vmatprep.subr.mxu0 0.0
  %v1766 = vand.u32 %v67, 4294901760
  %1767 = vmatpush1.msra.mxu0 %v1766
  %1768 = vmatprep.subr.mxu0 0.0
  %v1769 = vand.u32 %v68, 4294901760
  %1770 = vmatpush1.msra.mxu0 %v1769
  %1771 = vmatprep.subr.mxu0 0.0
  %v1772 = vand.u32 %v69, 4294901760
  %1773 = vmatpush1.msra.mxu0 %v1772
  %1774 = vmatprep.subr.mxu0 0.0
  %v1775 = vand.u32 %v70, 4294901760
  %1776 = vmatpush1.msra.mxu0 %v1775
  %1777 = vmatprep.subr.mxu0 0.0
  %v1778 = vand.u32 %v71, 4294901760
  %1779 = vmatpush1.msra.mxu0 %v1778
  %1780 = vmatprep.subr.mxu0 0.0
  %v1781 = vand.u32 %v72, 4294901760
  %1782 = vmatpush1.msra.mxu0 %v1781
  %1783 = vmatprep.subr.mxu0 0.0
  %v1784 = vand.u32 %v73, 4294901760
  %1785 = vmatpush1.msra.mxu0 %v1784
  %1786 = vmatprep.subr.mxu0 0.0
  %v1787 = vand.u32 %v74, 4294901760
  %1788 = vmatpush1.msra.mxu0 %v1787
  %1789 = vmatprep.subr.mxu0 0.0
  %v1790 = vand.u32 %v75, 4294901760
  %1791 = vmatpush1.msra.mxu0 %v1790
  %1792 = vmatprep.subr.mxu0 0.0
  %v1793 = vand.u32 %v76, 4294901760
  %1794 = vmatpush1.msra.mxu0 %v1793
  %1795 = vmatprep.subr.mxu0 0.0
  %v1796 = vand.u32 %v77, 4294901760
  %1797 = vmatpush1.msra.mxu0 %v1796
  %1798 = vmatprep.subr.mxu0 0.0
  %v1799 = vand.u32 %v78, 4294901760
  %1800 = vmatpush1.msra.mxu0 %v1799
  %1801 = vmatprep.subr.mxu0 0.0
  %v1802 = vand.u32 %v79, 4294901760
  %1803 = vmatpush1.msra.mxu0 %v1802
  %1804 = vmatprep.subr.mxu0 0.0
  %v1805 = vand.u32 %v80, 4294901760
  %1806 = vmatpush1.msra.mxu0 %v1805
  %1807 = vmatprep.subr.mxu0 0.0
  %v1808 = vand.u32 %v81, 4294901760
  %1809 = vmatpush1.msra.mxu0 %v1808
  %1810 = vmatprep.subr.mxu0 0.0
  %v1811 = vand.u32 %v82, 4294901760
  %1812 = vmatpush1.msra.mxu0 %v1811
  %1813 = vmatprep.subr.mxu0 0.0
  %v1814 = vand.u32 %v83, 4294901760
  %1815 = vmatpush1.msra.mxu0 %v1814
  %1816 = vmatprep.subr.mxu0 0.0
  %v1817 = vand.u32 %v84, 4294901760
  %1818 = vmatpush1.msra.mxu0 %v1817
  %1819 = vmatprep.subr.mxu0 0.0
  %v1820 = vand.u32 %v85, 4294901760
  %1821 = vmatpush1.msra.mxu0 %v1820
  %1822 = vmatprep.subr.mxu0 0.0
  %v1823 = vand.u32 %v86, 4294901760
  %1824 = vmatpush1.msra.mxu0 %v1823
  %1825 = vmatprep.subr.mxu0 0.0
  %v1826 = vand.u32 %v87, 4294901760
  %1827 = vmatpush1.msra.mxu0 %v1826
  %1828 = vmatprep.subr.mxu0 0.0
  %v1829 = vand.u32 %v88, 4294901760
  %1830 = vmatpush1.msra.mxu0 %v1829
  %v1831 = vand.u32 %v23, 4294901760
  %1832 = vmatprep.mubr.f32.mxu0 %v1831
  %v1833 = vand.u32 %v22, 4294901760
  %1834 = vmatmul.mubr.f32.gmra.mrb[0].mxu0 %v1833
  %v1835 = vpop.f32.mrb[0].mxu0
  %v1836 = vadd.f32 %v1732, %v1835
  %v1837 = vpop.f32.mrb[0].mxu0
  %1838 = vdwg.mxu0
  %1839 = vmatprep.subr.mxu0 0.0
  %v1840 = vand.u32 %v89, 4294901760
  %1841 = vmatpush1.msra.mxu0 %v1840
  %1842 = vmatprep.subr.mxu0 0.0
  %v1843 = vand.u32 %v90, 4294901760
  %1844 = vmatpush1.msra.mxu0 %v1843
  %1845 = vmatprep.subr.mxu0 0.0
  %v1846 = vand.u32 %v91, 4294901760
  %1847 = vmatpush1.msra.mxu0 %v1846
  %1848 = vmatprep.subr.mxu0 0.0
  %v1849 = vand.u32 %v92, 4294901760
  %1850 = vmatpush1.msra.mxu0 %v1849
  %1851 = vmatprep.subr.mxu0 0.0
  %v1852 = vand.u32 %v93, 4294901760
  %1853 = vmatpush1.msra.mxu0 %v1852
  %1854 = vmatprep.subr.mxu0 0.0
  %v1855 = vand.u32 %v94, 4294901760
  %1856 = vmatpush1.msra.mxu0 %v1855
  %1857 = vmatprep.subr.mxu0 0.0
  %v1858 = vand.u32 %v95, 4294901760
  %1859 = vmatpush1.msra.mxu0 %v1858
  %1860 = vmatprep.subr.mxu0 0.0
  %v1861 = vand.u32 %v96, 4294901760
  %1862 = vmatpush1.msra.mxu0 %v1861
  %1863 = vmatprep.subr.mxu0 0.0
  %v1864 = vand.u32 %v97, 4294901760
  %1865 = vmatpush1.msra.mxu0 %v1864
  %1866 = vmatprep.subr.mxu0 0.0
  %v1867 = vand.u32 %v98, 4294901760
  %1868 = vmatpush1.msra.mxu0 %v1867
  %1869 = vmatprep.subr.mxu0 0.0
  %v1870 = vand.u32 %v99, 4294901760
  %1871 = vmatpush1.msra.mxu0 %v1870
  %1872 = vmatprep.subr.mxu0 0.0
  %v1873 = vand.u32 %v100, 4294901760
  %1874 = vmatpush1.msra.mxu0 %v1873
  %1875 = vmatprep.subr.mxu0 0.0
  %v1876 = vand.u32 %v101, 4294901760
  %1877 = vmatpush1.msra.mxu0 %v1876
  %1878 = vmatprep.subr.mxu0 0.0
  %v1879 = vand.u32 %v102, 4294901760
  %1880 = vmatpush1.msra.mxu0 %v1879
  %1881 = vmatprep.subr.mxu0 0.0
  %v1882 = vand.u32 %v103, 4294901760
  %1883 = vmatpush1.msra.mxu0 %v1882
  %1884 = vmatprep.subr.mxu0 0.0
  %v1885 = vand.u32 %v104, 4294901760
  %1886 = vmatpush1.msra.mxu0 %v1885
  %1887 = vmatprep.subr.mxu0 0.0
  %1888 = vmatpush1.msra.mxu0 0.0
  %1889 = vmatprep.subr.mxu0 0.0
  %1890 = vmatpush1.msra.mxu0 0.0
  %1891 = vmatprep.subr.mxu0 0.0
  %1892 = vmatpush1.msra.mxu0 0.0
  %1893 = vmatprep.subr.mxu0 0.0
  %1894 = vmatpush1.msra.mxu0 0.0
  %1895 = vmatprep.subr.mxu0 0.0
  %1896 = vmatpush1.msra.mxu0 0.0
  %1897 = vmatprep.subr.mxu0 0.0
  %1898 = vmatpush1.msra.mxu0 0.0
  %1899 = vmatprep.subr.mxu0 0.0
  %1900 = vmatpush1.msra.mxu0 0.0
  %1901 = vmatprep.subr.mxu0 0.0
  %1902 = vmatpush1.msra.mxu0 0.0
  %1903 = vmatprep.subr.mxu0 0.0
  %1904 = vmatpush1.msra.mxu0 0.0
  %1905 = vmatprep.subr.mxu0 0.0
  %1906 = vmatpush1.msra.mxu0 0.0
  %1907 = vmatprep.subr.mxu0 0.0
  %1908 = vmatpush1.msra.mxu0 0.0
  %1909 = vmatprep.subr.mxu0 0.0
  %1910 = vmatpush1.msra.mxu0 0.0
  %1911 = vmatprep.subr.mxu0 0.0
  %1912 = vmatpush1.msra.mxu0 0.0
  %1913 = vmatprep.subr.mxu0 0.0
  %1914 = vmatpush1.msra.mxu0 0.0
  %1915 = vmatprep.subr.mxu0 0.0
  %1916 = vmatpush1.msra.mxu0 0.0
  %1917 = vmatprep.subr.mxu0 0.0
  %1918 = vmatpush1.msra.mxu0 0.0
  %1919 = vmatprep.mubr.f32.mxu0 0.0
  %v1920 = vand.u32 %v24, 4294901760
  %v1921 = vsub.f32 %v24, %v1920
  %v1922 = vand.u32 %v1921, 4294901760
  %v1923 = vsub.f32 %v1921, %v1922
  %v1924 = vand.u32 %v1923, 4294901760
  %1925 = vmatmul.mubr.f32.gmra.mrb[0].mxu0 %v1924
  %v1926 = vpop.f32.mrb[0].mxu0
  %v1927 = vadd.f32 %v1836, %v1926
  %v1928 = vpop.f32.mrb[0].mxu0
  %1929 = vdwg.mxu0
  %1930 = vmatprep.subr.mxu0 0.0
  %v1931 = vand.u32 %v89, 4294901760
  %v1932 = vsub.f32 %v89, %v1931
  %v1933 = vand.u32 %v1932, 4294901760
  %v1934 = vsub.f32 %v1932, %v1933
  %v1935 = vand.u32 %v1934, 4294901760
  %1936 = vmatpush1.msra.mxu0 %v1935
  %1937 = vmatprep.subr.mxu0 0.0
  %v1938 = vand.u32 %v90, 4294901760
  %v1939 = vsub.f32 %v90, %v1938
  %v1940 = vand.u32 %v1939, 4294901760
  %v1941 = vsub.f32 %v1939, %v1940
  %v1942 = vand.u32 %v1941, 4294901760
  %1943 = vmatpush1.msra.mxu0 %v1942
  %1944 = vmatprep.subr.mxu0 0.0
  %v1945 = vand.u32 %v91, 4294901760
  %v1946 = vsub.f32 %v91, %v1945
  %v1947 = vand.u32 %v1946, 4294901760
  %v1948 = vsub.f32 %v1946, %v1947
  %v1949 = vand.u32 %v1948, 4294901760
  %1950 = vmatpush1.msra.mxu0 %v1949
  %1951 = vmatprep.subr.mxu0 0.0
  %v1952 = vand.u32 %v92, 4294901760
  %v1953 = vsub.f32 %v92, %v1952
  %v1954 = vand.u32 %v1953, 4294901760
  %v1955 = vsub.f32 %v1953, %v1954
  %v1956 = vand.u32 %v1955, 4294901760
  %1957 = vmatpush1.msra.mxu0 %v1956
  %1958 = vmatprep.subr.mxu0 0.0
  %v1959 = vand.u32 %v93, 4294901760
  %v1960 = vsub.f32 %v93, %v1959
  %v1961 = vand.u32 %v1960, 4294901760
  %v1962 = vsub.f32 %v1960, %v1961
  %v1963 = vand.u32 %v1962, 4294901760
  %1964 = vmatpush1.msra.mxu0 %v1963
  %1965 = vmatprep.subr.mxu0 0.0
  %v1966 = vand.u32 %v94, 4294901760
  %v1967 = vsub.f32 %v94, %v1966
  %v1968 = vand.u32 %v1967, 4294901760
  %v1969 = vsub.f32 %v1967, %v1968
  %v1970 = vand.u32 %v1969, 4294901760
  %1971 = vmatpush1.msra.mxu0 %v1970
  %1972 = vmatprep.subr.mxu0 0.0
  %v1973 = vand.u32 %v95, 4294901760
  %v1974 = vsub.f32 %v95, %v1973
  %v1975 = vand.u32 %v1974, 4294901760
  %v1976 = vsub.f32 %v1974, %v1975
  %v1977 = vand.u32 %v1976, 4294901760
  %1978 = vmatpush1.msra.mxu0 %v1977
  %1979 = vmatprep.subr.mxu0 0.0
  %v1980 = vand.u32 %v96, 4294901760
  %v1981 = vsub.f32 %v96, %v1980
  %v1982 = vand.u32 %v1981, 4294901760
  %v1983 = vsub.f32 %v1981, %v1982
  %v1984 = vand.u32 %v1983, 4294901760
  %1985 = vmatpush1.msra.mxu0 %v1984
  %1986 = vmatprep.subr.mxu0 0.0
  %v1987 = vand.u32 %v97, 4294901760
  %v1988 = vsub.f32 %v97, %v1987
  %v1989 = vand.u32 %v1988, 4294901760
  %v1990 = vsub.f32 %v1988, %v1989
  %v1991 = vand.u32 %v1990, 4294901760
  %1992 = vmatpush1.msra.mxu0 %v1991
  %1993 = vmatprep.subr.mxu0 0.0
  %v1994 = vand.u32 %v98, 4294901760
  %v1995 = vsub.f32 %v98, %v1994
  %v1996 = vand.u32 %v1995, 4294901760
  %v1997 = vsub.f32 %v1995, %v1996
  %v1998 = vand.u32 %v1997, 4294901760
  %1999 = vmatpush1.msra.mxu0 %v1998
  %2000 = vmatprep.subr.mxu0 0.0
  %v2001 = vand.u32 %v99, 4294901760
  %v2002 = vsub.f32 %v99, %v2001
  %v2003 = vand.u32 %v2002, 4294901760
  %v2004 = vsub.f32 %v2002, %v2003
  %v2005 = vand.u32 %v2004, 4294901760
  %2006 = vmatpush1.msra.mxu0 %v2005
  %2007 = vmatprep.subr.mxu0 0.0
  %v2008 = vand.u32 %v100, 4294901760
  %v2009 = vsub.f32 %v100, %v2008
  %v2010 = vand.u32 %v2009, 4294901760
  %v2011 = vsub.f32 %v2009, %v2010
  %v2012 = vand.u32 %v2011, 4294901760
  %2013 = vmatpush1.msra.mxu0 %v2012
  %2014 = vmatprep.subr.mxu0 0.0
  %v2015 = vand.u32 %v101, 4294901760
  %v2016 = vsub.f32 %v101, %v2015
  %v2017 = vand.u32 %v2016, 4294901760
  %v2018 = vsub.f32 %v2016, %v2017
  %v2019 = vand.u32 %v2018, 4294901760
  %2020 = vmatpush1.msra.mxu0 %v2019
  %2021 = vmatprep.subr.mxu0 0.0
  %v2022 = vand.u32 %v102, 4294901760
  %v2023 = vsub.f32 %v102, %v2022
  %v2024 = vand.u32 %v2023, 4294901760
  %v2025 = vsub.f32 %v2023, %v2024
  %v2026 = vand.u32 %v2025, 4294901760
  %2027 = vmatpush1.msra.mxu0 %v2026
  %2028 = vmatprep.subr.mxu0 0.0
  %v2029 = vand.u32 %v103, 4294901760
  %v2030 = vsub.f32 %v103, %v2029
  %v2031 = vand.u32 %v2030, 4294901760
  %v2032 = vsub.f32 %v2030, %v2031
  %v2033 = vand.u32 %v2032, 4294901760
  %2034 = vmatpush1.msra.mxu0 %v2033
  %2035 = vmatprep.subr.mxu0 0.0
  %v2036 = vand.u32 %v104, 4294901760
  %v2037 = vsub.f32 %v104, %v2036
  %v2038 = vand.u32 %v2037, 4294901760
  %v2039 = vsub.f32 %v2037, %v2038
  %v2040 = vand.u32 %v2039, 4294901760
  %2041 = vmatpush1.msra.mxu0 %v2040
  %2042 = vmatprep.subr.mxu0 0.0
  %2043 = vmatpush1.msra.mxu0 0.0
  %2044 = vmatprep.subr.mxu0 0.0
  %2045 = vmatpush1.msra.mxu0 0.0
  %2046 = vmatprep.subr.mxu0 0.0
  %2047 = vmatpush1.msra.mxu0 0.0
  %2048 = vmatprep.subr.mxu0 0.0
  %2049 = vmatpush1.msra.mxu0 0.0
  %2050 = vmatprep.subr.mxu0 0.0
  %2051 = vmatpush1.msra.mxu0 0.0
  %2052 = vmatprep.subr.mxu0 0.0
  %2053 = vmatpush1.msra.mxu0 0.0
  %2054 = vmatprep.subr.mxu0 0.0
  %2055 = vmatpush1.msra.mxu0 0.0
  %2056 = vmatprep.subr.mxu0 0.0
  %2057 = vmatpush1.msra.mxu0 0.0
  %2058 = vmatprep.subr.mxu0 0.0
  %2059 = vmatpush1.msra.mxu0 0.0
  %2060 = vmatprep.subr.mxu0 0.0
  %2061 = vmatpush1.msra.mxu0 0.0
  %2062 = vmatprep.subr.mxu0 0.0
  %2063 = vmatpush1.msra.mxu0 0.0
  %2064 = vmatprep.subr.mxu0 0.0
  %2065 = vmatpush1.msra.mxu0 0.0
  %2066 = vmatprep.subr.mxu0 0.0
  %2067 = vmatpush1.msra.mxu0 0.0
  %2068 = vmatprep.subr.mxu0 0.0
  %2069 = vmatpush1.msra.mxu0 0.0
  %2070 = vmatprep.subr.mxu0 0.0
  %2071 = vmatpush1.msra.mxu0 0.0
  %2072 = vmatprep.subr.mxu0 0.0
  %2073 = vmatpush1.msra.mxu0 0.0
  %2074 = vmatprep.mubr.f32.mxu0 0.0
  %v2075 = vand.u32 %v24, 4294901760
  %2076 = vmatmul.mubr.f32.gmra.mrb[0].mxu0 %v2075
  %v2077 = vpop.f32.mrb[0].mxu0
  %v2078 = vadd.f32 %v1927, %v2077
  %v2079 = vpop.f32.mrb[0].mxu0
  %2080 = vdwg.mxu0
  %2081 = vmatprep.subr.mxu0 0.0
  %v2082 = vand.u32 %v89, 4294901760
  %v2083 = vsub.f32 %v89, %v2082
  %2084 = vmatpush1.msra.mxu0 %v2083
  %2085 = vmatprep.subr.mxu0 0.0
  %v2086 = vand.u32 %v90, 4294901760
  %v2087 = vsub.f32 %v90, %v2086
  %2088 = vmatpush1.msra.mxu0 %v2087
  %2089 = vmatprep.subr.mxu0 0.0
  %v2090 = vand.u32 %v91, 4294901760
  %v2091 = vsub.f32 %v91, %v2090
  %2092 = vmatpush1.msra.mxu0 %v2091
  %2093 = vmatprep.subr.mxu0 0.0
  %v2094 = vand.u32 %v92, 4294901760
  %v2095 = vsub.f32 %v92, %v2094
  %2096 = vmatpush1.msra.mxu0 %v2095
  %2097 = vmatprep.subr.mxu0 0.0
  %v2098 = vand.u32 %v93, 4294901760
  %v2099 = vsub.f32 %v93, %v2098
  %2100 = vmatpush1.msra.mxu0 %v2099
  %2101 = vmatprep.subr.mxu0 0.0
  %v2102 = vand.u32 %v94, 4294901760
  %v2103 = vsub.f32 %v94, %v2102
  %2104 = vmatpush1.msra.mxu0 %v2103
  %2105 = vmatprep.subr.mxu0 0.0
  %v2106 = vand.u32 %v95, 4294901760
  %v2107 = vsub.f32 %v95, %v2106
  %2108 = vmatpush1.msra.mxu0 %v2107
  %2109 = vmatprep.subr.mxu0 0.0
  %v2110 = vand.u32 %v96, 4294901760
  %v2111 = vsub.f32 %v96, %v2110
  %2112 = vmatpush1.msra.mxu0 %v2111
  %2113 = vmatprep.subr.mxu0 0.0
  %v2114 = vand.u32 %v97, 4294901760
  %v2115 = vsub.f32 %v97, %v2114
  %2116 = vmatpush1.msra.mxu0 %v2115
  %2117 = vmatprep.subr.mxu0 0.0
  %v2118 = vand.u32 %v98, 4294901760
  %v2119 = vsub.f32 %v98, %v2118
  %2120 = vmatpush1.msra.mxu0 %v2119
  %2121 = vmatprep.subr.mxu0 0.0
  %v2122 = vand.u32 %v99, 4294901760
  %v2123 = vsub.f32 %v99, %v2122
  %2124 = vmatpush1.msra.mxu0 %v2123
  %2125 = vmatprep.subr.mxu0 0.0
  %v2126 = vand.u32 %v100, 4294901760
  %v2127 = vsub.f32 %v100, %v2126
  %2128 = vmatpush1.msra.mxu0 %v2127
  %2129 = vmatprep.subr.mxu0 0.0
  %v2130 = vand.u32 %v101, 4294901760
  %v2131 = vsub.f32 %v101, %v2130
  %2132 = vmatpush1.msra.mxu0 %v2131
  %2133 = vmatprep.subr.mxu0 0.0
  %v2134 = vand.u32 %v102, 4294901760
  %v2135 = vsub.f32 %v102, %v2134
  %2136 = vmatpush1.msra.mxu0 %v2135
  %2137 = vmatprep.subr.mxu0 0.0
  %v2138 = vand.u32 %v103, 4294901760
  %v2139 = vsub.f32 %v103, %v2138
  %2140 = vmatpush1.msra.mxu0 %v2139
  %2141 = vmatprep.subr.mxu0 0.0
  %v2142 = vand.u32 %v104, 4294901760
  %v2143 = vsub.f32 %v104, %v2142
  %2144 = vmatpush1.msra.mxu0 %v2143
  %2145 = vmatprep.subr.mxu0 0.0
  %2146 = vmatpush1.msra.mxu0 0.0
  %2147 = vmatprep.subr.mxu0 0.0
  %2148 = vmatpush1.msra.mxu0 0.0
  %2149 = vmatprep.subr.mxu0 0.0
  %2150 = vmatpush1.msra.mxu0 0.0
  %2151 = vmatprep.subr.mxu0 0.0
  %2152 = vmatpush1.msra.mxu0 0.0
  %2153 = vmatprep.subr.mxu0 0.0
  %2154 = vmatpush1.msra.mxu0 0.0
  %2155 = vmatprep.subr.mxu0 0.0
  %2156 = vmatpush1.msra.mxu0 0.0
  %2157 = vmatprep.subr.mxu0 0.0
  %2158 = vmatpush1.msra.mxu0 0.0
  %2159 = vmatprep.subr.mxu0 0.0
  %2160 = vmatpush1.msra.mxu0 0.0
  %2161 = vmatprep.subr.mxu0 0.0
  %2162 = vmatpush1.msra.mxu0 0.0
  %2163 = vmatprep.subr.mxu0 0.0
  %2164 = vmatpush1.msra.mxu0 0.0
  %2165 = vmatprep.subr.mxu0 0.0
  %2166 = vmatpush1.msra.mxu0 0.0
  %2167 = vmatprep.subr.mxu0 0.0
  %2168 = vmatpush1.msra.mxu0 0.0
  %2169 = vmatprep.subr.mxu0 0.0
  %2170 = vmatpush1.msra.mxu0 0.0
  %2171 = vmatprep.subr.mxu0 0.0
  %2172 = vmatpush1.msra.mxu0 0.0
  %2173 = vmatprep.subr.mxu0 0.0
  %2174 = vmatpush1.msra.mxu0 0.0
  %2175 = vmatprep.subr.mxu0 0.0
  %2176 = vmatpush1.msra.mxu0 0.0
  %2177 = vmatprep.mubr.f32.mxu0 0.0
  %v2178 = vand.u32 %v24, 4294901760
  %v2179 = vsub.f32 %v24, %v2178
  %2180 = vmatmul.mubr.f32.gmra.mrb[0].mxu0 %v2179
  %v2181 = vpop.f32.mrb[0].mxu0
  %v2182 = vadd.f32 %v2078, %v2181
  %v2183 = vpop.f32.mrb[0].mxu0
  %2184 = vdwg.mxu0
  %2185 = vmatprep.subr.mxu0 0.0
  %v2186 = vand.u32 %v89, 4294901760
  %2187 = vmatpush1.msra.mxu0 %v2186
  %2188 = vmatprep.subr.mxu0 0.0
  %v2189 = vand.u32 %v90, 4294901760
  %2190 = vmatpush1.msra.mxu0 %v2189
  %2191 = vmatprep.subr.mxu0 0.0
  %v2192 = vand.u32 %v91, 4294901760
  %2193 = vmatpush1.msra.mxu0 %v2192
  %2194 = vmatprep.subr.mxu0 0.0
  %v2195 = vand.u32 %v92, 4294901760
  %2196 = vmatpush1.msra.mxu0 %v2195
  %2197 = vmatprep.subr.mxu0 0.0
  %v2198 = vand.u32 %v93, 4294901760
  %2199 = vmatpush1.msra.mxu0 %v2198
  %2200 = vmatprep.subr.mxu0 0.0
  %v2201 = vand.u32 %v94, 4294901760
  %2202 = vmatpush1.msra.mxu0 %v2201
  %2203 = vmatprep.subr.mxu0 0.0
  %v2204 = vand.u32 %v95, 4294901760
  %2205 = vmatpush1.msra.mxu0 %v2204
  %2206 = vmatprep.subr.mxu0 0.0
  %v2207 = vand.u32 %v96, 4294901760
  %2208 = vmatpush1.msra.mxu0 %v2207
  %2209 = vmatprep.subr.mxu0 0.0
  %v2210 = vand.u32 %v97, 4294901760
  %2211 = vmatpush1.msra.mxu0 %v2210
  %2212 = vmatprep.subr.mxu0 0.0
  %v2213 = vand.u32 %v98, 4294901760
  %2214 = vmatpush1.msra.mxu0 %v2213
  %2215 = vmatprep.subr.mxu0 0.0
  %v2216 = vand.u32 %v99, 4294901760
  %2217 = vmatpush1.msra.mxu0 %v2216
  %2218 = vmatprep.subr.mxu0 0.0
  %v2219 = vand.u32 %v100, 4294901760
  %2220 = vmatpush1.msra.mxu0 %v2219
  %2221 = vmatprep.subr.mxu0 0.0
  %v2222 = vand.u32 %v101, 4294901760
  %2223 = vmatpush1.msra.mxu0 %v2222
  %2224 = vmatprep.subr.mxu0 0.0
  %v2225 = vand.u32 %v102, 4294901760
  %2226 = vmatpush1.msra.mxu0 %v2225
  %2227 = vmatprep.subr.mxu0 0.0
  %v2228 = vand.u32 %v103, 4294901760
  %2229 = vmatpush1.msra.mxu0 %v2228
  %2230 = vmatprep.subr.mxu0 0.0
  %v2231 = vand.u32 %v104, 4294901760
  %2232 = vmatpush1.msra.mxu0 %v2231
  %2233 = vmatprep.subr.mxu0 0.0
  %2234 = vmatpush1.msra.mxu0 0.0
  %2235 = vmatprep.subr.mxu0 0.0
  %2236 = vmatpush1.msra.mxu0 0.0
  %2237 = vmatprep.subr.mxu0 0.0
  %2238 = vmatpush1.msra.mxu0 0.0
  %2239 = vmatprep.subr.mxu0 0.0
  %2240 = vmatpush1.msra.mxu0 0.0
  %2241 = vmatprep.subr.mxu0 0.0
  %2242 = vmatpush1.msra.mxu0 0.0
  %2243 = vmatprep.subr.mxu0 0.0
  %2244 = vmatpush1.msra.mxu0 0.0
  %2245 = vmatprep.subr.mxu0 0.0
  %2246 = vmatpush1.msra.mxu0 0.0
  %2247 = vmatprep.subr.mxu0 0.0
  %2248 = vmatpush1.msra.mxu0 0.0
  %2249 = vmatprep.subr.mxu0 0.0
  %2250 = vmatpush1.msra.mxu0 0.0
  %2251 = vmatprep.subr.mxu0 0.0
  %2252 = vmatpush1.msra.mxu0 0.0
  %2253 = vmatprep.subr.mxu0 0.0
  %2254 = vmatpush1.msra.mxu0 0.0
  %2255 = vmatprep.subr.mxu0 0.0
  %2256 = vmatpush1.msra.mxu0 0.0
  %2257 = vmatprep.subr.mxu0 0.0
  %2258 = vmatpush1.msra.mxu0 0.0
  %2259 = vmatprep.subr.mxu0 0.0
  %2260 = vmatpush1.msra.mxu0 0.0
  %2261 = vmatprep.subr.mxu0 0.0
  %2262 = vmatpush1.msra.mxu0 0.0
  %2263 = vmatprep.subr.mxu0 0.0
  %2264 = vmatpush1.msra.mxu0 0.0
  %2265 = vmatprep.mubr.f32.mxu0 0.0
  %v2266 = vand.u32 %v24, 4294901760
  %v2267 = vsub.f32 %v24, %v2266
  %v2268 = vand.u32 %v2267, 4294901760
  %2269 = vmatmul.mubr.f32.gmra.mrb[0].mxu0 %v2268
  %v2270 = vpop.f32.mrb[0].mxu0
  %v2271 = vadd.f32 %v2182, %v2270
  %v2272 = vpop.f32.mrb[0].mxu0
  %2273 = vdwg.mxu0
  %2274 = vmatprep.subr.mxu0 0.0
  %v2275 = vand.u32 %v89, 4294901760
  %v2276 = vsub.f32 %v89, %v2275
  %v2277 = vand.u32 %v2276, 4294901760
  %2278 = vmatpush1.msra.mxu0 %v2277
  %2279 = vmatprep.subr.mxu0 0.0
  %v2280 = vand.u32 %v90, 4294901760
  %v2281 = vsub.f32 %v90, %v2280
  %v2282 = vand.u32 %v2281, 4294901760
  %2283 = vmatpush1.msra.mxu0 %v2282
  %2284 = vmatprep.subr.mxu0 0.0
  %v2285 = vand.u32 %v91, 4294901760
  %v2286 = vsub.f32 %v91, %v2285
  %v2287 = vand.u32 %v2286, 4294901760
  %2288 = vmatpush1.msra.mxu0 %v2287
  %2289 = vmatprep.subr.mxu0 0.0
  %v2290 = vand.u32 %v92, 4294901760
  %v2291 = vsub.f32 %v92, %v2290
  %v2292 = vand.u32 %v2291, 4294901760
  %2293 = vmatpush1.msra.mxu0 %v2292
  %2294 = vmatprep.subr.mxu0 0.0
  %v2295 = vand.u32 %v93, 4294901760
  %v2296 = vsub.f32 %v93, %v2295
  %v2297 = vand.u32 %v2296, 4294901760
  %2298 = vmatpush1.msra.mxu0 %v2297
  %2299 = vmatprep.subr.mxu0 0.0
  %v2300 = vand.u32 %v94, 4294901760
  %v2301 = vsub.f32 %v94, %v2300
  %v2302 = vand.u32 %v2301, 4294901760
  %2303 = vmatpush1.msra.mxu0 %v2302
  %2304 = vmatprep.subr.mxu0 0.0
  %v2305 = vand.u32 %v95, 4294901760
  %v2306 = vsub.f32 %v95, %v2305
  %v2307 = vand.u32 %v2306, 4294901760
  %2308 = vmatpush1.msra.mxu0 %v2307
  %2309 = vmatprep.subr.mxu0 0.0
  %v2310 = vand.u32 %v96, 4294901760
  %v2311 = vsub.f32 %v96, %v2310
  %v2312 = vand.u32 %v2311, 4294901760
  %2313 = vmatpush1.msra.mxu0 %v2312
  %2314 = vmatprep.subr.mxu0 0.0
  %v2315 = vand.u32 %v97, 4294901760
  %v2316 = vsub.f32 %v97, %v2315
  %v2317 = vand.u32 %v2316, 4294901760
  %2318 = vmatpush1.msra.mxu0 %v2317
  %2319 = vmatprep.subr.mxu0 0.0
  %v2320 = vand.u32 %v98, 4294901760
  %v2321 = vsub.f32 %v98, %v2320
  %v2322 = vand.u32 %v2321, 4294901760
  %2323 = vmatpush1.msra.mxu0 %v2322
  %2324 = vmatprep.subr.mxu0 0.0
  %v2325 = vand.u32 %v99, 4294901760
  %v2326 = vsub.f32 %v99, %v2325
  %v2327 = vand.u32 %v2326, 4294901760
  %2328 = vmatpush1.msra.mxu0 %v2327
  %2329 = vmatprep.subr.mxu0 0.0
  %v2330 = vand.u32 %v100, 4294901760
  %v2331 = vsub.f32 %v100, %v2330
  %v2332 = vand.u32 %v2331, 4294901760
  %2333 = vmatpush1.msra.mxu0 %v2332
  %2334 = vmatprep.subr.mxu0 0.0
  %v2335 = vand.u32 %v101, 4294901760
  %v2336 = vsub.f32 %v101, %v2335
  %v2337 = vand.u32 %v2336, 4294901760
  %2338 = vmatpush1.msra.mxu0 %v2337
  %2339 = vmatprep.subr.mxu0 0.0
  %v2340 = vand.u32 %v102, 4294901760
  %v2341 = vsub.f32 %v102, %v2340
  %v2342 = vand.u32 %v2341, 4294901760
  %2343 = vmatpush1.msra.mxu0 %v2342
  %2344 = vmatprep.subr.mxu0 0.0
  %v2345 = vand.u32 %v103, 4294901760
  %v2346 = vsub.f32 %v103, %v2345
  %v2347 = vand.u32 %v2346, 4294901760
  %2348 = vmatpush1.msra.mxu0 %v2347
  %2349 = vmatprep.subr.mxu0 0.0
  %v2350 = vand.u32 %v104, 4294901760
  %v2351 = vsub.f32 %v104, %v2350
  %v2352 = vand.u32 %v2351, 4294901760
  %2353 = vmatpush1.msra.mxu0 %v2352
  %2354 = vmatprep.subr.mxu0 0.0
  %2355 = vmatpush1.msra.mxu0 0.0
  %2356 = vmatprep.subr.mxu0 0.0
  %2357 = vmatpush1.msra.mxu0 0.0
  %2358 = vmatprep.subr.mxu0 0.0
  %2359 = vmatpush1.msra.mxu0 0.0
  %2360 = vmatprep.subr.mxu0 0.0
  %2361 = vmatpush1.msra.mxu0 0.0
  %2362 = vmatprep.subr.mxu0 0.0
  %2363 = vmatpush1.msra.mxu0 0.0
  %2364 = vmatprep.subr.mxu0 0.0
  %2365 = vmatpush1.msra.mxu0 0.0
  %2366 = vmatprep.subr.mxu0 0.0
  %2367 = vmatpush1.msra.mxu0 0.0
  %2368 = vmatprep.subr.mxu0 0.0
  %2369 = vmatpush1.msra.mxu0 0.0
  %2370 = vmatprep.subr.mxu0 0.0
  %2371 = vmatpush1.msra.mxu0 0.0
  %2372 = vmatprep.subr.mxu0 0.0
  %2373 = vmatpush1.msra.mxu0 0.0
  %2374 = vmatprep.subr.mxu0 0.0
  %2375 = vmatpush1.msra.mxu0 0.0
  %2376 = vmatprep.subr.mxu0 0.0
  %2377 = vmatpush1.msra.mxu0 0.0
  %2378 = vmatprep.subr.mxu0 0.0
  %2379 = vmatpush1.msra.mxu0 0.0
  %2380 = vmatprep.subr.mxu0 0.0
  %2381 = vmatpush1.msra.mxu0 0.0
  %2382 = vmatprep.subr.mxu0 0.0
  %2383 = vmatpush1.msra.mxu0 0.0
  %2384 = vmatprep.subr.mxu0 0.0
  %2385 = vmatpush1.msra.mxu0 0.0
  %2386 = vmatprep.mubr.f32.mxu0 0.0
  %v2387 = vand.u32 %v24, 4294901760
  %2388 = vmatmul.mubr.f32.gmra.mrb[0].mxu0 %v2387
  %v2389 = vpop.f32.mrb[0].mxu0
  %v2390 = vadd.f32 %v2271, %v2389
  %v2391 = vpop.f32.mrb[0].mxu0
  %2392 = vdwg.mxu0
  %2393 = vmatprep.subr.mxu0 0.0
  %v2394 = vand.u32 %v89, 4294901760
  %2395 = vmatpush1.msra.mxu0 %v2394
  %2396 = vmatprep.subr.mxu0 0.0
  %v2397 = vand.u32 %v90, 4294901760
  %2398 = vmatpush1.msra.mxu0 %v2397
  %2399 = vmatprep.subr.mxu0 0.0
  %v2400 = vand.u32 %v91, 4294901760
  %2401 = vmatpush1.msra.mxu0 %v2400
  %2402 = vmatprep.subr.mxu0 0.0
  %v2403 = vand.u32 %v92, 4294901760
  %2404 = vmatpush1.msra.mxu0 %v2403
  %2405 = vmatprep.subr.mxu0 0.0
  %v2406 = vand.u32 %v93, 4294901760
  %2407 = vmatpush1.msra.mxu0 %v2406
  %2408 = vmatprep.subr.mxu0 0.0
  %v2409 = vand.u32 %v94, 4294901760
  %2410 = vmatpush1.msra.mxu0 %v2409
  %2411 = vmatprep.subr.mxu0 0.0
  %v2412 = vand.u32 %v95, 4294901760
  %2413 = vmatpush1.msra.mxu0 %v2412
  %2414 = vmatprep.subr.mxu0 0.0
  %v2415 = vand.u32 %v96, 4294901760
  %2416 = vmatpush1.msra.mxu0 %v2415
  %2417 = vmatprep.subr.mxu0 0.0
  %v2418 = vand.u32 %v97, 4294901760
  %2419 = vmatpush1.msra.mxu0 %v2418
  %2420 = vmatprep.subr.mxu0 0.0
  %v2421 = vand.u32 %v98, 4294901760
  %2422 = vmatpush1.msra.mxu0 %v2421
  %2423 = vmatprep.subr.mxu0 0.0
  %v2424 = vand.u32 %v99, 4294901760
  %2425 = vmatpush1.msra.mxu0 %v2424
  %2426 = vmatprep.subr.mxu0 0.0
  %v2427 = vand.u32 %v100, 4294901760
  %2428 = vmatpush1.msra.mxu0 %v2427
  %2429 = vmatprep.subr.mxu0 0.0
  %v2430 = vand.u32 %v101, 4294901760
  %2431 = vmatpush1.msra.mxu0 %v2430
  %2432 = vmatprep.subr.mxu0 0.0
  %v2433 = vand.u32 %v102, 4294901760
  %2434 = vmatpush1.msra.mxu0 %v2433
  %2435 = vmatprep.subr.mxu0 0.0
  %v2436 = vand.u32 %v103, 4294901760
  %2437 = vmatpush1.msra.mxu0 %v2436
  %2438 = vmatprep.subr.mxu0 0.0
  %v2439 = vand.u32 %v104, 4294901760
  %2440 = vmatpush1.msra.mxu0 %v2439
  %2441 = vmatprep.subr.mxu0 0.0
  %2442 = vmatpush1.msra.mxu0 0.0
  %2443 = vmatprep.subr.mxu0 0.0
  %2444 = vmatpush1.msra.mxu0 0.0
  %2445 = vmatprep.subr.mxu0 0.0
  %2446 = vmatpush1.msra.mxu0 0.0
  %2447 = vmatprep.subr.mxu0 0.0
  %2448 = vmatpush1.msra.mxu0 0.0
  %2449 = vmatprep.subr.mxu0 0.0
  %2450 = vmatpush1.msra.mxu0 0.0
  %2451 = vmatprep.subr.mxu0 0.0
  %2452 = vmatpush1.msra.mxu0 0.0
  %2453 = vmatprep.subr.mxu0 0.0
  %2454 = vmatpush1.msra.mxu0 0.0
  %2455 = vmatprep.subr.mxu0 0.0
  %2456 = vmatpush1.msra.mxu0 0.0
  %2457 = vmatprep.subr.mxu0 0.0
  %2458 = vmatpush1.msra.mxu0 0.0
  %2459 = vmatprep.subr.mxu0 0.0
  %2460 = vmatpush1.msra.mxu0 0.0
  %2461 = vmatprep.subr.mxu0 0.0
  %2462 = vmatpush1.msra.mxu0 0.0
  %2463 = vmatprep.subr.mxu0 0.0
  %2464 = vmatpush1.msra.mxu0 0.0
  %2465 = vmatprep.subr.mxu0 0.0
  %2466 = vmatpush1.msra.mxu0 0.0
  %2467 = vmatprep.subr.mxu0 0.0
  %2468 = vmatpush1.msra.mxu0 0.0
  %2469 = vmatprep.subr.mxu0 0.0
  %2470 = vmatpush1.msra.mxu0 0.0
  %2471 = vmatprep.subr.mxu0 0.0
  %2472 = vmatpush1.msra.mxu0 0.0
  %2473 = vmatprep.mubr.f32.mxu0 0.0
  %v2474 = vand.u32 %v24, 4294901760
  %2475 = vmatmul.mubr.f32.gmra.mrb[0].mxu0 %v2474
  %v2476 = vpop.f32.mrb[0].mxu0
  %v2477 = vadd.f32 %v2390, %v2476
  %v2478 = vpop.f32.mrb[0].mxu0
  %2479 = vdwg.mxu0
  %v2480 = vmul.f32 %v2477, 0.025
  %vm2481 = vcmask 130048
  %v2483 = vsel %vm2481, %v2480, 0
  %v2485 = vand.u32 %v106, 4294901760
  %2486 = vmatprep.subr.mxu0 %v2485
  %v2487 = vand.u32 %v105, 4294901760
  %2488 = vmatpush1.msra.mxu0 %v2487
  %v2489 = vand.u32 %v111, 4294901760
  %2490 = vmatprep.subr.mxu0 %v2489
  %v2491 = vand.u32 %v110, 4294901760
  %2492 = vmatpush1.msra.mxu0 %v2491
  %2493 = vmatprep.subr.mxu0 0.0
  %2494 = vmatpush1.msra.mxu0 0.0
  %2495 = vmatprep.subr.mxu0 0.0
  %2496 = vmatpush1.msra.mxu0 0.0
  %2497 = vmatprep.subr.mxu0 0.0
  %2498 = vmatpush1.msra.mxu0 0.0
  %2499 = vmatprep.subr.mxu0 0.0
  %2500 = vmatpush1.msra.mxu0 0.0
  %2501 = vmatprep.subr.mxu0 0.0
  %2502 = vmatpush1.msra.mxu0 0.0
  %2503 = vmatprep.subr.mxu0 0.0
  %2504 = vmatpush1.msra.mxu0 0.0
  %2505 = vmatprep.subr.mxu0 0.0
  %2506 = vmatpush1.msra.mxu0 0.0
  %2507 = vmatprep.subr.mxu0 0.0
  %2508 = vmatpush1.msra.mxu0 0.0
  %2509 = vmatprep.subr.mxu0 0.0
  %2510 = vmatpush1.msra.mxu0 0.0
  %2511 = vmatprep.subr.mxu0 0.0
  %2512 = vmatpush1.msra.mxu0 0.0
  %2513 = vmatprep.subr.mxu0 0.0
  %2514 = vmatpush1.msra.mxu0 0.0
  %2515 = vmatprep.subr.mxu0 0.0
  %2516 = vmatpush1.msra.mxu0 0.0
  %2517 = vmatprep.subr.mxu0 0.0
  %2518 = vmatpush1.msra.mxu0 0.0
  %2519 = vmatprep.subr.mxu0 0.0
  %2520 = vmatpush1.msra.mxu0 0.0
  %2521 = vmatprep.subr.mxu0 0.0
  %2522 = vmatpush1.msra.mxu0 0.0
  %2523 = vmatprep.subr.mxu0 0.0
  %2524 = vmatpush1.msra.mxu0 0.0
  %2525 = vmatprep.subr.mxu0 0.0
  %2526 = vmatpush1.msra.mxu0 0.0
  %2527 = vmatprep.subr.mxu0 0.0
  %2528 = vmatpush1.msra.mxu0 0.0
  %2529 = vmatprep.subr.mxu0 0.0
  %2530 = vmatpush1.msra.mxu0 0.0
  %2531 = vmatprep.subr.mxu0 0.0
  %2532 = vmatpush1.msra.mxu0 0.0
  %2533 = vmatprep.subr.mxu0 0.0
  %2534 = vmatpush1.msra.mxu0 0.0
  %2535 = vmatprep.subr.mxu0 0.0
  %2536 = vmatpush1.msra.mxu0 0.0
  %2537 = vmatprep.subr.mxu0 0.0
  %2538 = vmatpush1.msra.mxu0 0.0
  %2539 = vmatprep.subr.mxu0 0.0
  %2540 = vmatpush1.msra.mxu0 0.0
  %2541 = vmatprep.subr.mxu0 0.0
  %2542 = vmatpush1.msra.mxu0 0.0
  %2543 = vmatprep.subr.mxu0 0.0
  %2544 = vmatpush1.msra.mxu0 0.0
  %2545 = vmatprep.subr.mxu0 0.0
  %2546 = vmatpush1.msra.mxu0 0.0
  %2547 = vmatprep.subr.mxu0 0.0
  %2548 = vmatpush1.msra.mxu0 0.0
  %2549 = vmatprep.subr.mxu0 0.0
  %2550 = vmatpush1.msra.mxu0 0.0
  %2551 = vmatprep.subr.mxu0 0.0
  %2552 = vmatpush1.msra.mxu0 0.0
  %2553 = vmatprep.mubr.f32.mxu0 0.0
  %v2554 = vand.u32 %v2483, 4294901760
  %v2555 = vsub.f32 %v2483, %v2554
  %v2556 = vand.u32 %v2555, 4294901760
  %v2557 = vsub.f32 %v2555, %v2556
  %v2558 = vand.u32 %v2557, 4294901760
  %2559 = vmatmul.mubr.f32.gmra.mrb[0].mxu0 %v2558
  %v2560 = vpop.f32.mrb[0].mxu0
  %v2561 = vadd.f32 0.0, %v2560
  %v2562 = vpop.f32.mrb[0].mxu0
  %v2563 = vadd.f32 0.0, %v2562
  %2564 = vdwg.mxu0
  %v2565 = vand.u32 %v106, 4294901760
  %v2566 = vsub.f32 %v106, %v2565
  %v2567 = vand.u32 %v2566, 4294901760
  %v2568 = vsub.f32 %v2566, %v2567
  %v2569 = vand.u32 %v2568, 4294901760
  %2570 = vmatprep.subr.mxu0 %v2569
  %v2571 = vand.u32 %v105, 4294901760
  %v2572 = vsub.f32 %v105, %v2571
  %v2573 = vand.u32 %v2572, 4294901760
  %v2574 = vsub.f32 %v2572, %v2573
  %v2575 = vand.u32 %v2574, 4294901760
  %2576 = vmatpush1.msra.mxu0 %v2575
  %v2577 = vand.u32 %v111, 4294901760
  %v2578 = vsub.f32 %v111, %v2577
  %v2579 = vand.u32 %v2578, 4294901760
  %v2580 = vsub.f32 %v2578, %v2579
  %v2581 = vand.u32 %v2580, 4294901760
  %2582 = vmatprep.subr.mxu0 %v2581
  %v2583 = vand.u32 %v110, 4294901760
  %v2584 = vsub.f32 %v110, %v2583
  %v2585 = vand.u32 %v2584, 4294901760
  %v2586 = vsub.f32 %v2584, %v2585
  %v2587 = vand.u32 %v2586, 4294901760
  %2588 = vmatpush1.msra.mxu0 %v2587
  %2589 = vmatprep.subr.mxu0 0.0
  %2590 = vmatpush1.msra.mxu0 0.0
  %2591 = vmatprep.subr.mxu0 0.0
  %2592 = vmatpush1.msra.mxu0 0.0
  %2593 = vmatprep.subr.mxu0 0.0
  %2594 = vmatpush1.msra.mxu0 0.0
  %2595 = vmatprep.subr.mxu0 0.0
  %2596 = vmatpush1.msra.mxu0 0.0
  %2597 = vmatprep.subr.mxu0 0.0
  %2598 = vmatpush1.msra.mxu0 0.0
  %2599 = vmatprep.subr.mxu0 0.0
  %2600 = vmatpush1.msra.mxu0 0.0
  %2601 = vmatprep.subr.mxu0 0.0
  %2602 = vmatpush1.msra.mxu0 0.0
  %2603 = vmatprep.subr.mxu0 0.0
  %2604 = vmatpush1.msra.mxu0 0.0
  %2605 = vmatprep.subr.mxu0 0.0
  %2606 = vmatpush1.msra.mxu0 0.0
  %2607 = vmatprep.subr.mxu0 0.0
  %2608 = vmatpush1.msra.mxu0 0.0
  %2609 = vmatprep.subr.mxu0 0.0
  %2610 = vmatpush1.msra.mxu0 0.0
  %2611 = vmatprep.subr.mxu0 0.0
  %2612 = vmatpush1.msra.mxu0 0.0
  %2613 = vmatprep.subr.mxu0 0.0
  %2614 = vmatpush1.msra.mxu0 0.0
  %2615 = vmatprep.subr.mxu0 0.0
  %2616 = vmatpush1.msra.mxu0 0.0
  %2617 = vmatprep.subr.mxu0 0.0
  %2618 = vmatpush1.msra.mxu0 0.0
  %2619 = vmatprep.subr.mxu0 0.0
  %2620 = vmatpush1.msra.mxu0 0.0
  %2621 = vmatprep.subr.mxu0 0.0
  %2622 = vmatpush1.msra.mxu0 0.0
  %2623 = vmatprep.subr.mxu0 0.0
  %2624 = vmatpush1.msra.mxu0 0.0
  %2625 = vmatprep.subr.mxu0 0.0
  %2626 = vmatpush1.msra.mxu0 0.0
  %2627 = vmatprep.subr.mxu0 0.0
  %2628 = vmatpush1.msra.mxu0 0.0
  %2629 = vmatprep.subr.mxu0 0.0
  %2630 = vmatpush1.msra.mxu0 0.0
  %2631 = vmatprep.subr.mxu0 0.0
  %2632 = vmatpush1.msra.mxu0 0.0
  %2633 = vmatprep.subr.mxu0 0.0
  %2634 = vmatpush1.msra.mxu0 0.0
  %2635 = vmatprep.subr.mxu0 0.0
  %2636 = vmatpush1.msra.mxu0 0.0
  %2637 = vmatprep.subr.mxu0 0.0
  %2638 = vmatpush1.msra.mxu0 0.0
  %2639 = vmatprep.subr.mxu0 0.0
  %2640 = vmatpush1.msra.mxu0 0.0
  %2641 = vmatprep.subr.mxu0 0.0
  %2642 = vmatpush1.msra.mxu0 0.0
  %2643 = vmatprep.subr.mxu0 0.0
  %2644 = vmatpush1.msra.mxu0 0.0
  %2645 = vmatprep.subr.mxu0 0.0
  %2646 = vmatpush1.msra.mxu0 0.0
  %2647 = vmatprep.subr.mxu0 0.0
  %2648 = vmatpush1.msra.mxu0 0.0
  %2649 = vmatprep.mubr.f32.mxu0 0.0
  %v2650 = vand.u32 %v2483, 4294901760
  %2651 = vmatmul.mubr.f32.gmra.mrb[0].mxu0 %v2650
  %v2652 = vpop.f32.mrb[0].mxu0
  %v2653 = vadd.f32 %v2561, %v2652
  %v2654 = vpop.f32.mrb[0].mxu0
  %v2655 = vadd.f32 %v2563, %v2654
  %2656 = vdwg.mxu0
  %v2657 = vand.u32 %v106, 4294901760
  %v2658 = vsub.f32 %v106, %v2657
  %2659 = vmatprep.subr.mxu0 %v2658
  %v2660 = vand.u32 %v105, 4294901760
  %v2661 = vsub.f32 %v105, %v2660
  %2662 = vmatpush1.msra.mxu0 %v2661
  %v2663 = vand.u32 %v111, 4294901760
  %v2664 = vsub.f32 %v111, %v2663
  %2665 = vmatprep.subr.mxu0 %v2664
  %v2666 = vand.u32 %v110, 4294901760
  %v2667 = vsub.f32 %v110, %v2666
  %2668 = vmatpush1.msra.mxu0 %v2667
  %2669 = vmatprep.subr.mxu0 0.0
  %2670 = vmatpush1.msra.mxu0 0.0
  %2671 = vmatprep.subr.mxu0 0.0
  %2672 = vmatpush1.msra.mxu0 0.0
  %2673 = vmatprep.subr.mxu0 0.0
  %2674 = vmatpush1.msra.mxu0 0.0
  %2675 = vmatprep.subr.mxu0 0.0
  %2676 = vmatpush1.msra.mxu0 0.0
  %2677 = vmatprep.subr.mxu0 0.0
  %2678 = vmatpush1.msra.mxu0 0.0
  %2679 = vmatprep.subr.mxu0 0.0
  %2680 = vmatpush1.msra.mxu0 0.0
  %2681 = vmatprep.subr.mxu0 0.0
  %2682 = vmatpush1.msra.mxu0 0.0
  %2683 = vmatprep.subr.mxu0 0.0
  %2684 = vmatpush1.msra.mxu0 0.0
  %2685 = vmatprep.subr.mxu0 0.0
  %2686 = vmatpush1.msra.mxu0 0.0
  %2687 = vmatprep.subr.mxu0 0.0
  %2688 = vmatpush1.msra.mxu0 0.0
  %2689 = vmatprep.subr.mxu0 0.0
  %2690 = vmatpush1.msra.mxu0 0.0
  %2691 = vmatprep.subr.mxu0 0.0
  %2692 = vmatpush1.msra.mxu0 0.0
  %2693 = vmatprep.subr.mxu0 0.0
  %2694 = vmatpush1.msra.mxu0 0.0
  %2695 = vmatprep.subr.mxu0 0.0
  %2696 = vmatpush1.msra.mxu0 0.0
  %2697 = vmatprep.subr.mxu0 0.0
  %2698 = vmatpush1.msra.mxu0 0.0
  %2699 = vmatprep.subr.mxu0 0.0
  %2700 = vmatpush1.msra.mxu0 0.0
  %2701 = vmatprep.subr.mxu0 0.0
  %2702 = vmatpush1.msra.mxu0 0.0
  %2703 = vmatprep.subr.mxu0 0.0
  %2704 = vmatpush1.msra.mxu0 0.0
  %2705 = vmatprep.subr.mxu0 0.0
  %2706 = vmatpush1.msra.mxu0 0.0
  %2707 = vmatprep.subr.mxu0 0.0
  %2708 = vmatpush1.msra.mxu0 0.0
  %2709 = vmatprep.subr.mxu0 0.0
  %2710 = vmatpush1.msra.mxu0 0.0
  %2711 = vmatprep.subr.mxu0 0.0
  %2712 = vmatpush1.msra.mxu0 0.0
  %2713 = vmatprep.subr.mxu0 0.0
  %2714 = vmatpush1.msra.mxu0 0.0
  %2715 = vmatprep.subr.mxu0 0.0
  %2716 = vmatpush1.msra.mxu0 0.0
  %2717 = vmatprep.subr.mxu0 0.0
  %2718 = vmatpush1.msra.mxu0 0.0
  %2719 = vmatprep.subr.mxu0 0.0
  %2720 = vmatpush1.msra.mxu0 0.0
  %2721 = vmatprep.subr.mxu0 0.0
  %2722 = vmatpush1.msra.mxu0 0.0
  %2723 = vmatprep.subr.mxu0 0.0
  %2724 = vmatpush1.msra.mxu0 0.0
  %2725 = vmatprep.subr.mxu0 0.0
  %2726 = vmatpush1.msra.mxu0 0.0
  %2727 = vmatprep.subr.mxu0 0.0
  %2728 = vmatpush1.msra.mxu0 0.0
  %2729 = vmatprep.mubr.f32.mxu0 0.0
  %v2730 = vand.u32 %v2483, 4294901760
  %v2731 = vsub.f32 %v2483, %v2730
  %2732 = vmatmul.mubr.f32.gmra.mrb[0].mxu0 %v2731
  %v2733 = vpop.f32.mrb[0].mxu0
  %v2734 = vadd.f32 %v2653, %v2733
  %v2735 = vpop.f32.mrb[0].mxu0
  %v2736 = vadd.f32 %v2655, %v2735
  %2737 = vdwg.mxu0
  %v2738 = vand.u32 %v106, 4294901760
  %2739 = vmatprep.subr.mxu0 %v2738
  %v2740 = vand.u32 %v105, 4294901760
  %2741 = vmatpush1.msra.mxu0 %v2740
  %v2742 = vand.u32 %v111, 4294901760
  %2743 = vmatprep.subr.mxu0 %v2742
  %v2744 = vand.u32 %v110, 4294901760
  %2745 = vmatpush1.msra.mxu0 %v2744
  %2746 = vmatprep.subr.mxu0 0.0
  %2747 = vmatpush1.msra.mxu0 0.0
  %2748 = vmatprep.subr.mxu0 0.0
  %2749 = vmatpush1.msra.mxu0 0.0
  %2750 = vmatprep.subr.mxu0 0.0
  %2751 = vmatpush1.msra.mxu0 0.0
  %2752 = vmatprep.subr.mxu0 0.0
  %2753 = vmatpush1.msra.mxu0 0.0
  %2754 = vmatprep.subr.mxu0 0.0
  %2755 = vmatpush1.msra.mxu0 0.0
  %2756 = vmatprep.subr.mxu0 0.0
  %2757 = vmatpush1.msra.mxu0 0.0
  %2758 = vmatprep.subr.mxu0 0.0
  %2759 = vmatpush1.msra.mxu0 0.0
  %2760 = vmatprep.subr.mxu0 0.0
  %2761 = vmatpush1.msra.mxu0 0.0
  %2762 = vmatprep.subr.mxu0 0.0
  %2763 = vmatpush1.msra.mxu0 0.0
  %2764 = vmatprep.subr.mxu0 0.0
  %2765 = vmatpush1.msra.mxu0 0.0
  %2766 = vmatprep.subr.mxu0 0.0
  %2767 = vmatpush1.msra.mxu0 0.0
  %2768 = vmatprep.subr.mxu0 0.0
  %2769 = vmatpush1.msra.mxu0 0.0
  %2770 = vmatprep.subr.mxu0 0.0
  %2771 = vmatpush1.msra.mxu0 0.0
  %2772 = vmatprep.subr.mxu0 0.0
  %2773 = vmatpush1.msra.mxu0 0.0
  %2774 = vmatprep.subr.mxu0 0.0
  %2775 = vmatpush1.msra.mxu0 0.0
  %2776 = vmatprep.subr.mxu0 0.0
  %2777 = vmatpush1.msra.mxu0 0.0
  %2778 = vmatprep.subr.mxu0 0.0
  %2779 = vmatpush1.msra.mxu0 0.0
  %2780 = vmatprep.subr.mxu0 0.0
  %2781 = vmatpush1.msra.mxu0 0.0
  %2782 = vmatprep.subr.mxu0 0.0
  %2783 = vmatpush1.msra.mxu0 0.0
  %2784 = vmatprep.subr.mxu0 0.0
  %2785 = vmatpush1.msra.mxu0 0.0
  %2786 = vmatprep.subr.mxu0 0.0
  %2787 = vmatpush1.msra.mxu0 0.0
  %2788 = vmatprep.subr.mxu0 0.0
  %2789 = vmatpush1.msra.mxu0 0.0
  %2790 = vmatprep.subr.mxu0 0.0
  %2791 = vmatpush1.msra.mxu0 0.0
  %2792 = vmatprep.subr.mxu0 0.0
  %2793 = vmatpush1.msra.mxu0 0.0
  %2794 = vmatprep.subr.mxu0 0.0
  %2795 = vmatpush1.msra.mxu0 0.0
  %2796 = vmatprep.subr.mxu0 0.0
  %2797 = vmatpush1.msra.mxu0 0.0
  %2798 = vmatprep.subr.mxu0 0.0
  %2799 = vmatpush1.msra.mxu0 0.0
  %2800 = vmatprep.subr.mxu0 0.0
  %2801 = vmatpush1.msra.mxu0 0.0
  %2802 = vmatprep.subr.mxu0 0.0
  %2803 = vmatpush1.msra.mxu0 0.0
  %2804 = vmatprep.subr.mxu0 0.0
  %2805 = vmatpush1.msra.mxu0 0.0
  %2806 = vmatprep.mubr.f32.mxu0 0.0
  %v2807 = vand.u32 %v2483, 4294901760
  %v2808 = vsub.f32 %v2483, %v2807
  %v2809 = vand.u32 %v2808, 4294901760
  %2810 = vmatmul.mubr.f32.gmra.mrb[0].mxu0 %v2809
  %v2811 = vpop.f32.mrb[0].mxu0
  %v2812 = vadd.f32 %v2734, %v2811
  %v2813 = vpop.f32.mrb[0].mxu0
  %v2814 = vadd.f32 %v2736, %v2813
  %2815 = vdwg.mxu0
  %v2816 = vand.u32 %v106, 4294901760
  %v2817 = vsub.f32 %v106, %v2816
  %v2818 = vand.u32 %v2817, 4294901760
  %2819 = vmatprep.subr.mxu0 %v2818
  %v2820 = vand.u32 %v105, 4294901760
  %v2821 = vsub.f32 %v105, %v2820
  %v2822 = vand.u32 %v2821, 4294901760
  %2823 = vmatpush1.msra.mxu0 %v2822
  %v2824 = vand.u32 %v111, 4294901760
  %v2825 = vsub.f32 %v111, %v2824
  %v2826 = vand.u32 %v2825, 4294901760
  %2827 = vmatprep.subr.mxu0 %v2826
  %v2828 = vand.u32 %v110, 4294901760
  %v2829 = vsub.f32 %v110, %v2828
  %v2830 = vand.u32 %v2829, 4294901760
  %2831 = vmatpush1.msra.mxu0 %v2830
  %2832 = vmatprep.subr.mxu0 0.0
  %2833 = vmatpush1.msra.mxu0 0.0
  %2834 = vmatprep.subr.mxu0 0.0
  %2835 = vmatpush1.msra.mxu0 0.0
  %2836 = vmatprep.subr.mxu0 0.0
  %2837 = vmatpush1.msra.mxu0 0.0
  %2838 = vmatprep.subr.mxu0 0.0
  %2839 = vmatpush1.msra.mxu0 0.0
  %2840 = vmatprep.subr.mxu0 0.0
  %2841 = vmatpush1.msra.mxu0 0.0
  %2842 = vmatprep.subr.mxu0 0.0
  %2843 = vmatpush1.msra.mxu0 0.0
  %2844 = vmatprep.subr.mxu0 0.0
  %2845 = vmatpush1.msra.mxu0 0.0
  %2846 = vmatprep.subr.mxu0 0.0
  %2847 = vmatpush1.msra.mxu0 0.0
  %2848 = vmatprep.subr.mxu0 0.0
  %2849 = vmatpush1.msra.mxu0 0.0
  %2850 = vmatprep.subr.mxu0 0.0
  %2851 = vmatpush1.msra.mxu0 0.0
  %2852 = vmatprep.subr.mxu0 0.0
  %2853 = vmatpush1.msra.mxu0 0.0
  %2854 = vmatprep.subr.mxu0 0.0
  %2855 = vmatpush1.msra.mxu0 0.0
  %2856 = vmatprep.subr.mxu0 0.0
  %2857 = vmatpush1.msra.mxu0 0.0
  %2858 = vmatprep.subr.mxu0 0.0
  %2859 = vmatpush1.msra.mxu0 0.0
  %2860 = vmatprep.subr.mxu0 0.0
  %2861 = vmatpush1.msra.mxu0 0.0
  %2862 = vmatprep.subr.mxu0 0.0
  %2863 = vmatpush1.msra.mxu0 0.0
  %2864 = vmatprep.subr.mxu0 0.0
  %2865 = vmatpush1.msra.mxu0 0.0
  %2866 = vmatprep.subr.mxu0 0.0
  %2867 = vmatpush1.msra.mxu0 0.0
  %2868 = vmatprep.subr.mxu0 0.0
  %2869 = vmatpush1.msra.mxu0 0.0
  %2870 = vmatprep.subr.mxu0 0.0
  %2871 = vmatpush1.msra.mxu0 0.0
  %2872 = vmatprep.subr.mxu0 0.0
  %2873 = vmatpush1.msra.mxu0 0.0
  %2874 = vmatprep.subr.mxu0 0.0
  %2875 = vmatpush1.msra.mxu0 0.0
  %2876 = vmatprep.subr.mxu0 0.0
  %2877 = vmatpush1.msra.mxu0 0.0
  %2878 = vmatprep.subr.mxu0 0.0
  %2879 = vmatpush1.msra.mxu0 0.0
  %2880 = vmatprep.subr.mxu0 0.0
  %2881 = vmatpush1.msra.mxu0 0.0
  %2882 = vmatprep.subr.mxu0 0.0
  %2883 = vmatpush1.msra.mxu0 0.0
  %2884 = vmatprep.subr.mxu0 0.0
  %2885 = vmatpush1.msra.mxu0 0.0
  %2886 = vmatprep.subr.mxu0 0.0
  %2887 = vmatpush1.msra.mxu0 0.0
  %2888 = vmatprep.subr.mxu0 0.0
  %2889 = vmatpush1.msra.mxu0 0.0
  %2890 = vmatprep.subr.mxu0 0.0
  %2891 = vmatpush1.msra.mxu0 0.0
  %2892 = vmatprep.mubr.f32.mxu0 0.0
  %v2893 = vand.u32 %v2483, 4294901760
  %2894 = vmatmul.mubr.f32.gmra.mrb[0].mxu0 %v2893
  %v2895 = vpop.f32.mrb[0].mxu0
  %v2896 = vadd.f32 %v2812, %v2895
  %v2897 = vpop.f32.mrb[0].mxu0
  %v2898 = vadd.f32 %v2814, %v2897
  %2899 = vdwg.mxu0
  %v2900 = vand.u32 %v106, 4294901760
  %2901 = vmatprep.subr.mxu0 %v2900
  %v2902 = vand.u32 %v105, 4294901760
  %2903 = vmatpush1.msra.mxu0 %v2902
  %v2904 = vand.u32 %v111, 4294901760
  %2905 = vmatprep.subr.mxu0 %v2904
  %v2906 = vand.u32 %v110, 4294901760
  %2907 = vmatpush1.msra.mxu0 %v2906
  %2908 = vmatprep.subr.mxu0 0.0
  %2909 = vmatpush1.msra.mxu0 0.0
  %2910 = vmatprep.subr.mxu0 0.0
  %2911 = vmatpush1.msra.mxu0 0.0
  %2912 = vmatprep.subr.mxu0 0.0
  %2913 = vmatpush1.msra.mxu0 0.0
  %2914 = vmatprep.subr.mxu0 0.0
  %2915 = vmatpush1.msra.mxu0 0.0
  %2916 = vmatprep.subr.mxu0 0.0
  %2917 = vmatpush1.msra.mxu0 0.0
  %2918 = vmatprep.subr.mxu0 0.0
  %2919 = vmatpush1.msra.mxu0 0.0
  %2920 = vmatprep.subr.mxu0 0.0
  %2921 = vmatpush1.msra.mxu0 0.0
  %2922 = vmatprep.subr.mxu0 0.0
  %2923 = vmatpush1.msra.mxu0 0.0
  %2924 = vmatprep.subr.mxu0 0.0
  %2925 = vmatpush1.msra.mxu0 0.0
  %2926 = vmatprep.subr.mxu0 0.0
  %2927 = vmatpush1.msra.mxu0 0.0
  %2928 = vmatprep.subr.mxu0 0.0
  %2929 = vmatpush1.msra.mxu0 0.0
  %2930 = vmatprep.subr.mxu0 0.0
  %2931 = vmatpush1.msra.mxu0 0.0
  %2932 = vmatprep.subr.mxu0 0.0
  %2933 = vmatpush1.msra.mxu0 0.0
  %2934 = vmatprep.subr.mxu0 0.0
  %2935 = vmatpush1.msra.mxu0 0.0
  %2936 = vmatprep.subr.mxu0 0.0
  %2937 = vmatpush1.msra.mxu0 0.0
  %2938 = vmatprep.subr.mxu0 0.0
  %2939 = vmatpush1.msra.mxu0 0.0
  %2940 = vmatprep.subr.mxu0 0.0
  %2941 = vmatpush1.msra.mxu0 0.0
  %2942 = vmatprep.subr.mxu0 0.0
  %2943 = vmatpush1.msra.mxu0 0.0
  %2944 = vmatprep.subr.mxu0 0.0
  %2945 = vmatpush1.msra.mxu0 0.0
  %2946 = vmatprep.subr.mxu0 0.0
  %2947 = vmatpush1.msra.mxu0 0.0
  %2948 = vmatprep.subr.mxu0 0.0
  %2949 = vmatpush1.msra.mxu0 0.0
  %2950 = vmatprep.subr.mxu0 0.0
  %2951 = vmatpush1.msra.mxu0 0.0
  %2952 = vmatprep.subr.mxu0 0.0
  %2953 = vmatpush1.msra.mxu0 0.0
  %2954 = vmatprep.subr.mxu0 0.0
  %2955 = vmatpush1.msra.mxu0 0.0
  %2956 = vmatprep.subr.mxu0 0.0
  %2957 = vmatpush1.msra.mxu0 0.0
  %2958 = vmatprep.subr.mxu0 0.0
  %2959 = vmatpush1.msra.mxu0 0.0
  %2960 = vmatprep.subr.mxu0 0.0
  %2961 = vmatpush1.msra.mxu0 0.0
  %2962 = vmatprep.subr.mxu0 0.0
  %2963 = vmatpush1.msra.mxu0 0.0
  %2964 = vmatprep.subr.mxu0 0.0
  %2965 = vmatpush1.msra.mxu0 0.0
  %2966 = vmatprep.subr.mxu0 0.0
  %2967 = vmatpush1.msra.mxu0 0.0
  %2968 = vmatprep.mubr.f32.mxu0 0.0
  %v2969 = vand.u32 %v2483, 4294901760
  %2970 = vmatmul.mubr.f32.gmra.mrb[0].mxu0 %v2969
  %v2971 = vpop.f32.mrb[0].mxu0
  %v2972 = vadd.f32 %v2896, %v2971
  %v2973 = vpop.f32.mrb[0].mxu0
  %v2974 = vadd.f32 %v2898, %v2973
  %2975 = vdwg.mxu0
  %v2976 = vand.u32 %v108, 4294901760
  %2977 = vmatprep.subr.mxu0 %v2976
  %v2978 = vand.u32 %v107, 4294901760
  %2979 = vmatpush1.msra.mxu0 %v2978
  %v2980 = vand.u32 %v113, 4294901760
  %2981 = vmatprep.subr.mxu0 %v2980
  %v2982 = vand.u32 %v112, 4294901760
  %2983 = vmatpush1.msra.mxu0 %v2982
  %2984 = vmatprep.subr.mxu0 0.0
  %2985 = vmatpush1.msra.mxu0 0.0
  %2986 = vmatprep.subr.mxu0 0.0
  %2987 = vmatpush1.msra.mxu0 0.0
  %2988 = vmatprep.subr.mxu0 0.0
  %2989 = vmatpush1.msra.mxu0 0.0
  %2990 = vmatprep.subr.mxu0 0.0
  %2991 = vmatpush1.msra.mxu0 0.0
  %2992 = vmatprep.subr.mxu0 0.0
  %2993 = vmatpush1.msra.mxu0 0.0
  %2994 = vmatprep.subr.mxu0 0.0
  %2995 = vmatpush1.msra.mxu0 0.0
  %2996 = vmatprep.subr.mxu0 0.0
  %2997 = vmatpush1.msra.mxu0 0.0
  %2998 = vmatprep.subr.mxu0 0.0
  %2999 = vmatpush1.msra.mxu0 0.0
  %3000 = vmatprep.subr.mxu0 0.0
  %3001 = vmatpush1.msra.mxu0 0.0
  %3002 = vmatprep.subr.mxu0 0.0
  %3003 = vmatpush1.msra.mxu0 0.0
  %3004 = vmatprep.subr.mxu0 0.0
  %3005 = vmatpush1.msra.mxu0 0.0
  %3006 = vmatprep.subr.mxu0 0.0
  %3007 = vmatpush1.msra.mxu0 0.0
  %3008 = vmatprep.subr.mxu0 0.0
  %3009 = vmatpush1.msra.mxu0 0.0
  %3010 = vmatprep.subr.mxu0 0.0
  %3011 = vmatpush1.msra.mxu0 0.0
  %3012 = vmatprep.subr.mxu0 0.0
  %3013 = vmatpush1.msra.mxu0 0.0
  %3014 = vmatprep.subr.mxu0 0.0
  %3015 = vmatpush1.msra.mxu0 0.0
  %3016 = vmatprep.subr.mxu0 0.0
  %3017 = vmatpush1.msra.mxu0 0.0
  %3018 = vmatprep.subr.mxu0 0.0
  %3019 = vmatpush1.msra.mxu0 0.0
  %3020 = vmatprep.subr.mxu0 0.0
  %3021 = vmatpush1.msra.mxu0 0.0
  %3022 = vmatprep.subr.mxu0 0.0
  %3023 = vmatpush1.msra.mxu0 0.0
  %3024 = vmatprep.subr.mxu0 0.0
  %3025 = vmatpush1.msra.mxu0 0.0
  %3026 = vmatprep.subr.mxu0 0.0
  %3027 = vmatpush1.msra.mxu0 0.0
  %3028 = vmatprep.subr.mxu0 0.0
  %3029 = vmatpush1.msra.mxu0 0.0
  %3030 = vmatprep.subr.mxu0 0.0
  %3031 = vmatpush1.msra.mxu0 0.0
  %3032 = vmatprep.subr.mxu0 0.0
  %3033 = vmatpush1.msra.mxu0 0.0
  %3034 = vmatprep.subr.mxu0 0.0
  %3035 = vmatpush1.msra.mxu0 0.0
  %3036 = vmatprep.subr.mxu0 0.0
  %3037 = vmatpush1.msra.mxu0 0.0
  %3038 = vmatprep.subr.mxu0 0.0
  %3039 = vmatpush1.msra.mxu0 0.0
  %3040 = vmatprep.subr.mxu0 0.0
  %3041 = vmatpush1.msra.mxu0 0.0
  %3042 = vmatprep.subr.mxu0 0.0
  %3043 = vmatpush1.msra.mxu0 0.0
  %3044 = vmatprep.mubr.f32.mxu0 0.0
  %v3045 = vand.u32 %v2483, 4294901760
  %v3046 = vsub.f32 %v2483, %v3045
  %v3047 = vand.u32 %v3046, 4294901760
  %v3048 = vsub.f32 %v3046, %v3047
  %v3049 = vand.u32 %v3048, 4294901760
  %3050 = vmatmul.mubr.f32.gmra.mrb[0].mxu0 %v3049
  %v3051 = vpop.f32.mrb[0].mxu0
  %v3052 = vadd.f32 0.0, %v3051
  %v3053 = vpop.f32.mrb[0].mxu0
  %v3054 = vadd.f32 0.0, %v3053
  %3055 = vdwg.mxu0
  %v3056 = vand.u32 %v108, 4294901760
  %v3057 = vsub.f32 %v108, %v3056
  %v3058 = vand.u32 %v3057, 4294901760
  %v3059 = vsub.f32 %v3057, %v3058
  %v3060 = vand.u32 %v3059, 4294901760
  %3061 = vmatprep.subr.mxu0 %v3060
  %v3062 = vand.u32 %v107, 4294901760
  %v3063 = vsub.f32 %v107, %v3062
  %v3064 = vand.u32 %v3063, 4294901760
  %v3065 = vsub.f32 %v3063, %v3064
  %v3066 = vand.u32 %v3065, 4294901760
  %3067 = vmatpush1.msra.mxu0 %v3066
  %v3068 = vand.u32 %v113, 4294901760
  %v3069 = vsub.f32 %v113, %v3068
  %v3070 = vand.u32 %v3069, 4294901760
  %v3071 = vsub.f32 %v3069, %v3070
  %v3072 = vand.u32 %v3071, 4294901760
  %3073 = vmatprep.subr.mxu0 %v3072
  %v3074 = vand.u32 %v112, 4294901760
  %v3075 = vsub.f32 %v112, %v3074
  %v3076 = vand.u32 %v3075, 4294901760
  %v3077 = vsub.f32 %v3075, %v3076
  %v3078 = vand.u32 %v3077, 4294901760
  %3079 = vmatpush1.msra.mxu0 %v3078
  %3080 = vmatprep.subr.mxu0 0.0
  %3081 = vmatpush1.msra.mxu0 0.0
  %3082 = vmatprep.subr.mxu0 0.0
  %3083 = vmatpush1.msra.mxu0 0.0
  %3084 = vmatprep.subr.mxu0 0.0
  %3085 = vmatpush1.msra.mxu0 0.0
  %3086 = vmatprep.subr.mxu0 0.0
  %3087 = vmatpush1.msra.mxu0 0.0
  %3088 = vmatprep.subr.mxu0 0.0
  %3089 = vmatpush1.msra.mxu0 0.0
  %3090 = vmatprep.subr.mxu0 0.0
  %3091 = vmatpush1.msra.mxu0 0.0
  %3092 = vmatprep.subr.mxu0 0.0
  %3093 = vmatpush1.msra.mxu0 0.0
  %3094 = vmatprep.subr.mxu0 0.0
  %3095 = vmatpush1.msra.mxu0 0.0
  %3096 = vmatprep.subr.mxu0 0.0
  %3097 = vmatpush1.msra.mxu0 0.0
  %3098 = vmatprep.subr.mxu0 0.0
  %3099 = vmatpush1.msra.mxu0 0.0
  %3100 = vmatprep.subr.mxu0 0.0
  %3101 = vmatpush1.msra.mxu0 0.0
  %3102 = vmatprep.subr.mxu0 0.0
  %3103 = vmatpush1.msra.mxu0 0.0
  %3104 = vmatprep.subr.mxu0 0.0
  %3105 = vmatpush1.msra.mxu0 0.0
  %3106 = vmatprep.subr.mxu0 0.0
  %3107 = vmatpush1.msra.mxu0 0.0
  %3108 = vmatprep.subr.mxu0 0.0
  %3109 = vmatpush1.msra.mxu0 0.0
  %3110 = vmatprep.subr.mxu0 0.0
  %3111 = vmatpush1.msra.mxu0 0.0
  %3112 = vmatprep.subr.mxu0 0.0
  %3113 = vmatpush1.msra.mxu0 0.0
  %3114 = vmatprep.subr.mxu0 0.0
  %3115 = vmatpush1.msra.mxu0 0.0
  %3116 = vmatprep.subr.mxu0 0.0
  %3117 = vmatpush1.msra.mxu0 0.0
  %3118 = vmatprep.subr.mxu0 0.0
  %3119 = vmatpush1.msra.mxu0 0.0
  %3120 = vmatprep.subr.mxu0 0.0
  %3121 = vmatpush1.msra.mxu0 0.0
  %3122 = vmatprep.subr.mxu0 0.0
  %3123 = vmatpush1.msra.mxu0 0.0
  %3124 = vmatprep.subr.mxu0 0.0
  %3125 = vmatpush1.msra.mxu0 0.0
  %3126 = vmatprep.subr.mxu0 0.0
  %3127 = vmatpush1.msra.mxu0 0.0
  %3128 = vmatprep.subr.mxu0 0.0
  %3129 = vmatpush1.msra.mxu0 0.0
  %3130 = vmatprep.subr.mxu0 0.0
  %3131 = vmatpush1.msra.mxu0 0.0
  %3132 = vmatprep.subr.mxu0 0.0
  %3133 = vmatpush1.msra.mxu0 0.0
  %3134 = vmatprep.subr.mxu0 0.0
  %3135 = vmatpush1.msra.mxu0 0.0
  %3136 = vmatprep.subr.mxu0 0.0
  %3137 = vmatpush1.msra.mxu0 0.0
  %3138 = vmatprep.subr.mxu0 0.0
  %3139 = vmatpush1.msra.mxu0 0.0
  %3140 = vmatprep.mubr.f32.mxu0 0.0
  %v3141 = vand.u32 %v2483, 4294901760
  %3142 = vmatmul.mubr.f32.gmra.mrb[0].mxu0 %v3141
  %v3143 = vpop.f32.mrb[0].mxu0
  %v3144 = vadd.f32 %v3052, %v3143
  %v3145 = vpop.f32.mrb[0].mxu0
  %v3146 = vadd.f32 %v3054, %v3145
  %3147 = vdwg.mxu0
  %v3148 = vand.u32 %v108, 4294901760
  %v3149 = vsub.f32 %v108, %v3148
  %3150 = vmatprep.subr.mxu0 %v3149
  %v3151 = vand.u32 %v107, 4294901760
  %v3152 = vsub.f32 %v107, %v3151
  %3153 = vmatpush1.msra.mxu0 %v3152
  %v3154 = vand.u32 %v113, 4294901760
  %v3155 = vsub.f32 %v113, %v3154
  %3156 = vmatprep.subr.mxu0 %v3155
  %v3157 = vand.u32 %v112, 4294901760
  %v3158 = vsub.f32 %v112, %v3157
  %3159 = vmatpush1.msra.mxu0 %v3158
  %3160 = vmatprep.subr.mxu0 0.0
  %3161 = vmatpush1.msra.mxu0 0.0
  %3162 = vmatprep.subr.mxu0 0.0
  %3163 = vmatpush1.msra.mxu0 0.0
  %3164 = vmatprep.subr.mxu0 0.0
  %3165 = vmatpush1.msra.mxu0 0.0
  %3166 = vmatprep.subr.mxu0 0.0
  %3167 = vmatpush1.msra.mxu0 0.0
  %3168 = vmatprep.subr.mxu0 0.0
  %3169 = vmatpush1.msra.mxu0 0.0
  %3170 = vmatprep.subr.mxu0 0.0
  %3171 = vmatpush1.msra.mxu0 0.0
  %3172 = vmatprep.subr.mxu0 0.0
  %3173 = vmatpush1.msra.mxu0 0.0
  %3174 = vmatprep.subr.mxu0 0.0
  %3175 = vmatpush1.msra.mxu0 0.0
  %3176 = vmatprep.subr.mxu0 0.0
  %3177 = vmatpush1.msra.mxu0 0.0
  %3178 = vmatprep.subr.mxu0 0.0
  %3179 = vmatpush1.msra.mxu0 0.0
  %3180 = vmatprep.subr.mxu0 0.0
  %3181 = vmatpush1.msra.mxu0 0.0
  %3182 = vmatprep.subr.mxu0 0.0
  %3183 = vmatpush1.msra.mxu0 0.0
  %3184 = vmatprep.subr.mxu0 0.0
  %3185 = vmatpush1.msra.mxu0 0.0
  %3186 = vmatprep.subr.mxu0 0.0
  %3187 = vmatpush1.msra.mxu0 0.0
  %3188 = vmatprep.subr.mxu0 0.0
  %3189 = vmatpush1.msra.mxu0 0.0
  %3190 = vmatprep.subr.mxu0 0.0
  %3191 = vmatpush1.msra.mxu0 0.0
  %3192 = vmatprep.subr.mxu0 0.0
  %3193 = vmatpush1.msra.mxu0 0.0
  %3194 = vmatprep.subr.mxu0 0.0
  %3195 = vmatpush1.msra.mxu0 0.0
  %3196 = vmatprep.subr.mxu0 0.0
  %3197 = vmatpush1.msra.mxu0 0.0
  %3198 = vmatprep.subr.mxu0 0.0
  %3199 = vmatpush1.msra.mxu0 0.0
  %3200 = vmatprep.subr.mxu0 0.0
  %3201 = vmatpush1.msra.mxu0 0.0
  %3202 = vmatprep.subr.mxu0 0.0
  %3203 = vmatpush1.msra.mxu0 0.0
  %3204 = vmatprep.subr.mxu0 0.0
  %3205 = vmatpush1.msra.mxu0 0.0
  %3206 = vmatprep.subr.mxu0 0.0
  %3207 = vmatpush1.msra.mxu0 0.0
  %3208 = vmatprep.subr.mxu0 0.0
  %3209 = vmatpush1.msra.mxu0 0.0
  %3210 = vmatprep.subr.mxu0 0.0
  %3211 = vmatpush1.msra.mxu0 0.0
  %3212 = vmatprep.subr.mxu0 0.0
  %3213 = vmatpush1.msra.mxu0 0.0
  %3214 = vmatprep.subr.mxu0 0.0
  %3215 = vmatpush1.msra.mxu0 0.0
  %3216 = vmatprep.subr.mxu0 0.0
  %3217 = vmatpush1.msra.mxu0 0.0
  %3218 = vmatprep.subr.mxu0 0.0
  %3219 = vmatpush1.msra.mxu0 0.0
  %3220 = vmatprep.mubr.f32.mxu0 0.0
  %v3221 = vand.u32 %v2483, 4294901760
  %v3222 = vsub.f32 %v2483, %v3221
  %3223 = vmatmul.mubr.f32.gmra.mrb[0].mxu0 %v3222
  %v3224 = vpop.f32.mrb[0].mxu0
  %v3225 = vadd.f32 %v3144, %v3224
  %v3226 = vpop.f32.mrb[0].mxu0
  %v3227 = vadd.f32 %v3146, %v3226
  %3228 = vdwg.mxu0
  %v3229 = vand.u32 %v108, 4294901760
  %3230 = vmatprep.subr.mxu0 %v3229
  %v3231 = vand.u32 %v107, 4294901760
  %3232 = vmatpush1.msra.mxu0 %v3231
  %v3233 = vand.u32 %v113, 4294901760
  %3234 = vmatprep.subr.mxu0 %v3233
  %v3235 = vand.u32 %v112, 4294901760
  %3236 = vmatpush1.msra.mxu0 %v3235
  %3237 = vmatprep.subr.mxu0 0.0
  %3238 = vmatpush1.msra.mxu0 0.0
  %3239 = vmatprep.subr.mxu0 0.0
  %3240 = vmatpush1.msra.mxu0 0.0
  %3241 = vmatprep.subr.mxu0 0.0
  %3242 = vmatpush1.msra.mxu0 0.0
  %3243 = vmatprep.subr.mxu0 0.0
  %3244 = vmatpush1.msra.mxu0 0.0
  %3245 = vmatprep.subr.mxu0 0.0
  %3246 = vmatpush1.msra.mxu0 0.0
  %3247 = vmatprep.subr.mxu0 0.0
  %3248 = vmatpush1.msra.mxu0 0.0
  %3249 = vmatprep.subr.mxu0 0.0
  %3250 = vmatpush1.msra.mxu0 0.0
  %3251 = vmatprep.subr.mxu0 0.0
  %3252 = vmatpush1.msra.mxu0 0.0
  %3253 = vmatprep.subr.mxu0 0.0
  %3254 = vmatpush1.msra.mxu0 0.0
  %3255 = vmatprep.subr.mxu0 0.0
  %3256 = vmatpush1.msra.mxu0 0.0
  %3257 = vmatprep.subr.mxu0 0.0
  %3258 = vmatpush1.msra.mxu0 0.0
  %3259 = vmatprep.subr.mxu0 0.0
  %3260 = vmatpush1.msra.mxu0 0.0
  %3261 = vmatprep.subr.mxu0 0.0
  %3262 = vmatpush1.msra.mxu0 0.0
  %3263 = vmatprep.subr.mxu0 0.0
  %3264 = vmatpush1.msra.mxu0 0.0
  %3265 = vmatprep.subr.mxu0 0.0
  %3266 = vmatpush1.msra.mxu0 0.0
  %3267 = vmatprep.subr.mxu0 0.0
  %3268 = vmatpush1.msra.mxu0 0.0
  %3269 = vmatprep.subr.mxu0 0.0
  %3270 = vmatpush1.msra.mxu0 0.0
  %3271 = vmatprep.subr.mxu0 0.0
  %3272 = vmatpush1.msra.mxu0 0.0
  %3273 = vmatprep.subr.mxu0 0.0
  %3274 = vmatpush1.msra.mxu0 0.0
  %3275 = vmatprep.subr.mxu0 0.0
  %3276 = vmatpush1.msra.mxu0 0.0
  %3277 = vmatprep.subr.mxu0 0.0
  %3278 = vmatpush1.msra.mxu0 0.0
  %3279 = vmatprep.subr.mxu0 0.0
  %3280 = vmatpush1.msra.mxu0 0.0
  %3281 = vmatprep.subr.mxu0 0.0
  %3282 = vmatpush1.msra.mxu0 0.0
  %3283 = vmatprep.subr.mxu0 0.0
  %3284 = vmatpush1.msra.mxu0 0.0
  %3285 = vmatprep.subr.mxu0 0.0
  %3286 = vmatpush1.msra.mxu0 0.0
  %3287 = vmatprep.subr.mxu0 0.0
  %3288 = vmatpush1.msra.mxu0 0.0
  %3289 = vmatprep.subr.mxu0 0.0
  %3290 = vmatpush1.msra.mxu0 0.0
  %3291 = vmatprep.subr.mxu0 0.0
  %3292 = vmatpush1.msra.mxu0 0.0
  %3293 = vmatprep.subr.mxu0 0.0
  %3294 = vmatpush1.msra.mxu0 0.0
  %3295 = vmatprep.subr.mxu0 0.0
  %3296 = vmatpush1.msra.mxu0 0.0
  %3297 = vmatprep.mubr.f32.mxu0 0.0
  %v3298 = vand.u32 %v2483, 4294901760
  %v3299 = vsub.f32 %v2483, %v3298
  %v3300 = vand.u32 %v3299, 4294901760
  %3301 = vmatmul.mubr.f32.gmra.mrb[0].mxu0 %v3300
  %v3302 = vpop.f32.mrb[0].mxu0
  %v3303 = vadd.f32 %v3225, %v3302
  %v3304 = vpop.f32.mrb[0].mxu0
  %v3305 = vadd.f32 %v3227, %v3304
  %3306 = vdwg.mxu0
  %v3307 = vand.u32 %v108, 4294901760
  %v3308 = vsub.f32 %v108, %v3307
  %v3309 = vand.u32 %v3308, 4294901760
  %3310 = vmatprep.subr.mxu0 %v3309
  %v3311 = vand.u32 %v107, 4294901760
  %v3312 = vsub.f32 %v107, %v3311
  %v3313 = vand.u32 %v3312, 4294901760
  %3314 = vmatpush1.msra.mxu0 %v3313
  %v3315 = vand.u32 %v113, 4294901760
  %v3316 = vsub.f32 %v113, %v3315
  %v3317 = vand.u32 %v3316, 4294901760
  %3318 = vmatprep.subr.mxu0 %v3317
  %v3319 = vand.u32 %v112, 4294901760
  %v3320 = vsub.f32 %v112, %v3319
  %v3321 = vand.u32 %v3320, 4294901760
  %3322 = vmatpush1.msra.mxu0 %v3321
  %3323 = vmatprep.subr.mxu0 0.0
  %3324 = vmatpush1.msra.mxu0 0.0
  %3325 = vmatprep.subr.mxu0 0.0
  %3326 = vmatpush1.msra.mxu0 0.0
  %3327 = vmatprep.subr.mxu0 0.0
  %3328 = vmatpush1.msra.mxu0 0.0
  %3329 = vmatprep.subr.mxu0 0.0
  %3330 = vmatpush1.msra.mxu0 0.0
  %3331 = vmatprep.subr.mxu0 0.0
  %3332 = vmatpush1.msra.mxu0 0.0
  %3333 = vmatprep.subr.mxu0 0.0
  %3334 = vmatpush1.msra.mxu0 0.0
  %3335 = vmatprep.subr.mxu0 0.0
  %3336 = vmatpush1.msra.mxu0 0.0
  %3337 = vmatprep.subr.mxu0 0.0
  %3338 = vmatpush1.msra.mxu0 0.0
  %3339 = vmatprep.subr.mxu0 0.0
  %3340 = vmatpush1.msra.mxu0 0.0
  %3341 = vmatprep.subr.mxu0 0.0
  %3342 = vmatpush1.msra.mxu0 0.0
  %3343 = vmatprep.subr.mxu0 0.0
  %3344 = vmatpush1.msra.mxu0 0.0
  %3345 = vmatprep.subr.mxu0 0.0
  %3346 = vmatpush1.msra.mxu0 0.0
  %3347 = vmatprep.subr.mxu0 0.0
  %3348 = vmatpush1.msra.mxu0 0.0
  %3349 = vmatprep.subr.mxu0 0.0
  %3350 = vmatpush1.msra.mxu0 0.0
  %3351 = vmatprep.subr.mxu0 0.0
  %3352 = vmatpush1.msra.mxu0 0.0
  %3353 = vmatprep.subr.mxu0 0.0
  %3354 = vmatpush1.msra.mxu0 0.0
  %3355 = vmatprep.subr.mxu0 0.0
  %3356 = vmatpush1.msra.mxu0 0.0
  %3357 = vmatprep.subr.mxu0 0.0
  %3358 = vmatpush1.msra.mxu0 0.0
  %3359 = vmatprep.subr.mxu0 0.0
  %3360 = vmatpush1.msra.mxu0 0.0
  %3361 = vmatprep.subr.mxu0 0.0
  %3362 = vmatpush1.msra.mxu0 0.0
  %3363 = vmatprep.subr.mxu0 0.0
  %3364 = vmatpush1.msra.mxu0 0.0
  %3365 = vmatprep.subr.mxu0 0.0
  %3366 = vmatpush1.msra.mxu0 0.0
  %3367 = vmatprep.subr.mxu0 0.0
  %3368 = vmatpush1.msra.mxu0 0.0
  %3369 = vmatprep.subr.mxu0 0.0
  %3370 = vmatpush1.msra.mxu0 0.0
  %3371 = vmatprep.subr.mxu0 0.0
  %3372 = vmatpush1.msra.mxu0 0.0
  %3373 = vmatprep.subr.mxu0 0.0
  %3374 = vmatpush1.msra.mxu0 0.0
  %3375 = vmatprep.subr.mxu0 0.0
  %3376 = vmatpush1.msra.mxu0 0.0
  %3377 = vmatprep.subr.mxu0 0.0
  %3378 = vmatpush1.msra.mxu0 0.0
  %3379 = vmatprep.subr.mxu0 0.0
  %3380 = vmatpush1.msra.mxu0 0.0
  %3381 = vmatprep.subr.mxu0 0.0
  %3382 = vmatpush1.msra.mxu0 0.0
  %3383 = vmatprep.mubr.f32.mxu0 0.0
  %v3384 = vand.u32 %v2483, 4294901760
  %3385 = vmatmul.mubr.f32.gmra.mrb[0].mxu0 %v3384
  %v3386 = vpop.f32.mrb[0].mxu0
  %v3387 = vadd.f32 %v3303, %v3386
  %v3388 = vpop.f32.mrb[0].mxu0
  %v3389 = vadd.f32 %v3305, %v3388
  %3390 = vdwg.mxu0
  %v3391 = vand.u32 %v108, 4294901760
  %3392 = vmatprep.subr.mxu0 %v3391
  %v3393 = vand.u32 %v107, 4294901760
  %3394 = vmatpush1.msra.mxu0 %v3393
  %v3395 = vand.u32 %v113, 4294901760
  %3396 = vmatprep.subr.mxu0 %v3395
  %v3397 = vand.u32 %v112, 4294901760
  %3398 = vmatpush1.msra.mxu0 %v3397
  %3399 = vmatprep.subr.mxu0 0.0
  %3400 = vmatpush1.msra.mxu0 0.0
  %3401 = vmatprep.subr.mxu0 0.0
  %3402 = vmatpush1.msra.mxu0 0.0
  %3403 = vmatprep.subr.mxu0 0.0
  %3404 = vmatpush1.msra.mxu0 0.0
  %3405 = vmatprep.subr.mxu0 0.0
  %3406 = vmatpush1.msra.mxu0 0.0
  %3407 = vmatprep.subr.mxu0 0.0
  %3408 = vmatpush1.msra.mxu0 0.0
  %3409 = vmatprep.subr.mxu0 0.0
  %3410 = vmatpush1.msra.mxu0 0.0
  %3411 = vmatprep.subr.mxu0 0.0
  %3412 = vmatpush1.msra.mxu0 0.0
  %3413 = vmatprep.subr.mxu0 0.0
  %3414 = vmatpush1.msra.mxu0 0.0
  %3415 = vmatprep.subr.mxu0 0.0
  %3416 = vmatpush1.msra.mxu0 0.0
  %3417 = vmatprep.subr.mxu0 0.0
  %3418 = vmatpush1.msra.mxu0 0.0
  %3419 = vmatprep.subr.mxu0 0.0
  %3420 = vmatpush1.msra.mxu0 0.0
  %3421 = vmatprep.subr.mxu0 0.0
  %3422 = vmatpush1.msra.mxu0 0.0
  %3423 = vmatprep.subr.mxu0 0.0
  %3424 = vmatpush1.msra.mxu0 0.0
  %3425 = vmatprep.subr.mxu0 0.0
  %3426 = vmatpush1.msra.mxu0 0.0
  %3427 = vmatprep.subr.mxu0 0.0
  %3428 = vmatpush1.msra.mxu0 0.0
  %3429 = vmatprep.subr.mxu0 0.0
  %3430 = vmatpush1.msra.mxu0 0.0
  %3431 = vmatprep.subr.mxu0 0.0
  %3432 = vmatpush1.msra.mxu0 0.0
  %3433 = vmatprep.subr.mxu0 0.0
  %3434 = vmatpush1.msra.mxu0 0.0
  %3435 = vmatprep.subr.mxu0 0.0
  %3436 = vmatpush1.msra.mxu0 0.0
  %3437 = vmatprep.subr.mxu0 0.0
  %3438 = vmatpush1.msra.mxu0 0.0
  %3439 = vmatprep.subr.mxu0 0.0
  %3440 = vmatpush1.msra.mxu0 0.0
  %3441 = vmatprep.subr.mxu0 0.0
  %3442 = vmatpush1.msra.mxu0 0.0
  %3443 = vmatprep.subr.mxu0 0.0
  %3444 = vmatpush1.msra.mxu0 0.0
  %3445 = vmatprep.subr.mxu0 0.0
  %3446 = vmatpush1.msra.mxu0 0.0
  %3447 = vmatprep.subr.mxu0 0.0
  %3448 = vmatpush1.msra.mxu0 0.0
  %3449 = vmatprep.subr.mxu0 0.0
  %3450 = vmatpush1.msra.mxu0 0.0
  %3451 = vmatprep.subr.mxu0 0.0
  %3452 = vmatpush1.msra.mxu0 0.0
  %3453 = vmatprep.subr.mxu0 0.0
  %3454 = vmatpush1.msra.mxu0 0.0
  %3455 = vmatprep.subr.mxu0 0.0
  %3456 = vmatpush1.msra.mxu0 0.0
  %3457 = vmatprep.subr.mxu0 0.0
  %3458 = vmatpush1.msra.mxu0 0.0
  %3459 = vmatprep.mubr.f32.mxu0 0.0
  %v3460 = vand.u32 %v2483, 4294901760
  %3461 = vmatmul.mubr.f32.gmra.mrb[0].mxu0 %v3460
  %v3462 = vpop.f32.mrb[0].mxu0
  %v3463 = vadd.f32 %v3387, %v3462
  %v3464 = vpop.f32.mrb[0].mxu0
  %v3465 = vadd.f32 %v3389, %v3464
  %3466 = vdwg.mxu0
  %3467 = vmatprep.subr.mxu0 0.0
  %v3468 = vand.u32 %v109, 4294901760
  %3469 = vmatpush1.msra.mxu0 %v3468
  %3470 = vmatprep.subr.mxu0 0.0
  %v3471 = vand.u32 %v114, 4294901760
  %3472 = vmatpush1.msra.mxu0 %v3471
  %3473 = vmatprep.subr.mxu0 0.0
  %3474 = vmatpush1.msra.mxu0 0.0
  %3475 = vmatprep.subr.mxu0 0.0
  %3476 = vmatpush1.msra.mxu0 0.0
  %3477 = vmatprep.subr.mxu0 0.0
  %3478 = vmatpush1.msra.mxu0 0.0
  %3479 = vmatprep.subr.mxu0 0.0
  %3480 = vmatpush1.msra.mxu0 0.0
  %3481 = vmatprep.subr.mxu0 0.0
  %3482 = vmatpush1.msra.mxu0 0.0
  %3483 = vmatprep.subr.mxu0 0.0
  %3484 = vmatpush1.msra.mxu0 0.0
  %3485 = vmatprep.subr.mxu0 0.0
  %3486 = vmatpush1.msra.mxu0 0.0
  %3487 = vmatprep.subr.mxu0 0.0
  %3488 = vmatpush1.msra.mxu0 0.0
  %3489 = vmatprep.subr.mxu0 0.0
  %3490 = vmatpush1.msra.mxu0 0.0
  %3491 = vmatprep.subr.mxu0 0.0
  %3492 = vmatpush1.msra.mxu0 0.0
  %3493 = vmatprep.subr.mxu0 0.0
  %3494 = vmatpush1.msra.mxu0 0.0
  %3495 = vmatprep.subr.mxu0 0.0
  %3496 = vmatpush1.msra.mxu0 0.0
  %3497 = vmatprep.subr.mxu0 0.0
  %3498 = vmatpush1.msra.mxu0 0.0
  %3499 = vmatprep.subr.mxu0 0.0
  %3500 = vmatpush1.msra.mxu0 0.0
  %3501 = vmatprep.subr.mxu0 0.0
  %3502 = vmatpush1.msra.mxu0 0.0
  %3503 = vmatprep.subr.mxu0 0.0
  %3504 = vmatpush1.msra.mxu0 0.0
  %3505 = vmatprep.subr.mxu0 0.0
  %3506 = vmatpush1.msra.mxu0 0.0
  %3507 = vmatprep.subr.mxu0 0.0
  %3508 = vmatpush1.msra.mxu0 0.0
  %3509 = vmatprep.subr.mxu0 0.0
  %3510 = vmatpush1.msra.mxu0 0.0
  %3511 = vmatprep.subr.mxu0 0.0
  %3512 = vmatpush1.msra.mxu0 0.0
  %3513 = vmatprep.subr.mxu0 0.0
  %3514 = vmatpush1.msra.mxu0 0.0
  %3515 = vmatprep.subr.mxu0 0.0
  %3516 = vmatpush1.msra.mxu0 0.0
  %3517 = vmatprep.subr.mxu0 0.0
  %3518 = vmatpush1.msra.mxu0 0.0
  %3519 = vmatprep.subr.mxu0 0.0
  %3520 = vmatpush1.msra.mxu0 0.0
  %3521 = vmatprep.subr.mxu0 0.0
  %3522 = vmatpush1.msra.mxu0 0.0
  %3523 = vmatprep.subr.mxu0 0.0
  %3524 = vmatpush1.msra.mxu0 0.0
  %3525 = vmatprep.subr.mxu0 0.0
  %3526 = vmatpush1.msra.mxu0 0.0
  %3527 = vmatprep.subr.mxu0 0.0
  %3528 = vmatpush1.msra.mxu0 0.0
  %3529 = vmatprep.subr.mxu0 0.0
  %3530 = vmatpush1.msra.mxu0 0.0
  %3531 = vmatprep.subr.mxu0 0.0
  %3532 = vmatpush1.msra.mxu0 0.0
  %3533 = vmatprep.mubr.f32.mxu0 0.0
  %v3534 = vand.u32 %v2483, 4294901760
  %v3535 = vsub.f32 %v2483, %v3534
  %v3536 = vand.u32 %v3535, 4294901760
  %v3537 = vsub.f32 %v3535, %v3536
  %v3538 = vand.u32 %v3537, 4294901760
  %3539 = vmatmul.mubr.f32.gmra.mrb[0].mxu0 %v3538
  %v3540 = vpop.f32.mrb[0].mxu0
  %v3541 = vadd.f32 0.0, %v3540
  %v3542 = vpop.f32.mrb[0].mxu0
  %3543 = vdwg.mxu0
  %3544 = vmatprep.subr.mxu0 0.0
  %v3545 = vand.u32 %v109, 4294901760
  %v3546 = vsub.f32 %v109, %v3545
  %v3547 = vand.u32 %v3546, 4294901760
  %v3548 = vsub.f32 %v3546, %v3547
  %v3549 = vand.u32 %v3548, 4294901760
  %3550 = vmatpush1.msra.mxu0 %v3549
  %3551 = vmatprep.subr.mxu0 0.0
  %v3552 = vand.u32 %v114, 4294901760
  %v3553 = vsub.f32 %v114, %v3552
  %v3554 = vand.u32 %v3553, 4294901760
  %v3555 = vsub.f32 %v3553, %v3554
  %v3556 = vand.u32 %v3555, 4294901760
  %3557 = vmatpush1.msra.mxu0 %v3556
  %3558 = vmatprep.subr.mxu0 0.0
  %3559 = vmatpush1.msra.mxu0 0.0
  %3560 = vmatprep.subr.mxu0 0.0
  %3561 = vmatpush1.msra.mxu0 0.0
  %3562 = vmatprep.subr.mxu0 0.0
  %3563 = vmatpush1.msra.mxu0 0.0
  %3564 = vmatprep.subr.mxu0 0.0
  %3565 = vmatpush1.msra.mxu0 0.0
  %3566 = vmatprep.subr.mxu0 0.0
  %3567 = vmatpush1.msra.mxu0 0.0
  %3568 = vmatprep.subr.mxu0 0.0
  %3569 = vmatpush1.msra.mxu0 0.0
  %3570 = vmatprep.subr.mxu0 0.0
  %3571 = vmatpush1.msra.mxu0 0.0
  %3572 = vmatprep.subr.mxu0 0.0
  %3573 = vmatpush1.msra.mxu0 0.0
  %3574 = vmatprep.subr.mxu0 0.0
  %3575 = vmatpush1.msra.mxu0 0.0
  %3576 = vmatprep.subr.mxu0 0.0
  %3577 = vmatpush1.msra.mxu0 0.0
  %3578 = vmatprep.subr.mxu0 0.0
  %3579 = vmatpush1.msra.mxu0 0.0
  %3580 = vmatprep.subr.mxu0 0.0
  %3581 = vmatpush1.msra.mxu0 0.0
  %3582 = vmatprep.subr.mxu0 0.0
  %3583 = vmatpush1.msra.mxu0 0.0
  %3584 = vmatprep.subr.mxu0 0.0
  %3585 = vmatpush1.msra.mxu0 0.0
  %3586 = vmatprep.subr.mxu0 0.0
  %3587 = vmatpush1.msra.mxu0 0.0
  %3588 = vmatprep.subr.mxu0 0.0
  %3589 = vmatpush1.msra.mxu0 0.0
  %3590 = vmatprep.subr.mxu0 0.0
  %3591 = vmatpush1.msra.mxu0 0.0
  %3592 = vmatprep.subr.mxu0 0.0
  %3593 = vmatpush1.msra.mxu0 0.0
  %3594 = vmatprep.subr.mxu0 0.0
  %3595 = vmatpush1.msra.mxu0 0.0
  %3596 = vmatprep.subr.mxu0 0.0
  %3597 = vmatpush1.msra.mxu0 0.0
  %3598 = vmatprep.subr.mxu0 0.0
  %3599 = vmatpush1.msra.mxu0 0.0
  %3600 = vmatprep.subr.mxu0 0.0
  %3601 = vmatpush1.msra.mxu0 0.0
  %3602 = vmatprep.subr.mxu0 0.0
  %3603 = vmatpush1.msra.mxu0 0.0
  %3604 = vmatprep.subr.mxu0 0.0
  %3605 = vmatpush1.msra.mxu0 0.0
  %3606 = vmatprep.subr.mxu0 0.0
  %3607 = vmatpush1.msra.mxu0 0.0
  %3608 = vmatprep.subr.mxu0 0.0
  %3609 = vmatpush1.msra.mxu0 0.0
  %3610 = vmatprep.subr.mxu0 0.0
  %3611 = vmatpush1.msra.mxu0 0.0
  %3612 = vmatprep.subr.mxu0 0.0
  %3613 = vmatpush1.msra.mxu0 0.0
  %3614 = vmatprep.subr.mxu0 0.0
  %3615 = vmatpush1.msra.mxu0 0.0
  %3616 = vmatprep.subr.mxu0 0.0
  %3617 = vmatpush1.msra.mxu0 0.0
  %3618 = vmatprep.mubr.f32.mxu0 0.0
  %v3619 = vand.u32 %v2483, 4294901760
  %3620 = vmatmul.mubr.f32.gmra.mrb[0].mxu0 %v3619
  %v3621 = vpop.f32.mrb[0].mxu0
  %v3622 = vadd.f32 %v3541, %v3621
  %v3623 = vpop.f32.mrb[0].mxu0
  %3624 = vdwg.mxu0
  %3625 = vmatprep.subr.mxu0 0.0
  %v3626 = vand.u32 %v109, 4294901760
  %v3627 = vsub.f32 %v109, %v3626
  %3628 = vmatpush1.msra.mxu0 %v3627
  %3629 = vmatprep.subr.mxu0 0.0
  %v3630 = vand.u32 %v114, 4294901760
  %v3631 = vsub.f32 %v114, %v3630
  %3632 = vmatpush1.msra.mxu0 %v3631
  %3633 = vmatprep.subr.mxu0 0.0
  %3634 = vmatpush1.msra.mxu0 0.0
  %3635 = vmatprep.subr.mxu0 0.0
  %3636 = vmatpush1.msra.mxu0 0.0
  %3637 = vmatprep.subr.mxu0 0.0
  %3638 = vmatpush1.msra.mxu0 0.0
  %3639 = vmatprep.subr.mxu0 0.0
  %3640 = vmatpush1.msra.mxu0 0.0
  %3641 = vmatprep.subr.mxu0 0.0
  %3642 = vmatpush1.msra.mxu0 0.0
  %3643 = vmatprep.subr.mxu0 0.0
  %3644 = vmatpush1.msra.mxu0 0.0
  %3645 = vmatprep.subr.mxu0 0.0
  %3646 = vmatpush1.msra.mxu0 0.0
  %3647 = vmatprep.subr.mxu0 0.0
  %3648 = vmatpush1.msra.mxu0 0.0
  %3649 = vmatprep.subr.mxu0 0.0
  %3650 = vmatpush1.msra.mxu0 0.0
  %3651 = vmatprep.subr.mxu0 0.0
  %3652 = vmatpush1.msra.mxu0 0.0
  %3653 = vmatprep.subr.mxu0 0.0
  %3654 = vmatpush1.msra.mxu0 0.0
  %3655 = vmatprep.subr.mxu0 0.0
  %3656 = vmatpush1.msra.mxu0 0.0
  %3657 = vmatprep.subr.mxu0 0.0
  %3658 = vmatpush1.msra.mxu0 0.0
  %3659 = vmatprep.subr.mxu0 0.0
  %3660 = vmatpush1.msra.mxu0 0.0
  %3661 = vmatprep.subr.mxu0 0.0
  %3662 = vmatpush1.msra.mxu0 0.0
  %3663 = vmatprep.subr.mxu0 0.0
  %3664 = vmatpush1.msra.mxu0 0.0
  %3665 = vmatprep.subr.mxu0 0.0
  %3666 = vmatpush1.msra.mxu0 0.0
  %3667 = vmatprep.subr.mxu0 0.0
  %3668 = vmatpush1.msra.mxu0 0.0
  %3669 = vmatprep.subr.mxu0 0.0
  %3670 = vmatpush1.msra.mxu0 0.0
  %3671 = vmatprep.subr.mxu0 0.0
  %3672 = vmatpush1.msra.mxu0 0.0
  %3673 = vmatprep.subr.mxu0 0.0
  %3674 = vmatpush1.msra.mxu0 0.0
  %3675 = vmatprep.subr.mxu0 0.0
  %3676 = vmatpush1.msra.mxu0 0.0
  %3677 = vmatprep.subr.mxu0 0.0
  %3678 = vmatpush1.msra.mxu0 0.0
  %3679 = vmatprep.subr.mxu0 0.0
  %3680 = vmatpush1.msra.mxu0 0.0
  %3681 = vmatprep.subr.mxu0 0.0
  %3682 = vmatpush1.msra.mxu0 0.0
  %3683 = vmatprep.subr.mxu0 0.0
  %3684 = vmatpush1.msra.mxu0 0.0
  %3685 = vmatprep.subr.mxu0 0.0
  %3686 = vmatpush1.msra.mxu0 0.0
  %3687 = vmatprep.subr.mxu0 0.0
  %3688 = vmatpush1.msra.mxu0 0.0
  %3689 = vmatprep.subr.mxu0 0.0
  %3690 = vmatpush1.msra.mxu0 0.0
  %3691 = vmatprep.subr.mxu0 0.0
  %3692 = vmatpush1.msra.mxu0 0.0
  %3693 = vmatprep.mubr.f32.mxu0 0.0
  %v3694 = vand.u32 %v2483, 4294901760
  %v3695 = vsub.f32 %v2483, %v3694
  %3696 = vmatmul.mubr.f32.gmra.mrb[0].mxu0 %v3695
  %v3697 = vpop.f32.mrb[0].mxu0
  %v3698 = vadd.f32 %v3622, %v3697
  %v3699 = vpop.f32.mrb[0].mxu0
  %3700 = vdwg.mxu0
  %3701 = vmatprep.subr.mxu0 0.0
  %v3702 = vand.u32 %v109, 4294901760
  %3703 = vmatpush1.msra.mxu0 %v3702
  %3704 = vmatprep.subr.mxu0 0.0
  %v3705 = vand.u32 %v114, 4294901760
  %3706 = vmatpush1.msra.mxu0 %v3705
  %3707 = vmatprep.subr.mxu0 0.0
  %3708 = vmatpush1.msra.mxu0 0.0
  %3709 = vmatprep.subr.mxu0 0.0
  %3710 = vmatpush1.msra.mxu0 0.0
  %3711 = vmatprep.subr.mxu0 0.0
  %3712 = vmatpush1.msra.mxu0 0.0
  %3713 = vmatprep.subr.mxu0 0.0
  %3714 = vmatpush1.msra.mxu0 0.0
  %3715 = vmatprep.subr.mxu0 0.0
  %3716 = vmatpush1.msra.mxu0 0.0
  %3717 = vmatprep.subr.mxu0 0.0
  %3718 = vmatpush1.msra.mxu0 0.0
  %3719 = vmatprep.subr.mxu0 0.0
  %3720 = vmatpush1.msra.mxu0 0.0
  %3721 = vmatprep.subr.mxu0 0.0
  %3722 = vmatpush1.msra.mxu0 0.0
  %3723 = vmatprep.subr.mxu0 0.0
  %3724 = vmatpush1.msra.mxu0 0.0
  %3725 = vmatprep.subr.mxu0 0.0
  %3726 = vmatpush1.msra.mxu0 0.0
  %3727 = vmatprep.subr.mxu0 0.0
  %3728 = vmatpush1.msra.mxu0 0.0
  %3729 = vmatprep.subr.mxu0 0.0
  %3730 = vmatpush1.msra.mxu0 0.0
  %3731 = vmatprep.subr.mxu0 0.0
  %3732 = vmatpush1.msra.mxu0 0.0
  %3733 = vmatprep.subr.mxu0 0.0
  %3734 = vmatpush1.msra.mxu0 0.0
  %3735 = vmatprep.subr.mxu0 0.0
  %3736 = vmatpush1.msra.mxu0 0.0
  %3737 = vmatprep.subr.mxu0 0.0
  %3738 = vmatpush1.msra.mxu0 0.0
  %3739 = vmatprep.subr.mxu0 0.0
  %3740 = vmatpush1.msra.mxu0 0.0
  %3741 = vmatprep.subr.mxu0 0.0
  %3742 = vmatpush1.msra.mxu0 0.0
  %3743 = vmatprep.subr.mxu0 0.0
  %3744 = vmatpush1.msra.mxu0 0.0
  %3745 = vmatprep.subr.mxu0 0.0
  %3746 = vmatpush1.msra.mxu0 0.0
  %3747 = vmatprep.subr.mxu0 0.0
  %3748 = vmatpush1.msra.mxu0 0.0
  %3749 = vmatprep.subr.mxu0 0.0
  %3750 = vmatpush1.msra.mxu0 0.0
  %3751 = vmatprep.subr.mxu0 0.0
  %3752 = vmatpush1.msra.mxu0 0.0
  %3753 = vmatprep.subr.mxu0 0.0
  %3754 = vmatpush1.msra.mxu0 0.0
  %3755 = vmatprep.subr.mxu0 0.0
  %3756 = vmatpush1.msra.mxu0 0.0
  %3757 = vmatprep.subr.mxu0 0.0
  %3758 = vmatpush1.msra.mxu0 0.0
  %3759 = vmatprep.subr.mxu0 0.0
  %3760 = vmatpush1.msra.mxu0 0.0
  %3761 = vmatprep.subr.mxu0 0.0
  %3762 = vmatpush1.msra.mxu0 0.0
  %3763 = vmatprep.subr.mxu0 0.0
  %3764 = vmatpush1.msra.mxu0 0.0
  %3765 = vmatprep.subr.mxu0 0.0
  %3766 = vmatpush1.msra.mxu0 0.0
  %3767 = vmatprep.mubr.f32.mxu0 0.0
  %v3768 = vand.u32 %v2483, 4294901760
  %v3769 = vsub.f32 %v2483, %v3768
  %v3770 = vand.u32 %v3769, 4294901760
  %3771 = vmatmul.mubr.f32.gmra.mrb[0].mxu0 %v3770
  %v3772 = vpop.f32.mrb[0].mxu0
  %v3773 = vadd.f32 %v3698, %v3772
  %v3774 = vpop.f32.mrb[0].mxu0
  %3775 = vdwg.mxu0
  %3776 = vmatprep.subr.mxu0 0.0
  %v3777 = vand.u32 %v109, 4294901760
  %v3778 = vsub.f32 %v109, %v3777
  %v3779 = vand.u32 %v3778, 4294901760
  %3780 = vmatpush1.msra.mxu0 %v3779
  %3781 = vmatprep.subr.mxu0 0.0
  %v3782 = vand.u32 %v114, 4294901760
  %v3783 = vsub.f32 %v114, %v3782
  %v3784 = vand.u32 %v3783, 4294901760
  %3785 = vmatpush1.msra.mxu0 %v3784
  %3786 = vmatprep.subr.mxu0 0.0
  %3787 = vmatpush1.msra.mxu0 0.0
  %3788 = vmatprep.subr.mxu0 0.0
  %3789 = vmatpush1.msra.mxu0 0.0
  %3790 = vmatprep.subr.mxu0 0.0
  %3791 = vmatpush1.msra.mxu0 0.0
  %3792 = vmatprep.subr.mxu0 0.0
  %3793 = vmatpush1.msra.mxu0 0.0
  %3794 = vmatprep.subr.mxu0 0.0
  %3795 = vmatpush1.msra.mxu0 0.0
  %3796 = vmatprep.subr.mxu0 0.0
  %3797 = vmatpush1.msra.mxu0 0.0
  %3798 = vmatprep.subr.mxu0 0.0
  %3799 = vmatpush1.msra.mxu0 0.0
  %3800 = vmatprep.subr.mxu0 0.0
  %3801 = vmatpush1.msra.mxu0 0.0
  %3802 = vmatprep.subr.mxu0 0.0
  %3803 = vmatpush1.msra.mxu0 0.0
  %3804 = vmatprep.subr.mxu0 0.0
  %3805 = vmatpush1.msra.mxu0 0.0
  %3806 = vmatprep.subr.mxu0 0.0
  %3807 = vmatpush1.msra.mxu0 0.0
  %3808 = vmatprep.subr.mxu0 0.0
  %3809 = vmatpush1.msra.mxu0 0.0
  %3810 = vmatprep.subr.mxu0 0.0
  %3811 = vmatpush1.msra.mxu0 0.0
  %3812 = vmatprep.subr.mxu0 0.0
  %3813 = vmatpush1.msra.mxu0 0.0
  %3814 = vmatprep.subr.mxu0 0.0
  %3815 = vmatpush1.msra.mxu0 0.0
  %3816 = vmatprep.subr.mxu0 0.0
  %3817 = vmatpush1.msra.mxu0 0.0
  %3818 = vmatprep.subr.mxu0 0.0
  %3819 = vmatpush1.msra.mxu0 0.0
  %3820 = vmatprep.subr.mxu0 0.0
  %3821 = vmatpush1.msra.mxu0 0.0
  %3822 = vmatprep.subr.mxu0 0.0
  %3823 = vmatpush1.msra.mxu0 0.0
  %3824 = vmatprep.subr.mxu0 0.0
  %3825 = vmatpush1.msra.mxu0 0.0
  %3826 = vmatprep.subr.mxu0 0.0
  %3827 = vmatpush1.msra.mxu0 0.0
  %3828 = vmatprep.subr.mxu0 0.0
  %3829 = vmatpush1.msra.mxu0 0.0
  %3830 = vmatprep.subr.mxu0 0.0
  %3831 = vmatpush1.msra.mxu0 0.0
  %3832 = vmatprep.subr.mxu0 0.0
  %3833 = vmatpush1.msra.mxu0 0.0
  %3834 = vmatprep.subr.mxu0 0.0
  %3835 = vmatpush1.msra.mxu0 0.0
  %3836 = vmatprep.subr.mxu0 0.0
  %3837 = vmatpush1.msra.mxu0 0.0
  %3838 = vmatprep.subr.mxu0 0.0
  %3839 = vmatpush1.msra.mxu0 0.0
  %3840 = vmatprep.subr.mxu0 0.0
  %3841 = vmatpush1.msra.mxu0 0.0
  %3842 = vmatprep.subr.mxu0 0.0
  %3843 = vmatpush1.msra.mxu0 0.0
  %3844 = vmatprep.subr.mxu0 0.0
  %3845 = vmatpush1.msra.mxu0 0.0
  %3846 = vmatprep.mubr.f32.mxu0 0.0
  %v3847 = vand.u32 %v2483, 4294901760
  %3848 = vmatmul.mubr.f32.gmra.mrb[0].mxu0 %v3847
  %v3849 = vpop.f32.mrb[0].mxu0
  %v3850 = vadd.f32 %v3773, %v3849
  %v3851 = vpop.f32.mrb[0].mxu0
  %3852 = vdwg.mxu0
  %3853 = vmatprep.subr.mxu0 0.0
  %v3854 = vand.u32 %v109, 4294901760
  %3855 = vmatpush1.msra.mxu0 %v3854
  %3856 = vmatprep.subr.mxu0 0.0
  %v3857 = vand.u32 %v114, 4294901760
  %3858 = vmatpush1.msra.mxu0 %v3857
  %3859 = vmatprep.subr.mxu0 0.0
  %3860 = vmatpush1.msra.mxu0 0.0
  %3861 = vmatprep.subr.mxu0 0.0
  %3862 = vmatpush1.msra.mxu0 0.0
  %3863 = vmatprep.subr.mxu0 0.0
  %3864 = vmatpush1.msra.mxu0 0.0
  %3865 = vmatprep.subr.mxu0 0.0
  %3866 = vmatpush1.msra.mxu0 0.0
  %3867 = vmatprep.subr.mxu0 0.0
  %3868 = vmatpush1.msra.mxu0 0.0
  %3869 = vmatprep.subr.mxu0 0.0
  %3870 = vmatpush1.msra.mxu0 0.0
  %3871 = vmatprep.subr.mxu0 0.0
  %3872 = vmatpush1.msra.mxu0 0.0
  %3873 = vmatprep.subr.mxu0 0.0
  %3874 = vmatpush1.msra.mxu0 0.0
  %3875 = vmatprep.subr.mxu0 0.0
  %3876 = vmatpush1.msra.mxu0 0.0
  %3877 = vmatprep.subr.mxu0 0.0
  %3878 = vmatpush1.msra.mxu0 0.0
  %3879 = vmatprep.subr.mxu0 0.0
  %3880 = vmatpush1.msra.mxu0 0.0
  %3881 = vmatprep.subr.mxu0 0.0
  %3882 = vmatpush1.msra.mxu0 0.0
  %3883 = vmatprep.subr.mxu0 0.0
  %3884 = vmatpush1.msra.mxu0 0.0
  %3885 = vmatprep.subr.mxu0 0.0
  %3886 = vmatpush1.msra.mxu0 0.0
  %3887 = vmatprep.subr.mxu0 0.0
  %3888 = vmatpush1.msra.mxu0 0.0
  %3889 = vmatprep.subr.mxu0 0.0
  %3890 = vmatpush1.msra.mxu0 0.0
  %3891 = vmatprep.subr.mxu0 0.0
  %3892 = vmatpush1.msra.mxu0 0.0
  %3893 = vmatprep.subr.mxu0 0.0
  %3894 = vmatpush1.msra.mxu0 0.0
  %3895 = vmatprep.subr.mxu0 0.0
  %3896 = vmatpush1.msra.mxu0 0.0
  %3897 = vmatprep.subr.mxu0 0.0
  %3898 = vmatpush1.msra.mxu0 0.0
  %3899 = vmatprep.subr.mxu0 0.0
  %3900 = vmatpush1.msra.mxu0 0.0
  %3901 = vmatprep.subr.mxu0 0.0
  %3902 = vmatpush1.msra.mxu0 0.0
  %3903 = vmatprep.subr.mxu0 0.0
  %3904 = vmatpush1.msra.mxu0 0.0
  %3905 = vmatprep.subr.mxu0 0.0
  %3906 = vmatpush1.msra.mxu0 0.0
  %3907 = vmatprep.subr.mxu0 0.0
  %3908 = vmatpush1.msra.mxu0 0.0
  %3909 = vmatprep.subr.mxu0 0.0
  %3910 = vmatpush1.msra.mxu0 0.0
  %3911 = vmatprep.subr.mxu0 0.0
  %3912 = vmatpush1.msra.mxu0 0.0
  %3913 = vmatprep.subr.mxu0 0.0
  %3914 = vmatpush1.msra.mxu0 0.0
  %3915 = vmatprep.subr.mxu0 0.0
  %3916 = vmatpush1.msra.mxu0 0.0
  %3917 = vmatprep.subr.mxu0 0.0
  %3918 = vmatpush1.msra.mxu0 0.0
  %3919 = vmatprep.mubr.f32.mxu0 0.0
  %v3920 = vand.u32 %v2483, 4294901760
  %3921 = vmatmul.mubr.f32.gmra.mrb[0].mxu0 %v3920
  %v3922 = vpop.f32.mrb[0].mxu0
  %v3923 = vadd.f32 %v3850, %v3922
  %v3924 = vpop.f32.mrb[0].mxu0
  %3925 = vdwg.mxu0
  %v3926 = vsub.f32 %v20, %v2972
  %v3927 = vsub.f32 %v21, %v2974
  %v3928 = vsub.f32 %v22, %v3463
  %v3929 = vsub.f32 %v23, %v3465
  %v3930 = vsub.f32 %v24, %v3923
  %v3931 = vmul.f32 %v3926, %v3926
  %v3932 = vmul.f32 %v3927, %v3927
  %v3933 = vmul.f32 %v3928, %v3928
  %v3934 = vmul.f32 %v3929, %v3929
  %v3935 = vmul.f32 %v3930, %v3930
  %3936 = vmatprep.subr.mxu0 0.0
  %v3937 = vand.u32 %v25, 4294901760
  %3938 = vmatpush1.msra.mxu0 %v3937
  %3939 = vmatprep.subr.mxu0 0.0
  %v3940 = vand.u32 %v26, 4294901760
  %3941 = vmatpush1.msra.mxu0 %v3940
  %3942 = vmatprep.subr.mxu0 0.0
  %v3943 = vand.u32 %v27, 4294901760
  %3944 = vmatpush1.msra.mxu0 %v3943
  %3945 = vmatprep.subr.mxu0 0.0
  %v3946 = vand.u32 %v28, 4294901760
  %3947 = vmatpush1.msra.mxu0 %v3946
  %3948 = vmatprep.subr.mxu0 0.0
  %v3949 = vand.u32 %v29, 4294901760
  %3950 = vmatpush1.msra.mxu0 %v3949
  %3951 = vmatprep.subr.mxu0 0.0
  %v3952 = vand.u32 %v30, 4294901760
  %3953 = vmatpush1.msra.mxu0 %v3952
  %3954 = vmatprep.subr.mxu0 0.0
  %v3955 = vand.u32 %v31, 4294901760
  %3956 = vmatpush1.msra.mxu0 %v3955
  %3957 = vmatprep.subr.mxu0 0.0
  %v3958 = vand.u32 %v32, 4294901760
  %3959 = vmatpush1.msra.mxu0 %v3958
  %3960 = vmatprep.subr.mxu0 0.0
  %v3961 = vand.u32 %v33, 4294901760
  %3962 = vmatpush1.msra.mxu0 %v3961
  %3963 = vmatprep.subr.mxu0 0.0
  %v3964 = vand.u32 %v34, 4294901760
  %3965 = vmatpush1.msra.mxu0 %v3964
  %3966 = vmatprep.subr.mxu0 0.0
  %v3967 = vand.u32 %v35, 4294901760
  %3968 = vmatpush1.msra.mxu0 %v3967
  %3969 = vmatprep.subr.mxu0 0.0
  %v3970 = vand.u32 %v36, 4294901760
  %3971 = vmatpush1.msra.mxu0 %v3970
  %3972 = vmatprep.subr.mxu0 0.0
  %v3973 = vand.u32 %v37, 4294901760
  %3974 = vmatpush1.msra.mxu0 %v3973
  %3975 = vmatprep.subr.mxu0 0.0
  %v3976 = vand.u32 %v38, 4294901760
  %3977 = vmatpush1.msra.mxu0 %v3976
  %3978 = vmatprep.subr.mxu0 0.0
  %v3979 = vand.u32 %v39, 4294901760
  %3980 = vmatpush1.msra.mxu0 %v3979
  %3981 = vmatprep.subr.mxu0 0.0
  %v3982 = vand.u32 %v40, 4294901760
  %3983 = vmatpush1.msra.mxu0 %v3982
  %3984 = vmatprep.subr.mxu0 0.0
  %v3985 = vand.u32 %v41, 4294901760
  %3986 = vmatpush1.msra.mxu0 %v3985
  %3987 = vmatprep.subr.mxu0 0.0
  %v3988 = vand.u32 %v42, 4294901760
  %3989 = vmatpush1.msra.mxu0 %v3988
  %3990 = vmatprep.subr.mxu0 0.0
  %v3991 = vand.u32 %v43, 4294901760
  %3992 = vmatpush1.msra.mxu0 %v3991
  %3993 = vmatprep.subr.mxu0 0.0
  %v3994 = vand.u32 %v44, 4294901760
  %3995 = vmatpush1.msra.mxu0 %v3994
  %3996 = vmatprep.subr.mxu0 0.0
  %v3997 = vand.u32 %v45, 4294901760
  %3998 = vmatpush1.msra.mxu0 %v3997
  %3999 = vmatprep.subr.mxu0 0.0
  %v4000 = vand.u32 %v46, 4294901760
  %4001 = vmatpush1.msra.mxu0 %v4000
  %4002 = vmatprep.subr.mxu0 0.0
  %v4003 = vand.u32 %v47, 4294901760
  %4004 = vmatpush1.msra.mxu0 %v4003
  %4005 = vmatprep.subr.mxu0 0.0
  %v4006 = vand.u32 %v48, 4294901760
  %4007 = vmatpush1.msra.mxu0 %v4006
  %4008 = vmatprep.subr.mxu0 0.0
  %v4009 = vand.u32 %v49, 4294901760
  %4010 = vmatpush1.msra.mxu0 %v4009
  %4011 = vmatprep.subr.mxu0 0.0
  %v4012 = vand.u32 %v50, 4294901760
  %4013 = vmatpush1.msra.mxu0 %v4012
  %4014 = vmatprep.subr.mxu0 0.0
  %v4015 = vand.u32 %v51, 4294901760
  %4016 = vmatpush1.msra.mxu0 %v4015
  %4017 = vmatprep.subr.mxu0 0.0
  %v4018 = vand.u32 %v52, 4294901760
  %4019 = vmatpush1.msra.mxu0 %v4018
  %4020 = vmatprep.subr.mxu0 0.0
  %v4021 = vand.u32 %v53, 4294901760
  %4022 = vmatpush1.msra.mxu0 %v4021
  %4023 = vmatprep.subr.mxu0 0.0
  %v4024 = vand.u32 %v54, 4294901760
  %4025 = vmatpush1.msra.mxu0 %v4024
  %4026 = vmatprep.subr.mxu0 0.0
  %v4027 = vand.u32 %v55, 4294901760
  %4028 = vmatpush1.msra.mxu0 %v4027
  %4029 = vmatprep.subr.mxu0 0.0
  %v4030 = vand.u32 %v56, 4294901760
  %4031 = vmatpush1.msra.mxu0 %v4030
  %v4032 = vand.u32 %v3932, 4294901760
  %v4033 = vsub.f32 %v3932, %v4032
  %v4034 = vand.u32 %v4033, 4294901760
  %v4035 = vsub.f32 %v4033, %v4034
  %v4036 = vand.u32 %v4035, 4294901760
  %4037 = vmatprep.mubr.f32.mxu0 %v4036
  %v4038 = vand.u32 %v3931, 4294901760
  %v4039 = vsub.f32 %v3931, %v4038
  %v4040 = vand.u32 %v4039, 4294901760
  %v4041 = vsub.f32 %v4039, %v4040
  %v4042 = vand.u32 %v4041, 4294901760
  %4043 = vmatmul.mubr.f32.gmra.mrb[0].mxu0 %v4042
  %v4044 = vpop.f32.mrb[0].mxu0
  %v4045 = vadd.f32 0.0, %v4044
  %v4046 = vpop.f32.mrb[0].mxu0
  %4047 = vdwg.mxu0
  %4048 = vmatprep.subr.mxu0 0.0
  %v4049 = vand.u32 %v25, 4294901760
  %v4050 = vsub.f32 %v25, %v4049
  %v4051 = vand.u32 %v4050, 4294901760
  %v4052 = vsub.f32 %v4050, %v4051
  %v4053 = vand.u32 %v4052, 4294901760
  %4054 = vmatpush1.msra.mxu0 %v4053
  %4055 = vmatprep.subr.mxu0 0.0
  %v4056 = vand.u32 %v26, 4294901760
  %v4057 = vsub.f32 %v26, %v4056
  %v4058 = vand.u32 %v4057, 4294901760
  %v4059 = vsub.f32 %v4057, %v4058
  %v4060 = vand.u32 %v4059, 4294901760
  %4061 = vmatpush1.msra.mxu0 %v4060
  %4062 = vmatprep.subr.mxu0 0.0
  %v4063 = vand.u32 %v27, 4294901760
  %v4064 = vsub.f32 %v27, %v4063
  %v4065 = vand.u32 %v4064, 4294901760
  %v4066 = vsub.f32 %v4064, %v4065
  %v4067 = vand.u32 %v4066, 4294901760
  %4068 = vmatpush1.msra.mxu0 %v4067
  %4069 = vmatprep.subr.mxu0 0.0
  %v4070 = vand.u32 %v28, 4294901760
  %v4071 = vsub.f32 %v28, %v4070
  %v4072 = vand.u32 %v4071, 4294901760
  %v4073 = vsub.f32 %v4071, %v4072
  %v4074 = vand.u32 %v4073, 4294901760
  %4075 = vmatpush1.msra.mxu0 %v4074
  %4076 = vmatprep.subr.mxu0 0.0
  %v4077 = vand.u32 %v29, 4294901760
  %v4078 = vsub.f32 %v29, %v4077
  %v4079 = vand.u32 %v4078, 4294901760
  %v4080 = vsub.f32 %v4078, %v4079
  %v4081 = vand.u32 %v4080, 4294901760
  %4082 = vmatpush1.msra.mxu0 %v4081
  %4083 = vmatprep.subr.mxu0 0.0
  %v4084 = vand.u32 %v30, 4294901760
  %v4085 = vsub.f32 %v30, %v4084
  %v4086 = vand.u32 %v4085, 4294901760
  %v4087 = vsub.f32 %v4085, %v4086
  %v4088 = vand.u32 %v4087, 4294901760
  %4089 = vmatpush1.msra.mxu0 %v4088
  %4090 = vmatprep.subr.mxu0 0.0
  %v4091 = vand.u32 %v31, 4294901760
  %v4092 = vsub.f32 %v31, %v4091
  %v4093 = vand.u32 %v4092, 4294901760
  %v4094 = vsub.f32 %v4092, %v4093
  %v4095 = vand.u32 %v4094, 4294901760
  %4096 = vmatpush1.msra.mxu0 %v4095
  %4097 = vmatprep.subr.mxu0 0.0
  %v4098 = vand.u32 %v32, 4294901760
  %v4099 = vsub.f32 %v32, %v4098
  %v4100 = vand.u32 %v4099, 4294901760
  %v4101 = vsub.f32 %v4099, %v4100
  %v4102 = vand.u32 %v4101, 4294901760
  %4103 = vmatpush1.msra.mxu0 %v4102
  %4104 = vmatprep.subr.mxu0 0.0
  %v4105 = vand.u32 %v33, 4294901760
  %v4106 = vsub.f32 %v33, %v4105
  %v4107 = vand.u32 %v4106, 4294901760
  %v4108 = vsub.f32 %v4106, %v4107
  %v4109 = vand.u32 %v4108, 4294901760
  %4110 = vmatpush1.msra.mxu0 %v4109
  %4111 = vmatprep.subr.mxu0 0.0
  %v4112 = vand.u32 %v34, 4294901760
  %v4113 = vsub.f32 %v34, %v4112
  %v4114 = vand.u32 %v4113, 4294901760
  %v4115 = vsub.f32 %v4113, %v4114
  %v4116 = vand.u32 %v4115, 4294901760
  %4117 = vmatpush1.msra.mxu0 %v4116
  %4118 = vmatprep.subr.mxu0 0.0
  %v4119 = vand.u32 %v35, 4294901760
  %v4120 = vsub.f32 %v35, %v4119
  %v4121 = vand.u32 %v4120, 4294901760
  %v4122 = vsub.f32 %v4120, %v4121
  %v4123 = vand.u32 %v4122, 4294901760
  %4124 = vmatpush1.msra.mxu0 %v4123
  %4125 = vmatprep.subr.mxu0 0.0
  %v4126 = vand.u32 %v36, 4294901760
  %v4127 = vsub.f32 %v36, %v4126
  %v4128 = vand.u32 %v4127, 4294901760
  %v4129 = vsub.f32 %v4127, %v4128
  %v4130 = vand.u32 %v4129, 4294901760
  %4131 = vmatpush1.msra.mxu0 %v4130
  %4132 = vmatprep.subr.mxu0 0.0
  %v4133 = vand.u32 %v37, 4294901760
  %v4134 = vsub.f32 %v37, %v4133
  %v4135 = vand.u32 %v4134, 4294901760
  %v4136 = vsub.f32 %v4134, %v4135
  %v4137 = vand.u32 %v4136, 4294901760
  %4138 = vmatpush1.msra.mxu0 %v4137
  %4139 = vmatprep.subr.mxu0 0.0
  %v4140 = vand.u32 %v38, 4294901760
  %v4141 = vsub.f32 %v38, %v4140
  %v4142 = vand.u32 %v4141, 4294901760
  %v4143 = vsub.f32 %v4141, %v4142
  %v4144 = vand.u32 %v4143, 4294901760
  %4145 = vmatpush1.msra.mxu0 %v4144
  %4146 = vmatprep.subr.mxu0 0.0
  %v4147 = vand.u32 %v39, 4294901760
  %v4148 = vsub.f32 %v39, %v4147
  %v4149 = vand.u32 %v4148, 4294901760
  %v4150 = vsub.f32 %v4148, %v4149
  %v4151 = vand.u32 %v4150, 4294901760
  %4152 = vmatpush1.msra.mxu0 %v4151
  %4153 = vmatprep.subr.mxu0 0.0
  %v4154 = vand.u32 %v40, 4294901760
  %v4155 = vsub.f32 %v40, %v4154
  %v4156 = vand.u32 %v4155, 4294901760
  %v4157 = vsub.f32 %v4155, %v4156
  %v4158 = vand.u32 %v4157, 4294901760
  %4159 = vmatpush1.msra.mxu0 %v4158
  %4160 = vmatprep.subr.mxu0 0.0
  %v4161 = vand.u32 %v41, 4294901760
  %v4162 = vsub.f32 %v41, %v4161
  %v4163 = vand.u32 %v4162, 4294901760
  %v4164 = vsub.f32 %v4162, %v4163
  %v4165 = vand.u32 %v4164, 4294901760
  %4166 = vmatpush1.msra.mxu0 %v4165
  %4167 = vmatprep.subr.mxu0 0.0
  %v4168 = vand.u32 %v42, 4294901760
  %v4169 = vsub.f32 %v42, %v4168
  %v4170 = vand.u32 %v4169, 4294901760
  %v4171 = vsub.f32 %v4169, %v4170
  %v4172 = vand.u32 %v4171, 4294901760
  %4173 = vmatpush1.msra.mxu0 %v4172
  %4174 = vmatprep.subr.mxu0 0.0
  %v4175 = vand.u32 %v43, 4294901760
  %v4176 = vsub.f32 %v43, %v4175
  %v4177 = vand.u32 %v4176, 4294901760
  %v4178 = vsub.f32 %v4176, %v4177
  %v4179 = vand.u32 %v4178, 4294901760
  %4180 = vmatpush1.msra.mxu0 %v4179
  %4181 = vmatprep.subr.mxu0 0.0
  %v4182 = vand.u32 %v44, 4294901760
  %v4183 = vsub.f32 %v44, %v4182
  %v4184 = vand.u32 %v4183, 4294901760
  %v4185 = vsub.f32 %v4183, %v4184
  %v4186 = vand.u32 %v4185, 4294901760
  %4187 = vmatpush1.msra.mxu0 %v4186
  %4188 = vmatprep.subr.mxu0 0.0
  %v4189 = vand.u32 %v45, 4294901760
  %v4190 = vsub.f32 %v45, %v4189
  %v4191 = vand.u32 %v4190, 4294901760
  %v4192 = vsub.f32 %v4190, %v4191
  %v4193 = vand.u32 %v4192, 4294901760
  %4194 = vmatpush1.msra.mxu0 %v4193
  %4195 = vmatprep.subr.mxu0 0.0
  %v4196 = vand.u32 %v46, 4294901760
  %v4197 = vsub.f32 %v46, %v4196
  %v4198 = vand.u32 %v4197, 4294901760
  %v4199 = vsub.f32 %v4197, %v4198
  %v4200 = vand.u32 %v4199, 4294901760
  %4201 = vmatpush1.msra.mxu0 %v4200
  %4202 = vmatprep.subr.mxu0 0.0
  %v4203 = vand.u32 %v47, 4294901760
  %v4204 = vsub.f32 %v47, %v4203
  %v4205 = vand.u32 %v4204, 4294901760
  %v4206 = vsub.f32 %v4204, %v4205
  %v4207 = vand.u32 %v4206, 4294901760
  %4208 = vmatpush1.msra.mxu0 %v4207
  %4209 = vmatprep.subr.mxu0 0.0
  %v4210 = vand.u32 %v48, 4294901760
  %v4211 = vsub.f32 %v48, %v4210
  %v4212 = vand.u32 %v4211, 4294901760
  %v4213 = vsub.f32 %v4211, %v4212
  %v4214 = vand.u32 %v4213, 4294901760
  %4215 = vmatpush1.msra.mxu0 %v4214
  %4216 = vmatprep.subr.mxu0 0.0
  %v4217 = vand.u32 %v49, 4294901760
  %v4218 = vsub.f32 %v49, %v4217
  %v4219 = vand.u32 %v4218, 4294901760
  %v4220 = vsub.f32 %v4218, %v4219
  %v4221 = vand.u32 %v4220, 4294901760
  %4222 = vmatpush1.msra.mxu0 %v4221
  %4223 = vmatprep.subr.mxu0 0.0
  %v4224 = vand.u32 %v50, 4294901760
  %v4225 = vsub.f32 %v50, %v4224
  %v4226 = vand.u32 %v4225, 4294901760
  %v4227 = vsub.f32 %v4225, %v4226
  %v4228 = vand.u32 %v4227, 4294901760
  %4229 = vmatpush1.msra.mxu0 %v4228
  %4230 = vmatprep.subr.mxu0 0.0
  %v4231 = vand.u32 %v51, 4294901760
  %v4232 = vsub.f32 %v51, %v4231
  %v4233 = vand.u32 %v4232, 4294901760
  %v4234 = vsub.f32 %v4232, %v4233
  %v4235 = vand.u32 %v4234, 4294901760
  %4236 = vmatpush1.msra.mxu0 %v4235
  %4237 = vmatprep.subr.mxu0 0.0
  %v4238 = vand.u32 %v52, 4294901760
  %v4239 = vsub.f32 %v52, %v4238
  %v4240 = vand.u32 %v4239, 4294901760
  %v4241 = vsub.f32 %v4239, %v4240
  %v4242 = vand.u32 %v4241, 4294901760
  %4243 = vmatpush1.msra.mxu0 %v4242
  %4244 = vmatprep.subr.mxu0 0.0
  %v4245 = vand.u32 %v53, 4294901760
  %v4246 = vsub.f32 %v53, %v4245
  %v4247 = vand.u32 %v4246, 4294901760
  %v4248 = vsub.f32 %v4246, %v4247
  %v4249 = vand.u32 %v4248, 4294901760
  %4250 = vmatpush1.msra.mxu0 %v4249
  %4251 = vmatprep.subr.mxu0 0.0
  %v4252 = vand.u32 %v54, 4294901760
  %v4253 = vsub.f32 %v54, %v4252
  %v4254 = vand.u32 %v4253, 4294901760
  %v4255 = vsub.f32 %v4253, %v4254
  %v4256 = vand.u32 %v4255, 4294901760
  %4257 = vmatpush1.msra.mxu0 %v4256
  %4258 = vmatprep.subr.mxu0 0.0
  %v4259 = vand.u32 %v55, 4294901760
  %v4260 = vsub.f32 %v55, %v4259
  %v4261 = vand.u32 %v4260, 4294901760
  %v4262 = vsub.f32 %v4260, %v4261
  %v4263 = vand.u32 %v4262, 4294901760
  %4264 = vmatpush1.msra.mxu0 %v4263
  %4265 = vmatprep.subr.mxu0 0.0
  %v4266 = vand.u32 %v56, 4294901760
  %v4267 = vsub.f32 %v56, %v4266
  %v4268 = vand.u32 %v4267, 4294901760
  %v4269 = vsub.f32 %v4267, %v4268
  %v4270 = vand.u32 %v4269, 4294901760
  %4271 = vmatpush1.msra.mxu0 %v4270
  %v4272 = vand.u32 %v3932, 4294901760
  %4273 = vmatprep.mubr.f32.mxu0 %v4272
  %v4274 = vand.u32 %v3931, 4294901760
  %4275 = vmatmul.mubr.f32.gmra.mrb[0].mxu0 %v4274
  %v4276 = vpop.f32.mrb[0].mxu0
  %v4277 = vadd.f32 %v4045, %v4276
  %v4278 = vpop.f32.mrb[0].mxu0
  %4279 = vdwg.mxu0
  %4280 = vmatprep.subr.mxu0 0.0
  %v4281 = vand.u32 %v25, 4294901760
  %v4282 = vsub.f32 %v25, %v4281
  %4283 = vmatpush1.msra.mxu0 %v4282
  %4284 = vmatprep.subr.mxu0 0.0
  %v4285 = vand.u32 %v26, 4294901760
  %v4286 = vsub.f32 %v26, %v4285
  %4287 = vmatpush1.msra.mxu0 %v4286
  %4288 = vmatprep.subr.mxu0 0.0
  %v4289 = vand.u32 %v27, 4294901760
  %v4290 = vsub.f32 %v27, %v4289
  %4291 = vmatpush1.msra.mxu0 %v4290
  %4292 = vmatprep.subr.mxu0 0.0
  %v4293 = vand.u32 %v28, 4294901760
  %v4294 = vsub.f32 %v28, %v4293
  %4295 = vmatpush1.msra.mxu0 %v4294
  %4296 = vmatprep.subr.mxu0 0.0
  %v4297 = vand.u32 %v29, 4294901760
  %v4298 = vsub.f32 %v29, %v4297
  %4299 = vmatpush1.msra.mxu0 %v4298
  %4300 = vmatprep.subr.mxu0 0.0
  %v4301 = vand.u32 %v30, 4294901760
  %v4302 = vsub.f32 %v30, %v4301
  %4303 = vmatpush1.msra.mxu0 %v4302
  %4304 = vmatprep.subr.mxu0 0.0
  %v4305 = vand.u32 %v31, 4294901760
  %v4306 = vsub.f32 %v31, %v4305
  %4307 = vmatpush1.msra.mxu0 %v4306
  %4308 = vmatprep.subr.mxu0 0.0
  %v4309 = vand.u32 %v32, 4294901760
  %v4310 = vsub.f32 %v32, %v4309
  %4311 = vmatpush1.msra.mxu0 %v4310
  %4312 = vmatprep.subr.mxu0 0.0
  %v4313 = vand.u32 %v33, 4294901760
  %v4314 = vsub.f32 %v33, %v4313
  %4315 = vmatpush1.msra.mxu0 %v4314
  %4316 = vmatprep.subr.mxu0 0.0
  %v4317 = vand.u32 %v34, 4294901760
  %v4318 = vsub.f32 %v34, %v4317
  %4319 = vmatpush1.msra.mxu0 %v4318
  %4320 = vmatprep.subr.mxu0 0.0
  %v4321 = vand.u32 %v35, 4294901760
  %v4322 = vsub.f32 %v35, %v4321
  %4323 = vmatpush1.msra.mxu0 %v4322
  %4324 = vmatprep.subr.mxu0 0.0
  %v4325 = vand.u32 %v36, 4294901760
  %v4326 = vsub.f32 %v36, %v4325
  %4327 = vmatpush1.msra.mxu0 %v4326
  %4328 = vmatprep.subr.mxu0 0.0
  %v4329 = vand.u32 %v37, 4294901760
  %v4330 = vsub.f32 %v37, %v4329
  %4331 = vmatpush1.msra.mxu0 %v4330
  %4332 = vmatprep.subr.mxu0 0.0
  %v4333 = vand.u32 %v38, 4294901760
  %v4334 = vsub.f32 %v38, %v4333
  %4335 = vmatpush1.msra.mxu0 %v4334
  %4336 = vmatprep.subr.mxu0 0.0
  %v4337 = vand.u32 %v39, 4294901760
  %v4338 = vsub.f32 %v39, %v4337
  %4339 = vmatpush1.msra.mxu0 %v4338
  %4340 = vmatprep.subr.mxu0 0.0
  %v4341 = vand.u32 %v40, 4294901760
  %v4342 = vsub.f32 %v40, %v4341
  %4343 = vmatpush1.msra.mxu0 %v4342
  %4344 = vmatprep.subr.mxu0 0.0
  %v4345 = vand.u32 %v41, 4294901760
  %v4346 = vsub.f32 %v41, %v4345
  %4347 = vmatpush1.msra.mxu0 %v4346
  %4348 = vmatprep.subr.mxu0 0.0
  %v4349 = vand.u32 %v42, 4294901760
  %v4350 = vsub.f32 %v42, %v4349
  %4351 = vmatpush1.msra.mxu0 %v4350
  %4352 = vmatprep.subr.mxu0 0.0
  %v4353 = vand.u32 %v43, 4294901760
  %v4354 = vsub.f32 %v43, %v4353
  %4355 = vmatpush1.msra.mxu0 %v4354
  %4356 = vmatprep.subr.mxu0 0.0
  %v4357 = vand.u32 %v44, 4294901760
  %v4358 = vsub.f32 %v44, %v4357
  %4359 = vmatpush1.msra.mxu0 %v4358
  %4360 = vmatprep.subr.mxu0 0.0
  %v4361 = vand.u32 %v45, 4294901760
  %v4362 = vsub.f32 %v45, %v4361
  %4363 = vmatpush1.msra.mxu0 %v4362
  %4364 = vmatprep.subr.mxu0 0.0
  %v4365 = vand.u32 %v46, 4294901760
  %v4366 = vsub.f32 %v46, %v4365
  %4367 = vmatpush1.msra.mxu0 %v4366
  %4368 = vmatprep.subr.mxu0 0.0
  %v4369 = vand.u32 %v47, 4294901760
  %v4370 = vsub.f32 %v47, %v4369
  %4371 = vmatpush1.msra.mxu0 %v4370
  %4372 = vmatprep.subr.mxu0 0.0
  %v4373 = vand.u32 %v48, 4294901760
  %v4374 = vsub.f32 %v48, %v4373
  %4375 = vmatpush1.msra.mxu0 %v4374
  %4376 = vmatprep.subr.mxu0 0.0
  %v4377 = vand.u32 %v49, 4294901760
  %v4378 = vsub.f32 %v49, %v4377
  %4379 = vmatpush1.msra.mxu0 %v4378
  %4380 = vmatprep.subr.mxu0 0.0
  %v4381 = vand.u32 %v50, 4294901760
  %v4382 = vsub.f32 %v50, %v4381
  %4383 = vmatpush1.msra.mxu0 %v4382
  %4384 = vmatprep.subr.mxu0 0.0
  %v4385 = vand.u32 %v51, 4294901760
  %v4386 = vsub.f32 %v51, %v4385
  %4387 = vmatpush1.msra.mxu0 %v4386
  %4388 = vmatprep.subr.mxu0 0.0
  %v4389 = vand.u32 %v52, 4294901760
  %v4390 = vsub.f32 %v52, %v4389
  %4391 = vmatpush1.msra.mxu0 %v4390
  %4392 = vmatprep.subr.mxu0 0.0
  %v4393 = vand.u32 %v53, 4294901760
  %v4394 = vsub.f32 %v53, %v4393
  %4395 = vmatpush1.msra.mxu0 %v4394
  %4396 = vmatprep.subr.mxu0 0.0
  %v4397 = vand.u32 %v54, 4294901760
  %v4398 = vsub.f32 %v54, %v4397
  %4399 = vmatpush1.msra.mxu0 %v4398
  %4400 = vmatprep.subr.mxu0 0.0
  %v4401 = vand.u32 %v55, 4294901760
  %v4402 = vsub.f32 %v55, %v4401
  %4403 = vmatpush1.msra.mxu0 %v4402
  %4404 = vmatprep.subr.mxu0 0.0
  %v4405 = vand.u32 %v56, 4294901760
  %v4406 = vsub.f32 %v56, %v4405
  %4407 = vmatpush1.msra.mxu0 %v4406
  %v4408 = vand.u32 %v3932, 4294901760
  %v4409 = vsub.f32 %v3932, %v4408
  %4410 = vmatprep.mubr.f32.mxu0 %v4409
  %v4411 = vand.u32 %v3931, 4294901760
  %v4412 = vsub.f32 %v3931, %v4411
  %4413 = vmatmul.mubr.f32.gmra.mrb[0].mxu0 %v4412
  %v4414 = vpop.f32.mrb[0].mxu0
  %v4415 = vadd.f32 %v4277, %v4414
  %v4416 = vpop.f32.mrb[0].mxu0
  %4417 = vdwg.mxu0
  %4418 = vmatprep.subr.mxu0 0.0
  %v4419 = vand.u32 %v25, 4294901760
  %4420 = vmatpush1.msra.mxu0 %v4419
  %4421 = vmatprep.subr.mxu0 0.0
  %v4422 = vand.u32 %v26, 4294901760
  %4423 = vmatpush1.msra.mxu0 %v4422
  %4424 = vmatprep.subr.mxu0 0.0
  %v4425 = vand.u32 %v27, 4294901760
  %4426 = vmatpush1.msra.mxu0 %v4425
  %4427 = vmatprep.subr.mxu0 0.0
  %v4428 = vand.u32 %v28, 4294901760
  %4429 = vmatpush1.msra.mxu0 %v4428
  %4430 = vmatprep.subr.mxu0 0.0
  %v4431 = vand.u32 %v29, 4294901760
  %4432 = vmatpush1.msra.mxu0 %v4431
  %4433 = vmatprep.subr.mxu0 0.0
  %v4434 = vand.u32 %v30, 4294901760
  %4435 = vmatpush1.msra.mxu0 %v4434
  %4436 = vmatprep.subr.mxu0 0.0
  %v4437 = vand.u32 %v31, 4294901760
  %4438 = vmatpush1.msra.mxu0 %v4437
  %4439 = vmatprep.subr.mxu0 0.0
  %v4440 = vand.u32 %v32, 4294901760
  %4441 = vmatpush1.msra.mxu0 %v4440
  %4442 = vmatprep.subr.mxu0 0.0
  %v4443 = vand.u32 %v33, 4294901760
  %4444 = vmatpush1.msra.mxu0 %v4443
  %4445 = vmatprep.subr.mxu0 0.0
  %v4446 = vand.u32 %v34, 4294901760
  %4447 = vmatpush1.msra.mxu0 %v4446
  %4448 = vmatprep.subr.mxu0 0.0
  %v4449 = vand.u32 %v35, 4294901760
  %4450 = vmatpush1.msra.mxu0 %v4449
  %4451 = vmatprep.subr.mxu0 0.0
  %v4452 = vand.u32 %v36, 4294901760
  %4453 = vmatpush1.msra.mxu0 %v4452
  %4454 = vmatprep.subr.mxu0 0.0
  %v4455 = vand.u32 %v37, 4294901760
  %4456 = vmatpush1.msra.mxu0 %v4455
  %4457 = vmatprep.subr.mxu0 0.0
  %v4458 = vand.u32 %v38, 4294901760
  %4459 = vmatpush1.msra.mxu0 %v4458
  %4460 = vmatprep.subr.mxu0 0.0
  %v4461 = vand.u32 %v39, 4294901760
  %4462 = vmatpush1.msra.mxu0 %v4461
  %4463 = vmatprep.subr.mxu0 0.0
  %v4464 = vand.u32 %v40, 4294901760
  %4465 = vmatpush1.msra.mxu0 %v4464
  %4466 = vmatprep.subr.mxu0 0.0
  %v4467 = vand.u32 %v41, 4294901760
  %4468 = vmatpush1.msra.mxu0 %v4467
  %4469 = vmatprep.subr.mxu0 0.0
  %v4470 = vand.u32 %v42, 4294901760
  %4471 = vmatpush1.msra.mxu0 %v4470
  %4472 = vmatprep.subr.mxu0 0.0
  %v4473 = vand.u32 %v43, 4294901760
  %4474 = vmatpush1.msra.mxu0 %v4473
  %4475 = vmatprep.subr.mxu0 0.0
  %v4476 = vand.u32 %v44, 4294901760
  %4477 = vmatpush1.msra.mxu0 %v4476
  %4478 = vmatprep.subr.mxu0 0.0
  %v4479 = vand.u32 %v45, 4294901760
  %4480 = vmatpush1.msra.mxu0 %v4479
  %4481 = vmatprep.subr.mxu0 0.0
  %v4482 = vand.u32 %v46, 4294901760
  %4483 = vmatpush1.msra.mxu0 %v4482
  %4484 = vmatprep.subr.mxu0 0.0
  %v4485 = vand.u32 %v47, 4294901760
  %4486 = vmatpush1.msra.mxu0 %v4485
  %4487 = vmatprep.subr.mxu0 0.0
  %v4488 = vand.u32 %v48, 4294901760
  %4489 = vmatpush1.msra.mxu0 %v4488
  %4490 = vmatprep.subr.mxu0 0.0
  %v4491 = vand.u32 %v49, 4294901760
  %4492 = vmatpush1.msra.mxu0 %v4491
  %4493 = vmatprep.subr.mxu0 0.0
  %v4494 = vand.u32 %v50, 4294901760
  %4495 = vmatpush1.msra.mxu0 %v4494
  %4496 = vmatprep.subr.mxu0 0.0
  %v4497 = vand.u32 %v51, 4294901760
  %4498 = vmatpush1.msra.mxu0 %v4497
  %4499 = vmatprep.subr.mxu0 0.0
  %v4500 = vand.u32 %v52, 4294901760
  %4501 = vmatpush1.msra.mxu0 %v4500
  %4502 = vmatprep.subr.mxu0 0.0
  %v4503 = vand.u32 %v53, 4294901760
  %4504 = vmatpush1.msra.mxu0 %v4503
  %4505 = vmatprep.subr.mxu0 0.0
  %v4506 = vand.u32 %v54, 4294901760
  %4507 = vmatpush1.msra.mxu0 %v4506
  %4508 = vmatprep.subr.mxu0 0.0
  %v4509 = vand.u32 %v55, 4294901760
  %4510 = vmatpush1.msra.mxu0 %v4509
  %4511 = vmatprep.subr.mxu0 0.0
  %v4512 = vand.u32 %v56, 4294901760
  %4513 = vmatpush1.msra.mxu0 %v4512
  %v4514 = vand.u32 %v3932, 4294901760
  %v4515 = vsub.f32 %v3932, %v4514
  %v4516 = vand.u32 %v4515, 4294901760
  %4517 = vmatprep.mubr.f32.mxu0 %v4516
  %v4518 = vand.u32 %v3931, 4294901760
  %v4519 = vsub.f32 %v3931, %v4518
  %v4520 = vand.u32 %v4519, 4294901760
  %4521 = vmatmul.mubr.f32.gmra.mrb[0].mxu0 %v4520
  %v4522 = vpop.f32.mrb[0].mxu0
  %v4523 = vadd.f32 %v4415, %v4522
  %v4524 = vpop.f32.mrb[0].mxu0
  %4525 = vdwg.mxu0
  %4526 = vmatprep.subr.mxu0 0.0
  %v4527 = vand.u32 %v25, 4294901760
  %v4528 = vsub.f32 %v25, %v4527
  %v4529 = vand.u32 %v4528, 4294901760
  %4530 = vmatpush1.msra.mxu0 %v4529
  %4531 = vmatprep.subr.mxu0 0.0
  %v4532 = vand.u32 %v26, 4294901760
  %v4533 = vsub.f32 %v26, %v4532
  %v4534 = vand.u32 %v4533, 4294901760
  %4535 = vmatpush1.msra.mxu0 %v4534
  %4536 = vmatprep.subr.mxu0 0.0
  %v4537 = vand.u32 %v27, 4294901760
  %v4538 = vsub.f32 %v27, %v4537
  %v4539 = vand.u32 %v4538, 4294901760
  %4540 = vmatpush1.msra.mxu0 %v4539
  %4541 = vmatprep.subr.mxu0 0.0
  %v4542 = vand.u32 %v28, 4294901760
  %v4543 = vsub.f32 %v28, %v4542
  %v4544 = vand.u32 %v4543, 4294901760
  %4545 = vmatpush1.msra.mxu0 %v4544
  %4546 = vmatprep.subr.mxu0 0.0
  %v4547 = vand.u32 %v29, 4294901760
  %v4548 = vsub.f32 %v29, %v4547
  %v4549 = vand.u32 %v4548, 4294901760
  %4550 = vmatpush1.msra.mxu0 %v4549
  %4551 = vmatprep.subr.mxu0 0.0
  %v4552 = vand.u32 %v30, 4294901760
  %v4553 = vsub.f32 %v30, %v4552
  %v4554 = vand.u32 %v4553, 4294901760
  %4555 = vmatpush1.msra.mxu0 %v4554
  %4556 = vmatprep.subr.mxu0 0.0
  %v4557 = vand.u32 %v31, 4294901760
  %v4558 = vsub.f32 %v31, %v4557
  %v4559 = vand.u32 %v4558, 4294901760
  %4560 = vmatpush1.msra.mxu0 %v4559
  %4561 = vmatprep.subr.mxu0 0.0
  %v4562 = vand.u32 %v32, 4294901760
  %v4563 = vsub.f32 %v32, %v4562
  %v4564 = vand.u32 %v4563, 4294901760
  %4565 = vmatpush1.msra.mxu0 %v4564
  %4566 = vmatprep.subr.mxu0 0.0
  %v4567 = vand.u32 %v33, 4294901760
  %v4568 = vsub.f32 %v33, %v4567
  %v4569 = vand.u32 %v4568, 4294901760
  %4570 = vmatpush1.msra.mxu0 %v4569
  %4571 = vmatprep.subr.mxu0 0.0
  %v4572 = vand.u32 %v34, 4294901760
  %v4573 = vsub.f32 %v34, %v4572
  %v4574 = vand.u32 %v4573, 4294901760
  %4575 = vmatpush1.msra.mxu0 %v4574
  %4576 = vmatprep.subr.mxu0 0.0
  %v4577 = vand.u32 %v35, 4294901760
  %v4578 = vsub.f32 %v35, %v4577
  %v4579 = vand.u32 %v4578, 4294901760
  %4580 = vmatpush1.msra.mxu0 %v4579
  %4581 = vmatprep.subr.mxu0 0.0
  %v4582 = vand.u32 %v36, 4294901760
  %v4583 = vsub.f32 %v36, %v4582
  %v4584 = vand.u32 %v4583, 4294901760
  %4585 = vmatpush1.msra.mxu0 %v4584
  %4586 = vmatprep.subr.mxu0 0.0
  %v4587 = vand.u32 %v37, 4294901760
  %v4588 = vsub.f32 %v37, %v4587
  %v4589 = vand.u32 %v4588, 4294901760
  %4590 = vmatpush1.msra.mxu0 %v4589
  %4591 = vmatprep.subr.mxu0 0.0
  %v4592 = vand.u32 %v38, 4294901760
  %v4593 = vsub.f32 %v38, %v4592
  %v4594 = vand.u32 %v4593, 4294901760
  %4595 = vmatpush1.msra.mxu0 %v4594
  %4596 = vmatprep.subr.mxu0 0.0
  %v4597 = vand.u32 %v39, 4294901760
  %v4598 = vsub.f32 %v39, %v4597
  %v4599 = vand.u32 %v4598, 4294901760
  %4600 = vmatpush1.msra.mxu0 %v4599
  %4601 = vmatprep.subr.mxu0 0.0
  %v4602 = vand.u32 %v40, 4294901760
  %v4603 = vsub.f32 %v40, %v4602
  %v4604 = vand.u32 %v4603, 4294901760
  %4605 = vmatpush1.msra.mxu0 %v4604
  %4606 = vmatprep.subr.mxu0 0.0
  %v4607 = vand.u32 %v41, 4294901760
  %v4608 = vsub.f32 %v41, %v4607
  %v4609 = vand.u32 %v4608, 4294901760
  %4610 = vmatpush1.msra.mxu0 %v4609
  %4611 = vmatprep.subr.mxu0 0.0
  %v4612 = vand.u32 %v42, 4294901760
  %v4613 = vsub.f32 %v42, %v4612
  %v4614 = vand.u32 %v4613, 4294901760
  %4615 = vmatpush1.msra.mxu0 %v4614
  %4616 = vmatprep.subr.mxu0 0.0
  %v4617 = vand.u32 %v43, 4294901760
  %v4618 = vsub.f32 %v43, %v4617
  %v4619 = vand.u32 %v4618, 4294901760
  %4620 = vmatpush1.msra.mxu0 %v4619
  %4621 = vmatprep.subr.mxu0 0.0
  %v4622 = vand.u32 %v44, 4294901760
  %v4623 = vsub.f32 %v44, %v4622
  %v4624 = vand.u32 %v4623, 4294901760
  %4625 = vmatpush1.msra.mxu0 %v4624
  %4626 = vmatprep.subr.mxu0 0.0
  %v4627 = vand.u32 %v45, 4294901760
  %v4628 = vsub.f32 %v45, %v4627
  %v4629 = vand.u32 %v4628, 4294901760
  %4630 = vmatpush1.msra.mxu0 %v4629
  %4631 = vmatprep.subr.mxu0 0.0
  %v4632 = vand.u32 %v46, 4294901760
  %v4633 = vsub.f32 %v46, %v4632
  %v4634 = vand.u32 %v4633, 4294901760
  %4635 = vmatpush1.msra.mxu0 %v4634
  %4636 = vmatprep.subr.mxu0 0.0
  %v4637 = vand.u32 %v47, 4294901760
  %v4638 = vsub.f32 %v47, %v4637
  %v4639 = vand.u32 %v4638, 4294901760
  %4640 = vmatpush1.msra.mxu0 %v4639
  %4641 = vmatprep.subr.mxu0 0.0
  %v4642 = vand.u32 %v48, 4294901760
  %v4643 = vsub.f32 %v48, %v4642
  %v4644 = vand.u32 %v4643, 4294901760
  %4645 = vmatpush1.msra.mxu0 %v4644
  %4646 = vmatprep.subr.mxu0 0.0
  %v4647 = vand.u32 %v49, 4294901760
  %v4648 = vsub.f32 %v49, %v4647
  %v4649 = vand.u32 %v4648, 4294901760
  %4650 = vmatpush1.msra.mxu0 %v4649
  %4651 = vmatprep.subr.mxu0 0.0
  %v4652 = vand.u32 %v50, 4294901760
  %v4653 = vsub.f32 %v50, %v4652
  %v4654 = vand.u32 %v4653, 4294901760
  %4655 = vmatpush1.msra.mxu0 %v4654
  %4656 = vmatprep.subr.mxu0 0.0
  %v4657 = vand.u32 %v51, 4294901760
  %v4658 = vsub.f32 %v51, %v4657
  %v4659 = vand.u32 %v4658, 4294901760
  %4660 = vmatpush1.msra.mxu0 %v4659
  %4661 = vmatprep.subr.mxu0 0.0
  %v4662 = vand.u32 %v52, 4294901760
  %v4663 = vsub.f32 %v52, %v4662
  %v4664 = vand.u32 %v4663, 4294901760
  %4665 = vmatpush1.msra.mxu0 %v4664
  %4666 = vmatprep.subr.mxu0 0.0
  %v4667 = vand.u32 %v53, 4294901760
  %v4668 = vsub.f32 %v53, %v4667
  %v4669 = vand.u32 %v4668, 4294901760
  %4670 = vmatpush1.msra.mxu0 %v4669
  %4671 = vmatprep.subr.mxu0 0.0
  %v4672 = vand.u32 %v54, 4294901760
  %v4673 = vsub.f32 %v54, %v4672
  %v4674 = vand.u32 %v4673, 4294901760
  %4675 = vmatpush1.msra.mxu0 %v4674
  %4676 = vmatprep.subr.mxu0 0.0
  %v4677 = vand.u32 %v55, 4294901760
  %v4678 = vsub.f32 %v55, %v4677
  %v4679 = vand.u32 %v4678, 4294901760
  %4680 = vmatpush1.msra.mxu0 %v4679
  %4681 = vmatprep.subr.mxu0 0.0
  %v4682 = vand.u32 %v56, 4294901760
  %v4683 = vsub.f32 %v56, %v4682
  %v4684 = vand.u32 %v4683, 4294901760
  %4685 = vmatpush1.msra.mxu0 %v4684
  %v4686 = vand.u32 %v3932, 4294901760
  %4687 = vmatprep.mubr.f32.mxu0 %v4686
  %v4688 = vand.u32 %v3931, 4294901760
  %4689 = vmatmul.mubr.f32.gmra.mrb[0].mxu0 %v4688
  %v4690 = vpop.f32.mrb[0].mxu0
  %v4691 = vadd.f32 %v4523, %v4690
  %v4692 = vpop.f32.mrb[0].mxu0
  %4693 = vdwg.mxu0
  %4694 = vmatprep.subr.mxu0 0.0
  %v4695 = vand.u32 %v25, 4294901760
  %4696 = vmatpush1.msra.mxu0 %v4695
  %4697 = vmatprep.subr.mxu0 0.0
  %v4698 = vand.u32 %v26, 4294901760
  %4699 = vmatpush1.msra.mxu0 %v4698
  %4700 = vmatprep.subr.mxu0 0.0
  %v4701 = vand.u32 %v27, 4294901760
  %4702 = vmatpush1.msra.mxu0 %v4701
  %4703 = vmatprep.subr.mxu0 0.0
  %v4704 = vand.u32 %v28, 4294901760
  %4705 = vmatpush1.msra.mxu0 %v4704
  %4706 = vmatprep.subr.mxu0 0.0
  %v4707 = vand.u32 %v29, 4294901760
  %4708 = vmatpush1.msra.mxu0 %v4707
  %4709 = vmatprep.subr.mxu0 0.0
  %v4710 = vand.u32 %v30, 4294901760
  %4711 = vmatpush1.msra.mxu0 %v4710
  %4712 = vmatprep.subr.mxu0 0.0
  %v4713 = vand.u32 %v31, 4294901760
  %4714 = vmatpush1.msra.mxu0 %v4713
  %4715 = vmatprep.subr.mxu0 0.0
  %v4716 = vand.u32 %v32, 4294901760
  %4717 = vmatpush1.msra.mxu0 %v4716
  %4718 = vmatprep.subr.mxu0 0.0
  %v4719 = vand.u32 %v33, 4294901760
  %4720 = vmatpush1.msra.mxu0 %v4719
  %4721 = vmatprep.subr.mxu0 0.0
  %v4722 = vand.u32 %v34, 4294901760
  %4723 = vmatpush1.msra.mxu0 %v4722
  %4724 = vmatprep.subr.mxu0 0.0
  %v4725 = vand.u32 %v35, 4294901760
  %4726 = vmatpush1.msra.mxu0 %v4725
  %4727 = vmatprep.subr.mxu0 0.0
  %v4728 = vand.u32 %v36, 4294901760
  %4729 = vmatpush1.msra.mxu0 %v4728
  %4730 = vmatprep.subr.mxu0 0.0
  %v4731 = vand.u32 %v37, 4294901760
  %4732 = vmatpush1.msra.mxu0 %v4731
  %4733 = vmatprep.subr.mxu0 0.0
  %v4734 = vand.u32 %v38, 4294901760
  %4735 = vmatpush1.msra.mxu0 %v4734
  %4736 = vmatprep.subr.mxu0 0.0
  %v4737 = vand.u32 %v39, 4294901760
  %4738 = vmatpush1.msra.mxu0 %v4737
  %4739 = vmatprep.subr.mxu0 0.0
  %v4740 = vand.u32 %v40, 4294901760
  %4741 = vmatpush1.msra.mxu0 %v4740
  %4742 = vmatprep.subr.mxu0 0.0
  %v4743 = vand.u32 %v41, 4294901760
  %4744 = vmatpush1.msra.mxu0 %v4743
  %4745 = vmatprep.subr.mxu0 0.0
  %v4746 = vand.u32 %v42, 4294901760
  %4747 = vmatpush1.msra.mxu0 %v4746
  %4748 = vmatprep.subr.mxu0 0.0
  %v4749 = vand.u32 %v43, 4294901760
  %4750 = vmatpush1.msra.mxu0 %v4749
  %4751 = vmatprep.subr.mxu0 0.0
  %v4752 = vand.u32 %v44, 4294901760
  %4753 = vmatpush1.msra.mxu0 %v4752
  %4754 = vmatprep.subr.mxu0 0.0
  %v4755 = vand.u32 %v45, 4294901760
  %4756 = vmatpush1.msra.mxu0 %v4755
  %4757 = vmatprep.subr.mxu0 0.0
  %v4758 = vand.u32 %v46, 4294901760
  %4759 = vmatpush1.msra.mxu0 %v4758
  %4760 = vmatprep.subr.mxu0 0.0
  %v4761 = vand.u32 %v47, 4294901760
  %4762 = vmatpush1.msra.mxu0 %v4761
  %4763 = vmatprep.subr.mxu0 0.0
  %v4764 = vand.u32 %v48, 4294901760
  %4765 = vmatpush1.msra.mxu0 %v4764
  %4766 = vmatprep.subr.mxu0 0.0
  %v4767 = vand.u32 %v49, 4294901760
  %4768 = vmatpush1.msra.mxu0 %v4767
  %4769 = vmatprep.subr.mxu0 0.0
  %v4770 = vand.u32 %v50, 4294901760
  %4771 = vmatpush1.msra.mxu0 %v4770
  %4772 = vmatprep.subr.mxu0 0.0
  %v4773 = vand.u32 %v51, 4294901760
  %4774 = vmatpush1.msra.mxu0 %v4773
  %4775 = vmatprep.subr.mxu0 0.0
  %v4776 = vand.u32 %v52, 4294901760
  %4777 = vmatpush1.msra.mxu0 %v4776
  %4778 = vmatprep.subr.mxu0 0.0
  %v4779 = vand.u32 %v53, 4294901760
  %4780 = vmatpush1.msra.mxu0 %v4779
  %4781 = vmatprep.subr.mxu0 0.0
  %v4782 = vand.u32 %v54, 4294901760
  %4783 = vmatpush1.msra.mxu0 %v4782
  %4784 = vmatprep.subr.mxu0 0.0
  %v4785 = vand.u32 %v55, 4294901760
  %4786 = vmatpush1.msra.mxu0 %v4785
  %4787 = vmatprep.subr.mxu0 0.0
  %v4788 = vand.u32 %v56, 4294901760
  %4789 = vmatpush1.msra.mxu0 %v4788
  %v4790 = vand.u32 %v3932, 4294901760
  %4791 = vmatprep.mubr.f32.mxu0 %v4790
  %v4792 = vand.u32 %v3931, 4294901760
  %4793 = vmatmul.mubr.f32.gmra.mrb[0].mxu0 %v4792
  %v4794 = vpop.f32.mrb[0].mxu0
  %v4795 = vadd.f32 %v4691, %v4794
  %v4796 = vpop.f32.mrb[0].mxu0
  %4797 = vdwg.mxu0
  %4798 = vmatprep.subr.mxu0 0.0
  %v4799 = vand.u32 %v57, 4294901760
  %4800 = vmatpush1.msra.mxu0 %v4799
  %4801 = vmatprep.subr.mxu0 0.0
  %v4802 = vand.u32 %v58, 4294901760
  %4803 = vmatpush1.msra.mxu0 %v4802
  %4804 = vmatprep.subr.mxu0 0.0
  %v4805 = vand.u32 %v59, 4294901760
  %4806 = vmatpush1.msra.mxu0 %v4805
  %4807 = vmatprep.subr.mxu0 0.0
  %v4808 = vand.u32 %v60, 4294901760
  %4809 = vmatpush1.msra.mxu0 %v4808
  %4810 = vmatprep.subr.mxu0 0.0
  %v4811 = vand.u32 %v61, 4294901760
  %4812 = vmatpush1.msra.mxu0 %v4811
  %4813 = vmatprep.subr.mxu0 0.0
  %v4814 = vand.u32 %v62, 4294901760
  %4815 = vmatpush1.msra.mxu0 %v4814
  %4816 = vmatprep.subr.mxu0 0.0
  %v4817 = vand.u32 %v63, 4294901760
  %4818 = vmatpush1.msra.mxu0 %v4817
  %4819 = vmatprep.subr.mxu0 0.0
  %v4820 = vand.u32 %v64, 4294901760
  %4821 = vmatpush1.msra.mxu0 %v4820
  %4822 = vmatprep.subr.mxu0 0.0
  %v4823 = vand.u32 %v65, 4294901760
  %4824 = vmatpush1.msra.mxu0 %v4823
  %4825 = vmatprep.subr.mxu0 0.0
  %v4826 = vand.u32 %v66, 4294901760
  %4827 = vmatpush1.msra.mxu0 %v4826
  %4828 = vmatprep.subr.mxu0 0.0
  %v4829 = vand.u32 %v67, 4294901760
  %4830 = vmatpush1.msra.mxu0 %v4829
  %4831 = vmatprep.subr.mxu0 0.0
  %v4832 = vand.u32 %v68, 4294901760
  %4833 = vmatpush1.msra.mxu0 %v4832
  %4834 = vmatprep.subr.mxu0 0.0
  %v4835 = vand.u32 %v69, 4294901760
  %4836 = vmatpush1.msra.mxu0 %v4835
  %4837 = vmatprep.subr.mxu0 0.0
  %v4838 = vand.u32 %v70, 4294901760
  %4839 = vmatpush1.msra.mxu0 %v4838
  %4840 = vmatprep.subr.mxu0 0.0
  %v4841 = vand.u32 %v71, 4294901760
  %4842 = vmatpush1.msra.mxu0 %v4841
  %4843 = vmatprep.subr.mxu0 0.0
  %v4844 = vand.u32 %v72, 4294901760
  %4845 = vmatpush1.msra.mxu0 %v4844
  %4846 = vmatprep.subr.mxu0 0.0
  %v4847 = vand.u32 %v73, 4294901760
  %4848 = vmatpush1.msra.mxu0 %v4847
  %4849 = vmatprep.subr.mxu0 0.0
  %v4850 = vand.u32 %v74, 4294901760
  %4851 = vmatpush1.msra.mxu0 %v4850
  %4852 = vmatprep.subr.mxu0 0.0
  %v4853 = vand.u32 %v75, 4294901760
  %4854 = vmatpush1.msra.mxu0 %v4853
  %4855 = vmatprep.subr.mxu0 0.0
  %v4856 = vand.u32 %v76, 4294901760
  %4857 = vmatpush1.msra.mxu0 %v4856
  %4858 = vmatprep.subr.mxu0 0.0
  %v4859 = vand.u32 %v77, 4294901760
  %4860 = vmatpush1.msra.mxu0 %v4859
  %4861 = vmatprep.subr.mxu0 0.0
  %v4862 = vand.u32 %v78, 4294901760
  %4863 = vmatpush1.msra.mxu0 %v4862
  %4864 = vmatprep.subr.mxu0 0.0
  %v4865 = vand.u32 %v79, 4294901760
  %4866 = vmatpush1.msra.mxu0 %v4865
  %4867 = vmatprep.subr.mxu0 0.0
  %v4868 = vand.u32 %v80, 4294901760
  %4869 = vmatpush1.msra.mxu0 %v4868
  %4870 = vmatprep.subr.mxu0 0.0
  %v4871 = vand.u32 %v81, 4294901760
  %4872 = vmatpush1.msra.mxu0 %v4871
  %4873 = vmatprep.subr.mxu0 0.0
  %v4874 = vand.u32 %v82, 4294901760
  %4875 = vmatpush1.msra.mxu0 %v4874
  %4876 = vmatprep.subr.mxu0 0.0
  %v4877 = vand.u32 %v83, 4294901760
  %4878 = vmatpush1.msra.mxu0 %v4877
  %4879 = vmatprep.subr.mxu0 0.0
  %v4880 = vand.u32 %v84, 4294901760
  %4881 = vmatpush1.msra.mxu0 %v4880
  %4882 = vmatprep.subr.mxu0 0.0
  %v4883 = vand.u32 %v85, 4294901760
  %4884 = vmatpush1.msra.mxu0 %v4883
  %4885 = vmatprep.subr.mxu0 0.0
  %v4886 = vand.u32 %v86, 4294901760
  %4887 = vmatpush1.msra.mxu0 %v4886
  %4888 = vmatprep.subr.mxu0 0.0
  %v4889 = vand.u32 %v87, 4294901760
  %4890 = vmatpush1.msra.mxu0 %v4889
  %4891 = vmatprep.subr.mxu0 0.0
  %v4892 = vand.u32 %v88, 4294901760
  %4893 = vmatpush1.msra.mxu0 %v4892
  %v4894 = vand.u32 %v3934, 4294901760
  %v4895 = vsub.f32 %v3934, %v4894
  %v4896 = vand.u32 %v4895, 4294901760
  %v4897 = vsub.f32 %v4895, %v4896
  %v4898 = vand.u32 %v4897, 4294901760
  %4899 = vmatprep.mubr.f32.mxu0 %v4898
  %v4900 = vand.u32 %v3933, 4294901760
  %v4901 = vsub.f32 %v3933, %v4900
  %v4902 = vand.u32 %v4901, 4294901760
  %v4903 = vsub.f32 %v4901, %v4902
  %v4904 = vand.u32 %v4903, 4294901760
  %4905 = vmatmul.mubr.f32.gmra.mrb[0].mxu0 %v4904
  %v4906 = vpop.f32.mrb[0].mxu0
  %v4907 = vadd.f32 %v4795, %v4906
  %v4908 = vpop.f32.mrb[0].mxu0
  %4909 = vdwg.mxu0
  %4910 = vmatprep.subr.mxu0 0.0
  %v4911 = vand.u32 %v57, 4294901760
  %v4912 = vsub.f32 %v57, %v4911
  %v4913 = vand.u32 %v4912, 4294901760
  %v4914 = vsub.f32 %v4912, %v4913
  %v4915 = vand.u32 %v4914, 4294901760
  %4916 = vmatpush1.msra.mxu0 %v4915
  %4917 = vmatprep.subr.mxu0 0.0
  %v4918 = vand.u32 %v58, 4294901760
  %v4919 = vsub.f32 %v58, %v4918
  %v4920 = vand.u32 %v4919, 4294901760
  %v4921 = vsub.f32 %v4919, %v4920
  %v4922 = vand.u32 %v4921, 4294901760
  %4923 = vmatpush1.msra.mxu0 %v4922
  %4924 = vmatprep.subr.mxu0 0.0
  %v4925 = vand.u32 %v59, 4294901760
  %v4926 = vsub.f32 %v59, %v4925
  %v4927 = vand.u32 %v4926, 4294901760
  %v4928 = vsub.f32 %v4926, %v4927
  %v4929 = vand.u32 %v4928, 4294901760
  %4930 = vmatpush1.msra.mxu0 %v4929
  %4931 = vmatprep.subr.mxu0 0.0
  %v4932 = vand.u32 %v60, 4294901760
  %v4933 = vsub.f32 %v60, %v4932
  %v4934 = vand.u32 %v4933, 4294901760
  %v4935 = vsub.f32 %v4933, %v4934
  %v4936 = vand.u32 %v4935, 4294901760
  %4937 = vmatpush1.msra.mxu0 %v4936
  %4938 = vmatprep.subr.mxu0 0.0
  %v4939 = vand.u32 %v61, 4294901760
  %v4940 = vsub.f32 %v61, %v4939
  %v4941 = vand.u32 %v4940, 4294901760
  %v4942 = vsub.f32 %v4940, %v4941
  %v4943 = vand.u32 %v4942, 4294901760
  %4944 = vmatpush1.msra.mxu0 %v4943
  %4945 = vmatprep.subr.mxu0 0.0
  %v4946 = vand.u32 %v62, 4294901760
  %v4947 = vsub.f32 %v62, %v4946
  %v4948 = vand.u32 %v4947, 4294901760
  %v4949 = vsub.f32 %v4947, %v4948
  %v4950 = vand.u32 %v4949, 4294901760
  %4951 = vmatpush1.msra.mxu0 %v4950
  %4952 = vmatprep.subr.mxu0 0.0
  %v4953 = vand.u32 %v63, 4294901760
  %v4954 = vsub.f32 %v63, %v4953
  %v4955 = vand.u32 %v4954, 4294901760
  %v4956 = vsub.f32 %v4954, %v4955
  %v4957 = vand.u32 %v4956, 4294901760
  %4958 = vmatpush1.msra.mxu0 %v4957
  %4959 = vmatprep.subr.mxu0 0.0
  %v4960 = vand.u32 %v64, 4294901760
  %v4961 = vsub.f32 %v64, %v4960
  %v4962 = vand.u32 %v4961, 4294901760
  %v4963 = vsub.f32 %v4961, %v4962
  %v4964 = vand.u32 %v4963, 4294901760
  %4965 = vmatpush1.msra.mxu0 %v4964
  %4966 = vmatprep.subr.mxu0 0.0
  %v4967 = vand.u32 %v65, 4294901760
  %v4968 = vsub.f32 %v65, %v4967
  %v4969 = vand.u32 %v4968, 4294901760
  %v4970 = vsub.f32 %v4968, %v4969
  %v4971 = vand.u32 %v4970, 4294901760
  %4972 = vmatpush1.msra.mxu0 %v4971
  %4973 = vmatprep.subr.mxu0 0.0
  %v4974 = vand.u32 %v66, 4294901760
  %v4975 = vsub.f32 %v66, %v4974
  %v4976 = vand.u32 %v4975, 4294901760
  %v4977 = vsub.f32 %v4975, %v4976
  %v4978 = vand.u32 %v4977, 4294901760
  %4979 = vmatpush1.msra.mxu0 %v4978
  %4980 = vmatprep.subr.mxu0 0.0
  %v4981 = vand.u32 %v67, 4294901760
  %v4982 = vsub.f32 %v67, %v4981
  %v4983 = vand.u32 %v4982, 4294901760
  %v4984 = vsub.f32 %v4982, %v4983
  %v4985 = vand.u32 %v4984, 4294901760
  %4986 = vmatpush1.msra.mxu0 %v4985
  %4987 = vmatprep.subr.mxu0 0.0
  %v4988 = vand.u32 %v68, 4294901760
  %v4989 = vsub.f32 %v68, %v4988
  %v4990 = vand.u32 %v4989, 4294901760
  %v4991 = vsub.f32 %v4989, %v4990
  %v4992 = vand.u32 %v4991, 4294901760
  %4993 = vmatpush1.msra.mxu0 %v4992
  %4994 = vmatprep.subr.mxu0 0.0
  %v4995 = vand.u32 %v69, 4294901760
  %v4996 = vsub.f32 %v69, %v4995
  %v4997 = vand.u32 %v4996, 4294901760
  %v4998 = vsub.f32 %v4996, %v4997
  %v4999 = vand.u32 %v4998, 4294901760
  %5000 = vmatpush1.msra.mxu0 %v4999
  %5001 = vmatprep.subr.mxu0 0.0
  %v5002 = vand.u32 %v70, 4294901760
  %v5003 = vsub.f32 %v70, %v5002
  %v5004 = vand.u32 %v5003, 4294901760
  %v5005 = vsub.f32 %v5003, %v5004
  %v5006 = vand.u32 %v5005, 4294901760
  %5007 = vmatpush1.msra.mxu0 %v5006
  %5008 = vmatprep.subr.mxu0 0.0
  %v5009 = vand.u32 %v71, 4294901760
  %v5010 = vsub.f32 %v71, %v5009
  %v5011 = vand.u32 %v5010, 4294901760
  %v5012 = vsub.f32 %v5010, %v5011
  %v5013 = vand.u32 %v5012, 4294901760
  %5014 = vmatpush1.msra.mxu0 %v5013
  %5015 = vmatprep.subr.mxu0 0.0
  %v5016 = vand.u32 %v72, 4294901760
  %v5017 = vsub.f32 %v72, %v5016
  %v5018 = vand.u32 %v5017, 4294901760
  %v5019 = vsub.f32 %v5017, %v5018
  %v5020 = vand.u32 %v5019, 4294901760
  %5021 = vmatpush1.msra.mxu0 %v5020
  %5022 = vmatprep.subr.mxu0 0.0
  %v5023 = vand.u32 %v73, 4294901760
  %v5024 = vsub.f32 %v73, %v5023
  %v5025 = vand.u32 %v5024, 4294901760
  %v5026 = vsub.f32 %v5024, %v5025
  %v5027 = vand.u32 %v5026, 4294901760
  %5028 = vmatpush1.msra.mxu0 %v5027
  %5029 = vmatprep.subr.mxu0 0.0
  %v5030 = vand.u32 %v74, 4294901760
  %v5031 = vsub.f32 %v74, %v5030
  %v5032 = vand.u32 %v5031, 4294901760
  %v5033 = vsub.f32 %v5031, %v5032
  %v5034 = vand.u32 %v5033, 4294901760
  %5035 = vmatpush1.msra.mxu0 %v5034
  %5036 = vmatprep.subr.mxu0 0.0
  %v5037 = vand.u32 %v75, 4294901760
  %v5038 = vsub.f32 %v75, %v5037
  %v5039 = vand.u32 %v5038, 4294901760
  %v5040 = vsub.f32 %v5038, %v5039
  %v5041 = vand.u32 %v5040, 4294901760
  %5042 = vmatpush1.msra.mxu0 %v5041
  %5043 = vmatprep.subr.mxu0 0.0
  %v5044 = vand.u32 %v76, 4294901760
  %v5045 = vsub.f32 %v76, %v5044
  %v5046 = vand.u32 %v5045, 4294901760
  %v5047 = vsub.f32 %v5045, %v5046
  %v5048 = vand.u32 %v5047, 4294901760
  %5049 = vmatpush1.msra.mxu0 %v5048
  %5050 = vmatprep.subr.mxu0 0.0
  %v5051 = vand.u32 %v77, 4294901760
  %v5052 = vsub.f32 %v77, %v5051
  %v5053 = vand.u32 %v5052, 4294901760
  %v5054 = vsub.f32 %v5052, %v5053
  %v5055 = vand.u32 %v5054, 4294901760
  %5056 = vmatpush1.msra.mxu0 %v5055
  %5057 = vmatprep.subr.mxu0 0.0
  %v5058 = vand.u32 %v78, 4294901760
  %v5059 = vsub.f32 %v78, %v5058
  %v5060 = vand.u32 %v5059, 4294901760
  %v5061 = vsub.f32 %v5059, %v5060
  %v5062 = vand.u32 %v5061, 4294901760
  %5063 = vmatpush1.msra.mxu0 %v5062
  %5064 = vmatprep.subr.mxu0 0.0
  %v5065 = vand.u32 %v79, 4294901760
  %v5066 = vsub.f32 %v79, %v5065
  %v5067 = vand.u32 %v5066, 4294901760
  %v5068 = vsub.f32 %v5066, %v5067
  %v5069 = vand.u32 %v5068, 4294901760
  %5070 = vmatpush1.msra.mxu0 %v5069
  %5071 = vmatprep.subr.mxu0 0.0
  %v5072 = vand.u32 %v80, 4294901760
  %v5073 = vsub.f32 %v80, %v5072
  %v5074 = vand.u32 %v5073, 4294901760
  %v5075 = vsub.f32 %v5073, %v5074
  %v5076 = vand.u32 %v5075, 4294901760
  %5077 = vmatpush1.msra.mxu0 %v5076
  %5078 = vmatprep.subr.mxu0 0.0
  %v5079 = vand.u32 %v81, 4294901760
  %v5080 = vsub.f32 %v81, %v5079
  %v5081 = vand.u32 %v5080, 4294901760
  %v5082 = vsub.f32 %v5080, %v5081
  %v5083 = vand.u32 %v5082, 4294901760
  %5084 = vmatpush1.msra.mxu0 %v5083
  %5085 = vmatprep.subr.mxu0 0.0
  %v5086 = vand.u32 %v82, 4294901760
  %v5087 = vsub.f32 %v82, %v5086
  %v5088 = vand.u32 %v5087, 4294901760
  %v5089 = vsub.f32 %v5087, %v5088
  %v5090 = vand.u32 %v5089, 4294901760
  %5091 = vmatpush1.msra.mxu0 %v5090
  %5092 = vmatprep.subr.mxu0 0.0
  %v5093 = vand.u32 %v83, 4294901760
  %v5094 = vsub.f32 %v83, %v5093
  %v5095 = vand.u32 %v5094, 4294901760
  %v5096 = vsub.f32 %v5094, %v5095
  %v5097 = vand.u32 %v5096, 4294901760
  %5098 = vmatpush1.msra.mxu0 %v5097
  %5099 = vmatprep.subr.mxu0 0.0
  %v5100 = vand.u32 %v84, 4294901760
  %v5101 = vsub.f32 %v84, %v5100
  %v5102 = vand.u32 %v5101, 4294901760
  %v5103 = vsub.f32 %v5101, %v5102
  %v5104 = vand.u32 %v5103, 4294901760
  %5105 = vmatpush1.msra.mxu0 %v5104
  %5106 = vmatprep.subr.mxu0 0.0
  %v5107 = vand.u32 %v85, 4294901760
  %v5108 = vsub.f32 %v85, %v5107
  %v5109 = vand.u32 %v5108, 4294901760
  %v5110 = vsub.f32 %v5108, %v5109
  %v5111 = vand.u32 %v5110, 4294901760
  %5112 = vmatpush1.msra.mxu0 %v5111
  %5113 = vmatprep.subr.mxu0 0.0
  %v5114 = vand.u32 %v86, 4294901760
  %v5115 = vsub.f32 %v86, %v5114
  %v5116 = vand.u32 %v5115, 4294901760
  %v5117 = vsub.f32 %v5115, %v5116
  %v5118 = vand.u32 %v5117, 4294901760
  %5119 = vmatpush1.msra.mxu0 %v5118
  %5120 = vmatprep.subr.mxu0 0.0
  %v5121 = vand.u32 %v87, 4294901760
  %v5122 = vsub.f32 %v87, %v5121
  %v5123 = vand.u32 %v5122, 4294901760
  %v5124 = vsub.f32 %v5122, %v5123
  %v5125 = vand.u32 %v5124, 4294901760
  %5126 = vmatpush1.msra.mxu0 %v5125
  %5127 = vmatprep.subr.mxu0 0.0
  %v5128 = vand.u32 %v88, 4294901760
  %v5129 = vsub.f32 %v88, %v5128
  %v5130 = vand.u32 %v5129, 4294901760
  %v5131 = vsub.f32 %v5129, %v5130
  %v5132 = vand.u32 %v5131, 4294901760
  %5133 = vmatpush1.msra.mxu0 %v5132
  %v5134 = vand.u32 %v3934, 4294901760
  %5135 = vmatprep.mubr.f32.mxu0 %v5134
  %v5136 = vand.u32 %v3933, 4294901760
  %5137 = vmatmul.mubr.f32.gmra.mrb[0].mxu0 %v5136
  %v5138 = vpop.f32.mrb[0].mxu0
  %v5139 = vadd.f32 %v4907, %v5138
  %v5140 = vpop.f32.mrb[0].mxu0
  %5141 = vdwg.mxu0
  %5142 = vmatprep.subr.mxu0 0.0
  %v5143 = vand.u32 %v57, 4294901760
  %v5144 = vsub.f32 %v57, %v5143
  %5145 = vmatpush1.msra.mxu0 %v5144
  %5146 = vmatprep.subr.mxu0 0.0
  %v5147 = vand.u32 %v58, 4294901760
  %v5148 = vsub.f32 %v58, %v5147
  %5149 = vmatpush1.msra.mxu0 %v5148
  %5150 = vmatprep.subr.mxu0 0.0
  %v5151 = vand.u32 %v59, 4294901760
  %v5152 = vsub.f32 %v59, %v5151
  %5153 = vmatpush1.msra.mxu0 %v5152
  %5154 = vmatprep.subr.mxu0 0.0
  %v5155 = vand.u32 %v60, 4294901760
  %v5156 = vsub.f32 %v60, %v5155
  %5157 = vmatpush1.msra.mxu0 %v5156
  %5158 = vmatprep.subr.mxu0 0.0
  %v5159 = vand.u32 %v61, 4294901760
  %v5160 = vsub.f32 %v61, %v5159
  %5161 = vmatpush1.msra.mxu0 %v5160
  %5162 = vmatprep.subr.mxu0 0.0
  %v5163 = vand.u32 %v62, 4294901760
  %v5164 = vsub.f32 %v62, %v5163
  %5165 = vmatpush1.msra.mxu0 %v5164
  %5166 = vmatprep.subr.mxu0 0.0
  %v5167 = vand.u32 %v63, 4294901760
  %v5168 = vsub.f32 %v63, %v5167
  %5169 = vmatpush1.msra.mxu0 %v5168
  %5170 = vmatprep.subr.mxu0 0.0
  %v5171 = vand.u32 %v64, 4294901760
  %v5172 = vsub.f32 %v64, %v5171
  %5173 = vmatpush1.msra.mxu0 %v5172
  %5174 = vmatprep.subr.mxu0 0.0
  %v5175 = vand.u32 %v65, 4294901760
  %v5176 = vsub.f32 %v65, %v5175
  %5177 = vmatpush1.msra.mxu0 %v5176
  %5178 = vmatprep.subr.mxu0 0.0
  %v5179 = vand.u32 %v66, 4294901760
  %v5180 = vsub.f32 %v66, %v5179
  %5181 = vmatpush1.msra.mxu0 %v5180
  %5182 = vmatprep.subr.mxu0 0.0
  %v5183 = vand.u32 %v67, 4294901760
  %v5184 = vsub.f32 %v67, %v5183
  %5185 = vmatpush1.msra.mxu0 %v5184
  %5186 = vmatprep.subr.mxu0 0.0
  %v5187 = vand.u32 %v68, 4294901760
  %v5188 = vsub.f32 %v68, %v5187
  %5189 = vmatpush1.msra.mxu0 %v5188
  %5190 = vmatprep.subr.mxu0 0.0
  %v5191 = vand.u32 %v69, 4294901760
  %v5192 = vsub.f32 %v69, %v5191
  %5193 = vmatpush1.msra.mxu0 %v5192
  %5194 = vmatprep.subr.mxu0 0.0
  %v5195 = vand.u32 %v70, 4294901760
  %v5196 = vsub.f32 %v70, %v5195
  %5197 = vmatpush1.msra.mxu0 %v5196
  %5198 = vmatprep.subr.mxu0 0.0
  %v5199 = vand.u32 %v71, 4294901760
  %v5200 = vsub.f32 %v71, %v5199
  %5201 = vmatpush1.msra.mxu0 %v5200
  %5202 = vmatprep.subr.mxu0 0.0
  %v5203 = vand.u32 %v72, 4294901760
  %v5204 = vsub.f32 %v72, %v5203
  %5205 = vmatpush1.msra.mxu0 %v5204
  %5206 = vmatprep.subr.mxu0 0.0
  %v5207 = vand.u32 %v73, 4294901760
  %v5208 = vsub.f32 %v73, %v5207
  %5209 = vmatpush1.msra.mxu0 %v5208
  %5210 = vmatprep.subr.mxu0 0.0
  %v5211 = vand.u32 %v74, 4294901760
  %v5212 = vsub.f32 %v74, %v5211
  %5213 = vmatpush1.msra.mxu0 %v5212
  %5214 = vmatprep.subr.mxu0 0.0
  %v5215 = vand.u32 %v75, 4294901760
  %v5216 = vsub.f32 %v75, %v5215
  %5217 = vmatpush1.msra.mxu0 %v5216
  %5218 = vmatprep.subr.mxu0 0.0
  %v5219 = vand.u32 %v76, 4294901760
  %v5220 = vsub.f32 %v76, %v5219
  %5221 = vmatpush1.msra.mxu0 %v5220
  %5222 = vmatprep.subr.mxu0 0.0
  %v5223 = vand.u32 %v77, 4294901760
  %v5224 = vsub.f32 %v77, %v5223
  %5225 = vmatpush1.msra.mxu0 %v5224
  %5226 = vmatprep.subr.mxu0 0.0
  %v5227 = vand.u32 %v78, 4294901760
  %v5228 = vsub.f32 %v78, %v5227
  %5229 = vmatpush1.msra.mxu0 %v5228
  %5230 = vmatprep.subr.mxu0 0.0
  %v5231 = vand.u32 %v79, 4294901760
  %v5232 = vsub.f32 %v79, %v5231
  %5233 = vmatpush1.msra.mxu0 %v5232
  %5234 = vmatprep.subr.mxu0 0.0
  %v5235 = vand.u32 %v80, 4294901760
  %v5236 = vsub.f32 %v80, %v5235
  %5237 = vmatpush1.msra.mxu0 %v5236
  %5238 = vmatprep.subr.mxu0 0.0
  %v5239 = vand.u32 %v81, 4294901760
  %v5240 = vsub.f32 %v81, %v5239
  %5241 = vmatpush1.msra.mxu0 %v5240
  %5242 = vmatprep.subr.mxu0 0.0
  %v5243 = vand.u32 %v82, 4294901760
  %v5244 = vsub.f32 %v82, %v5243
  %5245 = vmatpush1.msra.mxu0 %v5244
  %5246 = vmatprep.subr.mxu0 0.0
  %v5247 = vand.u32 %v83, 4294901760
  %v5248 = vsub.f32 %v83, %v5247
  %5249 = vmatpush1.msra.mxu0 %v5248
  %5250 = vmatprep.subr.mxu0 0.0
  %v5251 = vand.u32 %v84, 4294901760
  %v5252 = vsub.f32 %v84, %v5251
  %5253 = vmatpush1.msra.mxu0 %v5252
  %5254 = vmatprep.subr.mxu0 0.0
  %v5255 = vand.u32 %v85, 4294901760
  %v5256 = vsub.f32 %v85, %v5255
  %5257 = vmatpush1.msra.mxu0 %v5256
  %5258 = vmatprep.subr.mxu0 0.0
  %v5259 = vand.u32 %v86, 4294901760
  %v5260 = vsub.f32 %v86, %v5259
  %5261 = vmatpush1.msra.mxu0 %v5260
  %5262 = vmatprep.subr.mxu0 0.0
  %v5263 = vand.u32 %v87, 4294901760
  %v5264 = vsub.f32 %v87, %v5263
  %5265 = vmatpush1.msra.mxu0 %v5264
  %5266 = vmatprep.subr.mxu0 0.0
  %v5267 = vand.u32 %v88, 4294901760
  %v5268 = vsub.f32 %v88, %v5267
  %5269 = vmatpush1.msra.mxu0 %v5268
  %v5270 = vand.u32 %v3934, 4294901760
  %v5271 = vsub.f32 %v3934, %v5270
  %5272 = vmatprep.mubr.f32.mxu0 %v5271
  %v5273 = vand.u32 %v3933, 4294901760
  %v5274 = vsub.f32 %v3933, %v5273
  %5275 = vmatmul.mubr.f32.gmra.mrb[0].mxu0 %v5274
  %v5276 = vpop.f32.mrb[0].mxu0
  %v5277 = vadd.f32 %v5139, %v5276
  %v5278 = vpop.f32.mrb[0].mxu0
  %5279 = vdwg.mxu0
  %5280 = vmatprep.subr.mxu0 0.0
  %v5281 = vand.u32 %v57, 4294901760
  %5282 = vmatpush1.msra.mxu0 %v5281
  %5283 = vmatprep.subr.mxu0 0.0
  %v5284 = vand.u32 %v58, 4294901760
  %5285 = vmatpush1.msra.mxu0 %v5284
  %5286 = vmatprep.subr.mxu0 0.0
  %v5287 = vand.u32 %v59, 4294901760
  %5288 = vmatpush1.msra.mxu0 %v5287
  %5289 = vmatprep.subr.mxu0 0.0
  %v5290 = vand.u32 %v60, 4294901760
  %5291 = vmatpush1.msra.mxu0 %v5290
  %5292 = vmatprep.subr.mxu0 0.0
  %v5293 = vand.u32 %v61, 4294901760
  %5294 = vmatpush1.msra.mxu0 %v5293
  %5295 = vmatprep.subr.mxu0 0.0
  %v5296 = vand.u32 %v62, 4294901760
  %5297 = vmatpush1.msra.mxu0 %v5296
  %5298 = vmatprep.subr.mxu0 0.0
  %v5299 = vand.u32 %v63, 4294901760
  %5300 = vmatpush1.msra.mxu0 %v5299
  %5301 = vmatprep.subr.mxu0 0.0
  %v5302 = vand.u32 %v64, 4294901760
  %5303 = vmatpush1.msra.mxu0 %v5302
  %5304 = vmatprep.subr.mxu0 0.0
  %v5305 = vand.u32 %v65, 4294901760
  %5306 = vmatpush1.msra.mxu0 %v5305
  %5307 = vmatprep.subr.mxu0 0.0
  %v5308 = vand.u32 %v66, 4294901760
  %5309 = vmatpush1.msra.mxu0 %v5308
  %5310 = vmatprep.subr.mxu0 0.0
  %v5311 = vand.u32 %v67, 4294901760
  %5312 = vmatpush1.msra.mxu0 %v5311
  %5313 = vmatprep.subr.mxu0 0.0
  %v5314 = vand.u32 %v68, 4294901760
  %5315 = vmatpush1.msra.mxu0 %v5314
  %5316 = vmatprep.subr.mxu0 0.0
  %v5317 = vand.u32 %v69, 4294901760
  %5318 = vmatpush1.msra.mxu0 %v5317
  %5319 = vmatprep.subr.mxu0 0.0
  %v5320 = vand.u32 %v70, 4294901760
  %5321 = vmatpush1.msra.mxu0 %v5320
  %5322 = vmatprep.subr.mxu0 0.0
  %v5323 = vand.u32 %v71, 4294901760
  %5324 = vmatpush1.msra.mxu0 %v5323
  %5325 = vmatprep.subr.mxu0 0.0
  %v5326 = vand.u32 %v72, 4294901760
  %5327 = vmatpush1.msra.mxu0 %v5326
  %5328 = vmatprep.subr.mxu0 0.0
  %v5329 = vand.u32 %v73, 4294901760
  %5330 = vmatpush1.msra.mxu0 %v5329
  %5331 = vmatprep.subr.mxu0 0.0
  %v5332 = vand.u32 %v74, 4294901760
  %5333 = vmatpush1.msra.mxu0 %v5332
  %5334 = vmatprep.subr.mxu0 0.0
  %v5335 = vand.u32 %v75, 4294901760
  %5336 = vmatpush1.msra.mxu0 %v5335
  %5337 = vmatprep.subr.mxu0 0.0
  %v5338 = vand.u32 %v76, 4294901760
  %5339 = vmatpush1.msra.mxu0 %v5338
  %5340 = vmatprep.subr.mxu0 0.0
  %v5341 = vand.u32 %v77, 4294901760
  %5342 = vmatpush1.msra.mxu0 %v5341
  %5343 = vmatprep.subr.mxu0 0.0
  %v5344 = vand.u32 %v78, 4294901760
  %5345 = vmatpush1.msra.mxu0 %v5344
  %5346 = vmatprep.subr.mxu0 0.0
  %v5347 = vand.u32 %v79, 4294901760
  %5348 = vmatpush1.msra.mxu0 %v5347
  %5349 = vmatprep.subr.mxu0 0.0
  %v5350 = vand.u32 %v80, 4294901760
  %5351 = vmatpush1.msra.mxu0 %v5350
  %5352 = vmatprep.subr.mxu0 0.0
  %v5353 = vand.u32 %v81, 4294901760
  %5354 = vmatpush1.msra.mxu0 %v5353
  %5355 = vmatprep.subr.mxu0 0.0
  %v5356 = vand.u32 %v82, 4294901760
  %5357 = vmatpush1.msra.mxu0 %v5356
  %5358 = vmatprep.subr.mxu0 0.0
  %v5359 = vand.u32 %v83, 4294901760
  %5360 = vmatpush1.msra.mxu0 %v5359
  %5361 = vmatprep.subr.mxu0 0.0
  %v5362 = vand.u32 %v84, 4294901760
  %5363 = vmatpush1.msra.mxu0 %v5362
  %5364 = vmatprep.subr.mxu0 0.0
  %v5365 = vand.u32 %v85, 4294901760
  %5366 = vmatpush1.msra.mxu0 %v5365
  %5367 = vmatprep.subr.mxu0 0.0
  %v5368 = vand.u32 %v86, 4294901760
  %5369 = vmatpush1.msra.mxu0 %v5368
  %5370 = vmatprep.subr.mxu0 0.0
  %v5371 = vand.u32 %v87, 4294901760
  %5372 = vmatpush1.msra.mxu0 %v5371
  %5373 = vmatprep.subr.mxu0 0.0
  %v5374 = vand.u32 %v88, 4294901760
  %5375 = vmatpush1.msra.mxu0 %v5374
  %v5376 = vand.u32 %v3934, 4294901760
  %v5377 = vsub.f32 %v3934, %v5376
  %v5378 = vand.u32 %v5377, 4294901760
  %5379 = vmatprep.mubr.f32.mxu0 %v5378
  %v5380 = vand.u32 %v3933, 4294901760
  %v5381 = vsub.f32 %v3933, %v5380
  %v5382 = vand.u32 %v5381, 4294901760
  %5383 = vmatmul.mubr.f32.gmra.mrb[0].mxu0 %v5382
  %v5384 = vpop.f32.mrb[0].mxu0
  %v5385 = vadd.f32 %v5277, %v5384
  %v5386 = vpop.f32.mrb[0].mxu0
  %5387 = vdwg.mxu0
  %5388 = vmatprep.subr.mxu0 0.0
  %v5389 = vand.u32 %v57, 4294901760
  %v5390 = vsub.f32 %v57, %v5389
  %v5391 = vand.u32 %v5390, 4294901760
  %5392 = vmatpush1.msra.mxu0 %v5391
  %5393 = vmatprep.subr.mxu0 0.0
  %v5394 = vand.u32 %v58, 4294901760
  %v5395 = vsub.f32 %v58, %v5394
  %v5396 = vand.u32 %v5395, 4294901760
  %5397 = vmatpush1.msra.mxu0 %v5396
  %5398 = vmatprep.subr.mxu0 0.0
  %v5399 = vand.u32 %v59, 4294901760
  %v5400 = vsub.f32 %v59, %v5399
  %v5401 = vand.u32 %v5400, 4294901760
  %5402 = vmatpush1.msra.mxu0 %v5401
  %5403 = vmatprep.subr.mxu0 0.0
  %v5404 = vand.u32 %v60, 4294901760
  %v5405 = vsub.f32 %v60, %v5404
  %v5406 = vand.u32 %v5405, 4294901760
  %5407 = vmatpush1.msra.mxu0 %v5406
  %5408 = vmatprep.subr.mxu0 0.0
  %v5409 = vand.u32 %v61, 4294901760
  %v5410 = vsub.f32 %v61, %v5409
  %v5411 = vand.u32 %v5410, 4294901760
  %5412 = vmatpush1.msra.mxu0 %v5411
  %5413 = vmatprep.subr.mxu0 0.0
  %v5414 = vand.u32 %v62, 4294901760
  %v5415 = vsub.f32 %v62, %v5414
  %v5416 = vand.u32 %v5415, 4294901760
  %5417 = vmatpush1.msra.mxu0 %v5416
  %5418 = vmatprep.subr.mxu0 0.0
  %v5419 = vand.u32 %v63, 4294901760
  %v5420 = vsub.f32 %v63, %v5419
  %v5421 = vand.u32 %v5420, 4294901760
  %5422 = vmatpush1.msra.mxu0 %v5421
  %5423 = vmatprep.subr.mxu0 0.0
  %v5424 = vand.u32 %v64, 4294901760
  %v5425 = vsub.f32 %v64, %v5424
  %v5426 = vand.u32 %v5425, 4294901760
  %5427 = vmatpush1.msra.mxu0 %v5426
  %5428 = vmatprep.subr.mxu0 0.0
  %v5429 = vand.u32 %v65, 4294901760
  %v5430 = vsub.f32 %v65, %v5429
  %v5431 = vand.u32 %v5430, 4294901760
  %5432 = vmatpush1.msra.mxu0 %v5431
  %5433 = vmatprep.subr.mxu0 0.0
  %v5434 = vand.u32 %v66, 4294901760
  %v5435 = vsub.f32 %v66, %v5434
  %v5436 = vand.u32 %v5435, 4294901760
  %5437 = vmatpush1.msra.mxu0 %v5436
  %5438 = vmatprep.subr.mxu0 0.0
  %v5439 = vand.u32 %v67, 4294901760
  %v5440 = vsub.f32 %v67, %v5439
  %v5441 = vand.u32 %v5440, 4294901760
  %5442 = vmatpush1.msra.mxu0 %v5441
  %5443 = vmatprep.subr.mxu0 0.0
  %v5444 = vand.u32 %v68, 4294901760
  %v5445 = vsub.f32 %v68, %v5444
  %v5446 = vand.u32 %v5445, 4294901760
  %5447 = vmatpush1.msra.mxu0 %v5446
  %5448 = vmatprep.subr.mxu0 0.0
  %v5449 = vand.u32 %v69, 4294901760
  %v5450 = vsub.f32 %v69, %v5449
  %v5451 = vand.u32 %v5450, 4294901760
  %5452 = vmatpush1.msra.mxu0 %v5451
  %5453 = vmatprep.subr.mxu0 0.0
  %v5454 = vand.u32 %v70, 4294901760
  %v5455 = vsub.f32 %v70, %v5454
  %v5456 = vand.u32 %v5455, 4294901760
  %5457 = vmatpush1.msra.mxu0 %v5456
  %5458 = vmatprep.subr.mxu0 0.0
  %v5459 = vand.u32 %v71, 4294901760
  %v5460 = vsub.f32 %v71, %v5459
  %v5461 = vand.u32 %v5460, 4294901760
  %5462 = vmatpush1.msra.mxu0 %v5461
  %5463 = vmatprep.subr.mxu0 0.0
  %v5464 = vand.u32 %v72, 4294901760
  %v5465 = vsub.f32 %v72, %v5464
  %v5466 = vand.u32 %v5465, 4294901760
  %5467 = vmatpush1.msra.mxu0 %v5466
  %5468 = vmatprep.subr.mxu0 0.0
  %v5469 = vand.u32 %v73, 4294901760
  %v5470 = vsub.f32 %v73, %v5469
  %v5471 = vand.u32 %v5470, 4294901760
  %5472 = vmatpush1.msra.mxu0 %v5471
  %5473 = vmatprep.subr.mxu0 0.0
  %v5474 = vand.u32 %v74, 4294901760
  %v5475 = vsub.f32 %v74, %v5474
  %v5476 = vand.u32 %v5475, 4294901760
  %5477 = vmatpush1.msra.mxu0 %v5476
  %5478 = vmatprep.subr.mxu0 0.0
  %v5479 = vand.u32 %v75, 4294901760
  %v5480 = vsub.f32 %v75, %v5479
  %v5481 = vand.u32 %v5480, 4294901760
  %5482 = vmatpush1.msra.mxu0 %v5481
  %5483 = vmatprep.subr.mxu0 0.0
  %v5484 = vand.u32 %v76, 4294901760
  %v5485 = vsub.f32 %v76, %v5484
  %v5486 = vand.u32 %v5485, 4294901760
  %5487 = vmatpush1.msra.mxu0 %v5486
  %5488 = vmatprep.subr.mxu0 0.0
  %v5489 = vand.u32 %v77, 4294901760
  %v5490 = vsub.f32 %v77, %v5489
  %v5491 = vand.u32 %v5490, 4294901760
  %5492 = vmatpush1.msra.mxu0 %v5491
  %5493 = vmatprep.subr.mxu0 0.0
  %v5494 = vand.u32 %v78, 4294901760
  %v5495 = vsub.f32 %v78, %v5494
  %v5496 = vand.u32 %v5495, 4294901760
  %5497 = vmatpush1.msra.mxu0 %v5496
  %5498 = vmatprep.subr.mxu0 0.0
  %v5499 = vand.u32 %v79, 4294901760
  %v5500 = vsub.f32 %v79, %v5499
  %v5501 = vand.u32 %v5500, 4294901760
  %5502 = vmatpush1.msra.mxu0 %v5501
  %5503 = vmatprep.subr.mxu0 0.0
  %v5504 = vand.u32 %v80, 4294901760
  %v5505 = vsub.f32 %v80, %v5504
  %v5506 = vand.u32 %v5505, 4294901760
  %5507 = vmatpush1.msra.mxu0 %v5506
  %5508 = vmatprep.subr.mxu0 0.0
  %v5509 = vand.u32 %v81, 4294901760
  %v5510 = vsub.f32 %v81, %v5509
  %v5511 = vand.u32 %v5510, 4294901760
  %5512 = vmatpush1.msra.mxu0 %v5511
  %5513 = vmatprep.subr.mxu0 0.0
  %v5514 = vand.u32 %v82, 4294901760
  %v5515 = vsub.f32 %v82, %v5514
  %v5516 = vand.u32 %v5515, 4294901760
  %5517 = vmatpush1.msra.mxu0 %v5516
  %5518 = vmatprep.subr.mxu0 0.0
  %v5519 = vand.u32 %v83, 4294901760
  %v5520 = vsub.f32 %v83, %v5519
  %v5521 = vand.u32 %v5520, 4294901760
  %5522 = vmatpush1.msra.mxu0 %v5521
  %5523 = vmatprep.subr.mxu0 0.0
  %v5524 = vand.u32 %v84, 4294901760
  %v5525 = vsub.f32 %v84, %v5524
  %v5526 = vand.u32 %v5525, 4294901760
  %5527 = vmatpush1.msra.mxu0 %v5526
  %5528 = vmatprep.subr.mxu0 0.0
  %v5529 = vand.u32 %v85, 4294901760
  %v5530 = vsub.f32 %v85, %v5529
  %v5531 = vand.u32 %v5530, 4294901760
  %5532 = vmatpush1.msra.mxu0 %v5531
  %5533 = vmatprep.subr.mxu0 0.0
  %v5534 = vand.u32 %v86, 4294901760
  %v5535 = vsub.f32 %v86, %v5534
  %v5536 = vand.u32 %v5535, 4294901760
  %5537 = vmatpush1.msra.mxu0 %v5536
  %5538 = vmatprep.subr.mxu0 0.0
  %v5539 = vand.u32 %v87, 4294901760
  %v5540 = vsub.f32 %v87, %v5539
  %v5541 = vand.u32 %v5540, 4294901760
  %5542 = vmatpush1.msra.mxu0 %v5541
  %5543 = vmatprep.subr.mxu0 0.0
  %v5544 = vand.u32 %v88, 4294901760
  %v5545 = vsub.f32 %v88, %v5544
  %v5546 = vand.u32 %v5545, 4294901760
  %5547 = vmatpush1.msra.mxu0 %v5546
  %v5548 = vand.u32 %v3934, 4294901760
  %5549 = vmatprep.mubr.f32.mxu0 %v5548
  %v5550 = vand.u32 %v3933, 4294901760
  %5551 = vmatmul.mubr.f32.gmra.mrb[0].mxu0 %v5550
  %v5552 = vpop.f32.mrb[0].mxu0
  %v5553 = vadd.f32 %v5385, %v5552
  %v5554 = vpop.f32.mrb[0].mxu0
  %5555 = vdwg.mxu0
  %5556 = vmatprep.subr.mxu0 0.0
  %v5557 = vand.u32 %v57, 4294901760
  %5558 = vmatpush1.msra.mxu0 %v5557
  %5559 = vmatprep.subr.mxu0 0.0
  %v5560 = vand.u32 %v58, 4294901760
  %5561 = vmatpush1.msra.mxu0 %v5560
  %5562 = vmatprep.subr.mxu0 0.0
  %v5563 = vand.u32 %v59, 4294901760
  %5564 = vmatpush1.msra.mxu0 %v5563
  %5565 = vmatprep.subr.mxu0 0.0
  %v5566 = vand.u32 %v60, 4294901760
  %5567 = vmatpush1.msra.mxu0 %v5566
  %5568 = vmatprep.subr.mxu0 0.0
  %v5569 = vand.u32 %v61, 4294901760
  %5570 = vmatpush1.msra.mxu0 %v5569
  %5571 = vmatprep.subr.mxu0 0.0
  %v5572 = vand.u32 %v62, 4294901760
  %5573 = vmatpush1.msra.mxu0 %v5572
  %5574 = vmatprep.subr.mxu0 0.0
  %v5575 = vand.u32 %v63, 4294901760
  %5576 = vmatpush1.msra.mxu0 %v5575
  %5577 = vmatprep.subr.mxu0 0.0
  %v5578 = vand.u32 %v64, 4294901760
  %5579 = vmatpush1.msra.mxu0 %v5578
  %5580 = vmatprep.subr.mxu0 0.0
  %v5581 = vand.u32 %v65, 4294901760
  %5582 = vmatpush1.msra.mxu0 %v5581
  %5583 = vmatprep.subr.mxu0 0.0
  %v5584 = vand.u32 %v66, 4294901760
  %5585 = vmatpush1.msra.mxu0 %v5584
  %5586 = vmatprep.subr.mxu0 0.0
  %v5587 = vand.u32 %v67, 4294901760
  %5588 = vmatpush1.msra.mxu0 %v5587
  %5589 = vmatprep.subr.mxu0 0.0
  %v5590 = vand.u32 %v68, 4294901760
  %5591 = vmatpush1.msra.mxu0 %v5590
  %5592 = vmatprep.subr.mxu0 0.0
  %v5593 = vand.u32 %v69, 4294901760
  %5594 = vmatpush1.msra.mxu0 %v5593
  %5595 = vmatprep.subr.mxu0 0.0
  %v5596 = vand.u32 %v70, 4294901760
  %5597 = vmatpush1.msra.mxu0 %v5596
  %5598 = vmatprep.subr.mxu0 0.0
  %v5599 = vand.u32 %v71, 4294901760
  %5600 = vmatpush1.msra.mxu0 %v5599
  %5601 = vmatprep.subr.mxu0 0.0
  %v5602 = vand.u32 %v72, 4294901760
  %5603 = vmatpush1.msra.mxu0 %v5602
  %5604 = vmatprep.subr.mxu0 0.0
  %v5605 = vand.u32 %v73, 4294901760
  %5606 = vmatpush1.msra.mxu0 %v5605
  %5607 = vmatprep.subr.mxu0 0.0
  %v5608 = vand.u32 %v74, 4294901760
  %5609 = vmatpush1.msra.mxu0 %v5608
  %5610 = vmatprep.subr.mxu0 0.0
  %v5611 = vand.u32 %v75, 4294901760
  %5612 = vmatpush1.msra.mxu0 %v5611
  %5613 = vmatprep.subr.mxu0 0.0
  %v5614 = vand.u32 %v76, 4294901760
  %5615 = vmatpush1.msra.mxu0 %v5614
  %5616 = vmatprep.subr.mxu0 0.0
  %v5617 = vand.u32 %v77, 4294901760
  %5618 = vmatpush1.msra.mxu0 %v5617
  %5619 = vmatprep.subr.mxu0 0.0
  %v5620 = vand.u32 %v78, 4294901760
  %5621 = vmatpush1.msra.mxu0 %v5620
  %5622 = vmatprep.subr.mxu0 0.0
  %v5623 = vand.u32 %v79, 4294901760
  %5624 = vmatpush1.msra.mxu0 %v5623
  %5625 = vmatprep.subr.mxu0 0.0
  %v5626 = vand.u32 %v80, 4294901760
  %5627 = vmatpush1.msra.mxu0 %v5626
  %5628 = vmatprep.subr.mxu0 0.0
  %v5629 = vand.u32 %v81, 4294901760
  %5630 = vmatpush1.msra.mxu0 %v5629
  %5631 = vmatprep.subr.mxu0 0.0
  %v5632 = vand.u32 %v82, 4294901760
  %5633 = vmatpush1.msra.mxu0 %v5632
  %5634 = vmatprep.subr.mxu0 0.0
  %v5635 = vand.u32 %v83, 4294901760
  %5636 = vmatpush1.msra.mxu0 %v5635
  %5637 = vmatprep.subr.mxu0 0.0
  %v5638 = vand.u32 %v84, 4294901760
  %5639 = vmatpush1.msra.mxu0 %v5638
  %5640 = vmatprep.subr.mxu0 0.0
  %v5641 = vand.u32 %v85, 4294901760
  %5642 = vmatpush1.msra.mxu0 %v5641
  %5643 = vmatprep.subr.mxu0 0.0
  %v5644 = vand.u32 %v86, 4294901760
  %5645 = vmatpush1.msra.mxu0 %v5644
  %5646 = vmatprep.subr.mxu0 0.0
  %v5647 = vand.u32 %v87, 4294901760
  %5648 = vmatpush1.msra.mxu0 %v5647
  %5649 = vmatprep.subr.mxu0 0.0
  %v5650 = vand.u32 %v88, 4294901760
  %5651 = vmatpush1.msra.mxu0 %v5650
  %v5652 = vand.u32 %v3934, 4294901760
  %5653 = vmatprep.mubr.f32.mxu0 %v5652
  %v5654 = vand.u32 %v3933, 4294901760
  %5655 = vmatmul.mubr.f32.gmra.mrb[0].mxu0 %v5654
  %v5656 = vpop.f32.mrb[0].mxu0
  %v5657 = vadd.f32 %v5553, %v5656
  %v5658 = vpop.f32.mrb[0].mxu0
  %5659 = vdwg.mxu0
  %5660 = vmatprep.subr.mxu0 0.0
  %v5661 = vand.u32 %v89, 4294901760
  %5662 = vmatpush1.msra.mxu0 %v5661
  %5663 = vmatprep.subr.mxu0 0.0
  %v5664 = vand.u32 %v90, 4294901760
  %5665 = vmatpush1.msra.mxu0 %v5664
  %5666 = vmatprep.subr.mxu0 0.0
  %v5667 = vand.u32 %v91, 4294901760
  %5668 = vmatpush1.msra.mxu0 %v5667
  %5669 = vmatprep.subr.mxu0 0.0
  %v5670 = vand.u32 %v92, 4294901760
  %5671 = vmatpush1.msra.mxu0 %v5670
  %5672 = vmatprep.subr.mxu0 0.0
  %v5673 = vand.u32 %v93, 4294901760
  %5674 = vmatpush1.msra.mxu0 %v5673
  %5675 = vmatprep.subr.mxu0 0.0
  %v5676 = vand.u32 %v94, 4294901760
  %5677 = vmatpush1.msra.mxu0 %v5676
  %5678 = vmatprep.subr.mxu0 0.0
  %v5679 = vand.u32 %v95, 4294901760
  %5680 = vmatpush1.msra.mxu0 %v5679
  %5681 = vmatprep.subr.mxu0 0.0
  %v5682 = vand.u32 %v96, 4294901760
  %5683 = vmatpush1.msra.mxu0 %v5682
  %5684 = vmatprep.subr.mxu0 0.0
  %v5685 = vand.u32 %v97, 4294901760
  %5686 = vmatpush1.msra.mxu0 %v5685
  %5687 = vmatprep.subr.mxu0 0.0
  %v5688 = vand.u32 %v98, 4294901760
  %5689 = vmatpush1.msra.mxu0 %v5688
  %5690 = vmatprep.subr.mxu0 0.0
  %v5691 = vand.u32 %v99, 4294901760
  %5692 = vmatpush1.msra.mxu0 %v5691
  %5693 = vmatprep.subr.mxu0 0.0
  %v5694 = vand.u32 %v100, 4294901760
  %5695 = vmatpush1.msra.mxu0 %v5694
  %5696 = vmatprep.subr.mxu0 0.0
  %v5697 = vand.u32 %v101, 4294901760
  %5698 = vmatpush1.msra.mxu0 %v5697
  %5699 = vmatprep.subr.mxu0 0.0
  %v5700 = vand.u32 %v102, 4294901760
  %5701 = vmatpush1.msra.mxu0 %v5700
  %5702 = vmatprep.subr.mxu0 0.0
  %v5703 = vand.u32 %v103, 4294901760
  %5704 = vmatpush1.msra.mxu0 %v5703
  %5705 = vmatprep.subr.mxu0 0.0
  %v5706 = vand.u32 %v104, 4294901760
  %5707 = vmatpush1.msra.mxu0 %v5706
  %5708 = vmatprep.subr.mxu0 0.0
  %5709 = vmatpush1.msra.mxu0 0.0
  %5710 = vmatprep.subr.mxu0 0.0
  %5711 = vmatpush1.msra.mxu0 0.0
  %5712 = vmatprep.subr.mxu0 0.0
  %5713 = vmatpush1.msra.mxu0 0.0
  %5714 = vmatprep.subr.mxu0 0.0
  %5715 = vmatpush1.msra.mxu0 0.0
  %5716 = vmatprep.subr.mxu0 0.0
  %5717 = vmatpush1.msra.mxu0 0.0
  %5718 = vmatprep.subr.mxu0 0.0
  %5719 = vmatpush1.msra.mxu0 0.0
  %5720 = vmatprep.subr.mxu0 0.0
  %5721 = vmatpush1.msra.mxu0 0.0
  %5722 = vmatprep.subr.mxu0 0.0
  %5723 = vmatpush1.msra.mxu0 0.0
  %5724 = vmatprep.subr.mxu0 0.0
  %5725 = vmatpush1.msra.mxu0 0.0
  %5726 = vmatprep.subr.mxu0 0.0
  %5727 = vmatpush1.msra.mxu0 0.0
  %5728 = vmatprep.subr.mxu0 0.0
  %5729 = vmatpush1.msra.mxu0 0.0
  %5730 = vmatprep.subr.mxu0 0.0
  %5731 = vmatpush1.msra.mxu0 0.0
  %5732 = vmatprep.subr.mxu0 0.0
  %5733 = vmatpush1.msra.mxu0 0.0
  %5734 = vmatprep.subr.mxu0 0.0
  %5735 = vmatpush1.msra.mxu0 0.0
  %5736 = vmatprep.subr.mxu0 0.0
  %5737 = vmatpush1.msra.mxu0 0.0
  %5738 = vmatprep.subr.mxu0 0.0
  %5739 = vmatpush1.msra.mxu0 0.0
  %5740 = vmatprep.mubr.f32.mxu0 0.0
  %v5741 = vand.u32 %v3935, 4294901760
  %v5742 = vsub.f32 %v3935, %v5741
  %v5743 = vand.u32 %v5742, 4294901760
  %v5744 = vsub.f32 %v5742, %v5743
  %v5745 = vand.u32 %v5744, 4294901760
  %5746 = vmatmul.mubr.f32.gmra.mrb[0].mxu0 %v5745
  %v5747 = vpop.f32.mrb[0].mxu0
  %v5748 = vadd.f32 %v5657, %v5747
  %v5749 = vpop.f32.mrb[0].mxu0
  %5750 = vdwg.mxu0
  %5751 = vmatprep.subr.mxu0 0.0
  %v5752 = vand.u32 %v89, 4294901760
  %v5753 = vsub.f32 %v89, %v5752
  %v5754 = vand.u32 %v5753, 4294901760
  %v5755 = vsub.f32 %v5753, %v5754
  %v5756 = vand.u32 %v5755, 4294901760
  %5757 = vmatpush1.msra.mxu0 %v5756
  %5758 = vmatprep.subr.mxu0 0.0
  %v5759 = vand.u32 %v90, 4294901760
  %v5760 = vsub.f32 %v90, %v5759
  %v5761 = vand.u32 %v5760, 4294901760
  %v5762 = vsub.f32 %v5760, %v5761
  %v5763 = vand.u32 %v5762, 4294901760
  %5764 = vmatpush1.msra.mxu0 %v5763
  %5765 = vmatprep.subr.mxu0 0.0
  %v5766 = vand.u32 %v91, 4294901760
  %v5767 = vsub.f32 %v91, %v5766
  %v5768 = vand.u32 %v5767, 4294901760
  %v5769 = vsub.f32 %v5767, %v5768
  %v5770 = vand.u32 %v5769, 4294901760
  %5771 = vmatpush1.msra.mxu0 %v5770
  %5772 = vmatprep.subr.mxu0 0.0
  %v5773 = vand.u32 %v92, 4294901760
  %v5774 = vsub.f32 %v92, %v5773
  %v5775 = vand.u32 %v5774, 4294901760
  %v5776 = vsub.f32 %v5774, %v5775
  %v5777 = vand.u32 %v5776, 4294901760
  %5778 = vmatpush1.msra.mxu0 %v5777
  %5779 = vmatprep.subr.mxu0 0.0
  %v5780 = vand.u32 %v93, 4294901760
  %v5781 = vsub.f32 %v93, %v5780
  %v5782 = vand.u32 %v5781, 4294901760
  %v5783 = vsub.f32 %v5781, %v5782
  %v5784 = vand.u32 %v5783, 4294901760
  %5785 = vmatpush1.msra.mxu0 %v5784
  %5786 = vmatprep.subr.mxu0 0.0
  %v5787 = vand.u32 %v94, 4294901760
  %v5788 = vsub.f32 %v94, %v5787
  %v5789 = vand.u32 %v5788, 4294901760
  %v5790 = vsub.f32 %v5788, %v5789
  %v5791 = vand.u32 %v5790, 4294901760
  %5792 = vmatpush1.msra.mxu0 %v5791
  %5793 = vmatprep.subr.mxu0 0.0
  %v5794 = vand.u32 %v95, 4294901760
  %v5795 = vsub.f32 %v95, %v5794
  %v5796 = vand.u32 %v5795, 4294901760
  %v5797 = vsub.f32 %v5795, %v5796
  %v5798 = vand.u32 %v5797, 4294901760
  %5799 = vmatpush1.msra.mxu0 %v5798
  %5800 = vmatprep.subr.mxu0 0.0
  %v5801 = vand.u32 %v96, 4294901760
  %v5802 = vsub.f32 %v96, %v5801
  %v5803 = vand.u32 %v5802, 4294901760
  %v5804 = vsub.f32 %v5802, %v5803
  %v5805 = vand.u32 %v5804, 4294901760
  %5806 = vmatpush1.msra.mxu0 %v5805
  %5807 = vmatprep.subr.mxu0 0.0
  %v5808 = vand.u32 %v97, 4294901760
  %v5809 = vsub.f32 %v97, %v5808
  %v5810 = vand.u32 %v5809, 4294901760
  %v5811 = vsub.f32 %v5809, %v5810
  %v5812 = vand.u32 %v5811, 4294901760
  %5813 = vmatpush1.msra.mxu0 %v5812
  %5814 = vmatprep.subr.mxu0 0.0
  %v5815 = vand.u32 %v98, 4294901760
  %v5816 = vsub.f32 %v98, %v5815
  %v5817 = vand.u32 %v5816, 4294901760
  %v5818 = vsub.f32 %v5816, %v5817
  %v5819 = vand.u32 %v5818, 4294901760
  %5820 = vmatpush1.msra.mxu0 %v5819
  %5821 = vmatprep.subr.mxu0 0.0
  %v5822 = vand.u32 %v99, 4294901760
  %v5823 = vsub.f32 %v99, %v5822
  %v5824 = vand.u32 %v5823, 4294901760
  %v5825 = vsub.f32 %v5823, %v5824
  %v5826 = vand.u32 %v5825, 4294901760
  %5827 = vmatpush1.msra.mxu0 %v5826
  %5828 = vmatprep.subr.mxu0 0.0
  %v5829 = vand.u32 %v100, 4294901760
  %v5830 = vsub.f32 %v100, %v5829
  %v5831 = vand.u32 %v5830, 4294901760
  %v5832 = vsub.f32 %v5830, %v5831
  %v5833 = vand.u32 %v5832, 4294901760
  %5834 = vmatpush1.msra.mxu0 %v5833
  %5835 = vmatprep.subr.mxu0 0.0
  %v5836 = vand.u32 %v101, 4294901760
  %v5837 = vsub.f32 %v101, %v5836
  %v5838 = vand.u32 %v5837, 4294901760
  %v5839 = vsub.f32 %v5837, %v5838
  %v5840 = vand.u32 %v5839, 4294901760
  %5841 = vmatpush1.msra.mxu0 %v5840
  %5842 = vmatprep.subr.mxu0 0.0
  %v5843 = vand.u32 %v102, 4294901760
  %v5844 = vsub.f32 %v102, %v5843
  %v5845 = vand.u32 %v5844, 4294901760
  %v5846 = vsub.f32 %v5844, %v5845
  %v5847 = vand.u32 %v5846, 4294901760
  %5848 = vmatpush1.msra.mxu0 %v5847
  %5849 = vmatprep.subr.mxu0 0.0
  %v5850 = vand.u32 %v103, 4294901760
  %v5851 = vsub.f32 %v103, %v5850
  %v5852 = vand.u32 %v5851, 4294901760
  %v5853 = vsub.f32 %v5851, %v5852
  %v5854 = vand.u32 %v5853, 4294901760
  %5855 = vmatpush1.msra.mxu0 %v5854
  %5856 = vmatprep.subr.mxu0 0.0
  %v5857 = vand.u32 %v104, 4294901760
  %v5858 = vsub.f32 %v104, %v5857
  %v5859 = vand.u32 %v5858, 4294901760
  %v5860 = vsub.f32 %v5858, %v5859
  %v5861 = vand.u32 %v5860, 4294901760
  %5862 = vmatpush1.msra.mxu0 %v5861
  %5863 = vmatprep.subr.mxu0 0.0
  %5864 = vmatpush1.msra.mxu0 0.0
  %5865 = vmatprep.subr.mxu0 0.0
  %5866 = vmatpush1.msra.mxu0 0.0
  %5867 = vmatprep.subr.mxu0 0.0
  %5868 = vmatpush1.msra.mxu0 0.0
  %5869 = vmatprep.subr.mxu0 0.0
  %5870 = vmatpush1.msra.mxu0 0.0
  %5871 = vmatprep.subr.mxu0 0.0
  %5872 = vmatpush1.msra.mxu0 0.0
  %5873 = vmatprep.subr.mxu0 0.0
  %5874 = vmatpush1.msra.mxu0 0.0
  %5875 = vmatprep.subr.mxu0 0.0
  %5876 = vmatpush1.msra.mxu0 0.0
  %5877 = vmatprep.subr.mxu0 0.0
  %5878 = vmatpush1.msra.mxu0 0.0
  %5879 = vmatprep.subr.mxu0 0.0
  %5880 = vmatpush1.msra.mxu0 0.0
  %5881 = vmatprep.subr.mxu0 0.0
  %5882 = vmatpush1.msra.mxu0 0.0
  %5883 = vmatprep.subr.mxu0 0.0
  %5884 = vmatpush1.msra.mxu0 0.0
  %5885 = vmatprep.subr.mxu0 0.0
  %5886 = vmatpush1.msra.mxu0 0.0
  %5887 = vmatprep.subr.mxu0 0.0
  %5888 = vmatpush1.msra.mxu0 0.0
  %5889 = vmatprep.subr.mxu0 0.0
  %5890 = vmatpush1.msra.mxu0 0.0
  %5891 = vmatprep.subr.mxu0 0.0
  %5892 = vmatpush1.msra.mxu0 0.0
  %5893 = vmatprep.subr.mxu0 0.0
  %5894 = vmatpush1.msra.mxu0 0.0
  %5895 = vmatprep.mubr.f32.mxu0 0.0
  %v5896 = vand.u32 %v3935, 4294901760
  %5897 = vmatmul.mubr.f32.gmra.mrb[0].mxu0 %v5896
  %v5898 = vpop.f32.mrb[0].mxu0
  %v5899 = vadd.f32 %v5748, %v5898
  %v5900 = vpop.f32.mrb[0].mxu0
  %5901 = vdwg.mxu0
  %5902 = vmatprep.subr.mxu0 0.0
  %v5903 = vand.u32 %v89, 4294901760
  %v5904 = vsub.f32 %v89, %v5903
  %5905 = vmatpush1.msra.mxu0 %v5904
  %5906 = vmatprep.subr.mxu0 0.0
  %v5907 = vand.u32 %v90, 4294901760
  %v5908 = vsub.f32 %v90, %v5907
  %5909 = vmatpush1.msra.mxu0 %v5908
  %5910 = vmatprep.subr.mxu0 0.0
  %v5911 = vand.u32 %v91, 4294901760
  %v5912 = vsub.f32 %v91, %v5911
  %5913 = vmatpush1.msra.mxu0 %v5912
  %5914 = vmatprep.subr.mxu0 0.0
  %v5915 = vand.u32 %v92, 4294901760
  %v5916 = vsub.f32 %v92, %v5915
  %5917 = vmatpush1.msra.mxu0 %v5916
  %5918 = vmatprep.subr.mxu0 0.0
  %v5919 = vand.u32 %v93, 4294901760
  %v5920 = vsub.f32 %v93, %v5919
  %5921 = vmatpush1.msra.mxu0 %v5920
  %5922 = vmatprep.subr.mxu0 0.0
  %v5923 = vand.u32 %v94, 4294901760
  %v5924 = vsub.f32 %v94, %v5923
  %5925 = vmatpush1.msra.mxu0 %v5924
  %5926 = vmatprep.subr.mxu0 0.0
  %v5927 = vand.u32 %v95, 4294901760
  %v5928 = vsub.f32 %v95, %v5927
  %5929 = vmatpush1.msra.mxu0 %v5928
  %5930 = vmatprep.subr.mxu0 0.0
  %v5931 = vand.u32 %v96, 4294901760
  %v5932 = vsub.f32 %v96, %v5931
  %5933 = vmatpush1.msra.mxu0 %v5932
  %5934 = vmatprep.subr.mxu0 0.0
  %v5935 = vand.u32 %v97, 4294901760
  %v5936 = vsub.f32 %v97, %v5935
  %5937 = vmatpush1.msra.mxu0 %v5936
  %5938 = vmatprep.subr.mxu0 0.0
  %v5939 = vand.u32 %v98, 4294901760
  %v5940 = vsub.f32 %v98, %v5939
  %5941 = vmatpush1.msra.mxu0 %v5940
  %5942 = vmatprep.subr.mxu0 0.0
  %v5943 = vand.u32 %v99, 4294901760
  %v5944 = vsub.f32 %v99, %v5943
  %5945 = vmatpush1.msra.mxu0 %v5944
  %5946 = vmatprep.subr.mxu0 0.0
  %v5947 = vand.u32 %v100, 4294901760
  %v5948 = vsub.f32 %v100, %v5947
  %5949 = vmatpush1.msra.mxu0 %v5948
  %5950 = vmatprep.subr.mxu0 0.0
  %v5951 = vand.u32 %v101, 4294901760
  %v5952 = vsub.f32 %v101, %v5951
  %5953 = vmatpush1.msra.mxu0 %v5952
  %5954 = vmatprep.subr.mxu0 0.0
  %v5955 = vand.u32 %v102, 4294901760
  %v5956 = vsub.f32 %v102, %v5955
  %5957 = vmatpush1.msra.mxu0 %v5956
  %5958 = vmatprep.subr.mxu0 0.0
  %v5959 = vand.u32 %v103, 4294901760
  %v5960 = vsub.f32 %v103, %v5959
  %5961 = vmatpush1.msra.mxu0 %v5960
  %5962 = vmatprep.subr.mxu0 0.0
  %v5963 = vand.u32 %v104, 4294901760
  %v5964 = vsub.f32 %v104, %v5963
  %5965 = vmatpush1.msra.mxu0 %v5964
  %5966 = vmatprep.subr.mxu0 0.0
  %5967 = vmatpush1.msra.mxu0 0.0
  %5968 = vmatprep.subr.mxu0 0.0
  %5969 = vmatpush1.msra.mxu0 0.0
  %5970 = vmatprep.subr.mxu0 0.0
  %5971 = vmatpush1.msra.mxu0 0.0
  %5972 = vmatprep.subr.mxu0 0.0
  %5973 = vmatpush1.msra.mxu0 0.0
  %5974 = vmatprep.subr.mxu0 0.0
  %5975 = vmatpush1.msra.mxu0 0.0
  %5976 = vmatprep.subr.mxu0 0.0
  %5977 = vmatpush1.msra.mxu0 0.0
  %5978 = vmatprep.subr.mxu0 0.0
  %5979 = vmatpush1.msra.mxu0 0.0
  %5980 = vmatprep.subr.mxu0 0.0
  %5981 = vmatpush1.msra.mxu0 0.0
  %5982 = vmatprep.subr.mxu0 0.0
  %5983 = vmatpush1.msra.mxu0 0.0
  %5984 = vmatprep.subr.mxu0 0.0
  %5985 = vmatpush1.msra.mxu0 0.0
  %5986 = vmatprep.subr.mxu0 0.0
  %5987 = vmatpush1.msra.mxu0 0.0
  %5988 = vmatprep.subr.mxu0 0.0
  %5989 = vmatpush1.msra.mxu0 0.0
  %5990 = vmatprep.subr.mxu0 0.0
  %5991 = vmatpush1.msra.mxu0 0.0
  %5992 = vmatprep.subr.mxu0 0.0
  %5993 = vmatpush1.msra.mxu0 0.0
  %5994 = vmatprep.subr.mxu0 0.0
  %5995 = vmatpush1.msra.mxu0 0.0
  %5996 = vmatprep.subr.mxu0 0.0
  %5997 = vmatpush1.msra.mxu0 0.0
  %5998 = vmatprep.mubr.f32.mxu0 0.0
  %v5999 = vand.u32 %v3935, 4294901760
  %v6000 = vsub.f32 %v3935, %v5999
  %6001 = vmatmul.mubr.f32.gmra.mrb[0].mxu0 %v6000
  %v6002 = vpop.f32.mrb[0].mxu0
  %v6003 = vadd.f32 %v5899, %v6002
  %v6004 = vpop.f32.mrb[0].mxu0
  %6005 = vdwg.mxu0
  %6006 = vmatprep.subr.mxu0 0.0
  %v6007 = vand.u32 %v89, 4294901760
  %6008 = vmatpush1.msra.mxu0 %v6007
  %6009 = vmatprep.subr.mxu0 0.0
  %v6010 = vand.u32 %v90, 4294901760
  %6011 = vmatpush1.msra.mxu0 %v6010
  %6012 = vmatprep.subr.mxu0 0.0
  %v6013 = vand.u32 %v91, 4294901760
  %6014 = vmatpush1.msra.mxu0 %v6013
  %6015 = vmatprep.subr.mxu0 0.0
  %v6016 = vand.u32 %v92, 4294901760
  %6017 = vmatpush1.msra.mxu0 %v6016
  %6018 = vmatprep.subr.mxu0 0.0
  %v6019 = vand.u32 %v93, 4294901760
  %6020 = vmatpush1.msra.mxu0 %v6019
  %6021 = vmatprep.subr.mxu0 0.0
  %v6022 = vand.u32 %v94, 4294901760
  %6023 = vmatpush1.msra.mxu0 %v6022
  %6024 = vmatprep.subr.mxu0 0.0
  %v6025 = vand.u32 %v95, 4294901760
  %6026 = vmatpush1.msra.mxu0 %v6025
  %6027 = vmatprep.subr.mxu0 0.0
  %v6028 = vand.u32 %v96, 4294901760
  %6029 = vmatpush1.msra.mxu0 %v6028
  %6030 = vmatprep.subr.mxu0 0.0
  %v6031 = vand.u32 %v97, 4294901760
  %6032 = vmatpush1.msra.mxu0 %v6031
  %6033 = vmatprep.subr.mxu0 0.0
  %v6034 = vand.u32 %v98, 4294901760
  %6035 = vmatpush1.msra.mxu0 %v6034
  %6036 = vmatprep.subr.mxu0 0.0
  %v6037 = vand.u32 %v99, 4294901760
  %6038 = vmatpush1.msra.mxu0 %v6037
  %6039 = vmatprep.subr.mxu0 0.0
  %v6040 = vand.u32 %v100, 4294901760
  %6041 = vmatpush1.msra.mxu0 %v6040
  %6042 = vmatprep.subr.mxu0 0.0
  %v6043 = vand.u32 %v101, 4294901760
  %6044 = vmatpush1.msra.mxu0 %v6043
  %6045 = vmatprep.subr.mxu0 0.0
  %v6046 = vand.u32 %v102, 4294901760
  %6047 = vmatpush1.msra.mxu0 %v6046
  %6048 = vmatprep.subr.mxu0 0.0
  %v6049 = vand.u32 %v103, 4294901760
  %6050 = vmatpush1.msra.mxu0 %v6049
  %6051 = vmatprep.subr.mxu0 0.0
  %v6052 = vand.u32 %v104, 4294901760
  %6053 = vmatpush1.msra.mxu0 %v6052
  %6054 = vmatprep.subr.mxu0 0.0
  %6055 = vmatpush1.msra.mxu0 0.0
  %6056 = vmatprep.subr.mxu0 0.0
  %6057 = vmatpush1.msra.mxu0 0.0
  %6058 = vmatprep.subr.mxu0 0.0
  %6059 = vmatpush1.msra.mxu0 0.0
  %6060 = vmatprep.subr.mxu0 0.0
  %6061 = vmatpush1.msra.mxu0 0.0
  %6062 = vmatprep.subr.mxu0 0.0
  %6063 = vmatpush1.msra.mxu0 0.0
  %6064 = vmatprep.subr.mxu0 0.0
  %6065 = vmatpush1.msra.mxu0 0.0
  %6066 = vmatprep.subr.mxu0 0.0
  %6067 = vmatpush1.msra.mxu0 0.0
  %6068 = vmatprep.subr.mxu0 0.0
  %6069 = vmatpush1.msra.mxu0 0.0
  %6070 = vmatprep.subr.mxu0 0.0
  %6071 = vmatpush1.msra.mxu0 0.0
  %6072 = vmatprep.subr.mxu0 0.0
  %6073 = vmatpush1.msra.mxu0 0.0
  %6074 = vmatprep.subr.mxu0 0.0
  %6075 = vmatpush1.msra.mxu0 0.0
  %6076 = vmatprep.subr.mxu0 0.0
  %6077 = vmatpush1.msra.mxu0 0.0
  %6078 = vmatprep.subr.mxu0 0.0
  %6079 = vmatpush1.msra.mxu0 0.0
  %6080 = vmatprep.subr.mxu0 0.0
  %6081 = vmatpush1.msra.mxu0 0.0
  %6082 = vmatprep.subr.mxu0 0.0
  %6083 = vmatpush1.msra.mxu0 0.0
  %6084 = vmatprep.subr.mxu0 0.0
  %6085 = vmatpush1.msra.mxu0 0.0
  %6086 = vmatprep.mubr.f32.mxu0 0.0
  %v6087 = vand.u32 %v3935, 4294901760
  %v6088 = vsub.f32 %v3935, %v6087
  %v6089 = vand.u32 %v6088, 4294901760
  %6090 = vmatmul.mubr.f32.gmra.mrb[0].mxu0 %v6089
  %v6091 = vpop.f32.mrb[0].mxu0
  %v6092 = vadd.f32 %v6003, %v6091
  %v6093 = vpop.f32.mrb[0].mxu0
  %6094 = vdwg.mxu0
  %6095 = vmatprep.subr.mxu0 0.0
  %v6096 = vand.u32 %v89, 4294901760
  %v6097 = vsub.f32 %v89, %v6096
  %v6098 = vand.u32 %v6097, 4294901760
  %6099 = vmatpush1.msra.mxu0 %v6098
  %6100 = vmatprep.subr.mxu0 0.0
  %v6101 = vand.u32 %v90, 4294901760
  %v6102 = vsub.f32 %v90, %v6101
  %v6103 = vand.u32 %v6102, 4294901760
  %6104 = vmatpush1.msra.mxu0 %v6103
  %6105 = vmatprep.subr.mxu0 0.0
  %v6106 = vand.u32 %v91, 4294901760
  %v6107 = vsub.f32 %v91, %v6106
  %v6108 = vand.u32 %v6107, 4294901760
  %6109 = vmatpush1.msra.mxu0 %v6108
  %6110 = vmatprep.subr.mxu0 0.0
  %v6111 = vand.u32 %v92, 4294901760
  %v6112 = vsub.f32 %v92, %v6111
  %v6113 = vand.u32 %v6112, 4294901760
  %6114 = vmatpush1.msra.mxu0 %v6113
  %6115 = vmatprep.subr.mxu0 0.0
  %v6116 = vand.u32 %v93, 4294901760
  %v6117 = vsub.f32 %v93, %v6116
  %v6118 = vand.u32 %v6117, 4294901760
  %6119 = vmatpush1.msra.mxu0 %v6118
  %6120 = vmatprep.subr.mxu0 0.0
  %v6121 = vand.u32 %v94, 4294901760
  %v6122 = vsub.f32 %v94, %v6121
  %v6123 = vand.u32 %v6122, 4294901760
  %6124 = vmatpush1.msra.mxu0 %v6123
  %6125 = vmatprep.subr.mxu0 0.0
  %v6126 = vand.u32 %v95, 4294901760
  %v6127 = vsub.f32 %v95, %v6126
  %v6128 = vand.u32 %v6127, 4294901760
  %6129 = vmatpush1.msra.mxu0 %v6128
  %6130 = vmatprep.subr.mxu0 0.0
  %v6131 = vand.u32 %v96, 4294901760
  %v6132 = vsub.f32 %v96, %v6131
  %v6133 = vand.u32 %v6132, 4294901760
  %6134 = vmatpush1.msra.mxu0 %v6133
  %6135 = vmatprep.subr.mxu0 0.0
  %v6136 = vand.u32 %v97, 4294901760
  %v6137 = vsub.f32 %v97, %v6136
  %v6138 = vand.u32 %v6137, 4294901760
  %6139 = vmatpush1.msra.mxu0 %v6138
  %6140 = vmatprep.subr.mxu0 0.0
  %v6141 = vand.u32 %v98, 4294901760
  %v6142 = vsub.f32 %v98, %v6141
  %v6143 = vand.u32 %v6142, 4294901760
  %6144 = vmatpush1.msra.mxu0 %v6143
  %6145 = vmatprep.subr.mxu0 0.0
  %v6146 = vand.u32 %v99, 4294901760
  %v6147 = vsub.f32 %v99, %v6146
  %v6148 = vand.u32 %v6147, 4294901760
  %6149 = vmatpush1.msra.mxu0 %v6148
  %6150 = vmatprep.subr.mxu0 0.0
  %v6151 = vand.u32 %v100, 4294901760
  %v6152 = vsub.f32 %v100, %v6151
  %v6153 = vand.u32 %v6152, 4294901760
  %6154 = vmatpush1.msra.mxu0 %v6153
  %6155 = vmatprep.subr.mxu0 0.0
  %v6156 = vand.u32 %v101, 4294901760
  %v6157 = vsub.f32 %v101, %v6156
  %v6158 = vand.u32 %v6157, 4294901760
  %6159 = vmatpush1.msra.mxu0 %v6158
  %6160 = vmatprep.subr.mxu0 0.0
  %v6161 = vand.u32 %v102, 4294901760
  %v6162 = vsub.f32 %v102, %v6161
  %v6163 = vand.u32 %v6162, 4294901760
  %6164 = vmatpush1.msra.mxu0 %v6163
  %6165 = vmatprep.subr.mxu0 0.0
  %v6166 = vand.u32 %v103, 4294901760
  %v6167 = vsub.f32 %v103, %v6166
  %v6168 = vand.u32 %v6167, 4294901760
  %6169 = vmatpush1.msra.mxu0 %v6168
  %6170 = vmatprep.subr.mxu0 0.0
  %v6171 = vand.u32 %v104, 4294901760
  %v6172 = vsub.f32 %v104, %v6171
  %v6173 = vand.u32 %v6172, 4294901760
  %6174 = vmatpush1.msra.mxu0 %v6173
  %6175 = vmatprep.subr.mxu0 0.0
  %6176 = vmatpush1.msra.mxu0 0.0
  %6177 = vmatprep.subr.mxu0 0.0
  %6178 = vmatpush1.msra.mxu0 0.0
  %6179 = vmatprep.subr.mxu0 0.0
  %6180 = vmatpush1.msra.mxu0 0.0
  %6181 = vmatprep.subr.mxu0 0.0
  %6182 = vmatpush1.msra.mxu0 0.0
  %6183 = vmatprep.subr.mxu0 0.0
  %6184 = vmatpush1.msra.mxu0 0.0
  %6185 = vmatprep.subr.mxu0 0.0
  %6186 = vmatpush1.msra.mxu0 0.0
  %6187 = vmatprep.subr.mxu0 0.0
  %6188 = vmatpush1.msra.mxu0 0.0
  %6189 = vmatprep.subr.mxu0 0.0
  %6190 = vmatpush1.msra.mxu0 0.0
  %6191 = vmatprep.subr.mxu0 0.0
  %6192 = vmatpush1.msra.mxu0 0.0
  %6193 = vmatprep.subr.mxu0 0.0
  %6194 = vmatpush1.msra.mxu0 0.0
  %6195 = vmatprep.subr.mxu0 0.0
  %6196 = vmatpush1.msra.mxu0 0.0
  %6197 = vmatprep.subr.mxu0 0.0
  %6198 = vmatpush1.msra.mxu0 0.0
  %6199 = vmatprep.subr.mxu0 0.0
  %6200 = vmatpush1.msra.mxu0 0.0
  %6201 = vmatprep.subr.mxu0 0.0
  %6202 = vmatpush1.msra.mxu0 0.0
  %6203 = vmatprep.subr.mxu0 0.0
  %6204 = vmatpush1.msra.mxu0 0.0
  %6205 = vmatprep.subr.mxu0 0.0
  %6206 = vmatpush1.msra.mxu0 0.0
  %6207 = vmatprep.mubr.f32.mxu0 0.0
  %v6208 = vand.u32 %v3935, 4294901760
  %6209 = vmatmul.mubr.f32.gmra.mrb[0].mxu0 %v6208
  %v6210 = vpop.f32.mrb[0].mxu0
  %v6211 = vadd.f32 %v6092, %v6210
  %v6212 = vpop.f32.mrb[0].mxu0
  %6213 = vdwg.mxu0
  %6214 = vmatprep.subr.mxu0 0.0
  %v6215 = vand.u32 %v89, 4294901760
  %6216 = vmatpush1.msra.mxu0 %v6215
  %6217 = vmatprep.subr.mxu0 0.0
  %v6218 = vand.u32 %v90, 4294901760
  %6219 = vmatpush1.msra.mxu0 %v6218
  %6220 = vmatprep.subr.mxu0 0.0
  %v6221 = vand.u32 %v91, 4294901760
  %6222 = vmatpush1.msra.mxu0 %v6221
  %6223 = vmatprep.subr.mxu0 0.0
  %v6224 = vand.u32 %v92, 4294901760
  %6225 = vmatpush1.msra.mxu0 %v6224
  %6226 = vmatprep.subr.mxu0 0.0
  %v6227 = vand.u32 %v93, 4294901760
  %6228 = vmatpush1.msra.mxu0 %v6227
  %6229 = vmatprep.subr.mxu0 0.0
  %v6230 = vand.u32 %v94, 4294901760
  %6231 = vmatpush1.msra.mxu0 %v6230
  %6232 = vmatprep.subr.mxu0 0.0
  %v6233 = vand.u32 %v95, 4294901760
  %6234 = vmatpush1.msra.mxu0 %v6233
  %6235 = vmatprep.subr.mxu0 0.0
  %v6236 = vand.u32 %v96, 4294901760
  %6237 = vmatpush1.msra.mxu0 %v6236
  %6238 = vmatprep.subr.mxu0 0.0
  %v6239 = vand.u32 %v97, 4294901760
  %6240 = vmatpush1.msra.mxu0 %v6239
  %6241 = vmatprep.subr.mxu0 0.0
  %v6242 = vand.u32 %v98, 4294901760
  %6243 = vmatpush1.msra.mxu0 %v6242
  %6244 = vmatprep.subr.mxu0 0.0
  %v6245 = vand.u32 %v99, 4294901760
  %6246 = vmatpush1.msra.mxu0 %v6245
  %6247 = vmatprep.subr.mxu0 0.0
  %v6248 = vand.u32 %v100, 4294901760
  %6249 = vmatpush1.msra.mxu0 %v6248
  %6250 = vmatprep.subr.mxu0 0.0
  %v6251 = vand.u32 %v101, 4294901760
  %6252 = vmatpush1.msra.mxu0 %v6251
  %6253 = vmatprep.subr.mxu0 0.0
  %v6254 = vand.u32 %v102, 4294901760
  %6255 = vmatpush1.msra.mxu0 %v6254
  %6256 = vmatprep.subr.mxu0 0.0
  %v6257 = vand.u32 %v103, 4294901760
  %6258 = vmatpush1.msra.mxu0 %v6257
  %6259 = vmatprep.subr.mxu0 0.0
  %v6260 = vand.u32 %v104, 4294901760
  %6261 = vmatpush1.msra.mxu0 %v6260
  %6262 = vmatprep.subr.mxu0 0.0
  %6263 = vmatpush1.msra.mxu0 0.0
  %6264 = vmatprep.subr.mxu0 0.0
  %6265 = vmatpush1.msra.mxu0 0.0
  %6266 = vmatprep.subr.mxu0 0.0
  %6267 = vmatpush1.msra.mxu0 0.0
  %6268 = vmatprep.subr.mxu0 0.0
  %6269 = vmatpush1.msra.mxu0 0.0
  %6270 = vmatprep.subr.mxu0 0.0
  %6271 = vmatpush1.msra.mxu0 0.0
  %6272 = vmatprep.subr.mxu0 0.0
  %6273 = vmatpush1.msra.mxu0 0.0
  %6274 = vmatprep.subr.mxu0 0.0
  %6275 = vmatpush1.msra.mxu0 0.0
  %6276 = vmatprep.subr.mxu0 0.0
  %6277 = vmatpush1.msra.mxu0 0.0
  %6278 = vmatprep.subr.mxu0 0.0
  %6279 = vmatpush1.msra.mxu0 0.0
  %6280 = vmatprep.subr.mxu0 0.0
  %6281 = vmatpush1.msra.mxu0 0.0
  %6282 = vmatprep.subr.mxu0 0.0
  %6283 = vmatpush1.msra.mxu0 0.0
  %6284 = vmatprep.subr.mxu0 0.0
  %6285 = vmatpush1.msra.mxu0 0.0
  %6286 = vmatprep.subr.mxu0 0.0
  %6287 = vmatpush1.msra.mxu0 0.0
  %6288 = vmatprep.subr.mxu0 0.0
  %6289 = vmatpush1.msra.mxu0 0.0
  %6290 = vmatprep.subr.mxu0 0.0
  %6291 = vmatpush1.msra.mxu0 0.0
  %6292 = vmatprep.subr.mxu0 0.0
  %6293 = vmatpush1.msra.mxu0 0.0
  %6294 = vmatprep.mubr.f32.mxu0 0.0
  %v6295 = vand.u32 %v3935, 4294901760
  %6296 = vmatmul.mubr.f32.gmra.mrb[0].mxu0 %v6295
  %v6297 = vpop.f32.mrb[0].mxu0
  %v6298 = vadd.f32 %v6211, %v6297
  %v6299 = vpop.f32.mrb[0].mxu0
  %6300 = vdwg.mxu0
  %v6301 = vmul.f32 %v6298, 0.025641026
  %v6302 = vrsqrt.pop %v6301
  %v6303 = vmul.f32 %v6301, %v6302
  %vm6304 = vcmp.eq.f32.partialorder %v6301, inf
  %v6305 = vsel %vm6304, %v6301, %v6303
  %vm6306 = vcmp.eq.f32.partialorder %v6301, 0.0
  %v6307 = vand.u32 %v6301, 2147483648
  %v6308 = vsel %vm6306, %v6307, %v6305
  %v6309 = vadd.f32 %v6308, 0.0001
  %v6310 = vrcp.pop %v6309
  %v6312 = vsel %vm2481, %v6310, 0
  %v6314 = vand.u32 %v106, 4294901760
  %6315 = vmatprep.subr.mxu0 %v6314
  %v6316 = vand.u32 %v105, 4294901760
  %6317 = vmatpush1.msra.mxu0 %v6316
  %v6318 = vand.u32 %v111, 4294901760
  %6319 = vmatprep.subr.mxu0 %v6318
  %v6320 = vand.u32 %v110, 4294901760
  %6321 = vmatpush1.msra.mxu0 %v6320
  %6322 = vmatprep.subr.mxu0 0.0
  %6323 = vmatpush1.msra.mxu0 0.0
  %6324 = vmatprep.subr.mxu0 0.0
  %6325 = vmatpush1.msra.mxu0 0.0
  %6326 = vmatprep.subr.mxu0 0.0
  %6327 = vmatpush1.msra.mxu0 0.0
  %6328 = vmatprep.subr.mxu0 0.0
  %6329 = vmatpush1.msra.mxu0 0.0
  %6330 = vmatprep.subr.mxu0 0.0
  %6331 = vmatpush1.msra.mxu0 0.0
  %6332 = vmatprep.subr.mxu0 0.0
  %6333 = vmatpush1.msra.mxu0 0.0
  %6334 = vmatprep.subr.mxu0 0.0
  %6335 = vmatpush1.msra.mxu0 0.0
  %6336 = vmatprep.subr.mxu0 0.0
  %6337 = vmatpush1.msra.mxu0 0.0
  %6338 = vmatprep.subr.mxu0 0.0
  %6339 = vmatpush1.msra.mxu0 0.0
  %6340 = vmatprep.subr.mxu0 0.0
  %6341 = vmatpush1.msra.mxu0 0.0
  %6342 = vmatprep.subr.mxu0 0.0
  %6343 = vmatpush1.msra.mxu0 0.0
  %6344 = vmatprep.subr.mxu0 0.0
  %6345 = vmatpush1.msra.mxu0 0.0
  %6346 = vmatprep.subr.mxu0 0.0
  %6347 = vmatpush1.msra.mxu0 0.0
  %6348 = vmatprep.subr.mxu0 0.0
  %6349 = vmatpush1.msra.mxu0 0.0
  %6350 = vmatprep.subr.mxu0 0.0
  %6351 = vmatpush1.msra.mxu0 0.0
  %6352 = vmatprep.subr.mxu0 0.0
  %6353 = vmatpush1.msra.mxu0 0.0
  %6354 = vmatprep.subr.mxu0 0.0
  %6355 = vmatpush1.msra.mxu0 0.0
  %6356 = vmatprep.subr.mxu0 0.0
  %6357 = vmatpush1.msra.mxu0 0.0
  %6358 = vmatprep.subr.mxu0 0.0
  %6359 = vmatpush1.msra.mxu0 0.0
  %6360 = vmatprep.subr.mxu0 0.0
  %6361 = vmatpush1.msra.mxu0 0.0
  %6362 = vmatprep.subr.mxu0 0.0
  %6363 = vmatpush1.msra.mxu0 0.0
  %6364 = vmatprep.subr.mxu0 0.0
  %6365 = vmatpush1.msra.mxu0 0.0
  %6366 = vmatprep.subr.mxu0 0.0
  %6367 = vmatpush1.msra.mxu0 0.0
  %6368 = vmatprep.subr.mxu0 0.0
  %6369 = vmatpush1.msra.mxu0 0.0
  %6370 = vmatprep.subr.mxu0 0.0
  %6371 = vmatpush1.msra.mxu0 0.0
  %6372 = vmatprep.subr.mxu0 0.0
  %6373 = vmatpush1.msra.mxu0 0.0
  %6374 = vmatprep.subr.mxu0 0.0
  %6375 = vmatpush1.msra.mxu0 0.0
  %6376 = vmatprep.subr.mxu0 0.0
  %6377 = vmatpush1.msra.mxu0 0.0
  %6378 = vmatprep.subr.mxu0 0.0
  %6379 = vmatpush1.msra.mxu0 0.0
  %6380 = vmatprep.subr.mxu0 0.0
  %6381 = vmatpush1.msra.mxu0 0.0
  %6382 = vmatprep.mubr.f32.mxu0 0.0
  %v6383 = vand.u32 %v6312, 4294901760
  %v6384 = vsub.f32 %v6312, %v6383
  %v6385 = vand.u32 %v6384, 4294901760
  %v6386 = vsub.f32 %v6384, %v6385
  %v6387 = vand.u32 %v6386, 4294901760
  %6388 = vmatmul.mubr.f32.gmra.mrb[0].mxu0 %v6387
  %v6389 = vpop.f32.mrb[0].mxu0
  %v6390 = vadd.f32 0.0, %v6389
  %v6391 = vpop.f32.mrb[0].mxu0
  %v6392 = vadd.f32 0.0, %v6391
  %6393 = vdwg.mxu0
  %v6394 = vand.u32 %v106, 4294901760
  %v6395 = vsub.f32 %v106, %v6394
  %v6396 = vand.u32 %v6395, 4294901760
  %v6397 = vsub.f32 %v6395, %v6396
  %v6398 = vand.u32 %v6397, 4294901760
  %6399 = vmatprep.subr.mxu0 %v6398
  %v6400 = vand.u32 %v105, 4294901760
  %v6401 = vsub.f32 %v105, %v6400
  %v6402 = vand.u32 %v6401, 4294901760
  %v6403 = vsub.f32 %v6401, %v6402
  %v6404 = vand.u32 %v6403, 4294901760
  %6405 = vmatpush1.msra.mxu0 %v6404
  %v6406 = vand.u32 %v111, 4294901760
  %v6407 = vsub.f32 %v111, %v6406
  %v6408 = vand.u32 %v6407, 4294901760
  %v6409 = vsub.f32 %v6407, %v6408
  %v6410 = vand.u32 %v6409, 4294901760
  %6411 = vmatprep.subr.mxu0 %v6410
  %v6412 = vand.u32 %v110, 4294901760
  %v6413 = vsub.f32 %v110, %v6412
  %v6414 = vand.u32 %v6413, 4294901760
  %v6415 = vsub.f32 %v6413, %v6414
  %v6416 = vand.u32 %v6415, 4294901760
  %6417 = vmatpush1.msra.mxu0 %v6416
  %6418 = vmatprep.subr.mxu0 0.0
  %6419 = vmatpush1.msra.mxu0 0.0
  %6420 = vmatprep.subr.mxu0 0.0
  %6421 = vmatpush1.msra.mxu0 0.0
  %6422 = vmatprep.subr.mxu0 0.0
  %6423 = vmatpush1.msra.mxu0 0.0
  %6424 = vmatprep.subr.mxu0 0.0
  %6425 = vmatpush1.msra.mxu0 0.0
  %6426 = vmatprep.subr.mxu0 0.0
  %6427 = vmatpush1.msra.mxu0 0.0
  %6428 = vmatprep.subr.mxu0 0.0
  %6429 = vmatpush1.msra.mxu0 0.0
  %6430 = vmatprep.subr.mxu0 0.0
  %6431 = vmatpush1.msra.mxu0 0.0
  %6432 = vmatprep.subr.mxu0 0.0
  %6433 = vmatpush1.msra.mxu0 0.0
  %6434 = vmatprep.subr.mxu0 0.0
  %6435 = vmatpush1.msra.mxu0 0.0
  %6436 = vmatprep.subr.mxu0 0.0
  %6437 = vmatpush1.msra.mxu0 0.0
  %6438 = vmatprep.subr.mxu0 0.0
  %6439 = vmatpush1.msra.mxu0 0.0
  %6440 = vmatprep.subr.mxu0 0.0
  %6441 = vmatpush1.msra.mxu0 0.0
  %6442 = vmatprep.subr.mxu0 0.0
  %6443 = vmatpush1.msra.mxu0 0.0
  %6444 = vmatprep.subr.mxu0 0.0
  %6445 = vmatpush1.msra.mxu0 0.0
  %6446 = vmatprep.subr.mxu0 0.0
  %6447 = vmatpush1.msra.mxu0 0.0
  %6448 = vmatprep.subr.mxu0 0.0
  %6449 = vmatpush1.msra.mxu0 0.0
  %6450 = vmatprep.subr.mxu0 0.0
  %6451 = vmatpush1.msra.mxu0 0.0
  %6452 = vmatprep.subr.mxu0 0.0
  %6453 = vmatpush1.msra.mxu0 0.0
  %6454 = vmatprep.subr.mxu0 0.0
  %6455 = vmatpush1.msra.mxu0 0.0
  %6456 = vmatprep.subr.mxu0 0.0
  %6457 = vmatpush1.msra.mxu0 0.0
  %6458 = vmatprep.subr.mxu0 0.0
  %6459 = vmatpush1.msra.mxu0 0.0
  %6460 = vmatprep.subr.mxu0 0.0
  %6461 = vmatpush1.msra.mxu0 0.0
  %6462 = vmatprep.subr.mxu0 0.0
  %6463 = vmatpush1.msra.mxu0 0.0
  %6464 = vmatprep.subr.mxu0 0.0
  %6465 = vmatpush1.msra.mxu0 0.0
  %6466 = vmatprep.subr.mxu0 0.0
  %6467 = vmatpush1.msra.mxu0 0.0
  %6468 = vmatprep.subr.mxu0 0.0
  %6469 = vmatpush1.msra.mxu0 0.0
  %6470 = vmatprep.subr.mxu0 0.0
  %6471 = vmatpush1.msra.mxu0 0.0
  %6472 = vmatprep.subr.mxu0 0.0
  %6473 = vmatpush1.msra.mxu0 0.0
  %6474 = vmatprep.subr.mxu0 0.0
  %6475 = vmatpush1.msra.mxu0 0.0
  %6476 = vmatprep.subr.mxu0 0.0
  %6477 = vmatpush1.msra.mxu0 0.0
  %6478 = vmatprep.mubr.f32.mxu0 0.0
  %v6479 = vand.u32 %v6312, 4294901760
  %6480 = vmatmul.mubr.f32.gmra.mrb[0].mxu0 %v6479
  %v6481 = vpop.f32.mrb[0].mxu0
  %v6482 = vadd.f32 %v6390, %v6481
  %v6483 = vpop.f32.mrb[0].mxu0
  %v6484 = vadd.f32 %v6392, %v6483
  %6485 = vdwg.mxu0
  %v6486 = vand.u32 %v106, 4294901760
  %v6487 = vsub.f32 %v106, %v6486
  %6488 = vmatprep.subr.mxu0 %v6487
  %v6489 = vand.u32 %v105, 4294901760
  %v6490 = vsub.f32 %v105, %v6489
  %6491 = vmatpush1.msra.mxu0 %v6490
  %v6492 = vand.u32 %v111, 4294901760
  %v6493 = vsub.f32 %v111, %v6492
  %6494 = vmatprep.subr.mxu0 %v6493
  %v6495 = vand.u32 %v110, 4294901760
  %v6496 = vsub.f32 %v110, %v6495
  %6497 = vmatpush1.msra.mxu0 %v6496
  %6498 = vmatprep.subr.mxu0 0.0
  %6499 = vmatpush1.msra.mxu0 0.0
  %6500 = vmatprep.subr.mxu0 0.0
  %6501 = vmatpush1.msra.mxu0 0.0
  %6502 = vmatprep.subr.mxu0 0.0
  %6503 = vmatpush1.msra.mxu0 0.0
  %6504 = vmatprep.subr.mxu0 0.0
  %6505 = vmatpush1.msra.mxu0 0.0
  %6506 = vmatprep.subr.mxu0 0.0
  %6507 = vmatpush1.msra.mxu0 0.0
  %6508 = vmatprep.subr.mxu0 0.0
  %6509 = vmatpush1.msra.mxu0 0.0
  %6510 = vmatprep.subr.mxu0 0.0
  %6511 = vmatpush1.msra.mxu0 0.0
  %6512 = vmatprep.subr.mxu0 0.0
  %6513 = vmatpush1.msra.mxu0 0.0
  %6514 = vmatprep.subr.mxu0 0.0
  %6515 = vmatpush1.msra.mxu0 0.0
  %6516 = vmatprep.subr.mxu0 0.0
  %6517 = vmatpush1.msra.mxu0 0.0
  %6518 = vmatprep.subr.mxu0 0.0
  %6519 = vmatpush1.msra.mxu0 0.0
  %6520 = vmatprep.subr.mxu0 0.0
  %6521 = vmatpush1.msra.mxu0 0.0
  %6522 = vmatprep.subr.mxu0 0.0
  %6523 = vmatpush1.msra.mxu0 0.0
  %6524 = vmatprep.subr.mxu0 0.0
  %6525 = vmatpush1.msra.mxu0 0.0
  %6526 = vmatprep.subr.mxu0 0.0
  %6527 = vmatpush1.msra.mxu0 0.0
  %6528 = vmatprep.subr.mxu0 0.0
  %6529 = vmatpush1.msra.mxu0 0.0
  %6530 = vmatprep.subr.mxu0 0.0
  %6531 = vmatpush1.msra.mxu0 0.0
  %6532 = vmatprep.subr.mxu0 0.0
  %6533 = vmatpush1.msra.mxu0 0.0
  %6534 = vmatprep.subr.mxu0 0.0
  %6535 = vmatpush1.msra.mxu0 0.0
  %6536 = vmatprep.subr.mxu0 0.0
  %6537 = vmatpush1.msra.mxu0 0.0
  %6538 = vmatprep.subr.mxu0 0.0
  %6539 = vmatpush1.msra.mxu0 0.0
  %6540 = vmatprep.subr.mxu0 0.0
  %6541 = vmatpush1.msra.mxu0 0.0
  %6542 = vmatprep.subr.mxu0 0.0
  %6543 = vmatpush1.msra.mxu0 0.0
  %6544 = vmatprep.subr.mxu0 0.0
  %6545 = vmatpush1.msra.mxu0 0.0
  %6546 = vmatprep.subr.mxu0 0.0
  %6547 = vmatpush1.msra.mxu0 0.0
  %6548 = vmatprep.subr.mxu0 0.0
  %6549 = vmatpush1.msra.mxu0 0.0
  %6550 = vmatprep.subr.mxu0 0.0
  %6551 = vmatpush1.msra.mxu0 0.0
  %6552 = vmatprep.subr.mxu0 0.0
  %6553 = vmatpush1.msra.mxu0 0.0
  %6554 = vmatprep.subr.mxu0 0.0
  %6555 = vmatpush1.msra.mxu0 0.0
  %6556 = vmatprep.subr.mxu0 0.0
  %6557 = vmatpush1.msra.mxu0 0.0
  %6558 = vmatprep.mubr.f32.mxu0 0.0
  %v6559 = vand.u32 %v6312, 4294901760
  %v6560 = vsub.f32 %v6312, %v6559
  %6561 = vmatmul.mubr.f32.gmra.mrb[0].mxu0 %v6560
  %v6562 = vpop.f32.mrb[0].mxu0
  %v6563 = vadd.f32 %v6482, %v6562
  %v6564 = vpop.f32.mrb[0].mxu0
  %v6565 = vadd.f32 %v6484, %v6564
  %6566 = vdwg.mxu0
  %v6567 = vand.u32 %v106, 4294901760
  %6568 = vmatprep.subr.mxu0 %v6567
  %v6569 = vand.u32 %v105, 4294901760
  %6570 = vmatpush1.msra.mxu0 %v6569
  %v6571 = vand.u32 %v111, 4294901760
  %6572 = vmatprep.subr.mxu0 %v6571
  %v6573 = vand.u32 %v110, 4294901760
  %6574 = vmatpush1.msra.mxu0 %v6573
  %6575 = vmatprep.subr.mxu0 0.0
  %6576 = vmatpush1.msra.mxu0 0.0
  %6577 = vmatprep.subr.mxu0 0.0
  %6578 = vmatpush1.msra.mxu0 0.0
  %6579 = vmatprep.subr.mxu0 0.0
  %6580 = vmatpush1.msra.mxu0 0.0
  %6581 = vmatprep.subr.mxu0 0.0
  %6582 = vmatpush1.msra.mxu0 0.0
  %6583 = vmatprep.subr.mxu0 0.0
  %6584 = vmatpush1.msra.mxu0 0.0
  %6585 = vmatprep.subr.mxu0 0.0
  %6586 = vmatpush1.msra.mxu0 0.0
  %6587 = vmatprep.subr.mxu0 0.0
  %6588 = vmatpush1.msra.mxu0 0.0
  %6589 = vmatprep.subr.mxu0 0.0
  %6590 = vmatpush1.msra.mxu0 0.0
  %6591 = vmatprep.subr.mxu0 0.0
  %6592 = vmatpush1.msra.mxu0 0.0
  %6593 = vmatprep.subr.mxu0 0.0
  %6594 = vmatpush1.msra.mxu0 0.0
  %6595 = vmatprep.subr.mxu0 0.0
  %6596 = vmatpush1.msra.mxu0 0.0
  %6597 = vmatprep.subr.mxu0 0.0
  %6598 = vmatpush1.msra.mxu0 0.0
  %6599 = vmatprep.subr.mxu0 0.0
  %6600 = vmatpush1.msra.mxu0 0.0
  %6601 = vmatprep.subr.mxu0 0.0
  %6602 = vmatpush1.msra.mxu0 0.0
  %6603 = vmatprep.subr.mxu0 0.0
  %6604 = vmatpush1.msra.mxu0 0.0
  %6605 = vmatprep.subr.mxu0 0.0
  %6606 = vmatpush1.msra.mxu0 0.0
  %6607 = vmatprep.subr.mxu0 0.0
  %6608 = vmatpush1.msra.mxu0 0.0
  %6609 = vmatprep.subr.mxu0 0.0
  %6610 = vmatpush1.msra.mxu0 0.0
  %6611 = vmatprep.subr.mxu0 0.0
  %6612 = vmatpush1.msra.mxu0 0.0
  %6613 = vmatprep.subr.mxu0 0.0
  %6614 = vmatpush1.msra.mxu0 0.0
  %6615 = vmatprep.subr.mxu0 0.0
  %6616 = vmatpush1.msra.mxu0 0.0
  %6617 = vmatprep.subr.mxu0 0.0
  %6618 = vmatpush1.msra.mxu0 0.0
  %6619 = vmatprep.subr.mxu0 0.0
  %6620 = vmatpush1.msra.mxu0 0.0
  %6621 = vmatprep.subr.mxu0 0.0
  %6622 = vmatpush1.msra.mxu0 0.0
  %6623 = vmatprep.subr.mxu0 0.0
  %6624 = vmatpush1.msra.mxu0 0.0
  %6625 = vmatprep.subr.mxu0 0.0
  %6626 = vmatpush1.msra.mxu0 0.0
  %6627 = vmatprep.subr.mxu0 0.0
  %6628 = vmatpush1.msra.mxu0 0.0
  %6629 = vmatprep.subr.mxu0 0.0
  %6630 = vmatpush1.msra.mxu0 0.0
  %6631 = vmatprep.subr.mxu0 0.0
  %6632 = vmatpush1.msra.mxu0 0.0
  %6633 = vmatprep.subr.mxu0 0.0
  %6634 = vmatpush1.msra.mxu0 0.0
  %6635 = vmatprep.mubr.f32.mxu0 0.0
  %v6636 = vand.u32 %v6312, 4294901760
  %v6637 = vsub.f32 %v6312, %v6636
  %v6638 = vand.u32 %v6637, 4294901760
  %6639 = vmatmul.mubr.f32.gmra.mrb[0].mxu0 %v6638
  %v6640 = vpop.f32.mrb[0].mxu0
  %v6641 = vadd.f32 %v6563, %v6640
  %v6642 = vpop.f32.mrb[0].mxu0
  %v6643 = vadd.f32 %v6565, %v6642
  %6644 = vdwg.mxu0
  %v6645 = vand.u32 %v106, 4294901760
  %v6646 = vsub.f32 %v106, %v6645
  %v6647 = vand.u32 %v6646, 4294901760
  %6648 = vmatprep.subr.mxu0 %v6647
  %v6649 = vand.u32 %v105, 4294901760
  %v6650 = vsub.f32 %v105, %v6649
  %v6651 = vand.u32 %v6650, 4294901760
  %6652 = vmatpush1.msra.mxu0 %v6651
  %v6653 = vand.u32 %v111, 4294901760
  %v6654 = vsub.f32 %v111, %v6653
  %v6655 = vand.u32 %v6654, 4294901760
  %6656 = vmatprep.subr.mxu0 %v6655
  %v6657 = vand.u32 %v110, 4294901760
  %v6658 = vsub.f32 %v110, %v6657
  %v6659 = vand.u32 %v6658, 4294901760
  %6660 = vmatpush1.msra.mxu0 %v6659
  %6661 = vmatprep.subr.mxu0 0.0
  %6662 = vmatpush1.msra.mxu0 0.0
  %6663 = vmatprep.subr.mxu0 0.0
  %6664 = vmatpush1.msra.mxu0 0.0
  %6665 = vmatprep.subr.mxu0 0.0
  %6666 = vmatpush1.msra.mxu0 0.0
  %6667 = vmatprep.subr.mxu0 0.0
  %6668 = vmatpush1.msra.mxu0 0.0
  %6669 = vmatprep.subr.mxu0 0.0
  %6670 = vmatpush1.msra.mxu0 0.0
  %6671 = vmatprep.subr.mxu0 0.0
  %6672 = vmatpush1.msra.mxu0 0.0
  %6673 = vmatprep.subr.mxu0 0.0
  %6674 = vmatpush1.msra.mxu0 0.0
  %6675 = vmatprep.subr.mxu0 0.0
  %6676 = vmatpush1.msra.mxu0 0.0
  %6677 = vmatprep.subr.mxu0 0.0
  %6678 = vmatpush1.msra.mxu0 0.0
  %6679 = vmatprep.subr.mxu0 0.0
  %6680 = vmatpush1.msra.mxu0 0.0
  %6681 = vmatprep.subr.mxu0 0.0
  %6682 = vmatpush1.msra.mxu0 0.0
  %6683 = vmatprep.subr.mxu0 0.0
  %6684 = vmatpush1.msra.mxu0 0.0
  %6685 = vmatprep.subr.mxu0 0.0
  %6686 = vmatpush1.msra.mxu0 0.0
  %6687 = vmatprep.subr.mxu0 0.0
  %6688 = vmatpush1.msra.mxu0 0.0
  %6689 = vmatprep.subr.mxu0 0.0
  %6690 = vmatpush1.msra.mxu0 0.0
  %6691 = vmatprep.subr.mxu0 0.0
  %6692 = vmatpush1.msra.mxu0 0.0
  %6693 = vmatprep.subr.mxu0 0.0
  %6694 = vmatpush1.msra.mxu0 0.0
  %6695 = vmatprep.subr.mxu0 0.0
  %6696 = vmatpush1.msra.mxu0 0.0
  %6697 = vmatprep.subr.mxu0 0.0
  %6698 = vmatpush1.msra.mxu0 0.0
  %6699 = vmatprep.subr.mxu0 0.0
  %6700 = vmatpush1.msra.mxu0 0.0
  %6701 = vmatprep.subr.mxu0 0.0
  %6702 = vmatpush1.msra.mxu0 0.0
  %6703 = vmatprep.subr.mxu0 0.0
  %6704 = vmatpush1.msra.mxu0 0.0
  %6705 = vmatprep.subr.mxu0 0.0
  %6706 = vmatpush1.msra.mxu0 0.0
  %6707 = vmatprep.subr.mxu0 0.0
  %6708 = vmatpush1.msra.mxu0 0.0
  %6709 = vmatprep.subr.mxu0 0.0
  %6710 = vmatpush1.msra.mxu0 0.0
  %6711 = vmatprep.subr.mxu0 0.0
  %6712 = vmatpush1.msra.mxu0 0.0
  %6713 = vmatprep.subr.mxu0 0.0
  %6714 = vmatpush1.msra.mxu0 0.0
  %6715 = vmatprep.subr.mxu0 0.0
  %6716 = vmatpush1.msra.mxu0 0.0
  %6717 = vmatprep.subr.mxu0 0.0
  %6718 = vmatpush1.msra.mxu0 0.0
  %6719 = vmatprep.subr.mxu0 0.0
  %6720 = vmatpush1.msra.mxu0 0.0
  %6721 = vmatprep.mubr.f32.mxu0 0.0
  %v6722 = vand.u32 %v6312, 4294901760
  %6723 = vmatmul.mubr.f32.gmra.mrb[0].mxu0 %v6722
  %v6724 = vpop.f32.mrb[0].mxu0
  %v6725 = vadd.f32 %v6641, %v6724
  %v6726 = vpop.f32.mrb[0].mxu0
  %v6727 = vadd.f32 %v6643, %v6726
  %6728 = vdwg.mxu0
  %v6729 = vand.u32 %v106, 4294901760
  %6730 = vmatprep.subr.mxu0 %v6729
  %v6731 = vand.u32 %v105, 4294901760
  %6732 = vmatpush1.msra.mxu0 %v6731
  %v6733 = vand.u32 %v111, 4294901760
  %6734 = vmatprep.subr.mxu0 %v6733
  %v6735 = vand.u32 %v110, 4294901760
  %6736 = vmatpush1.msra.mxu0 %v6735
  %6737 = vmatprep.subr.mxu0 0.0
  %6738 = vmatpush1.msra.mxu0 0.0
  %6739 = vmatprep.subr.mxu0 0.0
  %6740 = vmatpush1.msra.mxu0 0.0
  %6741 = vmatprep.subr.mxu0 0.0
  %6742 = vmatpush1.msra.mxu0 0.0
  %6743 = vmatprep.subr.mxu0 0.0
  %6744 = vmatpush1.msra.mxu0 0.0
  %6745 = vmatprep.subr.mxu0 0.0
  %6746 = vmatpush1.msra.mxu0 0.0
  %6747 = vmatprep.subr.mxu0 0.0
  %6748 = vmatpush1.msra.mxu0 0.0
  %6749 = vmatprep.subr.mxu0 0.0
  %6750 = vmatpush1.msra.mxu0 0.0
  %6751 = vmatprep.subr.mxu0 0.0
  %6752 = vmatpush1.msra.mxu0 0.0
  %6753 = vmatprep.subr.mxu0 0.0
  %6754 = vmatpush1.msra.mxu0 0.0
  %6755 = vmatprep.subr.mxu0 0.0
  %6756 = vmatpush1.msra.mxu0 0.0
  %6757 = vmatprep.subr.mxu0 0.0
  %6758 = vmatpush1.msra.mxu0 0.0
  %6759 = vmatprep.subr.mxu0 0.0
  %6760 = vmatpush1.msra.mxu0 0.0
  %6761 = vmatprep.subr.mxu0 0.0
  %6762 = vmatpush1.msra.mxu0 0.0
  %6763 = vmatprep.subr.mxu0 0.0
  %6764 = vmatpush1.msra.mxu0 0.0
  %6765 = vmatprep.subr.mxu0 0.0
  %6766 = vmatpush1.msra.mxu0 0.0
  %6767 = vmatprep.subr.mxu0 0.0
  %6768 = vmatpush1.msra.mxu0 0.0
  %6769 = vmatprep.subr.mxu0 0.0
  %6770 = vmatpush1.msra.mxu0 0.0
  %6771 = vmatprep.subr.mxu0 0.0
  %6772 = vmatpush1.msra.mxu0 0.0
  %6773 = vmatprep.subr.mxu0 0.0
  %6774 = vmatpush1.msra.mxu0 0.0
  %6775 = vmatprep.subr.mxu0 0.0
  %6776 = vmatpush1.msra.mxu0 0.0
  %6777 = vmatprep.subr.mxu0 0.0
  %6778 = vmatpush1.msra.mxu0 0.0
  %6779 = vmatprep.subr.mxu0 0.0
  %6780 = vmatpush1.msra.mxu0 0.0
  %6781 = vmatprep.subr.mxu0 0.0
  %6782 = vmatpush1.msra.mxu0 0.0
  %6783 = vmatprep.subr.mxu0 0.0
  %6784 = vmatpush1.msra.mxu0 0.0
  %6785 = vmatprep.subr.mxu0 0.0
  %6786 = vmatpush1.msra.mxu0 0.0
  %6787 = vmatprep.subr.mxu0 0.0
  %6788 = vmatpush1.msra.mxu0 0.0
  %6789 = vmatprep.subr.mxu0 0.0
  %6790 = vmatpush1.msra.mxu0 0.0
  %6791 = vmatprep.subr.mxu0 0.0
  %6792 = vmatpush1.msra.mxu0 0.0
  %6793 = vmatprep.subr.mxu0 0.0
  %6794 = vmatpush1.msra.mxu0 0.0
  %6795 = vmatprep.subr.mxu0 0.0
  %6796 = vmatpush1.msra.mxu0 0.0
  %6797 = vmatprep.mubr.f32.mxu0 0.0
  %v6798 = vand.u32 %v6312, 4294901760
  %6799 = vmatmul.mubr.f32.gmra.mrb[0].mxu0 %v6798
  %v6800 = vpop.f32.mrb[0].mxu0
  %v6801 = vadd.f32 %v6725, %v6800
  %v6802 = vpop.f32.mrb[0].mxu0
  %v6803 = vadd.f32 %v6727, %v6802
  %6804 = vdwg.mxu0
  %v6805 = vand.u32 %v108, 4294901760
  %6806 = vmatprep.subr.mxu0 %v6805
  %v6807 = vand.u32 %v107, 4294901760
  %6808 = vmatpush1.msra.mxu0 %v6807
  %v6809 = vand.u32 %v113, 4294901760
  %6810 = vmatprep.subr.mxu0 %v6809
  %v6811 = vand.u32 %v112, 4294901760
  %6812 = vmatpush1.msra.mxu0 %v6811
  %6813 = vmatprep.subr.mxu0 0.0
  %6814 = vmatpush1.msra.mxu0 0.0
  %6815 = vmatprep.subr.mxu0 0.0
  %6816 = vmatpush1.msra.mxu0 0.0
  %6817 = vmatprep.subr.mxu0 0.0
  %6818 = vmatpush1.msra.mxu0 0.0
  %6819 = vmatprep.subr.mxu0 0.0
  %6820 = vmatpush1.msra.mxu0 0.0
  %6821 = vmatprep.subr.mxu0 0.0
  %6822 = vmatpush1.msra.mxu0 0.0
  %6823 = vmatprep.subr.mxu0 0.0
  %6824 = vmatpush1.msra.mxu0 0.0
  %6825 = vmatprep.subr.mxu0 0.0
  %6826 = vmatpush1.msra.mxu0 0.0
  %6827 = vmatprep.subr.mxu0 0.0
  %6828 = vmatpush1.msra.mxu0 0.0
  %6829 = vmatprep.subr.mxu0 0.0
  %6830 = vmatpush1.msra.mxu0 0.0
  %6831 = vmatprep.subr.mxu0 0.0
  %6832 = vmatpush1.msra.mxu0 0.0
  %6833 = vmatprep.subr.mxu0 0.0
  %6834 = vmatpush1.msra.mxu0 0.0
  %6835 = vmatprep.subr.mxu0 0.0
  %6836 = vmatpush1.msra.mxu0 0.0
  %6837 = vmatprep.subr.mxu0 0.0
  %6838 = vmatpush1.msra.mxu0 0.0
  %6839 = vmatprep.subr.mxu0 0.0
  %6840 = vmatpush1.msra.mxu0 0.0
  %6841 = vmatprep.subr.mxu0 0.0
  %6842 = vmatpush1.msra.mxu0 0.0
  %6843 = vmatprep.subr.mxu0 0.0
  %6844 = vmatpush1.msra.mxu0 0.0
  %6845 = vmatprep.subr.mxu0 0.0
  %6846 = vmatpush1.msra.mxu0 0.0
  %6847 = vmatprep.subr.mxu0 0.0
  %6848 = vmatpush1.msra.mxu0 0.0
  %6849 = vmatprep.subr.mxu0 0.0
  %6850 = vmatpush1.msra.mxu0 0.0
  %6851 = vmatprep.subr.mxu0 0.0
  %6852 = vmatpush1.msra.mxu0 0.0
  %6853 = vmatprep.subr.mxu0 0.0
  %6854 = vmatpush1.msra.mxu0 0.0
  %6855 = vmatprep.subr.mxu0 0.0
  %6856 = vmatpush1.msra.mxu0 0.0
  %6857 = vmatprep.subr.mxu0 0.0
  %6858 = vmatpush1.msra.mxu0 0.0
  %6859 = vmatprep.subr.mxu0 0.0
  %6860 = vmatpush1.msra.mxu0 0.0
  %6861 = vmatprep.subr.mxu0 0.0
  %6862 = vmatpush1.msra.mxu0 0.0
  %6863 = vmatprep.subr.mxu0 0.0
  %6864 = vmatpush1.msra.mxu0 0.0
  %6865 = vmatprep.subr.mxu0 0.0
  %6866 = vmatpush1.msra.mxu0 0.0
  %6867 = vmatprep.subr.mxu0 0.0
  %6868 = vmatpush1.msra.mxu0 0.0
  %6869 = vmatprep.subr.mxu0 0.0
  %6870 = vmatpush1.msra.mxu0 0.0
  %6871 = vmatprep.subr.mxu0 0.0
  %6872 = vmatpush1.msra.mxu0 0.0
  %6873 = vmatprep.mubr.f32.mxu0 0.0
  %v6874 = vand.u32 %v6312, 4294901760
  %v6875 = vsub.f32 %v6312, %v6874
  %v6876 = vand.u32 %v6875, 4294901760
  %v6877 = vsub.f32 %v6875, %v6876
  %v6878 = vand.u32 %v6877, 4294901760
  %6879 = vmatmul.mubr.f32.gmra.mrb[0].mxu0 %v6878
  %v6880 = vpop.f32.mrb[0].mxu0
  %v6881 = vadd.f32 0.0, %v6880
  %v6882 = vpop.f32.mrb[0].mxu0
  %v6883 = vadd.f32 0.0, %v6882
  %6884 = vdwg.mxu0
  %v6885 = vand.u32 %v108, 4294901760
  %v6886 = vsub.f32 %v108, %v6885
  %v6887 = vand.u32 %v6886, 4294901760
  %v6888 = vsub.f32 %v6886, %v6887
  %v6889 = vand.u32 %v6888, 4294901760
  %6890 = vmatprep.subr.mxu0 %v6889
  %v6891 = vand.u32 %v107, 4294901760
  %v6892 = vsub.f32 %v107, %v6891
  %v6893 = vand.u32 %v6892, 4294901760
  %v6894 = vsub.f32 %v6892, %v6893
  %v6895 = vand.u32 %v6894, 4294901760
  %6896 = vmatpush1.msra.mxu0 %v6895
  %v6897 = vand.u32 %v113, 4294901760
  %v6898 = vsub.f32 %v113, %v6897
  %v6899 = vand.u32 %v6898, 4294901760
  %v6900 = vsub.f32 %v6898, %v6899
  %v6901 = vand.u32 %v6900, 4294901760
  %6902 = vmatprep.subr.mxu0 %v6901
  %v6903 = vand.u32 %v112, 4294901760
  %v6904 = vsub.f32 %v112, %v6903
  %v6905 = vand.u32 %v6904, 4294901760
  %v6906 = vsub.f32 %v6904, %v6905
  %v6907 = vand.u32 %v6906, 4294901760
  %6908 = vmatpush1.msra.mxu0 %v6907
  %6909 = vmatprep.subr.mxu0 0.0
  %6910 = vmatpush1.msra.mxu0 0.0
  %6911 = vmatprep.subr.mxu0 0.0
  %6912 = vmatpush1.msra.mxu0 0.0
  %6913 = vmatprep.subr.mxu0 0.0
  %6914 = vmatpush1.msra.mxu0 0.0
  %6915 = vmatprep.subr.mxu0 0.0
  %6916 = vmatpush1.msra.mxu0 0.0
  %6917 = vmatprep.subr.mxu0 0.0
  %6918 = vmatpush1.msra.mxu0 0.0
  %6919 = vmatprep.subr.mxu0 0.0
  %6920 = vmatpush1.msra.mxu0 0.0
  %6921 = vmatprep.subr.mxu0 0.0
  %6922 = vmatpush1.msra.mxu0 0.0
  %6923 = vmatprep.subr.mxu0 0.0
  %6924 = vmatpush1.msra.mxu0 0.0
  %6925 = vmatprep.subr.mxu0 0.0
  %6926 = vmatpush1.msra.mxu0 0.0
  %6927 = vmatprep.subr.mxu0 0.0
  %6928 = vmatpush1.msra.mxu0 0.0
  %6929 = vmatprep.subr.mxu0 0.0
  %6930 = vmatpush1.msra.mxu0 0.0
  %6931 = vmatprep.subr.mxu0 0.0
  %6932 = vmatpush1.msra.mxu0 0.0
  %6933 = vmatprep.subr.mxu0 0.0
  %6934 = vmatpush1.msra.mxu0 0.0
  %6935 = vmatprep.subr.mxu0 0.0
  %6936 = vmatpush1.msra.mxu0 0.0
  %6937 = vmatprep.subr.mxu0 0.0
  %6938 = vmatpush1.msra.mxu0 0.0
  %6939 = vmatprep.subr.mxu0 0.0
  %6940 = vmatpush1.msra.mxu0 0.0
  %6941 = vmatprep.subr.mxu0 0.0
  %6942 = vmatpush1.msra.mxu0 0.0
  %6943 = vmatprep.subr.mxu0 0.0
  %6944 = vmatpush1.msra.mxu0 0.0
  %6945 = vmatprep.subr.mxu0 0.0
  %6946 = vmatpush1.msra.mxu0 0.0
  %6947 = vmatprep.subr.mxu0 0.0
  %6948 = vmatpush1.msra.mxu0 0.0
  %6949 = vmatprep.subr.mxu0 0.0
  %6950 = vmatpush1.msra.mxu0 0.0
  %6951 = vmatprep.subr.mxu0 0.0
  %6952 = vmatpush1.msra.mxu0 0.0
  %6953 = vmatprep.subr.mxu0 0.0
  %6954 = vmatpush1.msra.mxu0 0.0
  %6955 = vmatprep.subr.mxu0 0.0
  %6956 = vmatpush1.msra.mxu0 0.0
  %6957 = vmatprep.subr.mxu0 0.0
  %6958 = vmatpush1.msra.mxu0 0.0
  %6959 = vmatprep.subr.mxu0 0.0
  %6960 = vmatpush1.msra.mxu0 0.0
  %6961 = vmatprep.subr.mxu0 0.0
  %6962 = vmatpush1.msra.mxu0 0.0
  %6963 = vmatprep.subr.mxu0 0.0
  %6964 = vmatpush1.msra.mxu0 0.0
  %6965 = vmatprep.subr.mxu0 0.0
  %6966 = vmatpush1.msra.mxu0 0.0
  %6967 = vmatprep.subr.mxu0 0.0
  %6968 = vmatpush1.msra.mxu0 0.0
  %6969 = vmatprep.mubr.f32.mxu0 0.0
  %v6970 = vand.u32 %v6312, 4294901760
  %6971 = vmatmul.mubr.f32.gmra.mrb[0].mxu0 %v6970
  %v6972 = vpop.f32.mrb[0].mxu0
  %v6973 = vadd.f32 %v6881, %v6972
  %v6974 = vpop.f32.mrb[0].mxu0
  %v6975 = vadd.f32 %v6883, %v6974
  %6976 = vdwg.mxu0
  %v6977 = vand.u32 %v108, 4294901760
  %v6978 = vsub.f32 %v108, %v6977
  %6979 = vmatprep.subr.mxu0 %v6978
  %v6980 = vand.u32 %v107, 4294901760
  %v6981 = vsub.f32 %v107, %v6980
  %6982 = vmatpush1.msra.mxu0 %v6981
  %v6983 = vand.u32 %v113, 4294901760
  %v6984 = vsub.f32 %v113, %v6983
  %6985 = vmatprep.subr.mxu0 %v6984
  %v6986 = vand.u32 %v112, 4294901760
  %v6987 = vsub.f32 %v112, %v6986
  %6988 = vmatpush1.msra.mxu0 %v6987
  %6989 = vmatprep.subr.mxu0 0.0
  %6990 = vmatpush1.msra.mxu0 0.0
  %6991 = vmatprep.subr.mxu0 0.0
  %6992 = vmatpush1.msra.mxu0 0.0
  %6993 = vmatprep.subr.mxu0 0.0
  %6994 = vmatpush1.msra.mxu0 0.0
  %6995 = vmatprep.subr.mxu0 0.0
  %6996 = vmatpush1.msra.mxu0 0.0
  %6997 = vmatprep.subr.mxu0 0.0
  %6998 = vmatpush1.msra.mxu0 0.0
  %6999 = vmatprep.subr.mxu0 0.0
  %7000 = vmatpush1.msra.mxu0 0.0
  %7001 = vmatprep.subr.mxu0 0.0
  %7002 = vmatpush1.msra.mxu0 0.0
  %7003 = vmatprep.subr.mxu0 0.0
  %7004 = vmatpush1.msra.mxu0 0.0
  %7005 = vmatprep.subr.mxu0 0.0
  %7006 = vmatpush1.msra.mxu0 0.0
  %7007 = vmatprep.subr.mxu0 0.0
  %7008 = vmatpush1.msra.mxu0 0.0
  %7009 = vmatprep.subr.mxu0 0.0
  %7010 = vmatpush1.msra.mxu0 0.0
  %7011 = vmatprep.subr.mxu0 0.0
  %7012 = vmatpush1.msra.mxu0 0.0
  %7013 = vmatprep.subr.mxu0 0.0
  %7014 = vmatpush1.msra.mxu0 0.0
  %7015 = vmatprep.subr.mxu0 0.0
  %7016 = vmatpush1.msra.mxu0 0.0
  %7017 = vmatprep.subr.mxu0 0.0
  %7018 = vmatpush1.msra.mxu0 0.0
  %7019 = vmatprep.subr.mxu0 0.0
  %7020 = vmatpush1.msra.mxu0 0.0
  %7021 = vmatprep.subr.mxu0 0.0
  %7022 = vmatpush1.msra.mxu0 0.0
  %7023 = vmatprep.subr.mxu0 0.0
  %7024 = vmatpush1.msra.mxu0 0.0
  %7025 = vmatprep.subr.mxu0 0.0
  %7026 = vmatpush1.msra.mxu0 0.0
  %7027 = vmatprep.subr.mxu0 0.0
  %7028 = vmatpush1.msra.mxu0 0.0
  %7029 = vmatprep.subr.mxu0 0.0
  %7030 = vmatpush1.msra.mxu0 0.0
  %7031 = vmatprep.subr.mxu0 0.0
  %7032 = vmatpush1.msra.mxu0 0.0
  %7033 = vmatprep.subr.mxu0 0.0
  %7034 = vmatpush1.msra.mxu0 0.0
  %7035 = vmatprep.subr.mxu0 0.0
  %7036 = vmatpush1.msra.mxu0 0.0
  %7037 = vmatprep.subr.mxu0 0.0
  %7038 = vmatpush1.msra.mxu0 0.0
  %7039 = vmatprep.subr.mxu0 0.0
  %7040 = vmatpush1.msra.mxu0 0.0
  %7041 = vmatprep.subr.mxu0 0.0
  %7042 = vmatpush1.msra.mxu0 0.0
  %7043 = vmatprep.subr.mxu0 0.0
  %7044 = vmatpush1.msra.mxu0 0.0
  %7045 = vmatprep.subr.mxu0 0.0
  %7046 = vmatpush1.msra.mxu0 0.0
  %7047 = vmatprep.subr.mxu0 0.0
  %7048 = vmatpush1.msra.mxu0 0.0
  %7049 = vmatprep.mubr.f32.mxu0 0.0
  %v7050 = vand.u32 %v6312, 4294901760
  %v7051 = vsub.f32 %v6312, %v7050
  %7052 = vmatmul.mubr.f32.gmra.mrb[0].mxu0 %v7051
  %v7053 = vpop.f32.mrb[0].mxu0
  %v7054 = vadd.f32 %v6973, %v7053
  %v7055 = vpop.f32.mrb[0].mxu0
  %v7056 = vadd.f32 %v6975, %v7055
  %7057 = vdwg.mxu0
  %v7058 = vand.u32 %v108, 4294901760
  %7059 = vmatprep.subr.mxu0 %v7058
  %v7060 = vand.u32 %v107, 4294901760
  %7061 = vmatpush1.msra.mxu0 %v7060
  %v7062 = vand.u32 %v113, 4294901760
  %7063 = vmatprep.subr.mxu0 %v7062
  %v7064 = vand.u32 %v112, 4294901760
  %7065 = vmatpush1.msra.mxu0 %v7064
  %7066 = vmatprep.subr.mxu0 0.0
  %7067 = vmatpush1.msra.mxu0 0.0
  %7068 = vmatprep.subr.mxu0 0.0
  %7069 = vmatpush1.msra.mxu0 0.0
  %7070 = vmatprep.subr.mxu0 0.0
  %7071 = vmatpush1.msra.mxu0 0.0
  %7072 = vmatprep.subr.mxu0 0.0
  %7073 = vmatpush1.msra.mxu0 0.0
  %7074 = vmatprep.subr.mxu0 0.0
  %7075 = vmatpush1.msra.mxu0 0.0
  %7076 = vmatprep.subr.mxu0 0.0
  %7077 = vmatpush1.msra.mxu0 0.0
  %7078 = vmatprep.subr.mxu0 0.0
  %7079 = vmatpush1.msra.mxu0 0.0
  %7080 = vmatprep.subr.mxu0 0.0
  %7081 = vmatpush1.msra.mxu0 0.0
  %7082 = vmatprep.subr.mxu0 0.0
  %7083 = vmatpush1.msra.mxu0 0.0
  %7084 = vmatprep.subr.mxu0 0.0
  %7085 = vmatpush1.msra.mxu0 0.0
  %7086 = vmatprep.subr.mxu0 0.0
  %7087 = vmatpush1.msra.mxu0 0.0
  %7088 = vmatprep.subr.mxu0 0.0
  %7089 = vmatpush1.msra.mxu0 0.0
  %7090 = vmatprep.subr.mxu0 0.0
  %7091 = vmatpush1.msra.mxu0 0.0
  %7092 = vmatprep.subr.mxu0 0.0
  %7093 = vmatpush1.msra.mxu0 0.0
  %7094 = vmatprep.subr.mxu0 0.0
  %7095 = vmatpush1.msra.mxu0 0.0
  %7096 = vmatprep.subr.mxu0 0.0
  %7097 = vmatpush1.msra.mxu0 0.0
  %7098 = vmatprep.subr.mxu0 0.0
  %7099 = vmatpush1.msra.mxu0 0.0
  %7100 = vmatprep.subr.mxu0 0.0
  %7101 = vmatpush1.msra.mxu0 0.0
  %7102 = vmatprep.subr.mxu0 0.0
  %7103 = vmatpush1.msra.mxu0 0.0
  %7104 = vmatprep.subr.mxu0 0.0
  %7105 = vmatpush1.msra.mxu0 0.0
  %7106 = vmatprep.subr.mxu0 0.0
  %7107 = vmatpush1.msra.mxu0 0.0
  %7108 = vmatprep.subr.mxu0 0.0
  %7109 = vmatpush1.msra.mxu0 0.0
  %7110 = vmatprep.subr.mxu0 0.0
  %7111 = vmatpush1.msra.mxu0 0.0
  %7112 = vmatprep.subr.mxu0 0.0
  %7113 = vmatpush1.msra.mxu0 0.0
  %7114 = vmatprep.subr.mxu0 0.0
  %7115 = vmatpush1.msra.mxu0 0.0
  %7116 = vmatprep.subr.mxu0 0.0
  %7117 = vmatpush1.msra.mxu0 0.0
  %7118 = vmatprep.subr.mxu0 0.0
  %7119 = vmatpush1.msra.mxu0 0.0
  %7120 = vmatprep.subr.mxu0 0.0
  %7121 = vmatpush1.msra.mxu0 0.0
  %7122 = vmatprep.subr.mxu0 0.0
  %7123 = vmatpush1.msra.mxu0 0.0
  %7124 = vmatprep.subr.mxu0 0.0
  %7125 = vmatpush1.msra.mxu0 0.0
  %7126 = vmatprep.mubr.f32.mxu0 0.0
  %v7127 = vand.u32 %v6312, 4294901760
  %v7128 = vsub.f32 %v6312, %v7127
  %v7129 = vand.u32 %v7128, 4294901760
  %7130 = vmatmul.mubr.f32.gmra.mrb[0].mxu0 %v7129
  %v7131 = vpop.f32.mrb[0].mxu0
  %v7132 = vadd.f32 %v7054, %v7131
  %v7133 = vpop.f32.mrb[0].mxu0
  %v7134 = vadd.f32 %v7056, %v7133
  %7135 = vdwg.mxu0
  %v7136 = vand.u32 %v108, 4294901760
  %v7137 = vsub.f32 %v108, %v7136
  %v7138 = vand.u32 %v7137, 4294901760
  %7139 = vmatprep.subr.mxu0 %v7138
  %v7140 = vand.u32 %v107, 4294901760
  %v7141 = vsub.f32 %v107, %v7140
  %v7142 = vand.u32 %v7141, 4294901760
  %7143 = vmatpush1.msra.mxu0 %v7142
  %v7144 = vand.u32 %v113, 4294901760
  %v7145 = vsub.f32 %v113, %v7144
  %v7146 = vand.u32 %v7145, 4294901760
  %7147 = vmatprep.subr.mxu0 %v7146
  %v7148 = vand.u32 %v112, 4294901760
  %v7149 = vsub.f32 %v112, %v7148
  %v7150 = vand.u32 %v7149, 4294901760
  %7151 = vmatpush1.msra.mxu0 %v7150
  %7152 = vmatprep.subr.mxu0 0.0
  %7153 = vmatpush1.msra.mxu0 0.0
  %7154 = vmatprep.subr.mxu0 0.0
  %7155 = vmatpush1.msra.mxu0 0.0
  %7156 = vmatprep.subr.mxu0 0.0
  %7157 = vmatpush1.msra.mxu0 0.0
  %7158 = vmatprep.subr.mxu0 0.0
  %7159 = vmatpush1.msra.mxu0 0.0
  %7160 = vmatprep.subr.mxu0 0.0
  %7161 = vmatpush1.msra.mxu0 0.0
  %7162 = vmatprep.subr.mxu0 0.0
  %7163 = vmatpush1.msra.mxu0 0.0
  %7164 = vmatprep.subr.mxu0 0.0
  %7165 = vmatpush1.msra.mxu0 0.0
  %7166 = vmatprep.subr.mxu0 0.0
  %7167 = vmatpush1.msra.mxu0 0.0
  %7168 = vmatprep.subr.mxu0 0.0
  %7169 = vmatpush1.msra.mxu0 0.0
  %7170 = vmatprep.subr.mxu0 0.0
  %7171 = vmatpush1.msra.mxu0 0.0
  %7172 = vmatprep.subr.mxu0 0.0
  %7173 = vmatpush1.msra.mxu0 0.0
  %7174 = vmatprep.subr.mxu0 0.0
  %7175 = vmatpush1.msra.mxu0 0.0
  %7176 = vmatprep.subr.mxu0 0.0
  %7177 = vmatpush1.msra.mxu0 0.0
  %7178 = vmatprep.subr.mxu0 0.0
  %7179 = vmatpush1.msra.mxu0 0.0
  %7180 = vmatprep.subr.mxu0 0.0
  %7181 = vmatpush1.msra.mxu0 0.0
  %7182 = vmatprep.subr.mxu0 0.0
  %7183 = vmatpush1.msra.mxu0 0.0
  %7184 = vmatprep.subr.mxu0 0.0
  %7185 = vmatpush1.msra.mxu0 0.0
  %7186 = vmatprep.subr.mxu0 0.0
  %7187 = vmatpush1.msra.mxu0 0.0
  %7188 = vmatprep.subr.mxu0 0.0
  %7189 = vmatpush1.msra.mxu0 0.0
  %7190 = vmatprep.subr.mxu0 0.0
  %7191 = vmatpush1.msra.mxu0 0.0
  %7192 = vmatprep.subr.mxu0 0.0
  %7193 = vmatpush1.msra.mxu0 0.0
  %7194 = vmatprep.subr.mxu0 0.0
  %7195 = vmatpush1.msra.mxu0 0.0
  %7196 = vmatprep.subr.mxu0 0.0
  %7197 = vmatpush1.msra.mxu0 0.0
  %7198 = vmatprep.subr.mxu0 0.0
  %7199 = vmatpush1.msra.mxu0 0.0
  %7200 = vmatprep.subr.mxu0 0.0
  %7201 = vmatpush1.msra.mxu0 0.0
  %7202 = vmatprep.subr.mxu0 0.0
  %7203 = vmatpush1.msra.mxu0 0.0
  %7204 = vmatprep.subr.mxu0 0.0
  %7205 = vmatpush1.msra.mxu0 0.0
  %7206 = vmatprep.subr.mxu0 0.0
  %7207 = vmatpush1.msra.mxu0 0.0
  %7208 = vmatprep.subr.mxu0 0.0
  %7209 = vmatpush1.msra.mxu0 0.0
  %7210 = vmatprep.subr.mxu0 0.0
  %7211 = vmatpush1.msra.mxu0 0.0
  %7212 = vmatprep.mubr.f32.mxu0 0.0
  %v7213 = vand.u32 %v6312, 4294901760
  %7214 = vmatmul.mubr.f32.gmra.mrb[0].mxu0 %v7213
  %v7215 = vpop.f32.mrb[0].mxu0
  %v7216 = vadd.f32 %v7132, %v7215
  %v7217 = vpop.f32.mrb[0].mxu0
  %v7218 = vadd.f32 %v7134, %v7217
  %7219 = vdwg.mxu0
  %v7220 = vand.u32 %v108, 4294901760
  %7221 = vmatprep.subr.mxu0 %v7220
  %v7222 = vand.u32 %v107, 4294901760
  %7223 = vmatpush1.msra.mxu0 %v7222
  %v7224 = vand.u32 %v113, 4294901760
  %7225 = vmatprep.subr.mxu0 %v7224
  %v7226 = vand.u32 %v112, 4294901760
  %7227 = vmatpush1.msra.mxu0 %v7226
  %7228 = vmatprep.subr.mxu0 0.0
  %7229 = vmatpush1.msra.mxu0 0.0
  %7230 = vmatprep.subr.mxu0 0.0
  %7231 = vmatpush1.msra.mxu0 0.0
  %7232 = vmatprep.subr.mxu0 0.0
  %7233 = vmatpush1.msra.mxu0 0.0
  %7234 = vmatprep.subr.mxu0 0.0
  %7235 = vmatpush1.msra.mxu0 0.0
  %7236 = vmatprep.subr.mxu0 0.0
  %7237 = vmatpush1.msra.mxu0 0.0
  %7238 = vmatprep.subr.mxu0 0.0
  %7239 = vmatpush1.msra.mxu0 0.0
  %7240 = vmatprep.subr.mxu0 0.0
  %7241 = vmatpush1.msra.mxu0 0.0
  %7242 = vmatprep.subr.mxu0 0.0
  %7243 = vmatpush1.msra.mxu0 0.0
  %7244 = vmatprep.subr.mxu0 0.0
  %7245 = vmatpush1.msra.mxu0 0.0
  %7246 = vmatprep.subr.mxu0 0.0
  %7247 = vmatpush1.msra.mxu0 0.0
  %7248 = vmatprep.subr.mxu0 0.0
  %7249 = vmatpush1.msra.mxu0 0.0
  %7250 = vmatprep.subr.mxu0 0.0
  %7251 = vmatpush1.msra.mxu0 0.0
  %7252 = vmatprep.subr.mxu0 0.0
  %7253 = vmatpush1.msra.mxu0 0.0
  %7254 = vmatprep.subr.mxu0 0.0
  %7255 = vmatpush1.msra.mxu0 0.0
  %7256 = vmatprep.subr.mxu0 0.0
  %7257 = vmatpush1.msra.mxu0 0.0
  %7258 = vmatprep.subr.mxu0 0.0
  %7259 = vmatpush1.msra.mxu0 0.0
  %7260 = vmatprep.subr.mxu0 0.0
  %7261 = vmatpush1.msra.mxu0 0.0
  %7262 = vmatprep.subr.mxu0 0.0
  %7263 = vmatpush1.msra.mxu0 0.0
  %7264 = vmatprep.subr.mxu0 0.0
  %7265 = vmatpush1.msra.mxu0 0.0
  %7266 = vmatprep.subr.mxu0 0.0
  %7267 = vmatpush1.msra.mxu0 0.0
  %7268 = vmatprep.subr.mxu0 0.0
  %7269 = vmatpush1.msra.mxu0 0.0
  %7270 = vmatprep.subr.mxu0 0.0
  %7271 = vmatpush1.msra.mxu0 0.0
  %7272 = vmatprep.subr.mxu0 0.0
  %7273 = vmatpush1.msra.mxu0 0.0
  %7274 = vmatprep.subr.mxu0 0.0
  %7275 = vmatpush1.msra.mxu0 0.0
  %7276 = vmatprep.subr.mxu0 0.0
  %7277 = vmatpush1.msra.mxu0 0.0
  %7278 = vmatprep.subr.mxu0 0.0
  %7279 = vmatpush1.msra.mxu0 0.0
  %7280 = vmatprep.subr.mxu0 0.0
  %7281 = vmatpush1.msra.mxu0 0.0
  %7282 = vmatprep.subr.mxu0 0.0
  %7283 = vmatpush1.msra.mxu0 0.0
  %7284 = vmatprep.subr.mxu0 0.0
  %7285 = vmatpush1.msra.mxu0 0.0
  %7286 = vmatprep.subr.mxu0 0.0
  %7287 = vmatpush1.msra.mxu0 0.0
  %7288 = vmatprep.mubr.f32.mxu0 0.0
  %v7289 = vand.u32 %v6312, 4294901760
  %7290 = vmatmul.mubr.f32.gmra.mrb[0].mxu0 %v7289
  %v7291 = vpop.f32.mrb[0].mxu0
  %v7292 = vadd.f32 %v7216, %v7291
  %v7293 = vpop.f32.mrb[0].mxu0
  %v7294 = vadd.f32 %v7218, %v7293
  %7295 = vdwg.mxu0
  %7296 = vmatprep.subr.mxu0 0.0
  %v7297 = vand.u32 %v109, 4294901760
  %7298 = vmatpush1.msra.mxu0 %v7297
  %7299 = vmatprep.subr.mxu0 0.0
  %v7300 = vand.u32 %v114, 4294901760
  %7301 = vmatpush1.msra.mxu0 %v7300
  %7302 = vmatprep.subr.mxu0 0.0
  %7303 = vmatpush1.msra.mxu0 0.0
  %7304 = vmatprep.subr.mxu0 0.0
  %7305 = vmatpush1.msra.mxu0 0.0
  %7306 = vmatprep.subr.mxu0 0.0
  %7307 = vmatpush1.msra.mxu0 0.0
  %7308 = vmatprep.subr.mxu0 0.0
  %7309 = vmatpush1.msra.mxu0 0.0
  %7310 = vmatprep.subr.mxu0 0.0
  %7311 = vmatpush1.msra.mxu0 0.0
  %7312 = vmatprep.subr.mxu0 0.0
  %7313 = vmatpush1.msra.mxu0 0.0
  %7314 = vmatprep.subr.mxu0 0.0
  %7315 = vmatpush1.msra.mxu0 0.0
  %7316 = vmatprep.subr.mxu0 0.0
  %7317 = vmatpush1.msra.mxu0 0.0
  %7318 = vmatprep.subr.mxu0 0.0
  %7319 = vmatpush1.msra.mxu0 0.0
  %7320 = vmatprep.subr.mxu0 0.0
  %7321 = vmatpush1.msra.mxu0 0.0
  %7322 = vmatprep.subr.mxu0 0.0
  %7323 = vmatpush1.msra.mxu0 0.0
  %7324 = vmatprep.subr.mxu0 0.0
  %7325 = vmatpush1.msra.mxu0 0.0
  %7326 = vmatprep.subr.mxu0 0.0
  %7327 = vmatpush1.msra.mxu0 0.0
  %7328 = vmatprep.subr.mxu0 0.0
  %7329 = vmatpush1.msra.mxu0 0.0
  %7330 = vmatprep.subr.mxu0 0.0
  %7331 = vmatpush1.msra.mxu0 0.0
  %7332 = vmatprep.subr.mxu0 0.0
  %7333 = vmatpush1.msra.mxu0 0.0
  %7334 = vmatprep.subr.mxu0 0.0
  %7335 = vmatpush1.msra.mxu0 0.0
  %7336 = vmatprep.subr.mxu0 0.0
  %7337 = vmatpush1.msra.mxu0 0.0
  %7338 = vmatprep.subr.mxu0 0.0
  %7339 = vmatpush1.msra.mxu0 0.0
  %7340 = vmatprep.subr.mxu0 0.0
  %7341 = vmatpush1.msra.mxu0 0.0
  %7342 = vmatprep.subr.mxu0 0.0
  %7343 = vmatpush1.msra.mxu0 0.0
  %7344 = vmatprep.subr.mxu0 0.0
  %7345 = vmatpush1.msra.mxu0 0.0
  %7346 = vmatprep.subr.mxu0 0.0
  %7347 = vmatpush1.msra.mxu0 0.0
  %7348 = vmatprep.subr.mxu0 0.0
  %7349 = vmatpush1.msra.mxu0 0.0
  %7350 = vmatprep.subr.mxu0 0.0
  %7351 = vmatpush1.msra.mxu0 0.0
  %7352 = vmatprep.subr.mxu0 0.0
  %7353 = vmatpush1.msra.mxu0 0.0
  %7354 = vmatprep.subr.mxu0 0.0
  %7355 = vmatpush1.msra.mxu0 0.0
  %7356 = vmatprep.subr.mxu0 0.0
  %7357 = vmatpush1.msra.mxu0 0.0
  %7358 = vmatprep.subr.mxu0 0.0
  %7359 = vmatpush1.msra.mxu0 0.0
  %7360 = vmatprep.subr.mxu0 0.0
  %7361 = vmatpush1.msra.mxu0 0.0
  %7362 = vmatprep.mubr.f32.mxu0 0.0
  %v7363 = vand.u32 %v6312, 4294901760
  %v7364 = vsub.f32 %v6312, %v7363
  %v7365 = vand.u32 %v7364, 4294901760
  %v7366 = vsub.f32 %v7364, %v7365
  %v7367 = vand.u32 %v7366, 4294901760
  %7368 = vmatmul.mubr.f32.gmra.mrb[0].mxu0 %v7367
  %v7369 = vpop.f32.mrb[0].mxu0
  %v7370 = vadd.f32 0.0, %v7369
  %v7371 = vpop.f32.mrb[0].mxu0
  %7372 = vdwg.mxu0
  %7373 = vmatprep.subr.mxu0 0.0
  %v7374 = vand.u32 %v109, 4294901760
  %v7375 = vsub.f32 %v109, %v7374
  %v7376 = vand.u32 %v7375, 4294901760
  %v7377 = vsub.f32 %v7375, %v7376
  %v7378 = vand.u32 %v7377, 4294901760
  %7379 = vmatpush1.msra.mxu0 %v7378
  %7380 = vmatprep.subr.mxu0 0.0
  %v7381 = vand.u32 %v114, 4294901760
  %v7382 = vsub.f32 %v114, %v7381
  %v7383 = vand.u32 %v7382, 4294901760
  %v7384 = vsub.f32 %v7382, %v7383
  %v7385 = vand.u32 %v7384, 4294901760
  %7386 = vmatpush1.msra.mxu0 %v7385
  %7387 = vmatprep.subr.mxu0 0.0
  %7388 = vmatpush1.msra.mxu0 0.0
  %7389 = vmatprep.subr.mxu0 0.0
  %7390 = vmatpush1.msra.mxu0 0.0
  %7391 = vmatprep.subr.mxu0 0.0
  %7392 = vmatpush1.msra.mxu0 0.0
  %7393 = vmatprep.subr.mxu0 0.0
  %7394 = vmatpush1.msra.mxu0 0.0
  %7395 = vmatprep.subr.mxu0 0.0
  %7396 = vmatpush1.msra.mxu0 0.0
  %7397 = vmatprep.subr.mxu0 0.0
  %7398 = vmatpush1.msra.mxu0 0.0
  %7399 = vmatprep.subr.mxu0 0.0
  %7400 = vmatpush1.msra.mxu0 0.0
  %7401 = vmatprep.subr.mxu0 0.0
  %7402 = vmatpush1.msra.mxu0 0.0
  %7403 = vmatprep.subr.mxu0 0.0
  %7404 = vmatpush1.msra.mxu0 0.0
  %7405 = vmatprep.subr.mxu0 0.0
  %7406 = vmatpush1.msra.mxu0 0.0
  %7407 = vmatprep.subr.mxu0 0.0
  %7408 = vmatpush1.msra.mxu0 0.0
  %7409 = vmatprep.subr.mxu0 0.0
  %7410 = vmatpush1.msra.mxu0 0.0
  %7411 = vmatprep.subr.mxu0 0.0
  %7412 = vmatpush1.msra.mxu0 0.0
  %7413 = vmatprep.subr.mxu0 0.0
  %7414 = vmatpush1.msra.mxu0 0.0
  %7415 = vmatprep.subr.mxu0 0.0
  %7416 = vmatpush1.msra.mxu0 0.0
  %7417 = vmatprep.subr.mxu0 0.0
  %7418 = vmatpush1.msra.mxu0 0.0
  %7419 = vmatprep.subr.mxu0 0.0
  %7420 = vmatpush1.msra.mxu0 0.0
  %7421 = vmatprep.subr.mxu0 0.0
  %7422 = vmatpush1.msra.mxu0 0.0
  %7423 = vmatprep.subr.mxu0 0.0
  %7424 = vmatpush1.msra.mxu0 0.0
  %7425 = vmatprep.subr.mxu0 0.0
  %7426 = vmatpush1.msra.mxu0 0.0
  %7427 = vmatprep.subr.mxu0 0.0
  %7428 = vmatpush1.msra.mxu0 0.0
  %7429 = vmatprep.subr.mxu0 0.0
  %7430 = vmatpush1.msra.mxu0 0.0
  %7431 = vmatprep.subr.mxu0 0.0
  %7432 = vmatpush1.msra.mxu0 0.0
  %7433 = vmatprep.subr.mxu0 0.0
  %7434 = vmatpush1.msra.mxu0 0.0
  %7435 = vmatprep.subr.mxu0 0.0
  %7436 = vmatpush1.msra.mxu0 0.0
  %7437 = vmatprep.subr.mxu0 0.0
  %7438 = vmatpush1.msra.mxu0 0.0
  %7439 = vmatprep.subr.mxu0 0.0
  %7440 = vmatpush1.msra.mxu0 0.0
  %7441 = vmatprep.subr.mxu0 0.0
  %7442 = vmatpush1.msra.mxu0 0.0
  %7443 = vmatprep.subr.mxu0 0.0
  %7444 = vmatpush1.msra.mxu0 0.0
  %7445 = vmatprep.subr.mxu0 0.0
  %7446 = vmatpush1.msra.mxu0 0.0
  %7447 = vmatprep.mubr.f32.mxu0 0.0
  %v7448 = vand.u32 %v6312, 4294901760
  %7449 = vmatmul.mubr.f32.gmra.mrb[0].mxu0 %v7448
  %v7450 = vpop.f32.mrb[0].mxu0
  %v7451 = vadd.f32 %v7370, %v7450
  %v7452 = vpop.f32.mrb[0].mxu0
  %7453 = vdwg.mxu0
  %7454 = vmatprep.subr.mxu0 0.0
  %v7455 = vand.u32 %v109, 4294901760
  %v7456 = vsub.f32 %v109, %v7455
  %7457 = vmatpush1.msra.mxu0 %v7456
  %7458 = vmatprep.subr.mxu0 0.0
  %v7459 = vand.u32 %v114, 4294901760
  %v7460 = vsub.f32 %v114, %v7459
  %7461 = vmatpush1.msra.mxu0 %v7460
  %7462 = vmatprep.subr.mxu0 0.0
  %7463 = vmatpush1.msra.mxu0 0.0
  %7464 = vmatprep.subr.mxu0 0.0
  %7465 = vmatpush1.msra.mxu0 0.0
  %7466 = vmatprep.subr.mxu0 0.0
  %7467 = vmatpush1.msra.mxu0 0.0
  %7468 = vmatprep.subr.mxu0 0.0
  %7469 = vmatpush1.msra.mxu0 0.0
  %7470 = vmatprep.subr.mxu0 0.0
  %7471 = vmatpush1.msra.mxu0 0.0
  %7472 = vmatprep.subr.mxu0 0.0
  %7473 = vmatpush1.msra.mxu0 0.0
  %7474 = vmatprep.subr.mxu0 0.0
  %7475 = vmatpush1.msra.mxu0 0.0
  %7476 = vmatprep.subr.mxu0 0.0
  %7477 = vmatpush1.msra.mxu0 0.0
  %7478 = vmatprep.subr.mxu0 0.0
  %7479 = vmatpush1.msra.mxu0 0.0
  %7480 = vmatprep.subr.mxu0 0.0
  %7481 = vmatpush1.msra.mxu0 0.0
  %7482 = vmatprep.subr.mxu0 0.0
  %7483 = vmatpush1.msra.mxu0 0.0
  %7484 = vmatprep.subr.mxu0 0.0
  %7485 = vmatpush1.msra.mxu0 0.0
  %7486 = vmatprep.subr.mxu0 0.0
  %7487 = vmatpush1.msra.mxu0 0.0
  %7488 = vmatprep.subr.mxu0 0.0
  %7489 = vmatpush1.msra.mxu0 0.0
  %7490 = vmatprep.subr.mxu0 0.0
  %7491 = vmatpush1.msra.mxu0 0.0
  %7492 = vmatprep.subr.mxu0 0.0
  %7493 = vmatpush1.msra.mxu0 0.0
  %7494 = vmatprep.subr.mxu0 0.0
  %7495 = vmatpush1.msra.mxu0 0.0
  %7496 = vmatprep.subr.mxu0 0.0
  %7497 = vmatpush1.msra.mxu0 0.0
  %7498 = vmatprep.subr.mxu0 0.0
  %7499 = vmatpush1.msra.mxu0 0.0
  %7500 = vmatprep.subr.mxu0 0.0
  %7501 = vmatpush1.msra.mxu0 0.0
  %7502 = vmatprep.subr.mxu0 0.0
  %7503 = vmatpush1.msra.mxu0 0.0
  %7504 = vmatprep.subr.mxu0 0.0
  %7505 = vmatpush1.msra.mxu0 0.0
  %7506 = vmatprep.subr.mxu0 0.0
  %7507 = vmatpush1.msra.mxu0 0.0
  %7508 = vmatprep.subr.mxu0 0.0
  %7509 = vmatpush1.msra.mxu0 0.0
  %7510 = vmatprep.subr.mxu0 0.0
  %7511 = vmatpush1.msra.mxu0 0.0
  %7512 = vmatprep.subr.mxu0 0.0
  %7513 = vmatpush1.msra.mxu0 0.0
  %7514 = vmatprep.subr.mxu0 0.0
  %7515 = vmatpush1.msra.mxu0 0.0
  %7516 = vmatprep.subr.mxu0 0.0
  %7517 = vmatpush1.msra.mxu0 0.0
  %7518 = vmatprep.subr.mxu0 0.0
  %7519 = vmatpush1.msra.mxu0 0.0
  %7520 = vmatprep.subr.mxu0 0.0
  %7521 = vmatpush1.msra.mxu0 0.0
  %7522 = vmatprep.mubr.f32.mxu0 0.0
  %v7523 = vand.u32 %v6312, 4294901760
  %v7524 = vsub.f32 %v6312, %v7523
  %7525 = vmatmul.mubr.f32.gmra.mrb[0].mxu0 %v7524
  %v7526 = vpop.f32.mrb[0].mxu0
  %v7527 = vadd.f32 %v7451, %v7526
  %v7528 = vpop.f32.mrb[0].mxu0
  %7529 = vdwg.mxu0
  %7530 = vmatprep.subr.mxu0 0.0
  %v7531 = vand.u32 %v109, 4294901760
  %7532 = vmatpush1.msra.mxu0 %v7531
  %7533 = vmatprep.subr.mxu0 0.0
  %v7534 = vand.u32 %v114, 4294901760
  %7535 = vmatpush1.msra.mxu0 %v7534
  %7536 = vmatprep.subr.mxu0 0.0
  %7537 = vmatpush1.msra.mxu0 0.0
  %7538 = vmatprep.subr.mxu0 0.0
  %7539 = vmatpush1.msra.mxu0 0.0
  %7540 = vmatprep.subr.mxu0 0.0
  %7541 = vmatpush1.msra.mxu0 0.0
  %7542 = vmatprep.subr.mxu0 0.0
  %7543 = vmatpush1.msra.mxu0 0.0
  %7544 = vmatprep.subr.mxu0 0.0
  %7545 = vmatpush1.msra.mxu0 0.0
  %7546 = vmatprep.subr.mxu0 0.0
  %7547 = vmatpush1.msra.mxu0 0.0
  %7548 = vmatprep.subr.mxu0 0.0
  %7549 = vmatpush1.msra.mxu0 0.0
  %7550 = vmatprep.subr.mxu0 0.0
  %7551 = vmatpush1.msra.mxu0 0.0
  %7552 = vmatprep.subr.mxu0 0.0
  %7553 = vmatpush1.msra.mxu0 0.0
  %7554 = vmatprep.subr.mxu0 0.0
  %7555 = vmatpush1.msra.mxu0 0.0
  %7556 = vmatprep.subr.mxu0 0.0
  %7557 = vmatpush1.msra.mxu0 0.0
  %7558 = vmatprep.subr.mxu0 0.0
  %7559 = vmatpush1.msra.mxu0 0.0
  %7560 = vmatprep.subr.mxu0 0.0
  %7561 = vmatpush1.msra.mxu0 0.0
  %7562 = vmatprep.subr.mxu0 0.0
  %7563 = vmatpush1.msra.mxu0 0.0
  %7564 = vmatprep.subr.mxu0 0.0
  %7565 = vmatpush1.msra.mxu0 0.0
  %7566 = vmatprep.subr.mxu0 0.0
  %7567 = vmatpush1.msra.mxu0 0.0
  %7568 = vmatprep.subr.mxu0 0.0
  %7569 = vmatpush1.msra.mxu0 0.0
  %7570 = vmatprep.subr.mxu0 0.0
  %7571 = vmatpush1.msra.mxu0 0.0
  %7572 = vmatprep.subr.mxu0 0.0
  %7573 = vmatpush1.msra.mxu0 0.0
  %7574 = vmatprep.subr.mxu0 0.0
  %7575 = vmatpush1.msra.mxu0 0.0
  %7576 = vmatprep.subr.mxu0 0.0
  %7577 = vmatpush1.msra.mxu0 0.0
  %7578 = vmatprep.subr.mxu0 0.0
  %7579 = vmatpush1.msra.mxu0 0.0
  %7580 = vmatprep.subr.mxu0 0.0
  %7581 = vmatpush1.msra.mxu0 0.0
  %7582 = vmatprep.subr.mxu0 0.0
  %7583 = vmatpush1.msra.mxu0 0.0
  %7584 = vmatprep.subr.mxu0 0.0
  %7585 = vmatpush1.msra.mxu0 0.0
  %7586 = vmatprep.subr.mxu0 0.0
  %7587 = vmatpush1.msra.mxu0 0.0
  %7588 = vmatprep.subr.mxu0 0.0
  %7589 = vmatpush1.msra.mxu0 0.0
  %7590 = vmatprep.subr.mxu0 0.0
  %7591 = vmatpush1.msra.mxu0 0.0
  %7592 = vmatprep.subr.mxu0 0.0
  %7593 = vmatpush1.msra.mxu0 0.0
  %7594 = vmatprep.subr.mxu0 0.0
  %7595 = vmatpush1.msra.mxu0 0.0
  %7596 = vmatprep.mubr.f32.mxu0 0.0
  %v7597 = vand.u32 %v6312, 4294901760
  %v7598 = vsub.f32 %v6312, %v7597
  %v7599 = vand.u32 %v7598, 4294901760
  %7600 = vmatmul.mubr.f32.gmra.mrb[0].mxu0 %v7599
  %v7601 = vpop.f32.mrb[0].mxu0
  %v7602 = vadd.f32 %v7527, %v7601
  %v7603 = vpop.f32.mrb[0].mxu0
  %7604 = vdwg.mxu0
  %7605 = vmatprep.subr.mxu0 0.0
  %v7606 = vand.u32 %v109, 4294901760
  %v7607 = vsub.f32 %v109, %v7606
  %v7608 = vand.u32 %v7607, 4294901760
  %7609 = vmatpush1.msra.mxu0 %v7608
  %7610 = vmatprep.subr.mxu0 0.0
  %v7611 = vand.u32 %v114, 4294901760
  %v7612 = vsub.f32 %v114, %v7611
  %v7613 = vand.u32 %v7612, 4294901760
  %7614 = vmatpush1.msra.mxu0 %v7613
  %7615 = vmatprep.subr.mxu0 0.0
  %7616 = vmatpush1.msra.mxu0 0.0
  %7617 = vmatprep.subr.mxu0 0.0
  %7618 = vmatpush1.msra.mxu0 0.0
  %7619 = vmatprep.subr.mxu0 0.0
  %7620 = vmatpush1.msra.mxu0 0.0
  %7621 = vmatprep.subr.mxu0 0.0
  %7622 = vmatpush1.msra.mxu0 0.0
  %7623 = vmatprep.subr.mxu0 0.0
  %7624 = vmatpush1.msra.mxu0 0.0
  %7625 = vmatprep.subr.mxu0 0.0
  %7626 = vmatpush1.msra.mxu0 0.0
  %7627 = vmatprep.subr.mxu0 0.0
  %7628 = vmatpush1.msra.mxu0 0.0
  %7629 = vmatprep.subr.mxu0 0.0
  %7630 = vmatpush1.msra.mxu0 0.0
  %7631 = vmatprep.subr.mxu0 0.0
  %7632 = vmatpush1.msra.mxu0 0.0
  %7633 = vmatprep.subr.mxu0 0.0
  %7634 = vmatpush1.msra.mxu0 0.0
  %7635 = vmatprep.subr.mxu0 0.0
  %7636 = vmatpush1.msra.mxu0 0.0
  %7637 = vmatprep.subr.mxu0 0.0
  %7638 = vmatpush1.msra.mxu0 0.0
  %7639 = vmatprep.subr.mxu0 0.0
  %7640 = vmatpush1.msra.mxu0 0.0
  %7641 = vmatprep.subr.mxu0 0.0
  %7642 = vmatpush1.msra.mxu0 0.0
  %7643 = vmatprep.subr.mxu0 0.0
  %7644 = vmatpush1.msra.mxu0 0.0
  %7645 = vmatprep.subr.mxu0 0.0
  %7646 = vmatpush1.msra.mxu0 0.0
  %7647 = vmatprep.subr.mxu0 0.0
  %7648 = vmatpush1.msra.mxu0 0.0
  %7649 = vmatprep.subr.mxu0 0.0
  %7650 = vmatpush1.msra.mxu0 0.0
  %7651 = vmatprep.subr.mxu0 0.0
  %7652 = vmatpush1.msra.mxu0 0.0
  %7653 = vmatprep.subr.mxu0 0.0
  %7654 = vmatpush1.msra.mxu0 0.0
  %7655 = vmatprep.subr.mxu0 0.0
  %7656 = vmatpush1.msra.mxu0 0.0
  %7657 = vmatprep.subr.mxu0 0.0
  %7658 = vmatpush1.msra.mxu0 0.0
  %7659 = vmatprep.subr.mxu0 0.0
  %7660 = vmatpush1.msra.mxu0 0.0
  %7661 = vmatprep.subr.mxu0 0.0
  %7662 = vmatpush1.msra.mxu0 0.0
  %7663 = vmatprep.subr.mxu0 0.0
  %7664 = vmatpush1.msra.mxu0 0.0
  %7665 = vmatprep.subr.mxu0 0.0
  %7666 = vmatpush1.msra.mxu0 0.0
  %7667 = vmatprep.subr.mxu0 0.0
  %7668 = vmatpush1.msra.mxu0 0.0
  %7669 = vmatprep.subr.mxu0 0.0
  %7670 = vmatpush1.msra.mxu0 0.0
  %7671 = vmatprep.subr.mxu0 0.0
  %7672 = vmatpush1.msra.mxu0 0.0
  %7673 = vmatprep.subr.mxu0 0.0
  %7674 = vmatpush1.msra.mxu0 0.0
  %7675 = vmatprep.mubr.f32.mxu0 0.0
  %v7676 = vand.u32 %v6312, 4294901760
  %7677 = vmatmul.mubr.f32.gmra.mrb[0].mxu0 %v7676
  %v7678 = vpop.f32.mrb[0].mxu0
  %v7679 = vadd.f32 %v7602, %v7678
  %v7680 = vpop.f32.mrb[0].mxu0
  %7681 = vdwg.mxu0
  %7682 = vmatprep.subr.mxu0 0.0
  %v7683 = vand.u32 %v109, 4294901760
  %7684 = vmatpush1.msra.mxu0 %v7683
  %7685 = vmatprep.subr.mxu0 0.0
  %v7686 = vand.u32 %v114, 4294901760
  %7687 = vmatpush1.msra.mxu0 %v7686
  %7688 = vmatprep.subr.mxu0 0.0
  %7689 = vmatpush1.msra.mxu0 0.0
  %7690 = vmatprep.subr.mxu0 0.0
  %7691 = vmatpush1.msra.mxu0 0.0
  %7692 = vmatprep.subr.mxu0 0.0
  %7693 = vmatpush1.msra.mxu0 0.0
  %7694 = vmatprep.subr.mxu0 0.0
  %7695 = vmatpush1.msra.mxu0 0.0
  %7696 = vmatprep.subr.mxu0 0.0
  %7697 = vmatpush1.msra.mxu0 0.0
  %7698 = vmatprep.subr.mxu0 0.0
  %7699 = vmatpush1.msra.mxu0 0.0
  %7700 = vmatprep.subr.mxu0 0.0
  %7701 = vmatpush1.msra.mxu0 0.0
  %7702 = vmatprep.subr.mxu0 0.0
  %7703 = vmatpush1.msra.mxu0 0.0
  %7704 = vmatprep.subr.mxu0 0.0
  %7705 = vmatpush1.msra.mxu0 0.0
  %7706 = vmatprep.subr.mxu0 0.0
  %7707 = vmatpush1.msra.mxu0 0.0
  %7708 = vmatprep.subr.mxu0 0.0
  %7709 = vmatpush1.msra.mxu0 0.0
  %7710 = vmatprep.subr.mxu0 0.0
  %7711 = vmatpush1.msra.mxu0 0.0
  %7712 = vmatprep.subr.mxu0 0.0
  %7713 = vmatpush1.msra.mxu0 0.0
  %7714 = vmatprep.subr.mxu0 0.0
  %7715 = vmatpush1.msra.mxu0 0.0
  %7716 = vmatprep.subr.mxu0 0.0
  %7717 = vmatpush1.msra.mxu0 0.0
  %7718 = vmatprep.subr.mxu0 0.0
  %7719 = vmatpush1.msra.mxu0 0.0
  %7720 = vmatprep.subr.mxu0 0.0
  %7721 = vmatpush1.msra.mxu0 0.0
  %7722 = vmatprep.subr.mxu0 0.0
  %7723 = vmatpush1.msra.mxu0 0.0
  %7724 = vmatprep.subr.mxu0 0.0
  %7725 = vmatpush1.msra.mxu0 0.0
  %7726 = vmatprep.subr.mxu0 0.0
  %7727 = vmatpush1.msra.mxu0 0.0
  %7728 = vmatprep.subr.mxu0 0.0
  %7729 = vmatpush1.msra.mxu0 0.0
  %7730 = vmatprep.subr.mxu0 0.0
  %7731 = vmatpush1.msra.mxu0 0.0
  %7732 = vmatprep.subr.mxu0 0.0
  %7733 = vmatpush1.msra.mxu0 0.0
  %7734 = vmatprep.subr.mxu0 0.0
  %7735 = vmatpush1.msra.mxu0 0.0
  %7736 = vmatprep.subr.mxu0 0.0
  %7737 = vmatpush1.msra.mxu0 0.0
  %7738 = vmatprep.subr.mxu0 0.0
  %7739 = vmatpush1.msra.mxu0 0.0
  %7740 = vmatprep.subr.mxu0 0.0
  %7741 = vmatpush1.msra.mxu0 0.0
  %7742 = vmatprep.subr.mxu0 0.0
  %7743 = vmatpush1.msra.mxu0 0.0
  %7744 = vmatprep.subr.mxu0 0.0
  %7745 = vmatpush1.msra.mxu0 0.0
  %7746 = vmatprep.subr.mxu0 0.0
  %7747 = vmatpush1.msra.mxu0 0.0
  %7748 = vmatprep.mubr.f32.mxu0 0.0
  %v7749 = vand.u32 %v6312, 4294901760
  %7750 = vmatmul.mubr.f32.gmra.mrb[0].mxu0 %v7749
  %v7751 = vpop.f32.mrb[0].mxu0
  %v7752 = vadd.f32 %v7679, %v7751
  %v7753 = vpop.f32.mrb[0].mxu0
  %7754 = vdwg.mxu0
  %v7755 = vmul.f32 %v3926, %v6801
  %v7756 = vmul.f32 %v3927, %v6803
  %v7757 = vmul.f32 %v3928, %v7292
  %v7758 = vmul.f32 %v3929, %v7294
  %v7759 = vmul.f32 %v3930, %v7752
  %v7760 = vld [vmem:[%s1] sm:$0x1f]
  %v7762 = vlaneseq
  %v7763 = vshrl.u32 %v7762, 7
  %v7764 = vsub.s32 0, %v7763
  %v7765 = vrot.slane %v7760, %v7764
  %v7766 = vlaneseq
  %v7767 = vshrl.u32 %v7766, 7
  %v7768 = vsub.s32 1, %v7767
  %v7769 = vrot.slane %v7760, %v7768
  %v7770 = vlaneseq
  %v7771 = vshrl.u32 %v7770, 7
  %v7772 = vsub.s32 2, %v7771
  %v7773 = vrot.slane %v7760, %v7772
  %v7774 = vlaneseq
  %v7775 = vshrl.u32 %v7774, 7
  %v7776 = vsub.s32 3, %v7775
  %v7777 = vrot.slane %v7760, %v7776
  %v7778 = vlaneseq
  %v7779 = vshrl.u32 %v7778, 7
  %v7780 = vsub.s32 4, %v7779
  %v7781 = vrot.slane %v7760, %v7780
  %v7787 = vmul.f32 %v7755, %v7765
  %v7788 = vmul.f32 %v7756, %v7769
  %v7789 = vmul.f32 %v7757, %v7773
  %v7790 = vmul.f32 %v7758, %v7777
  %v7791 = vmul.f32 %v7759, %v7781
  %v7792 = vld [vmem:[%s2] sm:$0x1f]
  %v7794 = vlaneseq
  %v7795 = vshrl.u32 %v7794, 7
  %v7796 = vsub.s32 0, %v7795
  %v7797 = vrot.slane %v7792, %v7796
  %v7798 = vlaneseq
  %v7799 = vshrl.u32 %v7798, 7
  %v7800 = vsub.s32 1, %v7799
  %v7801 = vrot.slane %v7792, %v7800
  %v7802 = vlaneseq
  %v7803 = vshrl.u32 %v7802, 7
  %v7804 = vsub.s32 2, %v7803
  %v7805 = vrot.slane %v7792, %v7804
  %v7806 = vlaneseq
  %v7807 = vshrl.u32 %v7806, 7
  %v7808 = vsub.s32 3, %v7807
  %v7809 = vrot.slane %v7792, %v7808
  %v7810 = vlaneseq
  %v7811 = vshrl.u32 %v7810, 7
  %v7812 = vsub.s32 4, %v7811
  %v7813 = vrot.slane %v7792, %v7812
  %v7819 = vadd.f32 %v7787, %v7797
  %v7820 = vadd.f32 %v7788, %v7801
  %v7821 = vadd.f32 %v7789, %v7805
  %v7822 = vadd.f32 %v7790, %v7809
  %v7823 = vadd.f32 %v7791, %v7813
  %7824 = vst [vmem:[%s5] sm:$0xff] %v7819
  %7825 = vst [vmem:[%s5 + $0x8] sm:$0xff] %v7820
  %7826 = vst [vmem:[%s5 + $0x10] sm:$0xff] %v7821
  %7827 = vst [vmem:[%s5 + $0x18] sm:$0xff] %v7822
  %7828 = vst [vmem:[%s5 + $0x20] sm:$0xff] %v7823
  // Predicated region
  $region22: #{layernorm.1} parent=0 // pred_check
    _
  $region23: #{layernorm.1} parent=0 // pred_check_branch
    %7830 = sbr.rel (0) target = $region25
  $region24: #{layernorm.1} parent=0 // pred_region
    _
  $region25: #{layernorm.1} parent=0 // pred_fallthru
    _
  // Predicated region
  $region26: #{layernorm.1} parent=0 // pred_check
    _
  $region27: #{layernorm.1} parent=0 // pred_check_branch
    %7832 = sbr.rel (0) target = $region29
  $region28: #{layernorm.1} parent=0 // pred_region
    _
  $region29: #{layernorm.1} parent=0 // pred_fallthru
    _

</llo_original>
